<compile_context>
chip_gen: v7x
topology: tpu7x:2x2x1
jax: 0.10.0
libtpu: 0.0.40
codegen_flags: <defaults>
</compile_context>

<pallas_src>
import math

import jax
import jax.numpy as jnp
from jax import lax
from jax.experimental import pallas as pl
from jax.experimental.pallas import tpu as pltpu

_LANE = 128      # f32 lane tile
_SUBLANE = 8     # f32 sublane tile

# Fully unroll the recurrent loop (static aligned slices, max scheduler visibility)
# up to this T; longer sequences use lax.fori_loop with modest unroll to bound
# vreg pressure (only 64 vregs).
_FULL_UNROLL_MAX_T = 16
_FORI_UNROLL = 4


def _round_up(x, m):
    return ((x + m - 1) // m) * m


# ----------------------------------- kernel -----------------------------------
def _make_bigru_kernel(T, Bp, Hp):
    Gp = 3 * Hp          # per-direction gate width (lane-aligned blocks [r|z|n])

    def kernel(x_ref,                                        # (T*Bp, E)  bf16
               w_ih0_ref, b_ih0_ref, w_hh0_ref, b_hh0n_ref,
               w_ih1f_ref, w_ih1b_ref, b_ih1_ref, w_hh1_ref, b_hh1n_ref,
               pw_ref, pb_ref,
               out_ref,                                      # (T*Bp, 1)  f32
               gi_ref,                                       # (T*Bp, 2*Gp) f32
               h0f_ref, h0b_ref, h1f_ref, h1b_ref):          # (T*Bp, Hp) f32

        def sigmoid(v):
            # exp and the approximate reciprocal both live on the EUP slot
            # (no VALU Newton refinement on the serial critical path).
            return pl.reciprocal(1.0 + jnp.exp(-v), approx=True)

        def gru_gates(gi, gh, bhn, h_prev):
            # PyTorch gate order [r | z | n]; each block is Hp (128-multiple) wide,
            # so every slice below is lane-aligned.  r/z hidden biases were folded
            # into gi on the host; only the n-gate hidden bias remains.
            r = sigmoid(gi[:, :Hp] + gh[:, :Hp])
            z = sigmoid(gi[:, Hp:2 * Hp] + gh[:, Hp:2 * Hp])
            n = jnp.tanh(gi[:, 2 * Hp:] + r * (gh[:, 2 * Hp:] + bhn))
            return (1.0 - z) * n + z * h_prev

        def run_layer(whh_ref, bhhn_ref, of_ref, ob_ref):
            # Recurrent weights stay f32 (numerics of the T-step recurrence);
            # loads + bias broadcast hoisted out of the loop.
            whh_f = whh_ref[0]
            whh_b = whh_ref[1]
            bhn_f = jnp.broadcast_to(bhhn_ref[0], (Bp, Hp))
            bhn_b = jnp.broadcast_to(bhhn_ref[1], (Bp, Hp))

            def body(i, carry):
                hf, hb = carry
                rf = i * Bp                  # forward step t = i
                rb = (T - 1 - i) * Bp        # backward step t = T-1-i
                if not isinstance(i, int):   # dynamic index: assert alignment
                    rf = pl.multiple_of(rf, Bp)
                    rb = pl.multiple_of(rb, Bp)
                gif = gi_ref[pl.ds(rf, Bp), :Gp]          # fwd gates (lane-aligned)
                gib = gi_ref[pl.ds(rb, Bp), Gp:]          # bwd gates (lane-aligned)
                ghf = jnp.dot(hf, whh_f, preferred_element_type=jnp.float32)
                ghb = jnp.dot(hb, whh_b, preferred_element_type=jnp.float32)
                hf = gru_gates(gif, ghf, bhn_f, hf)
                hb = gru_gates(gib, ghb, bhn_b, hb)
                of_ref[pl.ds(rf, Bp), :] = hf             # full-width (Bp, Hp) store
                ob_ref[pl.ds(rb, Bp), :] = hb
                return hf, hb

            h_init = jnp.zeros((Bp, Hp), jnp.float32)
            if T <= _FULL_UNROLL_MAX_T:
                carry = (h_init, h_init)
                for i in range(T):           # static unroll: static aligned slices
                    carry = body(i, carry)
            else:
                lax.fori_loop(0, T, body, (h_init, h_init), unroll=_FORI_UNROLL)

        # ---- layer 0: one fused bf16 GI matmul (both directions), f32 accumulate ----
        gi_ref[...] = (
            jnp.dot(x_ref[...], w_ih0_ref[...], preferred_element_type=jnp.float32)
            + b_ih0_ref[...])
        run_layer(w_hh0_ref, b_hh0n_ref, h0f_ref, h0b_ref)

        # ---- layer 1: input = concat([fwd, bwd]) of layer 0, pre-split weights ----
        x0f = h0f_ref[...].astype(jnp.bfloat16)
        x0b = h0b_ref[...].astype(jnp.bfloat16)
        gi_ref[...] = (
            jnp.dot(x0f, w_ih1f_ref[...], preferred_element_type=jnp.float32)
            + jnp.dot(x0b, w_ih1b_ref[...], preferred_element_type=jnp.float32)
            + b_ih1_ref[...])
        run_layer(w_hh1_ref, b_hh1n_ref, h1f_ref, h1b_ref)

        # ---- projection Linear(2H, 1): one batched matmul, one store ----
        out_ref[...] = (
            jnp.dot(h1f_ref[...].astype(jnp.bfloat16), pw_ref[0],
                    preferred_element_type=jnp.float32)
            + jnp.dot(h1b_ref[...].astype(jnp.bfloat16), pw_ref[1],
                      preferred_element_type=jnp.float32)
            + pb_ref[...])

    return kernel


# ------------------------ logical (PyTorch-layout) params ----------------------
def init_params(key, vocab_size, embedding_size, hidden_size):
    E, H = embedding_size, hidden_size
    scale = 1.0 / math.sqrt(H)
    ks = jax.random.split(key, 11)

    def u(k, shape):
        return jax.random.uniform(k, shape, jnp.float32, -scale, scale)

    return dict(
        embedding=jax.random.normal(ks[0], (vocab_size, E), jnp.float32),
        # stacked over direction (0=fwd, 1=bwd); weights already transposed to (in, 3H)
        w_ih0=u(ks[1], (2, E, 3 * H)),
        w_hh0=u(ks[2], (2, H, 3 * H)),
        b_ih0=u(ks[3], (2, 3 * H)),
        b_hh0=u(ks[4], (2, 3 * H)),
        w_ih1=u(ks[5], (2, 2 * H, 3 * H)),
        w_hh1=u(ks[6], (2, H, 3 * H)),
        b_ih1=u(ks[7], (2, 3 * H)),
        b_hh1=u(ks[8], (2, 3 * H)),
        pw=u(ks[9], (2 * H, 1)),
        pb=u(ks[10], (1, 1)),
    )


# --------------------- kernel-side params (pad / fold / bf16) ------------------
def _pad_gate_cols(a, H, Hp):
    """Pad the trailing 3H gate axis to 3*Hp, per gate block [r|z|n]."""
    pad = [(0, 0)] * (a.ndim - 1) + [(0, Hp - H)]
    return jnp.concatenate([jnp.pad(a[..., g * H:(g + 1) * H], pad) for g in range(3)],
                           axis=-1)


def _pad_rows(a, H, Hp):
    return jnp.pad(a, [(0, Hp - H)] + [(0, 0)] * (a.ndim - 1))


def prepare_params(params):
    """Host-side one-off: pad H->Hp (lane multiple), fold r/z hidden biases into the
    input biases, pre-split layer-1 / projection weights by input half, pre-cast all
    MXU operands (GI weights, embedding, projection) to bf16."""
    H = params["w_hh0"].shape[1]
    Hp = _round_up(H, _LANE)
    f32, bf16 = jnp.float32, jnp.bfloat16

    def ih_weights(w):                      # (2, in, 3H) -> (in, 6Hp) bf16, fwd|bwd
        return jnp.concatenate([_pad_gate_cols(w[d], H, Hp) for d in range(2)],
                               axis=-1).astype(bf16)

    def ih_bias(b_ih, b_hh):                # fold b_hh r/z into b_ih -> (1, 6Hp) f32
        parts = []
        for d in range(2):
            folded = jnp.concatenate(
                [b_ih[d, :2 * H] + b_hh[d, :2 * H], b_ih[d, 2 * H:]], axis=-1)
            parts.append(_pad_gate_cols(folded, H, Hp))
        return jnp.concatenate(parts, axis=-1)[None, :].astype(f32)

    def hh_weights(w):                      # (2, H, 3H) -> (2, Hp, 3Hp) f32
        return jnp.stack([_pad_gate_cols(_pad_rows(w[d], H, Hp), H, Hp)
                          for d in range(2)]).astype(f32)

    def hh_bias_n(b_hh):                    # n-gate slice only -> (2, 1, Hp) f32
        return jnp.stack([jnp.pad(b_hh[d, 2 * H:], (0, Hp - H))[None, :]
                          for d in range(2)]).astype(f32)

    w_ih1 = params["w_ih1"]                 # (2, 2H, 3H)
    w_ih1f = jnp.concatenate(
        [_pad_gate_cols(_pad_rows(w_ih1[d, :H], H, Hp), H, Hp) for d in range(2)],
        axis=-1).astype(bf16)               # (Hp, 6Hp): from layer-0 fwd hidden
    w_ih1b = jnp.concatenate(
        [_pad_gate_cols(_pad_rows(w_ih1[d, H:], H, Hp), H, Hp) for d in range(2)],
        axis=-1).astype(bf16)               # (Hp, 6Hp): from layer-0 bwd hidden

    pw = params["pw"]                       # (2H, 1) -> (2, Hp, 1) bf16
    pw2 = jnp.stack([_pad_rows(pw[:H], H, Hp), _pad_rows(pw[H:], H, Hp)]).astype(bf16)

    return dict(
        embedding=params["embedding"].astype(bf16),
        w_ih0=ih_weights(params["w_ih0"]),
        b_ih0=ih_bias(params["b_ih0"], params["b_hh0"]),
        w_hh0=hh_weights(params["w_hh0"]),
        b_hh0n=hh_bias_n(params["b_hh0"]),
        w_ih1f=w_ih1f,
        w_ih1b=w_ih1b,
        b_ih1=ih_bias(params["b_ih1"], params["b_hh1"]),
        w_hh1=hh_weights(params["w_hh1"]),
        b_hh1n=hh_bias_n(params["b_hh1"]),
        pw=pw2,
        pb=params["pb"].astype(f32),
    )


# ----------------------------------- wrapper -----------------------------------
@jax.jit
def sentiment_bigru_forward(sentences, kparams):
    emb = kparams["embedding"]                      # bf16 table
    E = emb.shape[1]
    Hp = kparams["w_hh0"].shape[1]
    B, T = sentences.shape
    Bp = max(_SUBLANE, _round_up(B, _SUBLANE))

    # Pad the tiny int token matrix (not the large embedded tensor) and gather
    # time-major in bf16: row = t*Bp + b.
    tok = jnp.pad(sentences, ((0, Bp - B), (0, 0)))     # (Bp, T)
    x = emb[tok.T].reshape(T * Bp, E)                   # (T*Bp, E) bf16

    operands = (x,
                kparams["w_ih0"], kparams["b_ih0"], kparams["w_hh0"], kparams["b_hh0n"],
                kparams["w_ih1f"], kparams["w_ih1b"], kparams["b_ih1"],
                kparams["w_hh1"], kparams["b_hh1n"],
                kparams["pw"], kparams["pb"])

    scratch = [
        pltpu.VMEM((T * Bp, 6 * Hp), jnp.float32),      # fused fwd|bwd input gates
        pltpu.VMEM((T * Bp, Hp), jnp.float32),          # layer-0 fwd hidden states
        pltpu.VMEM((T * Bp, Hp), jnp.float32),          # layer-0 bwd hidden states
        pltpu.VMEM((T * Bp, Hp), jnp.float32),          # layer-1 fwd hidden states
        pltpu.VMEM((T * Bp, Hp), jnp.float32),          # layer-1 bwd hidden states
    ]

    # Size the scoped VMEM limit from the actual resident footprint (+ headroom).
    footprint = sum(math.prod(a.shape) * a.dtype.itemsize for a in operands)
    footprint += (T * Bp) * (6 * Hp + 4 * Hp) * 4       # f32 scratch
    footprint += T * Bp * 4                             # output
    vmem_limit = int(min(127 << 20, max(32 << 20, int(footprint * 1.25) + (4 << 20))))

    vmem = pl.BlockSpec(memory_space=pltpu.MemorySpace.VMEM)
    out_flat = pl.pallas_call(
        _make_bigru_kernel(T, Bp, Hp),
        out_shape=jax.ShapeDtypeStruct((T * Bp, 1), jnp.float32),
        in_specs=[vmem] * len(operands),
        out_specs=vmem,
        scratch_shapes=scratch,
        compiler_params=pltpu.CompilerParams(vmem_limit_bytes=vmem_limit),
    )(*operands)

    out = out_flat.reshape(T, Bp)[:, :B]                # drop batch padding
    return jnp.transpose(out)[:, :, None]               # (B, T, 1), batch_first


# ------------------------- pure-JAX reference (for checking) -------------------------
def _gru_dir_ref(x_seq, w_ih, w_hh, b_ih, b_hh, reverse, mm_dtype):
    H = w_hh.shape[0]
    w_ih_m = w_ih.astype(mm_dtype)

    def step(h, x):
        gi = jnp.dot(x.astype(mm_dtype), w_ih_m,
                     preferred_element_type=jnp.float32) + b_ih
        gh = jnp.dot(h, w_hh, preferred_element_type=jnp.float32) + b_hh
        r = 1.0 / (1.0 + jnp.exp(-(gi[:, :H] + gh[:, :H])))
        z = 1.0 / (1.0 + jnp.exp(-(gi[:, H:2 * H] + gh[:, H:2 * H])))
        n = jnp.tanh(gi[:, 2 * H:] + r * gh[:, 2 * H:])
        h = (1.0 - z) * n + z * h
        return h, h

    h0 = jnp.zeros((x_seq.shape[1], H), jnp.float32)
    _, ys = lax.scan(step, h0, x_seq, reverse=reverse)
    return ys


def reference_forward(sentences, params, mm_dtype=jnp.float32):
    """mm_dtype = dtype of the input->hidden / projection matmul operands
    (bf16 mirrors the kernel's MXU operand choice; recurrent matmul stays f32)."""
    emb = params["embedding"][sentences]
    x = jnp.transpose(emb, (1, 0, 2))                   # (T, B, E)
    yf0 = _gru_dir_ref(x, params["w_ih0"][0], params["w_hh0"][0],
                       params["b_ih0"][0], params["b_hh0"][0], False, mm_dtype)
    yb0 = _gru_dir_ref(x, params["w_ih0"][1], params["w_hh0"][1],
                       params["b_ih0"][1], params["b_hh0"][1], True, mm_dtype)
    x1 = jnp.concatenate([yf0, yb0], axis=-1)
    yf1 = _gru_dir_ref(x1, params["w_ih1"][0], params["w_hh1"][0],
                       params["b_ih1"][0], params["b_hh1"][0], False, mm_dtype)
    yb1 = _gru_dir_ref(x1, params["w_ih1"][1], params["w_hh1"][1],
                       params["b_ih1"][1], params["b_hh1"][1], True, mm_dtype)
    out1 = jnp.concatenate([yf1, yb1], axis=-1)
    proj = jnp.dot(out1.astype(mm_dtype), params["pw"].astype(mm_dtype),
                   preferred_element_type=jnp.float32) + params["pb"][0]
    return jnp.transpose(proj, (1, 0, 2))               # (B, T, 1)


if __name__ == "__main__":
    vocab_size = 50
    embedding_size = 32
    hidden_size = 32
    B, T = 2, 8

    key = jax.random.PRNGKey(0)
    pkey, skey = jax.random.split(key)
    params = init_params(pkey, vocab_size, embedding_size, hidden_size)
    kparams = prepare_params(params)
    sentences = jax.random.randint(skey, (B, T), 0, vocab_size, dtype=jnp.int32)

    out = jax.block_until_ready(sentiment_bigru_forward(sentences, kparams))
    assert out.shape == (B, T, 1), out.shape
    assert bool(jnp.all(jnp.isfinite(out)))

    # Tight check vs. a reference using the same bf16 MXU-operand dtype as the kernel
    # (tolerance covers only the approximate EUP reciprocal + accumulation order).
    ref_mxu = jax.block_until_ready(reference_forward(sentences, params, jnp.bfloat16))
    assert jnp.allclose(out, ref_mxu, atol=2e-2, rtol=2e-2), (
        float(jnp.max(jnp.abs(out - ref_mxu))))

    # Loose sanity check vs. the pure-f32 reference (bf16 GI/projection operands make
    # an exact 1e-3 match to f32 infeasible; loosened deliberately).
    ref_f32 = jax.block_until_ready(reference_forward(sentences, params, jnp.float32))
    assert jnp.allclose(out, ref_f32, atol=1e-1, rtol=1e-1), (
        float(jnp.max(jnp.abs(out - ref_f32))))

    print("KERNEL_OK")
</pallas_src>

<mosaic_0001>
module attributes {stable_mosaic.version = 11 : i64} {
  func.func @kernel(%arg0: memref<64x32xbf16, #tpu.memory_space<vmem>>, %arg1: memref<32x768xbf16, #tpu.memory_space<vmem>>, %arg2: memref<1x768xf32, #tpu.memory_space<vmem>>, %arg3: memref<2x128x384xf32, #tpu.memory_space<vmem>>, %arg4: memref<2x1x128xf32, #tpu.memory_space<vmem>>, %arg5: memref<128x768xbf16, #tpu.memory_space<vmem>>, %arg6: memref<128x768xbf16, #tpu.memory_space<vmem>>, %arg7: memref<1x768xf32, #tpu.memory_space<vmem>>, %arg8: memref<2x128x384xf32, #tpu.memory_space<vmem>>, %arg9: memref<2x1x128xf32, #tpu.memory_space<vmem>>, %arg10: memref<2x128x1xbf16, #tpu.memory_space<vmem>>, %arg11: memref<1x1xf32, #tpu.memory_space<vmem>>, %arg12: memref<64x1xf32, #tpu.memory_space<vmem>>, %arg13: memref<64x768xf32, #tpu.memory_space<vmem>>, %arg14: memref<64x128xf32, #tpu.memory_space<vmem>>, %arg15: memref<64x128xf32, #tpu.memory_space<vmem>>, %arg16: memref<64x128xf32, #tpu.memory_space<vmem>>, %arg17: memref<64x128xf32, #tpu.memory_space<vmem>>) attributes {dimension_semantics = [], scalar_prefetch = 0 : i64, scratch_operands = 5 : i64, tpu.core_type = #tpu.core_type<tc>} {
    %c0 = arith.constant 0 : index
    %c0_0 = arith.constant 0 : index
    %0 = vector.load %arg0[%c0, %c0_0] : memref<64x32xbf16, #tpu.memory_space<vmem>>, vector<64x32xbf16>
    %c0_1 = arith.constant 0 : index
    %c0_2 = arith.constant 0 : index
    %1 = vector.load %arg1[%c0_1, %c0_2] : memref<32x768xbf16, #tpu.memory_space<vmem>>, vector<32x768xbf16>
    %cst = arith.constant dense<0.000000e+00> : vector<64x768xf32>
    %2 = tpu.matmul %0, %1, %cst {dimension_numbers = #tpu.dot_dimension_numbers<[1], [0], [0], [1], [0, 0, 1, 1], [], []>} : vector<64x32xbf16>, vector<32x768xbf16>, vector<64x768xf32> -> vector<64x768xf32>
    %c0_3 = arith.constant 0 : index
    %c0_4 = arith.constant 0 : index
    %3 = vector.load %arg2[%c0_3, %c0_4] : memref<1x768xf32, #tpu.memory_space<vmem>>, vector<1x768xf32>
    %4 = vector.broadcast %3 : vector<1x768xf32> to vector<64x768xf32>
    %5 = arith.addf %2, %4 : vector<64x768xf32>
    %c0_5 = arith.constant 0 : index
    %c0_6 = arith.constant 0 : index
    %6 = vector.load %arg13[%c0_5, %c0_6] : memref<64x768xf32, #tpu.memory_space<vmem>>, vector<64x768xf32>
    tpu.vector_store %arg13[%c0_5, %c0_6], %5 {strides = array<i32>} : memref<64x768xf32, #tpu.memory_space<vmem>>, vector<64x768xf32>,
    %c0_7 = arith.constant 0 : index
    %c0_8 = arith.constant 0 : index
    %c0_9 = arith.constant 0 : index
    %7 = vector.load %arg3[%c0_7, %c0_8, %c0_9] : memref<2x128x384xf32, #tpu.memory_space<vmem>>, vector<1x128x384xf32>
    %8 = vector.shape_cast %7 : vector<1x128x384xf32> to vector<128x384xf32>
    %c1 = arith.constant 1 : index
    %c0_10 = arith.constant 0 : index
    %c0_11 = arith.constant 0 : index
    %9 = vector.load %arg3[%c1, %c0_10, %c0_11] : memref<2x128x384xf32, #tpu.memory_space<vmem>>, vector<1x128x384xf32>
    %10 = vector.shape_cast %9 : vector<1x128x384xf32> to vector<128x384xf32>
    %c0_12 = arith.constant 0 : index
    %c0_13 = arith.constant 0 : index
    %c0_14 = arith.constant 0 : index
    %11 = vector.load %arg4[%c0_12, %c0_13, %c0_14] : memref<2x1x128xf32, #tpu.memory_space<vmem>>, vector<1x1x128xf32>
    %12 = vector.shape_cast %11 : vector<1x1x128xf32> to vector<1x128xf32>
    %13 = vector.shape_cast %12 : vector<1x128xf32> to vector<1x128xf32>
    %14 = vector.broadcast %13 : vector<1x128xf32> to vector<8x128xf32>
    %c1_15 = arith.constant 1 : index
    %c0_16 = arith.constant 0 : index
    %c0_17 = arith.constant 0 : index
    %15 = vector.load %arg4[%c1_15, %c0_16, %c0_17] : memref<2x1x128xf32, #tpu.memory_space<vmem>>, vector<1x1x128xf32>
    %16 = vector.shape_cast %15 : vector<1x1x128xf32> to vector<1x128xf32>
    %17 = vector.shape_cast %16 : vector<1x128xf32> to vector<1x128xf32>
    %18 = vector.broadcast %17 : vector<1x128xf32> to vector<8x128xf32>
    %cst_18 = arith.constant 0.000000e+00 : f32
    %19 = vector.broadcast %cst_18 : f32 to vector<8x128xf32>
    %c0_19 = arith.constant 0 : index
    %c0_20 = arith.constant 0 : index
    %20 = vector.load %arg13[%c0_19, %c0_20] : memref<64x768xf32, #tpu.memory_space<vmem>>, vector<8x384xf32>
    %c56 = arith.constant 56 : index
    %c384 = arith.constant 384 : index
    %21 = vector.load %arg13[%c56, %c384] : memref<64x768xf32, #tpu.memory_space<vmem>>, vector<8x384xf32>
    %cst_21 = arith.constant dense<0.000000e+00> : vector<8x384xf32>
    %22 = tpu.matmul %19, %8, %cst_21 {dimension_numbers = #tpu.dot_dimension_numbers<[1], [0], [0], [1], [0, 0, 1, 1], [], []>} : vector<8x128xf32>, vector<128x384xf32>, vector<8x384xf32> -> vector<8x384xf32>
    %cst_22 = arith.constant dense<0.000000e+00> : vector<8x384xf32>
    %23 = tpu.matmul %19, %10, %cst_22 {dimension_numbers = #tpu.dot_dimension_numbers<[1], [0], [0], [1], [0, 0, 1, 1], [], []>} : vector<8x128xf32>, vector<128x384xf32>, vector<8x384xf32> -> vector<8x384xf32>
    %24 = vector.extract_strided_slice %20 {offsets = [0, 0], sizes = [8, 128], strides = [1, 1]} : vector<8x384xf32> to vector<8x128xf32>
    %25 = vector.extract_strided_slice %22 {offsets = [0, 0], sizes = [8, 128], strides = [1, 1]} : vector<8x384xf32> to vector<8x128xf32>
    %26 = arith.addf %24, %25 : vector<8x128xf32>
    %cst_23 = arith.constant 0.000000e+00 : f32
    %27 = vector.broadcast %cst_23 : f32 to vector<8x128xf32>
    %28 = arith.subf %27, %26 : vector<8x128xf32>
    %29 = math.exp %28 : vector<8x128xf32>
    %cst_24 = arith.constant 1.000000e+00 : f32
    %30 = vector.broadcast %cst_24 : f32 to vector<8x128xf32>
    %31 = arith.addf %30, %29 : vector<8x128xf32>
    %32 = tpu.reciprocal %31 {approx = true} : vector<8x128xf32> -> vector<8x128xf32>
    %33 = vector.extract_strided_slice %20 {offsets = [0, 128], sizes = [8, 128], strides = [1, 1]} : vector<8x384xf32> to vector<8x128xf32>
    %34 = vector.extract_strided_slice %22 {offsets = [0, 128], sizes = [8, 128], strides = [1, 1]} : vector<8x384xf32> to vector<8x128xf32>
    %35 = arith.addf %33, %34 : vector<8x128xf32>
    %cst_25 = arith.constant 0.000000e+00 : f32
    %36 = vector.broadcast %cst_25 : f32 to vector<8x128xf32>
    %37 = arith.subf %36, %35 : vector<8x128xf32>
    %38 = math.exp %37 : vector<8x128xf32>
    %cst_26 = arith.constant 1.000000e+00 : f32
    %39 = vector.broadcast %cst_26 : f32 to vector<8x128xf32>
    %40 = arith.addf %39, %38 : vector<8x128xf32>
    %41 = tpu.reciprocal %40 {approx = true} : vector<8x128xf32> -> vector<8x128xf32>
    %42 = vector.extract_strided_slice %20 {offsets = [0, 256], sizes = [8, 128], strides = [1, 1]} : vector<8x384xf32> to vector<8x128xf32>
    %43 = vector.extract_strided_slice %22 {offsets = [0, 256], sizes = [8, 128], strides = [1, 1]} : vector<8x384xf32> to vector<8x128xf32>
    %44 = arith.addf %43, %14 : vector<8x128xf32>
    %45 = arith.mulf %32, %44 : vector<8x128xf32>
    %46 = arith.addf %42, %45 : vector<8x128xf32>
    %47 = math.tanh %46 : vector<8x128xf32>
    %cst_27 = arith.constant 1.000000e+00 : f32
    %48 = vector.broadcast %cst_27 : f32 to vector<8x128xf32>
    %49 = arith.subf %48, %41 : vector<8x128xf32>
    %50 = arith.mulf %49, %47 : vector<8x128xf32>
    %51 = arith.mulf %41, %19 : vector<8x128xf32>
    %52 = arith.addf %50, %51 : vector<8x128xf32>
    %53 = vector.extract_strided_slice %21 {offsets = [0, 0], sizes = [8, 128], strides = [1, 1]} : vector<8x384xf32> to vector<8x128xf32>
    %54 = vector.extract_strided_slice %23 {offsets = [0, 0], sizes = [8, 128], strides = [1, 1]} : vector<8x384xf32> to vector<8x128xf32>
    %55 = arith.addf %53, %54 : vector<8x128xf32>
    %cst_28 = arith.constant 0.000000e+00 : f32
    %56 = vector.broadcast %cst_28 : f32 to vector<8x128xf32>
    %57 = arith.subf %56, %55 : vector<8x128xf32>
    %58 = math.exp %57 : vector<8x128xf32>
    %cst_29 = arith.constant 1.000000e+00 : f32
    %59 = vector.broadcast %cst_29 : f32 to vector<8x128xf32>
    %60 = arith.addf %59, %58 : vector<8x128xf32>
    %61 = tpu.reciprocal %60 {approx = true} : vector<8x128xf32> -> vector<8x128xf32>
    %62 = vector.extract_strided_slice %21 {offsets = [0, 128], sizes = [8, 128], strides = [1, 1]} : vector<8x384xf32> to vector<8x128xf32>
    %63 = vector.extract_strided_slice %23 {offsets = [0, 128], sizes = [8, 128], strides = [1, 1]} : vector<8x384xf32> to vector<8x128xf32>
    %64 = arith.addf %62, %63 : vector<8x128xf32>
    %cst_30 = arith.constant 0.000000e+00 : f32
    %65 = vector.broadcast %cst_30 : f32 to vector<8x128xf32>
    %66 = arith.subf %65, %64 : vector<8x128xf32>
    %67 = math.exp %66 : vector<8x128xf32>
    %cst_31 = arith.constant 1.000000e+00 : f32
    %68 = vector.broadcast %cst_31 : f32 to vector<8x128xf32>
    %69 = arith.addf %68, %67 : vector<8x128xf32>
    %70 = tpu.reciprocal %69 {approx = true} : vector<8x128xf32> -> vector<8x128xf32>
    %71 = vector.extract_strided_slice %21 {offsets = [0, 256], sizes = [8, 128], strides = [1, 1]} : vector<8x384xf32> to vector<8x128xf32>
    %72 = vector.extract_strided_slice %23 {offsets = [0, 256], sizes = [8, 128], strides = [1, 1]} : vector<8x384xf32> to vector<8x128xf32>
    %73 = arith.addf %72, %18 : vector<8x128xf32>
    %74 = arith.mulf %61, %73 : vector<8x128xf32>
    %75 = arith.addf %71, %74 : vector<8x128xf32>
    %76 = math.tanh %75 : vector<8x128xf32>
    %cst_32 = arith.constant 1.000000e+00 : f32
    %77 = vector.broadcast %cst_32 : f32 to vector<8x128xf32>
    %78 = arith.subf %77, %70 : vector<8x128xf32>
    %79 = arith.mulf %78, %76 : vector<8x128xf32>
    %80 = arith.mulf %70, %19 : vector<8x128xf32>
    %81 = arith.addf %79, %80 : vector<8x128xf32>
    %c0_33 = arith.constant 0 : index
    %c0_34 = arith.constant 0 : index
    %82 = vector.load %arg14[%c0_33, %c0_34] : memref<64x128xf32, #tpu.memory_space<vmem>>, vector<8x128xf32>
    tpu.vector_store %arg14[%c0_33, %c0_34], %52 {strides = array<i32>} : memref<64x128xf32, #tpu.memory_space<vmem>>, vector<8x128xf32>,
    %c56_35 = arith.constant 56 : index
    %c0_36 = arith.constant 0 : index
    %83 = vector.load %arg15[%c56_35, %c0_36] : memref<64x128xf32, #tpu.memory_space<vmem>>, vector<8x128xf32>
    tpu.vector_store %arg15[%c56_35, %c0_36], %81 {strides = array<i32>} : memref<64x128xf32, #tpu.memory_space<vmem>>, vector<8x128xf32>,
    %c8 = arith.constant 8 : index
    %c0_37 = arith.constant 0 : index
    %84 = vector.load %arg13[%c8, %c0_37] : memref<64x768xf32, #tpu.memory_space<vmem>>, vector<8x384xf32>
    %c48 = arith.constant 48 : index
    %c384_38 = arith.constant 384 : index
    %85 = vector.load %arg13[%c48, %c384_38] : memref<64x768xf32, #tpu.memory_space<vmem>>, vector<8x384xf32>
    %cst_39 = arith.constant dense<0.000000e+00> : vector<8x384xf32>
    %86 = tpu.matmul %52, %8, %cst_39 {dimension_numbers = #tpu.dot_dimension_numbers<[1], [0], [0], [1], [0, 0, 1, 1], [], []>} : vector<8x128xf32>, vector<128x384xf32>, vector<8x384xf32> -> vector<8x384xf32>
    %cst_40 = arith.constant dense<0.000000e+00> : vector<8x384xf32>
    %87 = tpu.matmul %81, %10, %cst_40 {dimension_numbers = #tpu.dot_dimension_numbers<[1], [0], [0], [1], [0, 0, 1, 1], [], []>} : vector<8x128xf32>, vector<128x384xf32>, vector<8x384xf32> -> vector<8x384xf32>
    %88 = vector.extract_strided_slice %84 {offsets = [0, 0], sizes = [8, 128], strides = [1, 1]} : vector<8x384xf32> to vector<8x128xf32>
    %89 = vector.extract_strided_slice %86 {offsets = [0, 0], sizes = [8, 128], strides = [1, 1]} : vector<8x384xf32> to vector<8x128xf32>
    %90 = arith.addf %88, %89 : vector<8x128xf32>
    %cst_41 = arith.constant 0.000000e+00 : f32
    %91 = vector.broadcast %cst_41 : f32 to vector<8x128xf32>
    %92 = arith.subf %91, %90 : vector<8x128xf32>
    %93 = math.exp %92 : vector<8x128xf32>
    %cst_42 = arith.constant 1.000000e+00 : f32
    %94 = vector.broadcast %cst_42 : f32 to vector<8x128xf32>
    %95 = arith.addf %94, %93 : vector<8x128xf32>
    %96 = tpu.reciprocal %95 {approx = true} : vector<8x128xf32> -> vector<8x128xf32>
    %97 = vector.extract_strided_slice %84 {offsets = [0, 128], sizes = [8, 128], strides = [1, 1]} : vector<8x384xf32> to vector<8x128xf32>
    %98 = vector.extract_strided_slice %86 {offsets = [0, 128], sizes = [8, 128], strides = [1, 1]} : vector<8x384xf32> to vector<8x128xf32>
    %99 = arith.addf %97, %98 : vector<8x128xf32>
    %cst_43 = arith.constant 0.000000e+00 : f32
    %100 = vector.broadcast %cst_43 : f32 to vector<8x128xf32>
    %101 = arith.subf %100, %99 : vector<8x128xf32>
    %102 = math.exp %101 : vector<8x128xf32>
    %cst_44 = arith.constant 1.000000e+00 : f32
    %103 = vector.broadcast %cst_44 : f32 to vector<8x128xf32>
    %104 = arith.addf %103, %102 : vector<8x128xf32>
    %105 = tpu.reciprocal %104 {approx = true} : vector<8x128xf32> -> vector<8x128xf32>
    %106 = vector.extract_strided_slice %84 {offsets = [0, 256], sizes = [8, 128], strides = [1, 1]} : vector<8x384xf32> to vector<8x128xf32>
    %107 = vector.extract_strided_slice %86 {offsets = [0, 256], sizes = [8, 128], strides = [1, 1]} : vector<8x384xf32> to vector<8x128xf32>
    %108 = arith.addf %107, %14 : vector<8x128xf32>
    %109 = arith.mulf %96, %108 : vector<8x128xf32>
    %110 = arith.addf %106, %109 : vector<8x128xf32>
    %111 = math.tanh %110 : vector<8x128xf32>
    %cst_45 = arith.constant 1.000000e+00 : f32
    %112 = vector.broadcast %cst_45 : f32 to vector<8x128xf32>
    %113 = arith.subf %112, %105 : vector<8x128xf32>
    %114 = arith.mulf %113, %111 : vector<8x128xf32>
    %115 = arith.mulf %105, %52 : vector<8x128xf32>
    %116 = arith.addf %114, %115 : vector<8x128xf32>
    %117 = vector.extract_strided_slice %85 {offsets = [0, 0], sizes = [8, 128], strides = [1, 1]} : vector<8x384xf32> to vector<8x128xf32>
    %118 = vector.extract_strided_slice %87 {offsets = [0, 0], sizes = [8, 128], strides = [1, 1]} : vector<8x384xf32> to vector<8x128xf32>
    %119 = arith.addf %117, %118 : vector<8x128xf32>
    %cst_46 = arith.constant 0.000000e+00 : f32
    %120 = vector.broadcast %cst_46 : f32 to vector<8x128xf32>
    %121 = arith.subf %120, %119 : vector<8x128xf32>
    %122 = math.exp %121 : vector<8x128xf32>
    %cst_47 = arith.constant 1.000000e+00 : f32
    %123 = vector.broadcast %cst_47 : f32 to vector<8x128xf32>
    %124 = arith.addf %123, %122 : vector<8x128xf32>
    %125 = tpu.reciprocal %124 {approx = true} : vector<8x128xf32> -> vector<8x128xf32>
    %126 = vector.extract_strided_slice %85 {offsets = [0, 128], sizes = [8, 128], strides = [1, 1]} : vector<8x384xf32> to vector<8x128xf32>
    %127 = vector.extract_strided_slice %87 {offsets = [0, 128], sizes = [8, 128], strides = [1, 1]} : vector<8x384xf32> to vector<8x128xf32>
    %128 = arith.addf %126, %127 : vector<8x128xf32>
    %cst_48 = arith.constant 0.000000e+00 : f32
    %129 = vector.broadcast %cst_48 : f32 to vector<8x128xf32>
    %130 = arith.subf %129, %128 : vector<8x128xf32>
    %131 = math.exp %130 : vector<8x128xf32>
    %cst_49 = arith.constant 1.000000e+00 : f32
    %132 = vector.broadcast %cst_49 : f32 to vector<8x128xf32>
    %133 = arith.addf %132, %131 : vector<8x128xf32>
    %134 = tpu.reciprocal %133 {approx = true} : vector<8x128xf32> -> vector<8x128xf32>
    %135 = vector.extract_strided_slice %85 {offsets = [0, 256], sizes = [8, 128], strides = [1, 1]} : vector<8x384xf32> to vector<8x128xf32>
    %136 = vector.extract_strided_slice %87 {offsets = [0, 256], sizes = [8, 128], strides = [1, 1]} : vector<8x384xf32> to vector<8x128xf32>
    %137 = arith.addf %136, %18 : vector<8x128xf32>
    %138 = arith.mulf %125, %137 : vector<8x128xf32>
    %139 = arith.addf %135, %138 : vector<8x128xf32>
    %140 = math.tanh %139 : vector<8x128xf32>
    %cst_50 = arith.constant 1.000000e+00 : f32
    %141 = vector.broadcast %cst_50 : f32 to vector<8x128xf32>
    %142 = arith.subf %141, %134 : vector<8x128xf32>
    %143 = arith.mulf %142, %140 : vector<8x128xf32>
    %144 = arith.mulf %134, %81 : vector<8x128xf32>
    %145 = arith.addf %143, %144 : vector<8x128xf32>
    %c8_51 = arith.constant 8 : index
    %c0_52 = arith.constant 0 : index
    %146 = vector.load %arg14[%c8_51, %c0_52] : memref<64x128xf32, #tpu.memory_space<vmem>>, vector<8x128xf32>
    tpu.vector_store %arg14[%c8_51, %c0_52], %116 {strides = array<i32>} : memref<64x128xf32, #tpu.memory_space<vmem>>, vector<8x128xf32>,
    %c48_53 = arith.constant 48 : index
    %c0_54 = arith.constant 0 : index
    %147 = vector.load %arg15[%c48_53, %c0_54] : memref<64x128xf32, #tpu.memory_space<vmem>>, vector<8x128xf32>
    tpu.vector_store %arg15[%c48_53, %c0_54], %145 {strides = array<i32>} : memref<64x128xf32, #tpu.memory_space<vmem>>, vector<8x128xf32>,
    %c16 = arith.constant 16 : index
    %c0_55 = arith.constant 0 : index
    %148 = vector.load %arg13[%c16, %c0_55] : memref<64x768xf32, #tpu.memory_space<vmem>>, vector<8x384xf32>
    %c40 = arith.constant 40 : index
    %c384_56 = arith.constant 384 : index
    %149 = vector.load %arg13[%c40, %c384_56] : memref<64x768xf32, #tpu.memory_space<vmem>>, vector<8x384xf32>
    %cst_57 = arith.constant dense<0.000000e+00> : vector<8x384xf32>
    %150 = tpu.matmul %116, %8, %cst_57 {dimension_numbers = #tpu.dot_dimension_numbers<[1], [0], [0], [1], [0, 0, 1, 1], [], []>} : vector<8x128xf32>, vector<128x384xf32>, vector<8x384xf32> -> vector<8x384xf32>
    %cst_58 = arith.constant dense<0.000000e+00> : vector<8x384xf32>
    %151 = tpu.matmul %145, %10, %cst_58 {dimension_numbers = #tpu.dot_dimension_numbers<[1], [0], [0], [1], [0, 0, 1, 1], [], []>} : vector<8x128xf32>, vector<128x384xf32>, vector<8x384xf32> -> vector<8x384xf32>
    %152 = vector.extract_strided_slice %148 {offsets = [0, 0], sizes = [8, 128], strides = [1, 1]} : vector<8x384xf32> to vector<8x128xf32>
    %153 = vector.extract_strided_slice %150 {offsets = [0, 0], sizes = [8, 128], strides = [1, 1]} : vector<8x384xf32> to vector<8x128xf32>
    %154 = arith.addf %152, %153 : vector<8x128xf32>
    %cst_59 = arith.constant 0.000000e+00 : f32
    %155 = vector.broadcast %cst_59 : f32 to vector<8x128xf32>
    %156 = arith.subf %155, %154 : vector<8x128xf32>
    %157 = math.exp %156 : vector<8x128xf32>
    %cst_60 = arith.constant 1.000000e+00 : f32
    %158 = vector.broadcast %cst_60 : f32 to vector<8x128xf32>
    %159 = arith.addf %158, %157 : vector<8x128xf32>
    %160 = tpu.reciprocal %159 {approx = true} : vector<8x128xf32> -> vector<8x128xf32>
    %161 = vector.extract_strided_slice %148 {offsets = [0, 128], sizes = [8, 128], strides = [1, 1]} : vector<8x384xf32> to vector<8x128xf32>
    %162 = vector.extract_strided_slice %150 {offsets = [0, 128], sizes = [8, 128], strides = [1, 1]} : vector<8x384xf32> to vector<8x128xf32>
    %163 = arith.addf %161, %162 : vector<8x128xf32>
    %cst_61 = arith.constant 0.000000e+00 : f32
    %164 = vector.broadcast %cst_61 : f32 to vector<8x128xf32>
    %165 = arith.subf %164, %163 : vector<8x128xf32>
    %166 = math.exp %165 : vector<8x128xf32>
    %cst_62 = arith.constant 1.000000e+00 : f32
    %167 = vector.broadcast %cst_62 : f32 to vector<8x128xf32>
    %168 = arith.addf %167, %166 : vector<8x128xf32>
    %169 = tpu.reciprocal %168 {approx = true} : vector<8x128xf32> -> vector<8x128xf32>
    %170 = vector.extract_strided_slice %148 {offsets = [0, 256], sizes = [8, 128], strides = [1, 1]} : vector<8x384xf32> to vector<8x128xf32>
    %171 = vector.extract_strided_slice %150 {offsets = [0, 256], sizes = [8, 128], strides = [1, 1]} : vector<8x384xf32> to vector<8x128xf32>
    %172 = arith.addf %171, %14 : vector<8x128xf32>
    %173 = arith.mulf %160, %172 : vector<8x128xf32>
    %174 = arith.addf %170, %173 : vector<8x128xf32>
    %175 = math.tanh %174 : vector<8x128xf32>
    %cst_63 = arith.constant 1.000000e+00 : f32
    %176 = vector.broadcast %cst_63 : f32 to vector<8x128xf32>
    %177 = arith.subf %176, %169 : vector<8x128xf32>
    %178 = arith.mulf %177, %175 : vector<8x128xf32>
    %179 = arith.mulf %169, %116 : vector<8x128xf32>
    %180 = arith.addf %178, %179 : vector<8x128xf32>
    %181 = vector.extract_strided_slice %149 {offsets = [0, 0], sizes = [8, 128], strides = [1, 1]} : vector<8x384xf32> to vector<8x128xf32>
    %182 = vector.extract_strided_slice %151 {offsets = [0, 0], sizes = [8, 128], strides = [1, 1]} : vector<8x384xf32> to vector<8x128xf32>
    %183 = arith.addf %181, %182 : vector<8x128xf32>
    %cst_64 = arith.constant 0.000000e+00 : f32
    %184 = vector.broadcast %cst_64 : f32 to vector<8x128xf32>
    %185 = arith.subf %184, %183 : vector<8x128xf32>
    %186 = math.exp %185 : vector<8x128xf32>
    %cst_65 = arith.constant 1.000000e+00 : f32
    %187 = vector.broadcast %cst_65 : f32 to vector<8x128xf32>
    %188 = arith.addf %187, %186 : vector<8x128xf32>
    %189 = tpu.reciprocal %188 {approx = true} : vector<8x128xf32> -> vector<8x128xf32>
    %190 = vector.extract_strided_slice %149 {offsets = [0, 128], sizes = [8, 128], strides = [1, 1]} : vector<8x384xf32> to vector<8x128xf32>
    %191 = vector.extract_strided_slice %151 {offsets = [0, 128], sizes = [8, 128], strides = [1, 1]} : vector<8x384xf32> to vector<8x128xf32>
    %192 = arith.addf %190, %191 : vector<8x128xf32>
    %cst_66 = arith.constant 0.000000e+00 : f32
    %193 = vector.broadcast %cst_66 : f32 to vector<8x128xf32>
    %194 = arith.subf %193, %192 : vector<8x128xf32>
    %195 = math.exp %194 : vector<8x128xf32>
    %cst_67 = arith.constant 1.000000e+00 : f32
    %196 = vector.broadcast %cst_67 : f32 to vector<8x128xf32>
    %197 = arith.addf %196, %195 : vector<8x128xf32>
    %198 = tpu.reciprocal %197 {approx = true} : vector<8x128xf32> -> vector<8x128xf32>
    %199 = vector.extract_strided_slice %149 {offsets = [0, 256], sizes = [8, 128], strides = [1, 1]} : vector<8x384xf32> to vector<8x128xf32>
    %200 = vector.extract_strided_slice %151 {offsets = [0, 256], sizes = [8, 128], strides = [1, 1]} : vector<8x384xf32> to vector<8x128xf32>
    %201 = arith.addf %200, %18 : vector<8x128xf32>
    %202 = arith.mulf %189, %201 : vector<8x128xf32>
    %203 = arith.addf %199, %202 : vector<8x128xf32>
    %204 = math.tanh %203 : vector<8x128xf32>
    %cst_68 = arith.constant 1.000000e+00 : f32
    %205 = vector.broadcast %cst_68 : f32 to vector<8x128xf32>
    %206 = arith.subf %205, %198 : vector<8x128xf32>
    %207 = arith.mulf %206, %204 : vector<8x128xf32>
    %208 = arith.mulf %198, %145 : vector<8x128xf32>
    %209 = arith.addf %207, %208 : vector<8x128xf32>
    %c16_69 = arith.constant 16 : index
    %c0_70 = arith.constant 0 : index
    %210 = vector.load %arg14[%c16_69, %c0_70] : memref<64x128xf32, #tpu.memory_space<vmem>>, vector<8x128xf32>
    tpu.vector_store %arg14[%c16_69, %c0_70], %180 {strides = array<i32>} : memref<64x128xf32, #tpu.memory_space<vmem>>, vector<8x128xf32>,
    %c40_71 = arith.constant 40 : index
    %c0_72 = arith.constant 0 : index
    %211 = vector.load %arg15[%c40_71, %c0_72] : memref<64x128xf32, #tpu.memory_space<vmem>>, vector<8x128xf32>
    tpu.vector_store %arg15[%c40_71, %c0_72], %209 {strides = array<i32>} : memref<64x128xf32, #tpu.memory_space<vmem>>, vector<8x128xf32>,
    %c24 = arith.constant 24 : index
    %c0_73 = arith.constant 0 : index
    %212 = vector.load %arg13[%c24, %c0_73] : memref<64x768xf32, #tpu.memory_space<vmem>>, vector<8x384xf32>
    %c32 = arith.constant 32 : index
    %c384_74 = arith.constant 384 : index
    %213 = vector.load %arg13[%c32, %c384_74] : memref<64x768xf32, #tpu.memory_space<vmem>>, vector<8x384xf32>
    %cst_75 = arith.constant dense<0.000000e+00> : vector<8x384xf32>
    %214 = tpu.matmul %180, %8, %cst_75 {dimension_numbers = #tpu.dot_dimension_numbers<[1], [0], [0], [1], [0, 0, 1, 1], [], []>} : vector<8x128xf32>, vector<128x384xf32>, vector<8x384xf32> -> vector<8x384xf32>
    %cst_76 = arith.constant dense<0.000000e+00> : vector<8x384xf32>
    %215 = tpu.matmul %209, %10, %cst_76 {dimension_numbers = #tpu.dot_dimension_numbers<[1], [0], [0], [1], [0, 0, 1, 1], [], []>} : vector<8x128xf32>, vector<128x384xf32>, vector<8x384xf32> -> vector<8x384xf32>
    %216 = vector.extract_strided_slice %212 {offsets = [0, 0], sizes = [8, 128], strides = [1, 1]} : vector<8x384xf32> to vector<8x128xf32>
    %217 = vector.extract_strided_slice %214 {offsets = [0, 0], sizes = [8, 128], strides = [1, 1]} : vector<8x384xf32> to vector<8x128xf32>
    %218 = arith.addf %216, %217 : vector<8x128xf32>
    %cst_77 = arith.constant 0.000000e+00 : f32
    %219 = vector.broadcast %cst_77 : f32 to vector<8x128xf32>
    %220 = arith.subf %219, %218 : vector<8x128xf32>
    %221 = math.exp %220 : vector<8x128xf32>
    %cst_78 = arith.constant 1.000000e+00 : f32
    %222 = vector.broadcast %cst_78 : f32 to vector<8x128xf32>
    %223 = arith.addf %222, %221 : vector<8x128xf32>
    %224 = tpu.reciprocal %223 {approx = true} : vector<8x128xf32> -> vector<8x128xf32>
    %225 = vector.extract_strided_slice %212 {offsets = [0, 128], sizes = [8, 128], strides = [1, 1]} : vector<8x384xf32> to vector<8x128xf32>
    %226 = vector.extract_strided_slice %214 {offsets = [0, 128], sizes = [8, 128], strides = [1, 1]} : vector<8x384xf32> to vector<8x128xf32>
    %227 = arith.addf %225, %226 : vector<8x128xf32>
    %cst_79 = arith.constant 0.000000e+00 : f32
    %228 = vector.broadcast %cst_79 : f32 to vector<8x128xf32>
    %229 = arith.subf %228, %227 : vector<8x128xf32>
    %230 = math.exp %229 : vector<8x128xf32>
    %cst_80 = arith.constant 1.000000e+00 : f32
    %231 = vector.broadcast %cst_80 : f32 to vector<8x128xf32>
    %232 = arith.addf %231, %230 : vector<8x128xf32>
    %233 = tpu.reciprocal %232 {approx = true} : vector<8x128xf32> -> vector<8x128xf32>
    %234 = vector.extract_strided_slice %212 {offsets = [0, 256], sizes = [8, 128], strides = [1, 1]} : vector<8x384xf32> to vector<8x128xf32>
    %235 = vector.extract_strided_slice %214 {offsets = [0, 256], sizes = [8, 128], strides = [1, 1]} : vector<8x384xf32> to vector<8x128xf32>
    %236 = arith.addf %235, %14 : vector<8x128xf32>
    %237 = arith.mulf %224, %236 : vector<8x128xf32>
    %238 = arith.addf %234, %237 : vector<8x128xf32>
    %239 = math.tanh %238 : vector<8x128xf32>
    %cst_81 = arith.constant 1.000000e+00 : f32
    %240 = vector.broadcast %cst_81 : f32 to vector<8x128xf32>
    %241 = arith.subf %240, %233 : vector<8x128xf32>
    %242 = arith.mulf %241, %239 : vector<8x128xf32>
    %243 = arith.mulf %233, %180 : vector<8x128xf32>
    %244 = arith.addf %242, %243 : vector<8x128xf32>
    %245 = vector.extract_strided_slice %213 {offsets = [0, 0], sizes = [8, 128], strides = [1, 1]} : vector<8x384xf32> to vector<8x128xf32>
    %246 = vector.extract_strided_slice %215 {offsets = [0, 0], sizes = [8, 128], strides = [1, 1]} : vector<8x384xf32> to vector<8x128xf32>
    %247 = arith.addf %245, %246 : vector<8x128xf32>
    %cst_82 = arith.constant 0.000000e+00 : f32
    %248 = vector.broadcast %cst_82 : f32 to vector<8x128xf32>
    %249 = arith.subf %248, %247 : vector<8x128xf32>
    %250 = math.exp %249 : vector<8x128xf32>
    %cst_83 = arith.constant 1.000000e+00 : f32
    %251 = vector.broadcast %cst_83 : f32 to vector<8x128xf32>
    %252 = arith.addf %251, %250 : vector<8x128xf32>
    %253 = tpu.reciprocal %252 {approx = true} : vector<8x128xf32> -> vector<8x128xf32>
    %254 = vector.extract_strided_slice %213 {offsets = [0, 128], sizes = [8, 128], strides = [1, 1]} : vector<8x384xf32> to vector<8x128xf32>
    %255 = vector.extract_strided_slice %215 {offsets = [0, 128], sizes = [8, 128], strides = [1, 1]} : vector<8x384xf32> to vector<8x128xf32>
    %256 = arith.addf %254, %255 : vector<8x128xf32>
    %cst_84 = arith.constant 0.000000e+00 : f32
    %257 = vector.broadcast %cst_84 : f32 to vector<8x128xf32>
    %258 = arith.subf %257, %256 : vector<8x128xf32>
    %259 = math.exp %258 : vector<8x128xf32>
    %cst_85 = arith.constant 1.000000e+00 : f32
    %260 = vector.broadcast %cst_85 : f32 to vector<8x128xf32>
    %261 = arith.addf %260, %259 : vector<8x128xf32>
    %262 = tpu.reciprocal %261 {approx = true} : vector<8x128xf32> -> vector<8x128xf32>
    %263 = vector.extract_strided_slice %213 {offsets = [0, 256], sizes = [8, 128], strides = [1, 1]} : vector<8x384xf32> to vector<8x128xf32>
    %264 = vector.extract_strided_slice %215 {offsets = [0, 256], sizes = [8, 128], strides = [1, 1]} : vector<8x384xf32> to vector<8x128xf32>
    %265 = arith.addf %264, %18 : vector<8x128xf32>
    %266 = arith.mulf %253, %265 : vector<8x128xf32>
    %267 = arith.addf %263, %266 : vector<8x128xf32>
    %268 = math.tanh %267 : vector<8x128xf32>
    %cst_86 = arith.constant 1.000000e+00 : f32
    %269 = vector.broadcast %cst_86 : f32 to vector<8x128xf32>
    %270 = arith.subf %269, %262 : vector<8x128xf32>
    %271 = arith.mulf %270, %268 : vector<8x128xf32>
    %272 = arith.mulf %262, %209 : vector<8x128xf32>
    %273 = arith.addf %271, %272 : vector<8x128xf32>
    %c24_87 = arith.constant 24 : index
    %c0_88 = arith.constant 0 : index
    %274 = vector.load %arg14[%c24_87, %c0_88] : memref<64x128xf32, #tpu.memory_space<vmem>>, vector<8x128xf32>
    tpu.vector_store %arg14[%c24_87, %c0_88], %244 {strides = array<i32>} : memref<64x128xf32, #tpu.memory_space<vmem>>, vector<8x128xf32>,
    %c32_89 = arith.constant 32 : index
    %c0_90 = arith.constant 0 : index
    %275 = vector.load %arg15[%c32_89, %c0_90] : memref<64x128xf32, #tpu.memory_space<vmem>>, vector<8x128xf32>
    tpu.vector_store %arg15[%c32_89, %c0_90], %273 {strides = array<i32>} : memref<64x128xf32, #tpu.memory_space<vmem>>, vector<8x128xf32>,
    %c32_91 = arith.constant 32 : index
    %c0_92 = arith.constant 0 : index
    %276 = vector.load %arg13[%c32_91, %c0_92] : memref<64x768xf32, #tpu.memory_space<vmem>>, vector<8x384xf32>
    %c24_93 = arith.constant 24 : index
    %c384_94 = arith.constant 384 : index
    %277 = vector.load %arg13[%c24_93, %c384_94] : memref<64x768xf32, #tpu.memory_space<vmem>>, vector<8x384xf32>
    %cst_95 = arith.constant dense<0.000000e+00> : vector<8x384xf32>
    %278 = tpu.matmul %244, %8, %cst_95 {dimension_numbers = #tpu.dot_dimension_numbers<[1], [0], [0], [1], [0, 0, 1, 1], [], []>} : vector<8x128xf32>, vector<128x384xf32>, vector<8x384xf32> -> vector<8x384xf32>
    %cst_96 = arith.constant dense<0.000000e+00> : vector<8x384xf32>
    %279 = tpu.matmul %273, %10, %cst_96 {dimension_numbers = #tpu.dot_dimension_numbers<[1], [0], [0], [1], [0, 0, 1, 1], [], []>} : vector<8x128xf32>, vector<128x384xf32>, vector<8x384xf32> -> vector<8x384xf32>
    %280 = vector.extract_strided_slice %276 {offsets = [0, 0], sizes = [8, 128], strides = [1, 1]} : vector<8x384xf32> to vector<8x128xf32>
    %281 = vector.extract_strided_slice %278 {offsets = [0, 0], sizes = [8, 128], strides = [1, 1]} : vector<8x384xf32> to vector<8x128xf32>
    %282 = arith.addf %280, %281 : vector<8x128xf32>
    %cst_97 = arith.constant 0.000000e+00 : f32
    %283 = vector.broadcast %cst_97 : f32 to vector<8x128xf32>
    %284 = arith.subf %283, %282 : vector<8x128xf32>
    %285 = math.exp %284 : vector<8x128xf32>
    %cst_98 = arith.constant 1.000000e+00 : f32
    %286 = vector.broadcast %cst_98 : f32 to vector<8x128xf32>
    %287 = arith.addf %286, %285 : vector<8x128xf32>
    %288 = tpu.reciprocal %287 {approx = true} : vector<8x128xf32> -> vector<8x128xf32>
    %289 = vector.extract_strided_slice %276 {offsets = [0, 128], sizes = [8, 128], strides = [1, 1]} : vector<8x384xf32> to vector<8x128xf32>
    %290 = vector.extract_strided_slice %278 {offsets = [0, 128], sizes = [8, 128], strides = [1, 1]} : vector<8x384xf32> to vector<8x128xf32>
    %291 = arith.addf %289, %290 : vector<8x128xf32>
    %cst_99 = arith.constant 0.000000e+00 : f32
    %292 = vector.broadcast %cst_99 : f32 to vector<8x128xf32>
    %293 = arith.subf %292, %291 : vector<8x128xf32>
    %294 = math.exp %293 : vector<8x128xf32>
    %cst_100 = arith.constant 1.000000e+00 : f32
    %295 = vector.broadcast %cst_100 : f32 to vector<8x128xf32>
    %296 = arith.addf %295, %294 : vector<8x128xf32>
    %297 = tpu.reciprocal %296 {approx = true} : vector<8x128xf32> -> vector<8x128xf32>
    %298 = vector.extract_strided_slice %276 {offsets = [0, 256], sizes = [8, 128], strides = [1, 1]} : vector<8x384xf32> to vector<8x128xf32>
    %299 = vector.extract_strided_slice %278 {offsets = [0, 256], sizes = [8, 128], strides = [1, 1]} : vector<8x384xf32> to vector<8x128xf32>
    %300 = arith.addf %299, %14 : vector<8x128xf32>
    %301 = arith.mulf %288, %300 : vector<8x128xf32>
    %302 = arith.addf %298, %301 : vector<8x128xf32>
    %303 = math.tanh %302 : vector<8x128xf32>
    %cst_101 = arith.constant 1.000000e+00 : f32
    %304 = vector.broadcast %cst_101 : f32 to vector<8x128xf32>
    %305 = arith.subf %304, %297 : vector<8x128xf32>
    %306 = arith.mulf %305, %303 : vector<8x128xf32>
    %307 = arith.mulf %297, %244 : vector<8x128xf32>
    %308 = arith.addf %306, %307 : vector<8x128xf32>
    %309 = vector.extract_strided_slice %277 {offsets = [0, 0], sizes = [8, 128], strides = [1, 1]} : vector<8x384xf32> to vector<8x128xf32>
    %310 = vector.extract_strided_slice %279 {offsets = [0, 0], sizes = [8, 128], strides = [1, 1]} : vector<8x384xf32> to vector<8x128xf32>
    %311 = arith.addf %309, %310 : vector<8x128xf32>
    %cst_102 = arith.constant 0.000000e+00 : f32
    %312 = vector.broadcast %cst_102 : f32 to vector<8x128xf32>
    %313 = arith.subf %312, %311 : vector<8x128xf32>
    %314 = math.exp %313 : vector<8x128xf32>
    %cst_103 = arith.constant 1.000000e+00 : f32
    %315 = vector.broadcast %cst_103 : f32 to vector<8x128xf32>
    %316 = arith.addf %315, %314 : vector<8x128xf32>
    %317 = tpu.reciprocal %316 {approx = true} : vector<8x128xf32> -> vector<8x128xf32>
    %318 = vector.extract_strided_slice %277 {offsets = [0, 128], sizes = [8, 128], strides = [1, 1]} : vector<8x384xf32> to vector<8x128xf32>
    %319 = vector.extract_strided_slice %279 {offsets = [0, 128], sizes = [8, 128], strides = [1, 1]} : vector<8x384xf32> to vector<8x128xf32>
    %320 = arith.addf %318, %319 : vector<8x128xf32>
    %cst_104 = arith.constant 0.000000e+00 : f32
    %321 = vector.broadcast %cst_104 : f32 to vector<8x128xf32>
    %322 = arith.subf %321, %320 : vector<8x128xf32>
    %323 = math.exp %322 : vector<8x128xf32>
    %cst_105 = arith.constant 1.000000e+00 : f32
    %324 = vector.broadcast %cst_105 : f32 to vector<8x128xf32>
    %325 = arith.addf %324, %323 : vector<8x128xf32>
    %326 = tpu.reciprocal %325 {approx = true} : vector<8x128xf32> -> vector<8x128xf32>
    %327 = vector.extract_strided_slice %277 {offsets = [0, 256], sizes = [8, 128], strides = [1, 1]} : vector<8x384xf32> to vector<8x128xf32>
    %328 = vector.extract_strided_slice %279 {offsets = [0, 256], sizes = [8, 128], strides = [1, 1]} : vector<8x384xf32> to vector<8x128xf32>
    %329 = arith.addf %328, %18 : vector<8x128xf32>
    %330 = arith.mulf %317, %329 : vector<8x128xf32>
    %331 = arith.addf %327, %330 : vector<8x128xf32>
    %332 = math.tanh %331 : vector<8x128xf32>
    %cst_106 = arith.constant 1.000000e+00 : f32
    %333 = vector.broadcast %cst_106 : f32 to vector<8x128xf32>
    %334 = arith.subf %333, %326 : vector<8x128xf32>
    %335 = arith.mulf %334, %332 : vector<8x128xf32>
    %336 = arith.mulf %326, %273 : vector<8x128xf32>
    %337 = arith.addf %335, %336 : vector<8x128xf32>
    %c32_107 = arith.constant 32 : index
    %c0_108 = arith.constant 0 : index
    %338 = vector.load %arg14[%c32_107, %c0_108] : memref<64x128xf32, #tpu.memory_space<vmem>>, vector<8x128xf32>
    tpu.vector_store %arg14[%c32_107, %c0_108], %308 {strides = array<i32>} : memref<64x128xf32, #tpu.memory_space<vmem>>, vector<8x128xf32>,
    %c24_109 = arith.constant 24 : index
    %c0_110 = arith.constant 0 : index
    %339 = vector.load %arg15[%c24_109, %c0_110] : memref<64x128xf32, #tpu.memory_space<vmem>>, vector<8x128xf32>
    tpu.vector_store %arg15[%c24_109, %c0_110], %337 {strides = array<i32>} : memref<64x128xf32, #tpu.memory_space<vmem>>, vector<8x128xf32>,
    %c40_111 = arith.constant 40 : index
    %c0_112 = arith.constant 0 : index
    %340 = vector.load %arg13[%c40_111, %c0_112] : memref<64x768xf32, #tpu.memory_space<vmem>>, vector<8x384xf32>
    %c16_113 = arith.constant 16 : index
    %c384_114 = arith.constant 384 : index
    %341 = vector.load %arg13[%c16_113, %c384_114] : memref<64x768xf32, #tpu.memory_space<vmem>>, vector<8x384xf32>
    %cst_115 = arith.constant dense<0.000000e+00> : vector<8x384xf32>
    %342 = tpu.matmul %308, %8, %cst_115 {dimension_numbers = #tpu.dot_dimension_numbers<[1], [0], [0], [1], [0, 0, 1, 1], [], []>} : vector<8x128xf32>, vector<128x384xf32>, vector<8x384xf32> -> vector<8x384xf32>
    %cst_116 = arith.constant dense<0.000000e+00> : vector<8x384xf32>
    %343 = tpu.matmul %337, %10, %cst_116 {dimension_numbers = #tpu.dot_dimension_numbers<[1], [0], [0], [1], [0, 0, 1, 1], [], []>} : vector<8x128xf32>, vector<128x384xf32>, vector<8x384xf32> -> vector<8x384xf32>
    %344 = vector.extract_strided_slice %340 {offsets = [0, 0], sizes = [8, 128], strides = [1, 1]} : vector<8x384xf32> to vector<8x128xf32>
    %345 = vector.extract_strided_slice %342 {offsets = [0, 0], sizes = [8, 128], strides = [1, 1]} : vector<8x384xf32> to vector<8x128xf32>
    %346 = arith.addf %344, %345 : vector<8x128xf32>
    %cst_117 = arith.constant 0.000000e+00 : f32
    %347 = vector.broadcast %cst_117 : f32 to vector<8x128xf32>
    %348 = arith.subf %347, %346 : vector<8x128xf32>
    %349 = math.exp %348 : vector<8x128xf32>
    %cst_118 = arith.constant 1.000000e+00 : f32
    %350 = vector.broadcast %cst_118 : f32 to vector<8x128xf32>
    %351 = arith.addf %350, %349 : vector<8x128xf32>
    %352 = tpu.reciprocal %351 {approx = true} : vector<8x128xf32> -> vector<8x128xf32>
    %353 = vector.extract_strided_slice %340 {offsets = [0, 128], sizes = [8, 128], strides = [1, 1]} : vector<8x384xf32> to vector<8x128xf32>
    %354 = vector.extract_strided_slice %342 {offsets = [0, 128], sizes = [8, 128], strides = [1, 1]} : vector<8x384xf32> to vector<8x128xf32>
    %355 = arith.addf %353, %354 : vector<8x128xf32>
    %cst_119 = arith.constant 0.000000e+00 : f32
    %356 = vector.broadcast %cst_119 : f32 to vector<8x128xf32>
    %357 = arith.subf %356, %355 : vector<8x128xf32>
    %358 = math.exp %357 : vector<8x128xf32>
    %cst_120 = arith.constant 1.000000e+00 : f32
    %359 = vector.broadcast %cst_120 : f32 to vector<8x128xf32>
    %360 = arith.addf %359, %358 : vector<8x128xf32>
    %361 = tpu.reciprocal %360 {approx = true} : vector<8x128xf32> -> vector<8x128xf32>
    %362 = vector.extract_strided_slice %340 {offsets = [0, 256], sizes = [8, 128], strides = [1, 1]} : vector<8x384xf32> to vector<8x128xf32>
    %363 = vector.extract_strided_slice %342 {offsets = [0, 256], sizes = [8, 128], strides = [1, 1]} : vector<8x384xf32> to vector<8x128xf32>
    %364 = arith.addf %363, %14 : vector<8x128xf32>
    %365 = arith.mulf %352, %364 : vector<8x128xf32>
    %366 = arith.addf %362, %365 : vector<8x128xf32>
    %367 = math.tanh %366 : vector<8x128xf32>
    %cst_121 = arith.constant 1.000000e+00 : f32
    %368 = vector.broadcast %cst_121 : f32 to vector<8x128xf32>
    %369 = arith.subf %368, %361 : vector<8x128xf32>
    %370 = arith.mulf %369, %367 : vector<8x128xf32>
    %371 = arith.mulf %361, %308 : vector<8x128xf32>
    %372 = arith.addf %370, %371 : vector<8x128xf32>
    %373 = vector.extract_strided_slice %341 {offsets = [0, 0], sizes = [8, 128], strides = [1, 1]} : vector<8x384xf32> to vector<8x128xf32>
    %374 = vector.extract_strided_slice %343 {offsets = [0, 0], sizes = [8, 128], strides = [1, 1]} : vector<8x384xf32> to vector<8x128xf32>
    %375 = arith.addf %373, %374 : vector<8x128xf32>
    %cst_122 = arith.constant 0.000000e+00 : f32
    %376 = vector.broadcast %cst_122 : f32 to vector<8x128xf32>
    %377 = arith.subf %376, %375 : vector<8x128xf32>
    %378 = math.exp %377 : vector<8x128xf32>
    %cst_123 = arith.constant 1.000000e+00 : f32
    %379 = vector.broadcast %cst_123 : f32 to vector<8x128xf32>
    %380 = arith.addf %379, %378 : vector<8x128xf32>
    %381 = tpu.reciprocal %380 {approx = true} : vector<8x128xf32> -> vector<8x128xf32>
    %382 = vector.extract_strided_slice %341 {offsets = [0, 128], sizes = [8, 128], strides = [1, 1]} : vector<8x384xf32> to vector<8x128xf32>
    %383 = vector.extract_strided_slice %343 {offsets = [0, 128], sizes = [8, 128], strides = [1, 1]} : vector<8x384xf32> to vector<8x128xf32>
    %384 = arith.addf %382, %383 : vector<8x128xf32>
    %cst_124 = arith.constant 0.000000e+00 : f32
    %385 = vector.broadcast %cst_124 : f32 to vector<8x128xf32>
    %386 = arith.subf %385, %384 : vector<8x128xf32>
    %387 = math.exp %386 : vector<8x128xf32>
    %cst_125 = arith.constant 1.000000e+00 : f32
    %388 = vector.broadcast %cst_125 : f32 to vector<8x128xf32>
    %389 = arith.addf %388, %387 : vector<8x128xf32>
    %390 = tpu.reciprocal %389 {approx = true} : vector<8x128xf32> -> vector<8x128xf32>
    %391 = vector.extract_strided_slice %341 {offsets = [0, 256], sizes = [8, 128], strides = [1, 1]} : vector<8x384xf32> to vector<8x128xf32>
    %392 = vector.extract_strided_slice %343 {offsets = [0, 256], sizes = [8, 128], strides = [1, 1]} : vector<8x384xf32> to vector<8x128xf32>
    %393 = arith.addf %392, %18 : vector<8x128xf32>
    %394 = arith.mulf %381, %393 : vector<8x128xf32>
    %395 = arith.addf %391, %394 : vector<8x128xf32>
    %396 = math.tanh %395 : vector<8x128xf32>
    %cst_126 = arith.constant 1.000000e+00 : f32
    %397 = vector.broadcast %cst_126 : f32 to vector<8x128xf32>
    %398 = arith.subf %397, %390 : vector<8x128xf32>
    %399 = arith.mulf %398, %396 : vector<8x128xf32>
    %400 = arith.mulf %390, %337 : vector<8x128xf32>
    %401 = arith.addf %399, %400 : vector<8x128xf32>
    %c40_127 = arith.constant 40 : index
    %c0_128 = arith.constant 0 : index
    %402 = vector.load %arg14[%c40_127, %c0_128] : memref<64x128xf32, #tpu.memory_space<vmem>>, vector<8x128xf32>
    tpu.vector_store %arg14[%c40_127, %c0_128], %372 {strides = array<i32>} : memref<64x128xf32, #tpu.memory_space<vmem>>, vector<8x128xf32>,
    %c16_129 = arith.constant 16 : index
    %c0_130 = arith.constant 0 : index
    %403 = vector.load %arg15[%c16_129, %c0_130] : memref<64x128xf32, #tpu.memory_space<vmem>>, vector<8x128xf32>
    tpu.vector_store %arg15[%c16_129, %c0_130], %401 {strides = array<i32>} : memref<64x128xf32, #tpu.memory_space<vmem>>, vector<8x128xf32>,
    %c48_131 = arith.constant 48 : index
    %c0_132 = arith.constant 0 : index
    %404 = vector.load %arg13[%c48_131, %c0_132] : memref<64x768xf32, #tpu.memory_space<vmem>>, vector<8x384xf32>
    %c8_133 = arith.constant 8 : index
    %c384_134 = arith.constant 384 : index
    %405 = vector.load %arg13[%c8_133, %c384_134] : memref<64x768xf32, #tpu.memory_space<vmem>>, vector<8x384xf32>
    %cst_135 = arith.constant dense<0.000000e+00> : vector<8x384xf32>
    %406 = tpu.matmul %372, %8, %cst_135 {dimension_numbers = #tpu.dot_dimension_numbers<[1], [0], [0], [1], [0, 0, 1, 1], [], []>} : vector<8x128xf32>, vector<128x384xf32>, vector<8x384xf32> -> vector<8x384xf32>
    %cst_136 = arith.constant dense<0.000000e+00> : vector<8x384xf32>
    %407 = tpu.matmul %401, %10, %cst_136 {dimension_numbers = #tpu.dot_dimension_numbers<[1], [0], [0], [1], [0, 0, 1, 1], [], []>} : vector<8x128xf32>, vector<128x384xf32>, vector<8x384xf32> -> vector<8x384xf32>
    %408 = vector.extract_strided_slice %404 {offsets = [0, 0], sizes = [8, 128], strides = [1, 1]} : vector<8x384xf32> to vector<8x128xf32>
    %409 = vector.extract_strided_slice %406 {offsets = [0, 0], sizes = [8, 128], strides = [1, 1]} : vector<8x384xf32> to vector<8x128xf32>
    %410 = arith.addf %408, %409 : vector<8x128xf32>
    %cst_137 = arith.constant 0.000000e+00 : f32
    %411 = vector.broadcast %cst_137 : f32 to vector<8x128xf32>
    %412 = arith.subf %411, %410 : vector<8x128xf32>
    %413 = math.exp %412 : vector<8x128xf32>
    %cst_138 = arith.constant 1.000000e+00 : f32
    %414 = vector.broadcast %cst_138 : f32 to vector<8x128xf32>
    %415 = arith.addf %414, %413 : vector<8x128xf32>
    %416 = tpu.reciprocal %415 {approx = true} : vector<8x128xf32> -> vector<8x128xf32>
    %417 = vector.extract_strided_slice %404 {offsets = [0, 128], sizes = [8, 128], strides = [1, 1]} : vector<8x384xf32> to vector<8x128xf32>
    %418 = vector.extract_strided_slice %406 {offsets = [0, 128], sizes = [8, 128], strides = [1, 1]} : vector<8x384xf32> to vector<8x128xf32>
    %419 = arith.addf %417, %418 : vector<8x128xf32>
    %cst_139 = arith.constant 0.000000e+00 : f32
    %420 = vector.broadcast %cst_139 : f32 to vector<8x128xf32>
    %421 = arith.subf %420, %419 : vector<8x128xf32>
    %422 = math.exp %421 : vector<8x128xf32>
    %cst_140 = arith.constant 1.000000e+00 : f32
    %423 = vector.broadcast %cst_140 : f32 to vector<8x128xf32>
    %424 = arith.addf %423, %422 : vector<8x128xf32>
    %425 = tpu.reciprocal %424 {approx = true} : vector<8x128xf32> -> vector<8x128xf32>
    %426 = vector.extract_strided_slice %404 {offsets = [0, 256], sizes = [8, 128], strides = [1, 1]} : vector<8x384xf32> to vector<8x128xf32>
    %427 = vector.extract_strided_slice %406 {offsets = [0, 256], sizes = [8, 128], strides = [1, 1]} : vector<8x384xf32> to vector<8x128xf32>
    %428 = arith.addf %427, %14 : vector<8x128xf32>
    %429 = arith.mulf %416, %428 : vector<8x128xf32>
    %430 = arith.addf %426, %429 : vector<8x128xf32>
    %431 = math.tanh %430 : vector<8x128xf32>
    %cst_141 = arith.constant 1.000000e+00 : f32
    %432 = vector.broadcast %cst_141 : f32 to vector<8x128xf32>
    %433 = arith.subf %432, %425 : vector<8x128xf32>
    %434 = arith.mulf %433, %431 : vector<8x128xf32>
    %435 = arith.mulf %425, %372 : vector<8x128xf32>
    %436 = arith.addf %434, %435 : vector<8x128xf32>
    %437 = vector.extract_strided_slice %405 {offsets = [0, 0], sizes = [8, 128], strides = [1, 1]} : vector<8x384xf32> to vector<8x128xf32>
    %438 = vector.extract_strided_slice %407 {offsets = [0, 0], sizes = [8, 128], strides = [1, 1]} : vector<8x384xf32> to vector<8x128xf32>
    %439 = arith.addf %437, %438 : vector<8x128xf32>
    %cst_142 = arith.constant 0.000000e+00 : f32
    %440 = vector.broadcast %cst_142 : f32 to vector<8x128xf32>
    %441 = arith.subf %440, %439 : vector<8x128xf32>
    %442 = math.exp %441 : vector<8x128xf32>
    %cst_143 = arith.constant 1.000000e+00 : f32
    %443 = vector.broadcast %cst_143 : f32 to vector<8x128xf32>
    %444 = arith.addf %443, %442 : vector<8x128xf32>
    %445 = tpu.reciprocal %444 {approx = true} : vector<8x128xf32> -> vector<8x128xf32>
    %446 = vector.extract_strided_slice %405 {offsets = [0, 128], sizes = [8, 128], strides = [1, 1]} : vector<8x384xf32> to vector<8x128xf32>
    %447 = vector.extract_strided_slice %407 {offsets = [0, 128], sizes = [8, 128], strides = [1, 1]} : vector<8x384xf32> to vector<8x128xf32>
    %448 = arith.addf %446, %447 : vector<8x128xf32>
    %cst_144 = arith.constant 0.000000e+00 : f32
    %449 = vector.broadcast %cst_144 : f32 to vector<8x128xf32>
    %450 = arith.subf %449, %448 : vector<8x128xf32>
    %451 = math.exp %450 : vector<8x128xf32>
    %cst_145 = arith.constant 1.000000e+00 : f32
    %452 = vector.broadcast %cst_145 : f32 to vector<8x128xf32>
    %453 = arith.addf %452, %451 : vector<8x128xf32>
    %454 = tpu.reciprocal %453 {approx = true} : vector<8x128xf32> -> vector<8x128xf32>
    %455 = vector.extract_strided_slice %405 {offsets = [0, 256], sizes = [8, 128], strides = [1, 1]} : vector<8x384xf32> to vector<8x128xf32>
    %456 = vector.extract_strided_slice %407 {offsets = [0, 256], sizes = [8, 128], strides = [1, 1]} : vector<8x384xf32> to vector<8x128xf32>
    %457 = arith.addf %456, %18 : vector<8x128xf32>
    %458 = arith.mulf %445, %457 : vector<8x128xf32>
    %459 = arith.addf %455, %458 : vector<8x128xf32>
    %460 = math.tanh %459 : vector<8x128xf32>
    %cst_146 = arith.constant 1.000000e+00 : f32
    %461 = vector.broadcast %cst_146 : f32 to vector<8x128xf32>
    %462 = arith.subf %461, %454 : vector<8x128xf32>
    %463 = arith.mulf %462, %460 : vector<8x128xf32>
    %464 = arith.mulf %454, %401 : vector<8x128xf32>
    %465 = arith.addf %463, %464 : vector<8x128xf32>
    %c48_147 = arith.constant 48 : index
    %c0_148 = arith.constant 0 : index
    %466 = vector.load %arg14[%c48_147, %c0_148] : memref<64x128xf32, #tpu.memory_space<vmem>>, vector<8x128xf32>
    tpu.vector_store %arg14[%c48_147, %c0_148], %436 {strides = array<i32>} : memref<64x128xf32, #tpu.memory_space<vmem>>, vector<8x128xf32>,
    %c8_149 = arith.constant 8 : index
    %c0_150 = arith.constant 0 : index
    %467 = vector.load %arg15[%c8_149, %c0_150] : memref<64x128xf32, #tpu.memory_space<vmem>>, vector<8x128xf32>
    tpu.vector_store %arg15[%c8_149, %c0_150], %465 {strides = array<i32>} : memref<64x128xf32, #tpu.memory_space<vmem>>, vector<8x128xf32>,
    %c56_151 = arith.constant 56 : index
    %c0_152 = arith.constant 0 : index
    %468 = vector.load %arg13[%c56_151, %c0_152] : memref<64x768xf32, #tpu.memory_space<vmem>>, vector<8x384xf32>
    %c0_153 = arith.constant 0 : index
    %c384_154 = arith.constant 384 : index
    %469 = vector.load %arg13[%c0_153, %c384_154] : memref<64x768xf32, #tpu.memory_space<vmem>>, vector<8x384xf32>
    %cst_155 = arith.constant dense<0.000000e+00> : vector<8x384xf32>
    %470 = tpu.matmul %436, %8, %cst_155 {dimension_numbers = #tpu.dot_dimension_numbers<[1], [0], [0], [1], [0, 0, 1, 1], [], []>} : vector<8x128xf32>, vector<128x384xf32>, vector<8x384xf32> -> vector<8x384xf32>
    %cst_156 = arith.constant dense<0.000000e+00> : vector<8x384xf32>
    %471 = tpu.matmul %465, %10, %cst_156 {dimension_numbers = #tpu.dot_dimension_numbers<[1], [0], [0], [1], [0, 0, 1, 1], [], []>} : vector<8x128xf32>, vector<128x384xf32>, vector<8x384xf32> -> vector<8x384xf32>
    %472 = vector.extract_strided_slice %468 {offsets = [0, 0], sizes = [8, 128], strides = [1, 1]} : vector<8x384xf32> to vector<8x128xf32>
    %473 = vector.extract_strided_slice %470 {offsets = [0, 0], sizes = [8, 128], strides = [1, 1]} : vector<8x384xf32> to vector<8x128xf32>
    %474 = arith.addf %472, %473 : vector<8x128xf32>
    %cst_157 = arith.constant 0.000000e+00 : f32
    %475 = vector.broadcast %cst_157 : f32 to vector<8x128xf32>
    %476 = arith.subf %475, %474 : vector<8x128xf32>
    %477 = math.exp %476 : vector<8x128xf32>
    %cst_158 = arith.constant 1.000000e+00 : f32
    %478 = vector.broadcast %cst_158 : f32 to vector<8x128xf32>
    %479 = arith.addf %478, %477 : vector<8x128xf32>
    %480 = tpu.reciprocal %479 {approx = true} : vector<8x128xf32> -> vector<8x128xf32>
    %481 = vector.extract_strided_slice %468 {offsets = [0, 128], sizes = [8, 128], strides = [1, 1]} : vector<8x384xf32> to vector<8x128xf32>
    %482 = vector.extract_strided_slice %470 {offsets = [0, 128], sizes = [8, 128], strides = [1, 1]} : vector<8x384xf32> to vector<8x128xf32>
    %483 = arith.addf %481, %482 : vector<8x128xf32>
    %cst_159 = arith.constant 0.000000e+00 : f32
    %484 = vector.broadcast %cst_159 : f32 to vector<8x128xf32>
    %485 = arith.subf %484, %483 : vector<8x128xf32>
    %486 = math.exp %485 : vector<8x128xf32>
    %cst_160 = arith.constant 1.000000e+00 : f32
    %487 = vector.broadcast %cst_160 : f32 to vector<8x128xf32>
    %488 = arith.addf %487, %486 : vector<8x128xf32>
    %489 = tpu.reciprocal %488 {approx = true} : vector<8x128xf32> -> vector<8x128xf32>
    %490 = vector.extract_strided_slice %468 {offsets = [0, 256], sizes = [8, 128], strides = [1, 1]} : vector<8x384xf32> to vector<8x128xf32>
    %491 = vector.extract_strided_slice %470 {offsets = [0, 256], sizes = [8, 128], strides = [1, 1]} : vector<8x384xf32> to vector<8x128xf32>
    %492 = arith.addf %491, %14 : vector<8x128xf32>
    %493 = arith.mulf %480, %492 : vector<8x128xf32>
    %494 = arith.addf %490, %493 : vector<8x128xf32>
    %495 = math.tanh %494 : vector<8x128xf32>
    %cst_161 = arith.constant 1.000000e+00 : f32
    %496 = vector.broadcast %cst_161 : f32 to vector<8x128xf32>
    %497 = arith.subf %496, %489 : vector<8x128xf32>
    %498 = arith.mulf %497, %495 : vector<8x128xf32>
    %499 = arith.mulf %489, %436 : vector<8x128xf32>
    %500 = arith.addf %498, %499 : vector<8x128xf32>
    %501 = vector.extract_strided_slice %469 {offsets = [0, 0], sizes = [8, 128], strides = [1, 1]} : vector<8x384xf32> to vector<8x128xf32>
    %502 = vector.extract_strided_slice %471 {offsets = [0, 0], sizes = [8, 128], strides = [1, 1]} : vector<8x384xf32> to vector<8x128xf32>
    %503 = arith.addf %501, %502 : vector<8x128xf32>
    %cst_162 = arith.constant 0.000000e+00 : f32
    %504 = vector.broadcast %cst_162 : f32 to vector<8x128xf32>
    %505 = arith.subf %504, %503 : vector<8x128xf32>
    %506 = math.exp %505 : vector<8x128xf32>
    %cst_163 = arith.constant 1.000000e+00 : f32
    %507 = vector.broadcast %cst_163 : f32 to vector<8x128xf32>
    %508 = arith.addf %507, %506 : vector<8x128xf32>
    %509 = tpu.reciprocal %508 {approx = true} : vector<8x128xf32> -> vector<8x128xf32>
    %510 = vector.extract_strided_slice %469 {offsets = [0, 128], sizes = [8, 128], strides = [1, 1]} : vector<8x384xf32> to vector<8x128xf32>
    %511 = vector.extract_strided_slice %471 {offsets = [0, 128], sizes = [8, 128], strides = [1, 1]} : vector<8x384xf32> to vector<8x128xf32>
    %512 = arith.addf %510, %511 : vector<8x128xf32>
    %cst_164 = arith.constant 0.000000e+00 : f32
    %513 = vector.broadcast %cst_164 : f32 to vector<8x128xf32>
    %514 = arith.subf %513, %512 : vector<8x128xf32>
    %515 = math.exp %514 : vector<8x128xf32>
    %cst_165 = arith.constant 1.000000e+00 : f32
    %516 = vector.broadcast %cst_165 : f32 to vector<8x128xf32>
    %517 = arith.addf %516, %515 : vector<8x128xf32>
    %518 = tpu.reciprocal %517 {approx = true} : vector<8x128xf32> -> vector<8x128xf32>
    %519 = vector.extract_strided_slice %469 {offsets = [0, 256], sizes = [8, 128], strides = [1, 1]} : vector<8x384xf32> to vector<8x128xf32>
    %520 = vector.extract_strided_slice %471 {offsets = [0, 256], sizes = [8, 128], strides = [1, 1]} : vector<8x384xf32> to vector<8x128xf32>
    %521 = arith.addf %520, %18 : vector<8x128xf32>
    %522 = arith.mulf %509, %521 : vector<8x128xf32>
    %523 = arith.addf %519, %522 : vector<8x128xf32>
    %524 = math.tanh %523 : vector<8x128xf32>
    %cst_166 = arith.constant 1.000000e+00 : f32
    %525 = vector.broadcast %cst_166 : f32 to vector<8x128xf32>
    %526 = arith.subf %525, %518 : vector<8x128xf32>
    %527 = arith.mulf %526, %524 : vector<8x128xf32>
    %528 = arith.mulf %518, %465 : vector<8x128xf32>
    %529 = arith.addf %527, %528 : vector<8x128xf32>
    %c56_167 = arith.constant 56 : index
    %c0_168 = arith.constant 0 : index
    %530 = vector.load %arg14[%c56_167, %c0_168] : memref<64x128xf32, #tpu.memory_space<vmem>>, vector<8x128xf32>
    tpu.vector_store %arg14[%c56_167, %c0_168], %500 {strides = array<i32>} : memref<64x128xf32, #tpu.memory_space<vmem>>, vector<8x128xf32>,
    %c0_169 = arith.constant 0 : index
    %c0_170 = arith.constant 0 : index
    %531 = vector.load %arg15[%c0_169, %c0_170] : memref<64x128xf32, #tpu.memory_space<vmem>>, vector<8x128xf32>
    tpu.vector_store %arg15[%c0_169, %c0_170], %529 {strides = array<i32>} : memref<64x128xf32, #tpu.memory_space<vmem>>, vector<8x128xf32>,
    %c0_171 = arith.constant 0 : index
    %c0_172 = arith.constant 0 : index
    %532 = vector.load %arg14[%c0_171, %c0_172] : memref<64x128xf32, #tpu.memory_space<vmem>>, vector<64x128xf32>
    %533 = arith.truncf %532 : vector<64x128xf32> to vector<64x128xbf16>
    %c0_173 = arith.constant 0 : index
    %c0_174 = arith.constant 0 : index
    %534 = vector.load %arg15[%c0_173, %c0_174] : memref<64x128xf32, #tpu.memory_space<vmem>>, vector<64x128xf32>
    %535 = arith.truncf %534 : vector<64x128xf32> to vector<64x128xbf16>
    %c0_175 = arith.constant 0 : index
    %c0_176 = arith.constant 0 : index
    %536 = vector.load %arg5[%c0_175, %c0_176] : memref<128x768xbf16, #tpu.memory_space<vmem>>, vector<128x768xbf16>
    %cst_177 = arith.constant dense<0.000000e+00> : vector<64x768xf32>
    %537 = tpu.matmul %533, %536, %cst_177 {dimension_numbers = #tpu.dot_dimension_numbers<[1], [0], [0], [1], [0, 0, 1, 1], [], []>} : vector<64x128xbf16>, vector<128x768xbf16>, vector<64x768xf32> -> vector<64x768xf32>
    %c0_178 = arith.constant 0 : index
    %c0_179 = arith.constant 0 : index
    %538 = vector.load %arg6[%c0_178, %c0_179] : memref<128x768xbf16, #tpu.memory_space<vmem>>, vector<128x768xbf16>
    %cst_180 = arith.constant dense<0.000000e+00> : vector<64x768xf32>
    %539 = tpu.matmul %535, %538, %cst_180 {dimension_numbers = #tpu.dot_dimension_numbers<[1], [0], [0], [1], [0, 0, 1, 1], [], []>} : vector<64x128xbf16>, vector<128x768xbf16>, vector<64x768xf32> -> vector<64x768xf32>
    %540 = arith.addf %537, %539 : vector<64x768xf32>
    %c0_181 = arith.constant 0 : index
    %c0_182 = arith.constant 0 : index
    %541 = vector.load %arg7[%c0_181, %c0_182] : memref<1x768xf32, #tpu.memory_space<vmem>>, vector<1x768xf32>
    %542 = vector.broadcast %541 : vector<1x768xf32> to vector<64x768xf32>
    %543 = arith.addf %540, %542 : vector<64x768xf32>
    %c0_183 = arith.constant 0 : index
    %c0_184 = arith.constant 0 : index
    %544 = vector.load %arg13[%c0_183, %c0_184] : memref<64x768xf32, #tpu.memory_space<vmem>>, vector<64x768xf32>
    tpu.vector_store %arg13[%c0_183, %c0_184], %543 {strides = array<i32>} : memref<64x768xf32, #tpu.memory_space<vmem>>, vector<64x768xf32>,
    %c0_185 = arith.constant 0 : index
    %c0_186 = arith.constant 0 : index
    %c0_187 = arith.constant 0 : index
    %545 = vector.load %arg8[%c0_185, %c0_186, %c0_187] : memref<2x128x384xf32, #tpu.memory_space<vmem>>, vector<1x128x384xf32>
    %546 = vector.shape_cast %545 : vector<1x128x384xf32> to vector<128x384xf32>
    %c1_188 = arith.constant 1 : index
    %c0_189 = arith.constant 0 : index
    %c0_190 = arith.constant 0 : index
    %547 = vector.load %arg8[%c1_188, %c0_189, %c0_190] : memref<2x128x384xf32, #tpu.memory_space<vmem>>, vector<1x128x384xf32>
    %548 = vector.shape_cast %547 : vector<1x128x384xf32> to vector<128x384xf32>
    %c0_191 = arith.constant 0 : index
    %c0_192 = arith.constant 0 : index
    %c0_193 = arith.constant 0 : index
    %549 = vector.load %arg9[%c0_191, %c0_192, %c0_193] : memref<2x1x128xf32, #tpu.memory_space<vmem>>, vector<1x1x128xf32>
    %550 = vector.shape_cast %549 : vector<1x1x128xf32> to vector<1x128xf32>
    %551 = vector.shape_cast %550 : vector<1x128xf32> to vector<1x128xf32>
    %552 = vector.broadcast %551 : vector<1x128xf32> to vector<8x128xf32>
    %c1_194 = arith.constant 1 : index
    %c0_195 = arith.constant 0 : index
    %c0_196 = arith.constant 0 : index
    %553 = vector.load %arg9[%c1_194, %c0_195, %c0_196] : memref<2x1x128xf32, #tpu.memory_space<vmem>>, vector<1x1x128xf32>
    %554 = vector.shape_cast %553 : vector<1x1x128xf32> to vector<1x128xf32>
    %555 = vector.shape_cast %554 : vector<1x128xf32> to vector<1x128xf32>
    %556 = vector.broadcast %555 : vector<1x128xf32> to vector<8x128xf32>
    %cst_197 = arith.constant 0.000000e+00 : f32
    %557 = vector.broadcast %cst_197 : f32 to vector<8x128xf32>
    %c0_198 = arith.constant 0 : index
    %c0_199 = arith.constant 0 : index
    %558 = vector.load %arg13[%c0_198, %c0_199] : memref<64x768xf32, #tpu.memory_space<vmem>>, vector<8x384xf32>
    %c56_200 = arith.constant 56 : index
    %c384_201 = arith.constant 384 : index
    %559 = vector.load %arg13[%c56_200, %c384_201] : memref<64x768xf32, #tpu.memory_space<vmem>>, vector<8x384xf32>
    %cst_202 = arith.constant dense<0.000000e+00> : vector<8x384xf32>
    %560 = tpu.matmul %557, %546, %cst_202 {dimension_numbers = #tpu.dot_dimension_numbers<[1], [0], [0], [1], [0, 0, 1, 1], [], []>} : vector<8x128xf32>, vector<128x384xf32>, vector<8x384xf32> -> vector<8x384xf32>
    %cst_203 = arith.constant dense<0.000000e+00> : vector<8x384xf32>
    %561 = tpu.matmul %557, %548, %cst_203 {dimension_numbers = #tpu.dot_dimension_numbers<[1], [0], [0], [1], [0, 0, 1, 1], [], []>} : vector<8x128xf32>, vector<128x384xf32>, vector<8x384xf32> -> vector<8x384xf32>
    %562 = vector.extract_strided_slice %558 {offsets = [0, 0], sizes = [8, 128], strides = [1, 1]} : vector<8x384xf32> to vector<8x128xf32>
    %563 = vector.extract_strided_slice %560 {offsets = [0, 0], sizes = [8, 128], strides = [1, 1]} : vector<8x384xf32> to vector<8x128xf32>
    %564 = arith.addf %562, %563 : vector<8x128xf32>
    %cst_204 = arith.constant 0.000000e+00 : f32
    %565 = vector.broadcast %cst_204 : f32 to vector<8x128xf32>
    %566 = arith.subf %565, %564 : vector<8x128xf32>
    %567 = math.exp %566 : vector<8x128xf32>
    %cst_205 = arith.constant 1.000000e+00 : f32
    %568 = vector.broadcast %cst_205 : f32 to vector<8x128xf32>
    %569 = arith.addf %568, %567 : vector<8x128xf32>
    %570 = tpu.reciprocal %569 {approx = true} : vector<8x128xf32> -> vector<8x128xf32>
    %571 = vector.extract_strided_slice %558 {offsets = [0, 128], sizes = [8, 128], strides = [1, 1]} : vector<8x384xf32> to vector<8x128xf32>
    %572 = vector.extract_strided_slice %560 {offsets = [0, 128], sizes = [8, 128], strides = [1, 1]} : vector<8x384xf32> to vector<8x128xf32>
    %573 = arith.addf %571, %572 : vector<8x128xf32>
    %cst_206 = arith.constant 0.000000e+00 : f32
    %574 = vector.broadcast %cst_206 : f32 to vector<8x128xf32>
    %575 = arith.subf %574, %573 : vector<8x128xf32>
    %576 = math.exp %575 : vector<8x128xf32>
    %cst_207 = arith.constant 1.000000e+00 : f32
    %577 = vector.broadcast %cst_207 : f32 to vector<8x128xf32>
    %578 = arith.addf %577, %576 : vector<8x128xf32>
    %579 = tpu.reciprocal %578 {approx = true} : vector<8x128xf32> -> vector<8x128xf32>
    %580 = vector.extract_strided_slice %558 {offsets = [0, 256], sizes = [8, 128], strides = [1, 1]} : vector<8x384xf32> to vector<8x128xf32>
    %581 = vector.extract_strided_slice %560 {offsets = [0, 256], sizes = [8, 128], strides = [1, 1]} : vector<8x384xf32> to vector<8x128xf32>
    %582 = arith.addf %581, %552 : vector<8x128xf32>
    %583 = arith.mulf %570, %582 : vector<8x128xf32>
    %584 = arith.addf %580, %583 : vector<8x128xf32>
    %585 = math.tanh %584 : vector<8x128xf32>
    %cst_208 = arith.constant 1.000000e+00 : f32
    %586 = vector.broadcast %cst_208 : f32 to vector<8x128xf32>
    %587 = arith.subf %586, %579 : vector<8x128xf32>
    %588 = arith.mulf %587, %585 : vector<8x128xf32>
    %589 = arith.mulf %579, %557 : vector<8x128xf32>
    %590 = arith.addf %588, %589 : vector<8x128xf32>
    %591 = vector.extract_strided_slice %559 {offsets = [0, 0], sizes = [8, 128], strides = [1, 1]} : vector<8x384xf32> to vector<8x128xf32>
    %592 = vector.extract_strided_slice %561 {offsets = [0, 0], sizes = [8, 128], strides = [1, 1]} : vector<8x384xf32> to vector<8x128xf32>
    %593 = arith.addf %591, %592 : vector<8x128xf32>
    %cst_209 = arith.constant 0.000000e+00 : f32
    %594 = vector.broadcast %cst_209 : f32 to vector<8x128xf32>
    %595 = arith.subf %594, %593 : vector<8x128xf32>
    %596 = math.exp %595 : vector<8x128xf32>
    %cst_210 = arith.constant 1.000000e+00 : f32
    %597 = vector.broadcast %cst_210 : f32 to vector<8x128xf32>
    %598 = arith.addf %597, %596 : vector<8x128xf32>
    %599 = tpu.reciprocal %598 {approx = true} : vector<8x128xf32> -> vector<8x128xf32>
    %600 = vector.extract_strided_slice %559 {offsets = [0, 128], sizes = [8, 128], strides = [1, 1]} : vector<8x384xf32> to vector<8x128xf32>
    %601 = vector.extract_strided_slice %561 {offsets = [0, 128], sizes = [8, 128], strides = [1, 1]} : vector<8x384xf32> to vector<8x128xf32>
    %602 = arith.addf %600, %601 : vector<8x128xf32>
    %cst_211 = arith.constant 0.000000e+00 : f32
    %603 = vector.broadcast %cst_211 : f32 to vector<8x128xf32>
    %604 = arith.subf %603, %602 : vector<8x128xf32>
    %605 = math.exp %604 : vector<8x128xf32>
    %cst_212 = arith.constant 1.000000e+00 : f32
    %606 = vector.broadcast %cst_212 : f32 to vector<8x128xf32>
    %607 = arith.addf %606, %605 : vector<8x128xf32>
    %608 = tpu.reciprocal %607 {approx = true} : vector<8x128xf32> -> vector<8x128xf32>
    %609 = vector.extract_strided_slice %559 {offsets = [0, 256], sizes = [8, 128], strides = [1, 1]} : vector<8x384xf32> to vector<8x128xf32>
    %610 = vector.extract_strided_slice %561 {offsets = [0, 256], sizes = [8, 128], strides = [1, 1]} : vector<8x384xf32> to vector<8x128xf32>
    %611 = arith.addf %610, %556 : vector<8x128xf32>
    %612 = arith.mulf %599, %611 : vector<8x128xf32>
    %613 = arith.addf %609, %612 : vector<8x128xf32>
    %614 = math.tanh %613 : vector<8x128xf32>
    %cst_213 = arith.constant 1.000000e+00 : f32
    %615 = vector.broadcast %cst_213 : f32 to vector<8x128xf32>
    %616 = arith.subf %615, %608 : vector<8x128xf32>
    %617 = arith.mulf %616, %614 : vector<8x128xf32>
    %618 = arith.mulf %608, %557 : vector<8x128xf32>
    %619 = arith.addf %617, %618 : vector<8x128xf32>
    %c0_214 = arith.constant 0 : index
    %c0_215 = arith.constant 0 : index
    %620 = vector.load %arg16[%c0_214, %c0_215] : memref<64x128xf32, #tpu.memory_space<vmem>>, vector<8x128xf32>
    tpu.vector_store %arg16[%c0_214, %c0_215], %590 {strides = array<i32>} : memref<64x128xf32, #tpu.memory_space<vmem>>, vector<8x128xf32>,
    %c56_216 = arith.constant 56 : index
    %c0_217 = arith.constant 0 : index
    %621 = vector.load %arg17[%c56_216, %c0_217] : memref<64x128xf32, #tpu.memory_space<vmem>>, vector<8x128xf32>
    tpu.vector_store %arg17[%c56_216, %c0_217], %619 {strides = array<i32>} : memref<64x128xf32, #tpu.memory_space<vmem>>, vector<8x128xf32>,
    %c8_218 = arith.constant 8 : index
    %c0_219 = arith.constant 0 : index
    %622 = vector.load %arg13[%c8_218, %c0_219] : memref<64x768xf32, #tpu.memory_space<vmem>>, vector<8x384xf32>
    %c48_220 = arith.constant 48 : index
    %c384_221 = arith.constant 384 : index
    %623 = vector.load %arg13[%c48_220, %c384_221] : memref<64x768xf32, #tpu.memory_space<vmem>>, vector<8x384xf32>
    %cst_222 = arith.constant dense<0.000000e+00> : vector<8x384xf32>
    %624 = tpu.matmul %590, %546, %cst_222 {dimension_numbers = #tpu.dot_dimension_numbers<[1], [0], [0], [1], [0, 0, 1, 1], [], []>} : vector<8x128xf32>, vector<128x384xf32>, vector<8x384xf32> -> vector<8x384xf32>
    %cst_223 = arith.constant dense<0.000000e+00> : vector<8x384xf32>
    %625 = tpu.matmul %619, %548, %cst_223 {dimension_numbers = #tpu.dot_dimension_numbers<[1], [0], [0], [1], [0, 0, 1, 1], [], []>} : vector<8x128xf32>, vector<128x384xf32>, vector<8x384xf32> -> vector<8x384xf32>
    %626 = vector.extract_strided_slice %622 {offsets = [0, 0], sizes = [8, 128], strides = [1, 1]} : vector<8x384xf32> to vector<8x128xf32>
    %627 = vector.extract_strided_slice %624 {offsets = [0, 0], sizes = [8, 128], strides = [1, 1]} : vector<8x384xf32> to vector<8x128xf32>
    %628 = arith.addf %626, %627 : vector<8x128xf32>
    %cst_224 = arith.constant 0.000000e+00 : f32
    %629 = vector.broadcast %cst_224 : f32 to vector<8x128xf32>
    %630 = arith.subf %629, %628 : vector<8x128xf32>
    %631 = math.exp %630 : vector<8x128xf32>
    %cst_225 = arith.constant 1.000000e+00 : f32
    %632 = vector.broadcast %cst_225 : f32 to vector<8x128xf32>
    %633 = arith.addf %632, %631 : vector<8x128xf32>
    %634 = tpu.reciprocal %633 {approx = true} : vector<8x128xf32> -> vector<8x128xf32>
    %635 = vector.extract_strided_slice %622 {offsets = [0, 128], sizes = [8, 128], strides = [1, 1]} : vector<8x384xf32> to vector<8x128xf32>
    %636 = vector.extract_strided_slice %624 {offsets = [0, 128], sizes = [8, 128], strides = [1, 1]} : vector<8x384xf32> to vector<8x128xf32>
    %637 = arith.addf %635, %636 : vector<8x128xf32>
    %cst_226 = arith.constant 0.000000e+00 : f32
    %638 = vector.broadcast %cst_226 : f32 to vector<8x128xf32>
    %639 = arith.subf %638, %637 : vector<8x128xf32>
    %640 = math.exp %639 : vector<8x128xf32>
    %cst_227 = arith.constant 1.000000e+00 : f32
    %641 = vector.broadcast %cst_227 : f32 to vector<8x128xf32>
    %642 = arith.addf %641, %640 : vector<8x128xf32>
    %643 = tpu.reciprocal %642 {approx = true} : vector<8x128xf32> -> vector<8x128xf32>
    %644 = vector.extract_strided_slice %622 {offsets = [0, 256], sizes = [8, 128], strides = [1, 1]} : vector<8x384xf32> to vector<8x128xf32>
    %645 = vector.extract_strided_slice %624 {offsets = [0, 256], sizes = [8, 128], strides = [1, 1]} : vector<8x384xf32> to vector<8x128xf32>
    %646 = arith.addf %645, %552 : vector<8x128xf32>
    %647 = arith.mulf %634, %646 : vector<8x128xf32>
    %648 = arith.addf %644, %647 : vector<8x128xf32>
    %649 = math.tanh %648 : vector<8x128xf32>
    %cst_228 = arith.constant 1.000000e+00 : f32
    %650 = vector.broadcast %cst_228 : f32 to vector<8x128xf32>
    %651 = arith.subf %650, %643 : vector<8x128xf32>
    %652 = arith.mulf %651, %649 : vector<8x128xf32>
    %653 = arith.mulf %643, %590 : vector<8x128xf32>
    %654 = arith.addf %652, %653 : vector<8x128xf32>
    %655 = vector.extract_strided_slice %623 {offsets = [0, 0], sizes = [8, 128], strides = [1, 1]} : vector<8x384xf32> to vector<8x128xf32>
    %656 = vector.extract_strided_slice %625 {offsets = [0, 0], sizes = [8, 128], strides = [1, 1]} : vector<8x384xf32> to vector<8x128xf32>
    %657 = arith.addf %655, %656 : vector<8x128xf32>
    %cst_229 = arith.constant 0.000000e+00 : f32
    %658 = vector.broadcast %cst_229 : f32 to vector<8x128xf32>
    %659 = arith.subf %658, %657 : vector<8x128xf32>
    %660 = math.exp %659 : vector<8x128xf32>
    %cst_230 = arith.constant 1.000000e+00 : f32
    %661 = vector.broadcast %cst_230 : f32 to vector<8x128xf32>
    %662 = arith.addf %661, %660 : vector<8x128xf32>
    %663 = tpu.reciprocal %662 {approx = true} : vector<8x128xf32> -> vector<8x128xf32>
    %664 = vector.extract_strided_slice %623 {offsets = [0, 128], sizes = [8, 128], strides = [1, 1]} : vector<8x384xf32> to vector<8x128xf32>
    %665 = vector.extract_strided_slice %625 {offsets = [0, 128], sizes = [8, 128], strides = [1, 1]} : vector<8x384xf32> to vector<8x128xf32>
    %666 = arith.addf %664, %665 : vector<8x128xf32>
    %cst_231 = arith.constant 0.000000e+00 : f32
    %667 = vector.broadcast %cst_231 : f32 to vector<8x128xf32>
    %668 = arith.subf %667, %666 : vector<8x128xf32>
    %669 = math.exp %668 : vector<8x128xf32>
    %cst_232 = arith.constant 1.000000e+00 : f32
    %670 = vector.broadcast %cst_232 : f32 to vector<8x128xf32>
    %671 = arith.addf %670, %669 : vector<8x128xf32>
    %672 = tpu.reciprocal %671 {approx = true} : vector<8x128xf32> -> vector<8x128xf32>
    %673 = vector.extract_strided_slice %623 {offsets = [0, 256], sizes = [8, 128], strides = [1, 1]} : vector<8x384xf32> to vector<8x128xf32>
    %674 = vector.extract_strided_slice %625 {offsets = [0, 256], sizes = [8, 128], strides = [1, 1]} : vector<8x384xf32> to vector<8x128xf32>
    %675 = arith.addf %674, %556 : vector<8x128xf32>
    %676 = arith.mulf %663, %675 : vector<8x128xf32>
    %677 = arith.addf %673, %676 : vector<8x128xf32>
    %678 = math.tanh %677 : vector<8x128xf32>
    %cst_233 = arith.constant 1.000000e+00 : f32
    %679 = vector.broadcast %cst_233 : f32 to vector<8x128xf32>
    %680 = arith.subf %679, %672 : vector<8x128xf32>
    %681 = arith.mulf %680, %678 : vector<8x128xf32>
    %682 = arith.mulf %672, %619 : vector<8x128xf32>
    %683 = arith.addf %681, %682 : vector<8x128xf32>
    %c8_234 = arith.constant 8 : index
    %c0_235 = arith.constant 0 : index
    %684 = vector.load %arg16[%c8_234, %c0_235] : memref<64x128xf32, #tpu.memory_space<vmem>>, vector<8x128xf32>
    tpu.vector_store %arg16[%c8_234, %c0_235], %654 {strides = array<i32>} : memref<64x128xf32, #tpu.memory_space<vmem>>, vector<8x128xf32>,
    %c48_236 = arith.constant 48 : index
    %c0_237 = arith.constant 0 : index
    %685 = vector.load %arg17[%c48_236, %c0_237] : memref<64x128xf32, #tpu.memory_space<vmem>>, vector<8x128xf32>
    tpu.vector_store %arg17[%c48_236, %c0_237], %683 {strides = array<i32>} : memref<64x128xf32, #tpu.memory_space<vmem>>, vector<8x128xf32>,
    %c16_238 = arith.constant 16 : index
    %c0_239 = arith.constant 0 : index
    %686 = vector.load %arg13[%c16_238, %c0_239] : memref<64x768xf32, #tpu.memory_space<vmem>>, vector<8x384xf32>
    %c40_240 = arith.constant 40 : index
    %c384_241 = arith.constant 384 : index
    %687 = vector.load %arg13[%c40_240, %c384_241] : memref<64x768xf32, #tpu.memory_space<vmem>>, vector<8x384xf32>
    %cst_242 = arith.constant dense<0.000000e+00> : vector<8x384xf32>
    %688 = tpu.matmul %654, %546, %cst_242 {dimension_numbers = #tpu.dot_dimension_numbers<[1], [0], [0], [1], [0, 0, 1, 1], [], []>} : vector<8x128xf32>, vector<128x384xf32>, vector<8x384xf32> -> vector<8x384xf32>
    %cst_243 = arith.constant dense<0.000000e+00> : vector<8x384xf32>
    %689 = tpu.matmul %683, %548, %cst_243 {dimension_numbers = #tpu.dot_dimension_numbers<[1], [0], [0], [1], [0, 0, 1, 1], [], []>} : vector<8x128xf32>, vector<128x384xf32>, vector<8x384xf32> -> vector<8x384xf32>
    %690 = vector.extract_strided_slice %686 {offsets = [0, 0], sizes = [8, 128], strides = [1, 1]} : vector<8x384xf32> to vector<8x128xf32>
    %691 = vector.extract_strided_slice %688 {offsets = [0, 0], sizes = [8, 128], strides = [1, 1]} : vector<8x384xf32> to vector<8x128xf32>
    %692 = arith.addf %690, %691 : vector<8x128xf32>
    %cst_244 = arith.constant 0.000000e+00 : f32
    %693 = vector.broadcast %cst_244 : f32 to vector<8x128xf32>
    %694 = arith.subf %693, %692 : vector<8x128xf32>
    %695 = math.exp %694 : vector<8x128xf32>
    %cst_245 = arith.constant 1.000000e+00 : f32
    %696 = vector.broadcast %cst_245 : f32 to vector<8x128xf32>
    %697 = arith.addf %696, %695 : vector<8x128xf32>
    %698 = tpu.reciprocal %697 {approx = true} : vector<8x128xf32> -> vector<8x128xf32>
    %699 = vector.extract_strided_slice %686 {offsets = [0, 128], sizes = [8, 128], strides = [1, 1]} : vector<8x384xf32> to vector<8x128xf32>
    %700 = vector.extract_strided_slice %688 {offsets = [0, 128], sizes = [8, 128], strides = [1, 1]} : vector<8x384xf32> to vector<8x128xf32>
    %701 = arith.addf %699, %700 : vector<8x128xf32>
    %cst_246 = arith.constant 0.000000e+00 : f32
    %702 = vector.broadcast %cst_246 : f32 to vector<8x128xf32>
    %703 = arith.subf %702, %701 : vector<8x128xf32>
    %704 = math.exp %703 : vector<8x128xf32>
    %cst_247 = arith.constant 1.000000e+00 : f32
    %705 = vector.broadcast %cst_247 : f32 to vector<8x128xf32>
    %706 = arith.addf %705, %704 : vector<8x128xf32>
    %707 = tpu.reciprocal %706 {approx = true} : vector<8x128xf32> -> vector<8x128xf32>
    %708 = vector.extract_strided_slice %686 {offsets = [0, 256], sizes = [8, 128], strides = [1, 1]} : vector<8x384xf32> to vector<8x128xf32>
    %709 = vector.extract_strided_slice %688 {offsets = [0, 256], sizes = [8, 128], strides = [1, 1]} : vector<8x384xf32> to vector<8x128xf32>
    %710 = arith.addf %709, %552 : vector<8x128xf32>
    %711 = arith.mulf %698, %710 : vector<8x128xf32>
    %712 = arith.addf %708, %711 : vector<8x128xf32>
    %713 = math.tanh %712 : vector<8x128xf32>
    %cst_248 = arith.constant 1.000000e+00 : f32
    %714 = vector.broadcast %cst_248 : f32 to vector<8x128xf32>
    %715 = arith.subf %714, %707 : vector<8x128xf32>
    %716 = arith.mulf %715, %713 : vector<8x128xf32>
    %717 = arith.mulf %707, %654 : vector<8x128xf32>
    %718 = arith.addf %716, %717 : vector<8x128xf32>
    %719 = vector.extract_strided_slice %687 {offsets = [0, 0], sizes = [8, 128], strides = [1, 1]} : vector<8x384xf32> to vector<8x128xf32>
    %720 = vector.extract_strided_slice %689 {offsets = [0, 0], sizes = [8, 128], strides = [1, 1]} : vector<8x384xf32> to vector<8x128xf32>
    %721 = arith.addf %719, %720 : vector<8x128xf32>
    %cst_249 = arith.constant 0.000000e+00 : f32
    %722 = vector.broadcast %cst_249 : f32 to vector<8x128xf32>
    %723 = arith.subf %722, %721 : vector<8x128xf32>
    %724 = math.exp %723 : vector<8x128xf32>
    %cst_250 = arith.constant 1.000000e+00 : f32
    %725 = vector.broadcast %cst_250 : f32 to vector<8x128xf32>
    %726 = arith.addf %725, %724 : vector<8x128xf32>
    %727 = tpu.reciprocal %726 {approx = true} : vector<8x128xf32> -> vector<8x128xf32>
    %728 = vector.extract_strided_slice %687 {offsets = [0, 128], sizes = [8, 128], strides = [1, 1]} : vector<8x384xf32> to vector<8x128xf32>
    %729 = vector.extract_strided_slice %689 {offsets = [0, 128], sizes = [8, 128], strides = [1, 1]} : vector<8x384xf32> to vector<8x128xf32>
    %730 = arith.addf %728, %729 : vector<8x128xf32>
    %cst_251 = arith.constant 0.000000e+00 : f32
    %731 = vector.broadcast %cst_251 : f32 to vector<8x128xf32>
    %732 = arith.subf %731, %730 : vector<8x128xf32>
    %733 = math.exp %732 : vector<8x128xf32>
    %cst_252 = arith.constant 1.000000e+00 : f32
    %734 = vector.broadcast %cst_252 : f32 to vector<8x128xf32>
    %735 = arith.addf %734, %733 : vector<8x128xf32>
    %736 = tpu.reciprocal %735 {approx = true} : vector<8x128xf32> -> vector<8x128xf32>
    %737 = vector.extract_strided_slice %687 {offsets = [0, 256], sizes = [8, 128], strides = [1, 1]} : vector<8x384xf32> to vector<8x128xf32>
    %738 = vector.extract_strided_slice %689 {offsets = [0, 256], sizes = [8, 128], strides = [1, 1]} : vector<8x384xf32> to vector<8x128xf32>
    %739 = arith.addf %738, %556 : vector<8x128xf32>
    %740 = arith.mulf %727, %739 : vector<8x128xf32>
    %741 = arith.addf %737, %740 : vector<8x128xf32>
    %742 = math.tanh %741 : vector<8x128xf32>
    %cst_253 = arith.constant 1.000000e+00 : f32
    %743 = vector.broadcast %cst_253 : f32 to vector<8x128xf32>
    %744 = arith.subf %743, %736 : vector<8x128xf32>
    %745 = arith.mulf %744, %742 : vector<8x128xf32>
    %746 = arith.mulf %736, %683 : vector<8x128xf32>
    %747 = arith.addf %745, %746 : vector<8x128xf32>
    %c16_254 = arith.constant 16 : index
    %c0_255 = arith.constant 0 : index
    %748 = vector.load %arg16[%c16_254, %c0_255] : memref<64x128xf32, #tpu.memory_space<vmem>>, vector<8x128xf32>
    tpu.vector_store %arg16[%c16_254, %c0_255], %718 {strides = array<i32>} : memref<64x128xf32, #tpu.memory_space<vmem>>, vector<8x128xf32>,
    %c40_256 = arith.constant 40 : index
    %c0_257 = arith.constant 0 : index
    %749 = vector.load %arg17[%c40_256, %c0_257] : memref<64x128xf32, #tpu.memory_space<vmem>>, vector<8x128xf32>
    tpu.vector_store %arg17[%c40_256, %c0_257], %747 {strides = array<i32>} : memref<64x128xf32, #tpu.memory_space<vmem>>, vector<8x128xf32>,
    %c24_258 = arith.constant 24 : index
    %c0_259 = arith.constant 0 : index
    %750 = vector.load %arg13[%c24_258, %c0_259] : memref<64x768xf32, #tpu.memory_space<vmem>>, vector<8x384xf32>
    %c32_260 = arith.constant 32 : index
    %c384_261 = arith.constant 384 : index
    %751 = vector.load %arg13[%c32_260, %c384_261] : memref<64x768xf32, #tpu.memory_space<vmem>>, vector<8x384xf32>
    %cst_262 = arith.constant dense<0.000000e+00> : vector<8x384xf32>
    %752 = tpu.matmul %718, %546, %cst_262 {dimension_numbers = #tpu.dot_dimension_numbers<[1], [0], [0], [1], [0, 0, 1, 1], [], []>} : vector<8x128xf32>, vector<128x384xf32>, vector<8x384xf32> -> vector<8x384xf32>
    %cst_263 = arith.constant dense<0.000000e+00> : vector<8x384xf32>
    %753 = tpu.matmul %747, %548, %cst_263 {dimension_numbers = #tpu.dot_dimension_numbers<[1], [0], [0], [1], [0, 0, 1, 1], [], []>} : vector<8x128xf32>, vector<128x384xf32>, vector<8x384xf32> -> vector<8x384xf32>
    %754 = vector.extract_strided_slice %750 {offsets = [0, 0], sizes = [8, 128], strides = [1, 1]} : vector<8x384xf32> to vector<8x128xf32>
    %755 = vector.extract_strided_slice %752 {offsets = [0, 0], sizes = [8, 128], strides = [1, 1]} : vector<8x384xf32> to vector<8x128xf32>
    %756 = arith.addf %754, %755 : vector<8x128xf32>
    %cst_264 = arith.constant 0.000000e+00 : f32
    %757 = vector.broadcast %cst_264 : f32 to vector<8x128xf32>
    %758 = arith.subf %757, %756 : vector<8x128xf32>
    %759 = math.exp %758 : vector<8x128xf32>
    %cst_265 = arith.constant 1.000000e+00 : f32
    %760 = vector.broadcast %cst_265 : f32 to vector<8x128xf32>
    %761 = arith.addf %760, %759 : vector<8x128xf32>
    %762 = tpu.reciprocal %761 {approx = true} : vector<8x128xf32> -> vector<8x128xf32>
    %763 = vector.extract_strided_slice %750 {offsets = [0, 128], sizes = [8, 128], strides = [1, 1]} : vector<8x384xf32> to vector<8x128xf32>
    %764 = vector.extract_strided_slice %752 {offsets = [0, 128], sizes = [8, 128], strides = [1, 1]} : vector<8x384xf32> to vector<8x128xf32>
    %765 = arith.addf %763, %764 : vector<8x128xf32>
    %cst_266 = arith.constant 0.000000e+00 : f32
    %766 = vector.broadcast %cst_266 : f32 to vector<8x128xf32>
    %767 = arith.subf %766, %765 : vector<8x128xf32>
    %768 = math.exp %767 : vector<8x128xf32>
    %cst_267 = arith.constant 1.000000e+00 : f32
    %769 = vector.broadcast %cst_267 : f32 to vector<8x128xf32>
    %770 = arith.addf %769, %768 : vector<8x128xf32>
    %771 = tpu.reciprocal %770 {approx = true} : vector<8x128xf32> -> vector<8x128xf32>
    %772 = vector.extract_strided_slice %750 {offsets = [0, 256], sizes = [8, 128], strides = [1, 1]} : vector<8x384xf32> to vector<8x128xf32>
    %773 = vector.extract_strided_slice %752 {offsets = [0, 256], sizes = [8, 128], strides = [1, 1]} : vector<8x384xf32> to vector<8x128xf32>
    %774 = arith.addf %773, %552 : vector<8x128xf32>
    %775 = arith.mulf %762, %774 : vector<8x128xf32>
    %776 = arith.addf %772, %775 : vector<8x128xf32>
    %777 = math.tanh %776 : vector<8x128xf32>
    %cst_268 = arith.constant 1.000000e+00 : f32
    %778 = vector.broadcast %cst_268 : f32 to vector<8x128xf32>
    %779 = arith.subf %778, %771 : vector<8x128xf32>
    %780 = arith.mulf %779, %777 : vector<8x128xf32>
    %781 = arith.mulf %771, %718 : vector<8x128xf32>
    %782 = arith.addf %780, %781 : vector<8x128xf32>
    %783 = vector.extract_strided_slice %751 {offsets = [0, 0], sizes = [8, 128], strides = [1, 1]} : vector<8x384xf32> to vector<8x128xf32>
    %784 = vector.extract_strided_slice %753 {offsets = [0, 0], sizes = [8, 128], strides = [1, 1]} : vector<8x384xf32> to vector<8x128xf32>
    %785 = arith.addf %783, %784 : vector<8x128xf32>
    %cst_269 = arith.constant 0.000000e+00 : f32
    %786 = vector.broadcast %cst_269 : f32 to vector<8x128xf32>
    %787 = arith.subf %786, %785 : vector<8x128xf32>
    %788 = math.exp %787 : vector<8x128xf32>
    %cst_270 = arith.constant 1.000000e+00 : f32
    %789 = vector.broadcast %cst_270 : f32 to vector<8x128xf32>
    %790 = arith.addf %789, %788 : vector<8x128xf32>
    %791 = tpu.reciprocal %790 {approx = true} : vector<8x128xf32> -> vector<8x128xf32>
    %792 = vector.extract_strided_slice %751 {offsets = [0, 128], sizes = [8, 128], strides = [1, 1]} : vector<8x384xf32> to vector<8x128xf32>
    %793 = vector.extract_strided_slice %753 {offsets = [0, 128], sizes = [8, 128], strides = [1, 1]} : vector<8x384xf32> to vector<8x128xf32>
    %794 = arith.addf %792, %793 : vector<8x128xf32>
    %cst_271 = arith.constant 0.000000e+00 : f32
    %795 = vector.broadcast %cst_271 : f32 to vector<8x128xf32>
    %796 = arith.subf %795, %794 : vector<8x128xf32>
    %797 = math.exp %796 : vector<8x128xf32>
    %cst_272 = arith.constant 1.000000e+00 : f32
    %798 = vector.broadcast %cst_272 : f32 to vector<8x128xf32>
    %799 = arith.addf %798, %797 : vector<8x128xf32>
    %800 = tpu.reciprocal %799 {approx = true} : vector<8x128xf32> -> vector<8x128xf32>
    %801 = vector.extract_strided_slice %751 {offsets = [0, 256], sizes = [8, 128], strides = [1, 1]} : vector<8x384xf32> to vector<8x128xf32>
    %802 = vector.extract_strided_slice %753 {offsets = [0, 256], sizes = [8, 128], strides = [1, 1]} : vector<8x384xf32> to vector<8x128xf32>
    %803 = arith.addf %802, %556 : vector<8x128xf32>
    %804 = arith.mulf %791, %803 : vector<8x128xf32>
    %805 = arith.addf %801, %804 : vector<8x128xf32>
    %806 = math.tanh %805 : vector<8x128xf32>
    %cst_273 = arith.constant 1.000000e+00 : f32
    %807 = vector.broadcast %cst_273 : f32 to vector<8x128xf32>
    %808 = arith.subf %807, %800 : vector<8x128xf32>
    %809 = arith.mulf %808, %806 : vector<8x128xf32>
    %810 = arith.mulf %800, %747 : vector<8x128xf32>
    %811 = arith.addf %809, %810 : vector<8x128xf32>
    %c24_274 = arith.constant 24 : index
    %c0_275 = arith.constant 0 : index
    %812 = vector.load %arg16[%c24_274, %c0_275] : memref<64x128xf32, #tpu.memory_space<vmem>>, vector<8x128xf32>
    tpu.vector_store %arg16[%c24_274, %c0_275], %782 {strides = array<i32>} : memref<64x128xf32, #tpu.memory_space<vmem>>, vector<8x128xf32>,
    %c32_276 = arith.constant 32 : index
    %c0_277 = arith.constant 0 : index
    %813 = vector.load %arg17[%c32_276, %c0_277] : memref<64x128xf32, #tpu.memory_space<vmem>>, vector<8x128xf32>
    tpu.vector_store %arg17[%c32_276, %c0_277], %811 {strides = array<i32>} : memref<64x128xf32, #tpu.memory_space<vmem>>, vector<8x128xf32>,
    %c32_278 = arith.constant 32 : index
    %c0_279 = arith.constant 0 : index
    %814 = vector.load %arg13[%c32_278, %c0_279] : memref<64x768xf32, #tpu.memory_space<vmem>>, vector<8x384xf32>
    %c24_280 = arith.constant 24 : index
    %c384_281 = arith.constant 384 : index
    %815 = vector.load %arg13[%c24_280, %c384_281] : memref<64x768xf32, #tpu.memory_space<vmem>>, vector<8x384xf32>
    %cst_282 = arith.constant dense<0.000000e+00> : vector<8x384xf32>
    %816 = tpu.matmul %782, %546, %cst_282 {dimension_numbers = #tpu.dot_dimension_numbers<[1], [0], [0], [1], [0, 0, 1, 1], [], []>} : vector<8x128xf32>, vector<128x384xf32>, vector<8x384xf32> -> vector<8x384xf32>
    %cst_283 = arith.constant dense<0.000000e+00> : vector<8x384xf32>
    %817 = tpu.matmul %811, %548, %cst_283 {dimension_numbers = #tpu.dot_dimension_numbers<[1], [0], [0], [1], [0, 0, 1, 1], [], []>} : vector<8x128xf32>, vector<128x384xf32>, vector<8x384xf32> -> vector<8x384xf32>
    %818 = vector.extract_strided_slice %814 {offsets = [0, 0], sizes = [8, 128], strides = [1, 1]} : vector<8x384xf32> to vector<8x128xf32>
    %819 = vector.extract_strided_slice %816 {offsets = [0, 0], sizes = [8, 128], strides = [1, 1]} : vector<8x384xf32> to vector<8x128xf32>
    %820 = arith.addf %818, %819 : vector<8x128xf32>
    %cst_284 = arith.constant 0.000000e+00 : f32
    %821 = vector.broadcast %cst_284 : f32 to vector<8x128xf32>
    %822 = arith.subf %821, %820 : vector<8x128xf32>
    %823 = math.exp %822 : vector<8x128xf32>
    %cst_285 = arith.constant 1.000000e+00 : f32
    %824 = vector.broadcast %cst_285 : f32 to vector<8x128xf32>
    %825 = arith.addf %824, %823 : vector<8x128xf32>
    %826 = tpu.reciprocal %825 {approx = true} : vector<8x128xf32> -> vector<8x128xf32>
    %827 = vector.extract_strided_slice %814 {offsets = [0, 128], sizes = [8, 128], strides = [1, 1]} : vector<8x384xf32> to vector<8x128xf32>
    %828 = vector.extract_strided_slice %816 {offsets = [0, 128], sizes = [8, 128], strides = [1, 1]} : vector<8x384xf32> to vector<8x128xf32>
    %829 = arith.addf %827, %828 : vector<8x128xf32>
    %cst_286 = arith.constant 0.000000e+00 : f32
    %830 = vector.broadcast %cst_286 : f32 to vector<8x128xf32>
    %831 = arith.subf %830, %829 : vector<8x128xf32>
    %832 = math.exp %831 : vector<8x128xf32>
    %cst_287 = arith.constant 1.000000e+00 : f32
    %833 = vector.broadcast %cst_287 : f32 to vector<8x128xf32>
    %834 = arith.addf %833, %832 : vector<8x128xf32>
    %835 = tpu.reciprocal %834 {approx = true} : vector<8x128xf32> -> vector<8x128xf32>
    %836 = vector.extract_strided_slice %814 {offsets = [0, 256], sizes = [8, 128], strides = [1, 1]} : vector<8x384xf32> to vector<8x128xf32>
    %837 = vector.extract_strided_slice %816 {offsets = [0, 256], sizes = [8, 128], strides = [1, 1]} : vector<8x384xf32> to vector<8x128xf32>
    %838 = arith.addf %837, %552 : vector<8x128xf32>
    %839 = arith.mulf %826, %838 : vector<8x128xf32>
    %840 = arith.addf %836, %839 : vector<8x128xf32>
    %841 = math.tanh %840 : vector<8x128xf32>
    %cst_288 = arith.constant 1.000000e+00 : f32
    %842 = vector.broadcast %cst_288 : f32 to vector<8x128xf32>
    %843 = arith.subf %842, %835 : vector<8x128xf32>
    %844 = arith.mulf %843, %841 : vector<8x128xf32>
    %845 = arith.mulf %835, %782 : vector<8x128xf32>
    %846 = arith.addf %844, %845 : vector<8x128xf32>
    %847 = vector.extract_strided_slice %815 {offsets = [0, 0], sizes = [8, 128], strides = [1, 1]} : vector<8x384xf32> to vector<8x128xf32>
    %848 = vector.extract_strided_slice %817 {offsets = [0, 0], sizes = [8, 128], strides = [1, 1]} : vector<8x384xf32> to vector<8x128xf32>
    %849 = arith.addf %847, %848 : vector<8x128xf32>
    %cst_289 = arith.constant 0.000000e+00 : f32
    %850 = vector.broadcast %cst_289 : f32 to vector<8x128xf32>
    %851 = arith.subf %850, %849 : vector<8x128xf32>
    %852 = math.exp %851 : vector<8x128xf32>
    %cst_290 = arith.constant 1.000000e+00 : f32
    %853 = vector.broadcast %cst_290 : f32 to vector<8x128xf32>
    %854 = arith.addf %853, %852 : vector<8x128xf32>
    %855 = tpu.reciprocal %854 {approx = true} : vector<8x128xf32> -> vector<8x128xf32>
    %856 = vector.extract_strided_slice %815 {offsets = [0, 128], sizes = [8, 128], strides = [1, 1]} : vector<8x384xf32> to vector<8x128xf32>
    %857 = vector.extract_strided_slice %817 {offsets = [0, 128], sizes = [8, 128], strides = [1, 1]} : vector<8x384xf32> to vector<8x128xf32>
    %858 = arith.addf %856, %857 : vector<8x128xf32>
    %cst_291 = arith.constant 0.000000e+00 : f32
    %859 = vector.broadcast %cst_291 : f32 to vector<8x128xf32>
    %860 = arith.subf %859, %858 : vector<8x128xf32>
    %861 = math.exp %860 : vector<8x128xf32>
    %cst_292 = arith.constant 1.000000e+00 : f32
    %862 = vector.broadcast %cst_292 : f32 to vector<8x128xf32>
    %863 = arith.addf %862, %861 : vector<8x128xf32>
    %864 = tpu.reciprocal %863 {approx = true} : vector<8x128xf32> -> vector<8x128xf32>
    %865 = vector.extract_strided_slice %815 {offsets = [0, 256], sizes = [8, 128], strides = [1, 1]} : vector<8x384xf32> to vector<8x128xf32>
    %866 = vector.extract_strided_slice %817 {offsets = [0, 256], sizes = [8, 128], strides = [1, 1]} : vector<8x384xf32> to vector<8x128xf32>
    %867 = arith.addf %866, %556 : vector<8x128xf32>
    %868 = arith.mulf %855, %867 : vector<8x128xf32>
    %869 = arith.addf %865, %868 : vector<8x128xf32>
    %870 = math.tanh %869 : vector<8x128xf32>
    %cst_293 = arith.constant 1.000000e+00 : f32
    %871 = vector.broadcast %cst_293 : f32 to vector<8x128xf32>
    %872 = arith.subf %871, %864 : vector<8x128xf32>
    %873 = arith.mulf %872, %870 : vector<8x128xf32>
    %874 = arith.mulf %864, %811 : vector<8x128xf32>
    %875 = arith.addf %873, %874 : vector<8x128xf32>
    %c32_294 = arith.constant 32 : index
    %c0_295 = arith.constant 0 : index
    %876 = vector.load %arg16[%c32_294, %c0_295] : memref<64x128xf32, #tpu.memory_space<vmem>>, vector<8x128xf32>
    tpu.vector_store %arg16[%c32_294, %c0_295], %846 {strides = array<i32>} : memref<64x128xf32, #tpu.memory_space<vmem>>, vector<8x128xf32>,
    %c24_296 = arith.constant 24 : index
    %c0_297 = arith.constant 0 : index
    %877 = vector.load %arg17[%c24_296, %c0_297] : memref<64x128xf32, #tpu.memory_space<vmem>>, vector<8x128xf32>
    tpu.vector_store %arg17[%c24_296, %c0_297], %875 {strides = array<i32>} : memref<64x128xf32, #tpu.memory_space<vmem>>, vector<8x128xf32>,
    %c40_298 = arith.constant 40 : index
    %c0_299 = arith.constant 0 : index
    %878 = vector.load %arg13[%c40_298, %c0_299] : memref<64x768xf32, #tpu.memory_space<vmem>>, vector<8x384xf32>
    %c16_300 = arith.constant 16 : index
    %c384_301 = arith.constant 384 : index
    %879 = vector.load %arg13[%c16_300, %c384_301] : memref<64x768xf32, #tpu.memory_space<vmem>>, vector<8x384xf32>
    %cst_302 = arith.constant dense<0.000000e+00> : vector<8x384xf32>
    %880 = tpu.matmul %846, %546, %cst_302 {dimension_numbers = #tpu.dot_dimension_numbers<[1], [0], [0], [1], [0, 0, 1, 1], [], []>} : vector<8x128xf32>, vector<128x384xf32>, vector<8x384xf32> -> vector<8x384xf32>
    %cst_303 = arith.constant dense<0.000000e+00> : vector<8x384xf32>
    %881 = tpu.matmul %875, %548, %cst_303 {dimension_numbers = #tpu.dot_dimension_numbers<[1], [0], [0], [1], [0, 0, 1, 1], [], []>} : vector<8x128xf32>, vector<128x384xf32>, vector<8x384xf32> -> vector<8x384xf32>
    %882 = vector.extract_strided_slice %878 {offsets = [0, 0], sizes = [8, 128], strides = [1, 1]} : vector<8x384xf32> to vector<8x128xf32>
    %883 = vector.extract_strided_slice %880 {offsets = [0, 0], sizes = [8, 128], strides = [1, 1]} : vector<8x384xf32> to vector<8x128xf32>
    %884 = arith.addf %882, %883 : vector<8x128xf32>
    %cst_304 = arith.constant 0.000000e+00 : f32
    %885 = vector.broadcast %cst_304 : f32 to vector<8x128xf32>
    %886 = arith.subf %885, %884 : vector<8x128xf32>
    %887 = math.exp %886 : vector<8x128xf32>
    %cst_305 = arith.constant 1.000000e+00 : f32
    %888 = vector.broadcast %cst_305 : f32 to vector<8x128xf32>
    %889 = arith.addf %888, %887 : vector<8x128xf32>
    %890 = tpu.reciprocal %889 {approx = true} : vector<8x128xf32> -> vector<8x128xf32>
    %891 = vector.extract_strided_slice %878 {offsets = [0, 128], sizes = [8, 128], strides = [1, 1]} : vector<8x384xf32> to vector<8x128xf32>
    %892 = vector.extract_strided_slice %880 {offsets = [0, 128], sizes = [8, 128], strides = [1, 1]} : vector<8x384xf32> to vector<8x128xf32>
    %893 = arith.addf %891, %892 : vector<8x128xf32>
    %cst_306 = arith.constant 0.000000e+00 : f32
    %894 = vector.broadcast %cst_306 : f32 to vector<8x128xf32>
    %895 = arith.subf %894, %893 : vector<8x128xf32>
    %896 = math.exp %895 : vector<8x128xf32>
    %cst_307 = arith.constant 1.000000e+00 : f32
    %897 = vector.broadcast %cst_307 : f32 to vector<8x128xf32>
    %898 = arith.addf %897, %896 : vector<8x128xf32>
    %899 = tpu.reciprocal %898 {approx = true} : vector<8x128xf32> -> vector<8x128xf32>
    %900 = vector.extract_strided_slice %878 {offsets = [0, 256], sizes = [8, 128], strides = [1, 1]} : vector<8x384xf32> to vector<8x128xf32>
    %901 = vector.extract_strided_slice %880 {offsets = [0, 256], sizes = [8, 128], strides = [1, 1]} : vector<8x384xf32> to vector<8x128xf32>
    %902 = arith.addf %901, %552 : vector<8x128xf32>
    %903 = arith.mulf %890, %902 : vector<8x128xf32>
    %904 = arith.addf %900, %903 : vector<8x128xf32>
    %905 = math.tanh %904 : vector<8x128xf32>
    %cst_308 = arith.constant 1.000000e+00 : f32
    %906 = vector.broadcast %cst_308 : f32 to vector<8x128xf32>
    %907 = arith.subf %906, %899 : vector<8x128xf32>
    %908 = arith.mulf %907, %905 : vector<8x128xf32>
    %909 = arith.mulf %899, %846 : vector<8x128xf32>
    %910 = arith.addf %908, %909 : vector<8x128xf32>
    %911 = vector.extract_strided_slice %879 {offsets = [0, 0], sizes = [8, 128], strides = [1, 1]} : vector<8x384xf32> to vector<8x128xf32>
    %912 = vector.extract_strided_slice %881 {offsets = [0, 0], sizes = [8, 128], strides = [1, 1]} : vector<8x384xf32> to vector<8x128xf32>
    %913 = arith.addf %911, %912 : vector<8x128xf32>
    %cst_309 = arith.constant 0.000000e+00 : f32
    %914 = vector.broadcast %cst_309 : f32 to vector<8x128xf32>
    %915 = arith.subf %914, %913 : vector<8x128xf32>
    %916 = math.exp %915 : vector<8x128xf32>
    %cst_310 = arith.constant 1.000000e+00 : f32
    %917 = vector.broadcast %cst_310 : f32 to vector<8x128xf32>
    %918 = arith.addf %917, %916 : vector<8x128xf32>
    %919 = tpu.reciprocal %918 {approx = true} : vector<8x128xf32> -> vector<8x128xf32>
    %920 = vector.extract_strided_slice %879 {offsets = [0, 128], sizes = [8, 128], strides = [1, 1]} : vector<8x384xf32> to vector<8x128xf32>
    %921 = vector.extract_strided_slice %881 {offsets = [0, 128], sizes = [8, 128], strides = [1, 1]} : vector<8x384xf32> to vector<8x128xf32>
    %922 = arith.addf %920, %921 : vector<8x128xf32>
    %cst_311 = arith.constant 0.000000e+00 : f32
    %923 = vector.broadcast %cst_311 : f32 to vector<8x128xf32>
    %924 = arith.subf %923, %922 : vector<8x128xf32>
    %925 = math.exp %924 : vector<8x128xf32>
    %cst_312 = arith.constant 1.000000e+00 : f32
    %926 = vector.broadcast %cst_312 : f32 to vector<8x128xf32>
    %927 = arith.addf %926, %925 : vector<8x128xf32>
    %928 = tpu.reciprocal %927 {approx = true} : vector<8x128xf32> -> vector<8x128xf32>
    %929 = vector.extract_strided_slice %879 {offsets = [0, 256], sizes = [8, 128], strides = [1, 1]} : vector<8x384xf32> to vector<8x128xf32>
    %930 = vector.extract_strided_slice %881 {offsets = [0, 256], sizes = [8, 128], strides = [1, 1]} : vector<8x384xf32> to vector<8x128xf32>
    %931 = arith.addf %930, %556 : vector<8x128xf32>
    %932 = arith.mulf %919, %931 : vector<8x128xf32>
    %933 = arith.addf %929, %932 : vector<8x128xf32>
    %934 = math.tanh %933 : vector<8x128xf32>
    %cst_313 = arith.constant 1.000000e+00 : f32
    %935 = vector.broadcast %cst_313 : f32 to vector<8x128xf32>
    %936 = arith.subf %935, %928 : vector<8x128xf32>
    %937 = arith.mulf %936, %934 : vector<8x128xf32>
    %938 = arith.mulf %928, %875 : vector<8x128xf32>
    %939 = arith.addf %937, %938 : vector<8x128xf32>
    %c40_314 = arith.constant 40 : index
    %c0_315 = arith.constant 0 : index
    %940 = vector.load %arg16[%c40_314, %c0_315] : memref<64x128xf32, #tpu.memory_space<vmem>>, vector<8x128xf32>
    tpu.vector_store %arg16[%c40_314, %c0_315], %910 {strides = array<i32>} : memref<64x128xf32, #tpu.memory_space<vmem>>, vector<8x128xf32>,
    %c16_316 = arith.constant 16 : index
    %c0_317 = arith.constant 0 : index
    %941 = vector.load %arg17[%c16_316, %c0_317] : memref<64x128xf32, #tpu.memory_space<vmem>>, vector<8x128xf32>
    tpu.vector_store %arg17[%c16_316, %c0_317], %939 {strides = array<i32>} : memref<64x128xf32, #tpu.memory_space<vmem>>, vector<8x128xf32>,
    %c48_318 = arith.constant 48 : index
    %c0_319 = arith.constant 0 : index
    %942 = vector.load %arg13[%c48_318, %c0_319] : memref<64x768xf32, #tpu.memory_space<vmem>>, vector<8x384xf32>
    %c8_320 = arith.constant 8 : index
    %c384_321 = arith.constant 384 : index
    %943 = vector.load %arg13[%c8_320, %c384_321] : memref<64x768xf32, #tpu.memory_space<vmem>>, vector<8x384xf32>
    %cst_322 = arith.constant dense<0.000000e+00> : vector<8x384xf32>
    %944 = tpu.matmul %910, %546, %cst_322 {dimension_numbers = #tpu.dot_dimension_numbers<[1], [0], [0], [1], [0, 0, 1, 1], [], []>} : vector<8x128xf32>, vector<128x384xf32>, vector<8x384xf32> -> vector<8x384xf32>
    %cst_323 = arith.constant dense<0.000000e+00> : vector<8x384xf32>
    %945 = tpu.matmul %939, %548, %cst_323 {dimension_numbers = #tpu.dot_dimension_numbers<[1], [0], [0], [1], [0, 0, 1, 1], [], []>} : vector<8x128xf32>, vector<128x384xf32>, vector<8x384xf32> -> vector<8x384xf32>
    %946 = vector.extract_strided_slice %942 {offsets = [0, 0], sizes = [8, 128], strides = [1, 1]} : vector<8x384xf32> to vector<8x128xf32>
    %947 = vector.extract_strided_slice %944 {offsets = [0, 0], sizes = [8, 128], strides = [1, 1]} : vector<8x384xf32> to vector<8x128xf32>
    %948 = arith.addf %946, %947 : vector<8x128xf32>
    %cst_324 = arith.constant 0.000000e+00 : f32
    %949 = vector.broadcast %cst_324 : f32 to vector<8x128xf32>
    %950 = arith.subf %949, %948 : vector<8x128xf32>
    %951 = math.exp %950 : vector<8x128xf32>
    %cst_325 = arith.constant 1.000000e+00 : f32
    %952 = vector.broadcast %cst_325 : f32 to vector<8x128xf32>
    %953 = arith.addf %952, %951 : vector<8x128xf32>
    %954 = tpu.reciprocal %953 {approx = true} : vector<8x128xf32> -> vector<8x128xf32>
    %955 = vector.extract_strided_slice %942 {offsets = [0, 128], sizes = [8, 128], strides = [1, 1]} : vector<8x384xf32> to vector<8x128xf32>
    %956 = vector.extract_strided_slice %944 {offsets = [0, 128], sizes = [8, 128], strides = [1, 1]} : vector<8x384xf32> to vector<8x128xf32>
    %957 = arith.addf %955, %956 : vector<8x128xf32>
    %cst_326 = arith.constant 0.000000e+00 : f32
    %958 = vector.broadcast %cst_326 : f32 to vector<8x128xf32>
    %959 = arith.subf %958, %957 : vector<8x128xf32>
    %960 = math.exp %959 : vector<8x128xf32>
    %cst_327 = arith.constant 1.000000e+00 : f32
    %961 = vector.broadcast %cst_327 : f32 to vector<8x128xf32>
    %962 = arith.addf %961, %960 : vector<8x128xf32>
    %963 = tpu.reciprocal %962 {approx = true} : vector<8x128xf32> -> vector<8x128xf32>
    %964 = vector.extract_strided_slice %942 {offsets = [0, 256], sizes = [8, 128], strides = [1, 1]} : vector<8x384xf32> to vector<8x128xf32>
    %965 = vector.extract_strided_slice %944 {offsets = [0, 256], sizes = [8, 128], strides = [1, 1]} : vector<8x384xf32> to vector<8x128xf32>
    %966 = arith.addf %965, %552 : vector<8x128xf32>
    %967 = arith.mulf %954, %966 : vector<8x128xf32>
    %968 = arith.addf %964, %967 : vector<8x128xf32>
    %969 = math.tanh %968 : vector<8x128xf32>
    %cst_328 = arith.constant 1.000000e+00 : f32
    %970 = vector.broadcast %cst_328 : f32 to vector<8x128xf32>
    %971 = arith.subf %970, %963 : vector<8x128xf32>
    %972 = arith.mulf %971, %969 : vector<8x128xf32>
    %973 = arith.mulf %963, %910 : vector<8x128xf32>
    %974 = arith.addf %972, %973 : vector<8x128xf32>
    %975 = vector.extract_strided_slice %943 {offsets = [0, 0], sizes = [8, 128], strides = [1, 1]} : vector<8x384xf32> to vector<8x128xf32>
    %976 = vector.extract_strided_slice %945 {offsets = [0, 0], sizes = [8, 128], strides = [1, 1]} : vector<8x384xf32> to vector<8x128xf32>
    %977 = arith.addf %975, %976 : vector<8x128xf32>
    %cst_329 = arith.constant 0.000000e+00 : f32
    %978 = vector.broadcast %cst_329 : f32 to vector<8x128xf32>
    %979 = arith.subf %978, %977 : vector<8x128xf32>
    %980 = math.exp %979 : vector<8x128xf32>
    %cst_330 = arith.constant 1.000000e+00 : f32
    %981 = vector.broadcast %cst_330 : f32 to vector<8x128xf32>
    %982 = arith.addf %981, %980 : vector<8x128xf32>
    %983 = tpu.reciprocal %982 {approx = true} : vector<8x128xf32> -> vector<8x128xf32>
    %984 = vector.extract_strided_slice %943 {offsets = [0, 128], sizes = [8, 128], strides = [1, 1]} : vector<8x384xf32> to vector<8x128xf32>
    %985 = vector.extract_strided_slice %945 {offsets = [0, 128], sizes = [8, 128], strides = [1, 1]} : vector<8x384xf32> to vector<8x128xf32>
    %986 = arith.addf %984, %985 : vector<8x128xf32>
    %cst_331 = arith.constant 0.000000e+00 : f32
    %987 = vector.broadcast %cst_331 : f32 to vector<8x128xf32>
    %988 = arith.subf %987, %986 : vector<8x128xf32>
    %989 = math.exp %988 : vector<8x128xf32>
    %cst_332 = arith.constant 1.000000e+00 : f32
    %990 = vector.broadcast %cst_332 : f32 to vector<8x128xf32>
    %991 = arith.addf %990, %989 : vector<8x128xf32>
    %992 = tpu.reciprocal %991 {approx = true} : vector<8x128xf32> -> vector<8x128xf32>
    %993 = vector.extract_strided_slice %943 {offsets = [0, 256], sizes = [8, 128], strides = [1, 1]} : vector<8x384xf32> to vector<8x128xf32>
    %994 = vector.extract_strided_slice %945 {offsets = [0, 256], sizes = [8, 128], strides = [1, 1]} : vector<8x384xf32> to vector<8x128xf32>
    %995 = arith.addf %994, %556 : vector<8x128xf32>
    %996 = arith.mulf %983, %995 : vector<8x128xf32>
    %997 = arith.addf %993, %996 : vector<8x128xf32>
    %998 = math.tanh %997 : vector<8x128xf32>
    %cst_333 = arith.constant 1.000000e+00 : f32
    %999 = vector.broadcast %cst_333 : f32 to vector<8x128xf32>
    %1000 = arith.subf %999, %992 : vector<8x128xf32>
    %1001 = arith.mulf %1000, %998 : vector<8x128xf32>
    %1002 = arith.mulf %992, %939 : vector<8x128xf32>
    %1003 = arith.addf %1001, %1002 : vector<8x128xf32>
    %c48_334 = arith.constant 48 : index
    %c0_335 = arith.constant 0 : index
    %1004 = vector.load %arg16[%c48_334, %c0_335] : memref<64x128xf32, #tpu.memory_space<vmem>>, vector<8x128xf32>
    tpu.vector_store %arg16[%c48_334, %c0_335], %974 {strides = array<i32>} : memref<64x128xf32, #tpu.memory_space<vmem>>, vector<8x128xf32>,
    %c8_336 = arith.constant 8 : index
    %c0_337 = arith.constant 0 : index
    %1005 = vector.load %arg17[%c8_336, %c0_337] : memref<64x128xf32, #tpu.memory_space<vmem>>, vector<8x128xf32>
    tpu.vector_store %arg17[%c8_336, %c0_337], %1003 {strides = array<i32>} : memref<64x128xf32, #tpu.memory_space<vmem>>, vector<8x128xf32>,
    %c56_338 = arith.constant 56 : index
    %c0_339 = arith.constant 0 : index
    %1006 = vector.load %arg13[%c56_338, %c0_339] : memref<64x768xf32, #tpu.memory_space<vmem>>, vector<8x384xf32>
    %c0_340 = arith.constant 0 : index
    %c384_341 = arith.constant 384 : index
    %1007 = vector.load %arg13[%c0_340, %c384_341] : memref<64x768xf32, #tpu.memory_space<vmem>>, vector<8x384xf32>
    %cst_342 = arith.constant dense<0.000000e+00> : vector<8x384xf32>
    %1008 = tpu.matmul %974, %546, %cst_342 {dimension_numbers = #tpu.dot_dimension_numbers<[1], [0], [0], [1], [0, 0, 1, 1], [], []>} : vector<8x128xf32>, vector<128x384xf32>, vector<8x384xf32> -> vector<8x384xf32>
    %cst_343 = arith.constant dense<0.000000e+00> : vector<8x384xf32>
    %1009 = tpu.matmul %1003, %548, %cst_343 {dimension_numbers = #tpu.dot_dimension_numbers<[1], [0], [0], [1], [0, 0, 1, 1], [], []>} : vector<8x128xf32>, vector<128x384xf32>, vector<8x384xf32> -> vector<8x384xf32>
    %1010 = vector.extract_strided_slice %1006 {offsets = [0, 0], sizes = [8, 128], strides = [1, 1]} : vector<8x384xf32> to vector<8x128xf32>
    %1011 = vector.extract_strided_slice %1008 {offsets = [0, 0], sizes = [8, 128], strides = [1, 1]} : vector<8x384xf32> to vector<8x128xf32>
    %1012 = arith.addf %1010, %1011 : vector<8x128xf32>
    %cst_344 = arith.constant 0.000000e+00 : f32
    %1013 = vector.broadcast %cst_344 : f32 to vector<8x128xf32>
    %1014 = arith.subf %1013, %1012 : vector<8x128xf32>
    %1015 = math.exp %1014 : vector<8x128xf32>
    %cst_345 = arith.constant 1.000000e+00 : f32
    %1016 = vector.broadcast %cst_345 : f32 to vector<8x128xf32>
    %1017 = arith.addf %1016, %1015 : vector<8x128xf32>
    %1018 = tpu.reciprocal %1017 {approx = true} : vector<8x128xf32> -> vector<8x128xf32>
    %1019 = vector.extract_strided_slice %1006 {offsets = [0, 128], sizes = [8, 128], strides = [1, 1]} : vector<8x384xf32> to vector<8x128xf32>
    %1020 = vector.extract_strided_slice %1008 {offsets = [0, 128], sizes = [8, 128], strides = [1, 1]} : vector<8x384xf32> to vector<8x128xf32>
    %1021 = arith.addf %1019, %1020 : vector<8x128xf32>
    %cst_346 = arith.constant 0.000000e+00 : f32
    %1022 = vector.broadcast %cst_346 : f32 to vector<8x128xf32>
    %1023 = arith.subf %1022, %1021 : vector<8x128xf32>
    %1024 = math.exp %1023 : vector<8x128xf32>
    %cst_347 = arith.constant 1.000000e+00 : f32
    %1025 = vector.broadcast %cst_347 : f32 to vector<8x128xf32>
    %1026 = arith.addf %1025, %1024 : vector<8x128xf32>
    %1027 = tpu.reciprocal %1026 {approx = true} : vector<8x128xf32> -> vector<8x128xf32>
    %1028 = vector.extract_strided_slice %1006 {offsets = [0, 256], sizes = [8, 128], strides = [1, 1]} : vector<8x384xf32> to vector<8x128xf32>
    %1029 = vector.extract_strided_slice %1008 {offsets = [0, 256], sizes = [8, 128], strides = [1, 1]} : vector<8x384xf32> to vector<8x128xf32>
    %1030 = arith.addf %1029, %552 : vector<8x128xf32>
    %1031 = arith.mulf %1018, %1030 : vector<8x128xf32>
    %1032 = arith.addf %1028, %1031 : vector<8x128xf32>
    %1033 = math.tanh %1032 : vector<8x128xf32>
    %cst_348 = arith.constant 1.000000e+00 : f32
    %1034 = vector.broadcast %cst_348 : f32 to vector<8x128xf32>
    %1035 = arith.subf %1034, %1027 : vector<8x128xf32>
    %1036 = arith.mulf %1035, %1033 : vector<8x128xf32>
    %1037 = arith.mulf %1027, %974 : vector<8x128xf32>
    %1038 = arith.addf %1036, %1037 : vector<8x128xf32>
    %1039 = vector.extract_strided_slice %1007 {offsets = [0, 0], sizes = [8, 128], strides = [1, 1]} : vector<8x384xf32> to vector<8x128xf32>
    %1040 = vector.extract_strided_slice %1009 {offsets = [0, 0], sizes = [8, 128], strides = [1, 1]} : vector<8x384xf32> to vector<8x128xf32>
    %1041 = arith.addf %1039, %1040 : vector<8x128xf32>
    %cst_349 = arith.constant 0.000000e+00 : f32
    %1042 = vector.broadcast %cst_349 : f32 to vector<8x128xf32>
    %1043 = arith.subf %1042, %1041 : vector<8x128xf32>
    %1044 = math.exp %1043 : vector<8x128xf32>
    %cst_350 = arith.constant 1.000000e+00 : f32
    %1045 = vector.broadcast %cst_350 : f32 to vector<8x128xf32>
    %1046 = arith.addf %1045, %1044 : vector<8x128xf32>
    %1047 = tpu.reciprocal %1046 {approx = true} : vector<8x128xf32> -> vector<8x128xf32>
    %1048 = vector.extract_strided_slice %1007 {offsets = [0, 128], sizes = [8, 128], strides = [1, 1]} : vector<8x384xf32> to vector<8x128xf32>
    %1049 = vector.extract_strided_slice %1009 {offsets = [0, 128], sizes = [8, 128], strides = [1, 1]} : vector<8x384xf32> to vector<8x128xf32>
    %1050 = arith.addf %1048, %1049 : vector<8x128xf32>
    %cst_351 = arith.constant 0.000000e+00 : f32
    %1051 = vector.broadcast %cst_351 : f32 to vector<8x128xf32>
    %1052 = arith.subf %1051, %1050 : vector<8x128xf32>
    %1053 = math.exp %1052 : vector<8x128xf32>
    %cst_352 = arith.constant 1.000000e+00 : f32
    %1054 = vector.broadcast %cst_352 : f32 to vector<8x128xf32>
    %1055 = arith.addf %1054, %1053 : vector<8x128xf32>
    %1056 = tpu.reciprocal %1055 {approx = true} : vector<8x128xf32> -> vector<8x128xf32>
    %1057 = vector.extract_strided_slice %1007 {offsets = [0, 256], sizes = [8, 128], strides = [1, 1]} : vector<8x384xf32> to vector<8x128xf32>
    %1058 = vector.extract_strided_slice %1009 {offsets = [0, 256], sizes = [8, 128], strides = [1, 1]} : vector<8x384xf32> to vector<8x128xf32>
    %1059 = arith.addf %1058, %556 : vector<8x128xf32>
    %1060 = arith.mulf %1047, %1059 : vector<8x128xf32>
    %1061 = arith.addf %1057, %1060 : vector<8x128xf32>
    %1062 = math.tanh %1061 : vector<8x128xf32>
    %cst_353 = arith.constant 1.000000e+00 : f32
    %1063 = vector.broadcast %cst_353 : f32 to vector<8x128xf32>
    %1064 = arith.subf %1063, %1056 : vector<8x128xf32>
    %1065 = arith.mulf %1064, %1062 : vector<8x128xf32>
    %1066 = arith.mulf %1056, %1003 : vector<8x128xf32>
    %1067 = arith.addf %1065, %1066 : vector<8x128xf32>
    %c56_354 = arith.constant 56 : index
    %c0_355 = arith.constant 0 : index
    %1068 = vector.load %arg16[%c56_354, %c0_355] : memref<64x128xf32, #tpu.memory_space<vmem>>, vector<8x128xf32>
    tpu.vector_store %arg16[%c56_354, %c0_355], %1038 {strides = array<i32>} : memref<64x128xf32, #tpu.memory_space<vmem>>, vector<8x128xf32>,
    %c0_356 = arith.constant 0 : index
    %c0_357 = arith.constant 0 : index
    %1069 = vector.load %arg17[%c0_356, %c0_357] : memref<64x128xf32, #tpu.memory_space<vmem>>, vector<8x128xf32>
    tpu.vector_store %arg17[%c0_356, %c0_357], %1067 {strides = array<i32>} : memref<64x128xf32, #tpu.memory_space<vmem>>, vector<8x128xf32>,
    %c0_358 = arith.constant 0 : index
    %c0_359 = arith.constant 0 : index
    %1070 = vector.load %arg16[%c0_358, %c0_359] : memref<64x128xf32, #tpu.memory_space<vmem>>, vector<64x128xf32>
    %1071 = arith.truncf %1070 : vector<64x128xf32> to vector<64x128xbf16>
    %c0_360 = arith.constant 0 : index
    %c0_361 = arith.constant 0 : index
    %c0_362 = arith.constant 0 : index
    %1072 = vector.load %arg10[%c0_360, %c0_361, %c0_362] : memref<2x128x1xbf16, #tpu.memory_space<vmem>>, vector<1x128x1xbf16>
    %1073 = vector.shape_cast %1072 : vector<1x128x1xbf16> to vector<128x1xbf16>
    %cst_363 = arith.constant dense<0.000000e+00> : vector<64x1xf32>
    %1074 = tpu.matmul %1071, %1073, %cst_363 {dimension_numbers = #tpu.dot_dimension_numbers<[1], [0], [0], [1], [0, 0, 1, 1], [], []>} : vector<64x128xbf16>, vector<128x1xbf16>, vector<64x1xf32> -> vector<64x1xf32>
    %c0_364 = arith.constant 0 : index
    %c0_365 = arith.constant 0 : index
    %1075 = vector.load %arg17[%c0_364, %c0_365] : memref<64x128xf32, #tpu.memory_space<vmem>>, vector<64x128xf32>
    %1076 = arith.truncf %1075 : vector<64x128xf32> to vector<64x128xbf16>
    %c1_366 = arith.constant 1 : index
    %c0_367 = arith.constant 0 : index
    %c0_368 = arith.constant 0 : index
    %1077 = vector.load %arg10[%c1_366, %c0_367, %c0_368] : memref<2x128x1xbf16, #tpu.memory_space<vmem>>, vector<1x128x1xbf16>
    %1078 = vector.shape_cast %1077 : vector<1x128x1xbf16> to vector<128x1xbf16>
    %cst_369 = arith.constant dense<0.000000e+00> : vector<64x1xf32>
    %1079 = tpu.matmul %1076, %1078, %cst_369 {dimension_numbers = #tpu.dot_dimension_numbers<[1], [0], [0], [1], [0, 0, 1, 1], [], []>} : vector<64x128xbf16>, vector<128x1xbf16>, vector<64x1xf32> -> vector<64x1xf32>
    %1080 = arith.addf %1074, %1079 : vector<64x1xf32>
    %c0_370 = arith.constant 0 : index
    %c0_371 = arith.constant 0 : index
    %1081 = vector.load %arg11[%c0_370, %c0_371] : memref<1x1xf32, #tpu.memory_space<vmem>>, vector<1x1xf32>
    %1082 = vector.broadcast %1081 : vector<1x1xf32> to vector<64x1xf32>
    %1083 = arith.addf %1080, %1082 : vector<64x1xf32>
    %c0_372 = arith.constant 0 : index
    %c0_373 = arith.constant 0 : index
    %1084 = vector.load %arg12[%c0_372, %c0_373] : memref<64x1xf32, #tpu.memory_space<vmem>>, vector<64x1xf32>
    tpu.vector_store %arg12[%c0_372, %c0_373], %1083 {strides = array<i32>} : memref<64x1xf32, #tpu.memory_space<vmem>>, vector<64x1xf32>,
    return
  }
}

</mosaic_0001>

<llo_original>
// kernel: sentiment_bigru_forward.1
$region0: #{sentiment_bigru_forward.1}
  #allocation0 [shape = 'u32[]', space=smem, size = 0x4, offset = 0x4, fixed_abs, tag = 'smem constant byte address 0x4 - core index']
  #allocation1 [shape = 'u32[144,128]{1,0:T(1,128)}', space=vmem, size = 0x12000, scoped, tag = 'internal scratch']
  #allocation2 [shape = 'f32[64,768]{1,0:T(8,128)}', space=vmem, size = 0x30000, scoped, tag = 'scratch operand']
  #allocation3 [shape = 'f32[64,128]{1,0:T(8,128)}', space=vmem, size = 0x8000, scoped, tag = 'scratch operand']
  #allocation4 [shape = 'f32[64,128]{1,0:T(8,128)}', space=vmem, size = 0x8000, scoped, tag = 'scratch operand']
  #allocation5 [shape = 'f32[64,128]{1,0:T(8,128)}', space=vmem, size = 0x8000, scoped, tag = 'scratch operand']
  #allocation6 [shape = 'f32[64,128]{1,0:T(8,128)}', space=vmem, size = 0x8000, scoped, tag = 'scratch operand']
  #allocation7 [shape = 'f32[1,1]{1,0:T(1,128)S(1)}', space=vmem, size = 0x200, scoped, tag = 'scoped memory for sentiment_bigru_forward.1']
  %s0 = inlined_call_operand.vmem [shape: bf16[64,32], index: 0, kind: input, shape index: {}]
  %s1 = inlined_call_operand.vmem [shape: bf16[32,768], index: 1, kind: input, shape index: {}]
  %s2 = inlined_call_operand.vmem [shape: f32[1,768], index: 2, kind: input, shape index: {}]
  %s3 = inlined_call_operand.hbm [shape: f32[2,128,384], index: 3, kind: input, shape index: {}]
  %s4 = inlined_call_operand.vmem [shape: f32[2,1,128], index: 4, kind: input, shape index: {}]
  %s5 = inlined_call_operand.vmem [shape: bf16[128,768], index: 5, kind: input, shape index: {}]
  %s6 = inlined_call_operand.hbm [shape: bf16[128,768], index: 6, kind: input, shape index: {}]
  %s7 = inlined_call_operand.vmem [shape: f32[1,768], index: 7, kind: input, shape index: {}]
  %s8 = inlined_call_operand.hbm [shape: f32[2,128,384], index: 8, kind: input, shape index: {}]
  %s9 = inlined_call_operand.vmem [shape: f32[2,1,128], index: 9, kind: input, shape index: {}]
  %s10 = inlined_call_operand.vmem [shape: bf16[2,128,1], index: 10, kind: input, shape index: {}]
  %s11 = inlined_call_operand.<no memory space> [shape: f32[1,1], index: 11, kind: input, shape index: {}]
  %s12 = inlined_call_operand.vmem [shape: f32[64,1], index: 12, kind: output, shape index: {}]
  %s13 = sld [smem:[#allocation0]]
  $region70: #{sentiment_bigru_forward.1} parent=0
    _
  %s15 = ssub.s32 1, %s13
  %s16 = scalar_select 0, %s15, %s13
  %v17 = vstv %s11
  %18 = vst [vmem:[#allocation7] sm:$0x1] %v17
  $region1: #{sentiment_bigru_forward.1} parent=0
    #allocation8 [shape = 'u8[393216]{0}', space=vmem, size = 0x60000, scoped, tag = 'input window, operand 3, single buffered']
    #allocation9 [shape = 's32[1]{0}', space=sflag, size = 0x4, scoped, tag = 'scoped memory for sentiment_bigru_forward.1']
    #allocation10 [shape = 'u8[196608]{0}', space=vmem, size = 0x30000, scoped, tag = 'input window, operand 6, single buffered']
    #allocation11 [shape = 's32[1]{0}', space=sflag, size = 0x4, scoped, tag = 'scoped memory for sentiment_bigru_forward.1']
    #allocation12 [shape = 'u8[393216]{0}', space=vmem, size = 0x60000, scoped, tag = 'input window, operand 8, single buffered']
    %19 = vsyncpa [#allocation9], 0
    %20 = vsyncpa [#allocation11], 0
    // Predicated region
    $region2: #{sentiment_bigru_forward.1} parent=1 // pred_check
      _
    $region3: #{sentiment_bigru_forward.1} parent=1 // pred_check_branch
      %22 = sbr.rel (0) target = $region5
    $region4: #{sentiment_bigru_forward.1} parent=1 // pred_region
      _
    $region5: #{sentiment_bigru_forward.1} parent=1 // pred_fallthru
      _
    // Predicated region
    $region6: #{sentiment_bigru_forward.1} parent=1 // pred_check
      _
    $region7: #{sentiment_bigru_forward.1} parent=1 // pred_check_branch
      %24 = sbr.rel (0) target = $region9
    $region8: #{sentiment_bigru_forward.1} parent=1 // pred_region
      _
    $region9: #{sentiment_bigru_forward.1} parent=1 // pred_fallthru
      _
    // Predicated region
    $region10: #{sentiment_bigru_forward.1} parent=1 // pred_check
      _
    $region11: #{sentiment_bigru_forward.1} parent=1 // pred_check_branch
      %26 = sbr.rel (0) target = $region13
    $region12: #{sentiment_bigru_forward.1} parent=1 // pred_region
      _
    $region13: #{sentiment_bigru_forward.1} parent=1 // pred_fallthru
      _
    // Predicated region
    $region14: #{sentiment_bigru_forward.1} parent=1 // pred_check
      _
    $region15: #{sentiment_bigru_forward.1} parent=1 // pred_check_branch
      %28 = sbr.rel (0) target = $region17
    $region16: #{sentiment_bigru_forward.1} parent=1 // pred_region
      %s30 = ssub.s32 12288, 12288
      %31 = vsyncadd [#allocation9], %s30
      %s32 = sshll.u32 [#allocation8], 4
      %s33 = int_to_ptr.vmem [resolvable:$true] %s32
      %38 = dma.hbm_to_vmem [thread:$0]  %s3, 12288, %s33, [#allocation9], 384, 384, 24
    $region17: #{sentiment_bigru_forward.1} parent=1 // pred_fallthru
      _
    // Predicated region
    $region18: #{sentiment_bigru_forward.1} parent=1 // pred_check
      _
    $region19: #{sentiment_bigru_forward.1} parent=1 // pred_check_branch
      %40 = sbr.rel (0) target = $region21
    $region20: #{sentiment_bigru_forward.1} parent=1 // pred_region
      _
    $region21: #{sentiment_bigru_forward.1} parent=1 // pred_fallthru
      _
    // Predicated region
    $region22: #{sentiment_bigru_forward.1} parent=1 // pred_check
      _
    $region23: #{sentiment_bigru_forward.1} parent=1 // pred_check_branch
      %42 = sbr.rel (0) target = $region25
    $region24: #{sentiment_bigru_forward.1} parent=1 // pred_region
      _
    $region25: #{sentiment_bigru_forward.1} parent=1 // pred_fallthru
      _
    // Predicated region
    $region26: #{sentiment_bigru_forward.1} parent=1 // pred_check
      _
    $region27: #{sentiment_bigru_forward.1} parent=1 // pred_check_branch
      %44 = sbr.rel (0) target = $region29
    $region28: #{sentiment_bigru_forward.1} parent=1 // pred_region
      %s46 = ssub.s32 6144, 6144
      %47 = vsyncadd [#allocation11], %s46
      %s48 = sshll.u32 [#allocation10], 4
      %s49 = int_to_ptr.vmem [resolvable:$true] %s48
      %54 = dma.hbm_to_vmem [thread:$0]  %s6, 6144, %s49, [#allocation11], 384, 384, 24
    $region29: #{sentiment_bigru_forward.1} parent=1 // pred_fallthru
      _
    // Predicated region
    $region30: #{sentiment_bigru_forward.1} parent=1 // pred_check
      _
    $region31: #{sentiment_bigru_forward.1} parent=1 // pred_check_branch
      %56 = sbr.rel (0) target = $region33
    $region32: #{sentiment_bigru_forward.1} parent=1 // pred_region
      _
    $region33: #{sentiment_bigru_forward.1} parent=1 // pred_fallthru
      _
    // Predicated region
    $region34: #{sentiment_bigru_forward.1} parent=1 // pred_check
      _
    $region35: #{sentiment_bigru_forward.1} parent=1 // pred_check_branch
      %58 = sbr.rel (0) target = $region37
    $region36: #{sentiment_bigru_forward.1} parent=1 // pred_region
      %s60 = ssub.s32 12288, 12288
      %61 = vsyncadd [#allocation11], %s60
      %s62 = sshll.u32 [#allocation12], 4
      %s63 = int_to_ptr.vmem [resolvable:$true] %s62
      %68 = dma.hbm_to_vmem [thread:$0]  %s8, 12288, %s63, [#allocation11], 384, 384, 24
    $region37: #{sentiment_bigru_forward.1} parent=1 // pred_fallthru
      _
    // Predicated region
    $region38: #{sentiment_bigru_forward.1} parent=1 // pred_check
      _
    $region39: #{sentiment_bigru_forward.1} parent=1 // pred_check_branch
      %70 = sbr.rel (0) target = $region41
    $region40: #{sentiment_bigru_forward.1} parent=1 // pred_region
      _
    $region41: #{sentiment_bigru_forward.1} parent=1 // pred_fallthru
      _
    // Predicated region
    $region42: #{sentiment_bigru_forward.1} parent=1 // pred_check
      _
    $region43: #{sentiment_bigru_forward.1} parent=1 // pred_check_branch
      %72 = sbr.rel (0) target = $region45
    $region44: #{sentiment_bigru_forward.1} parent=1 // pred_region
      _
    $region45: #{sentiment_bigru_forward.1} parent=1 // pred_fallthru
      _
    // Predicated region
    $region46: #{sentiment_bigru_forward.1} parent=1 // pred_check
      _
    $region47: #{sentiment_bigru_forward.1} parent=1 // pred_check_branch
      %74 = sbr.rel (0) target = $region49
    $region48: #{sentiment_bigru_forward.1} parent=1 // pred_region
      _
    $region49: #{sentiment_bigru_forward.1} parent=1 // pred_fallthru
      _
    // Predicated region
    $region50: #{sentiment_bigru_forward.1} parent=1 // pred_check
      _
    $region51: #{sentiment_bigru_forward.1} parent=1 // pred_check_branch
      %76 = sbr.rel (0) target = $region53
    $region52: #{sentiment_bigru_forward.1} parent=1 // pred_region
      %77 = dma.done [#allocation9], 12288
    $region53: #{sentiment_bigru_forward.1} parent=1 // pred_fallthru
      _
    // Predicated region
    $region54: #{sentiment_bigru_forward.1} parent=1 // pred_check
      _
    $region55: #{sentiment_bigru_forward.1} parent=1 // pred_check_branch
      %79 = sbr.rel (0) target = $region57
    $region56: #{sentiment_bigru_forward.1} parent=1 // pred_region
      %80 = dma.done [#allocation11], 6144
    $region57: #{sentiment_bigru_forward.1} parent=1 // pred_fallthru
      _
    // Predicated region
    $region58: #{sentiment_bigru_forward.1} parent=1 // pred_check
      _
    $region59: #{sentiment_bigru_forward.1} parent=1 // pred_check_branch
      %82 = sbr.rel (0) target = $region61
    $region60: #{sentiment_bigru_forward.1} parent=1 // pred_region
      %83 = dma.done [#allocation11], 12288
    $region61: #{sentiment_bigru_forward.1} parent=1 // pred_fallthru
      _
    %v85 = vld [vmem:[%s0] sm:$0xf]
    %v86 = vld [vmem:[%s0 + $0x4] sm:$0xf]
    %v87 = vld [vmem:[%s0 + $0x8] sm:$0xf]
    %v88 = vld [vmem:[%s0 + $0xc] sm:$0xf]
    %v89 = vld [vmem:[%s0 + $0x10] sm:$0xf]
    %v90 = vld [vmem:[%s0 + $0x14] sm:$0xf]
    %v91 = vld [vmem:[%s0 + $0x18] sm:$0xf]
    %v92 = vld [vmem:[%s0 + $0x1c] sm:$0xf]
    %v93 = vld [vmem:[%s1] sm:$0xff]
    %v94 = vld [vmem:[%s1 + $0x8] sm:$0xff]
    %v95 = vld [vmem:[%s1 + $0x10] sm:$0xff]
    %v96 = vld [vmem:[%s1 + $0x18] sm:$0xff]
    %v97 = vld [vmem:[%s1 + $0x20] sm:$0xff]
    %v98 = vld [vmem:[%s1 + $0x28] sm:$0xff]
    %v99 = vld [vmem:[%s1 + $0x30] sm:$0xff]
    %v100 = vld [vmem:[%s1 + $0x38] sm:$0xff]
    %v101 = vld [vmem:[%s1 + $0x40] sm:$0xff]
    %v102 = vld [vmem:[%s1 + $0x48] sm:$0xff]
    %v103 = vld [vmem:[%s1 + $0x50] sm:$0xff]
    %v104 = vld [vmem:[%s1 + $0x58] sm:$0xff]
    %v105 = vld [vmem:[%s2] sm:$0x3f]
    %v107 = vlaneseq
    %v108 = vshrl.u32 %v107, 7
    %v109 = vsub.s32 0, %v108
    %v110 = vrot.slane %v105, %v109
    %v111 = vlaneseq
    %v112 = vshrl.u32 %v111, 7
    %v113 = vsub.s32 1, %v112
    %v114 = vrot.slane %v105, %v113
    %v115 = vlaneseq
    %v116 = vshrl.u32 %v115, 7
    %v117 = vsub.s32 2, %v116
    %v118 = vrot.slane %v105, %v117
    %v119 = vlaneseq
    %v120 = vshrl.u32 %v119, 7
    %v121 = vsub.s32 3, %v120
    %v122 = vrot.slane %v105, %v121
    %v123 = vlaneseq
    %v124 = vshrl.u32 %v123, 7
    %v125 = vsub.s32 4, %v124
    %v126 = vrot.slane %v105, %v125
    %v127 = vlaneseq
    %v128 = vshrl.u32 %v127, 7
    %v129 = vsub.s32 5, %v128
    %v130 = vrot.slane %v105, %v129
    %v145 = vunpack.c.l.b16 %v85
    %v146 = vunpack.c.l.b16 %v86
    %v147 = vunpack.c.l.b16 %v87
    %v148 = vunpack.c.l.b16 %v88
    %v149 = vunpack.c.l.b16 %v89
    %v150 = vunpack.c.l.b16 %v90
    %v151 = vunpack.c.l.b16 %v91
    %v152 = vunpack.c.l.b16 %v92
    %v153 = vpack.c.b16 %v146, %v145
    %v154 = vpack.c.b16 %v148, %v147
    %v155 = vpack.c.b16 %v150, %v149
    %v156 = vpack.c.b16 %v152, %v151
    %v169 = vunpack.c.l.b16 %v93
    %v170 = vunpack.c.h.b16 %v93
    %v171 = vunpack.c.l.b16 %v94
    %v172 = vunpack.c.h.b16 %v94
    %v173 = vunpack.c.l.b16 %v95
    %v174 = vunpack.c.h.b16 %v95
    %v175 = vunpack.c.l.b16 %v96
    %v176 = vunpack.c.h.b16 %v96
    %v177 = vunpack.c.l.b16 %v97
    %v178 = vunpack.c.h.b16 %v97
    %v179 = vunpack.c.l.b16 %v98
    %v180 = vunpack.c.h.b16 %v98
    %v181 = vunpack.c.l.b16 %v99
    %v182 = vunpack.c.h.b16 %v99
    %v183 = vunpack.c.l.b16 %v100
    %v184 = vunpack.c.h.b16 %v100
    %v185 = vunpack.c.l.b16 %v101
    %v186 = vunpack.c.h.b16 %v101
    %v187 = vunpack.c.l.b16 %v102
    %v188 = vunpack.c.h.b16 %v102
    %v189 = vunpack.c.l.b16 %v103
    %v190 = vunpack.c.h.b16 %v103
    %v191 = vunpack.c.l.b16 %v104
    %v192 = vunpack.c.h.b16 %v104
    %v193 = vpack.c.b16 %v175, %v169
    %v194 = vpack.c.b16 %v176, %v170
    %v195 = vpack.c.b16 %v177, %v171
    %v196 = vpack.c.b16 %v178, %v172
    %v197 = vpack.c.b16 %v179, %v173
    %v198 = vpack.c.b16 %v180, %v174
    %v199 = vpack.c.b16 %v187, %v181
    %v200 = vpack.c.b16 %v188, %v182
    %v201 = vpack.c.b16 %v189, %v183
    %v202 = vpack.c.b16 %v190, %v184
    %v203 = vpack.c.b16 %v191, %v185
    %v204 = vpack.c.b16 %v192, %v186
    %vm217 = vcmask 261120
    %v219 = vsel %vm217, %v153, 0
    %v222 = vsel %vm217, %v154, 0
    %v225 = vsel %vm217, %v155, 0
    %v228 = vsel %vm217, %v156, 0
    %230 = vmatprep.subr.bf16.mxu0 %v194
    %231 = vmatpush1.bf16.msra.mxu0 %v193
    %232 = vmatprep.subr.bf16.mxu0 %v200
    %233 = vmatpush1.bf16.msra.mxu0 %v199
    %234 = vmatprep.subr.bf16.mxu0 0
    %235 = vmatpush1.bf16.msra.mxu0 0
    %236 = vmatprep.subr.bf16.mxu0 0
    %237 = vmatpush1.bf16.msra.mxu0 0
    %238 = vmatprep.subr.bf16.mxu0 0
    %239 = vmatpush1.bf16.msra.mxu0 0
    %240 = vmatprep.subr.bf16.mxu0 0
    %241 = vmatpush1.bf16.msra.mxu0 0
    %242 = vmatprep.subr.bf16.mxu0 0
    %243 = vmatpush1.bf16.msra.mxu0 0
    %244 = vmatprep.subr.bf16.mxu0 0
    %245 = vmatpush1.bf16.msra.mxu0 0
    %246 = vmatprep.subr.bf16.mxu0 0
    %247 = vmatpush1.bf16.msra.mxu0 0
    %248 = vmatprep.subr.bf16.mxu0 0
    %249 = vmatpush1.bf16.msra.mxu0 0
    %250 = vmatprep.subr.bf16.mxu0 0
    %251 = vmatpush1.bf16.msra.mxu0 0
    %252 = vmatprep.subr.bf16.mxu0 0
    %253 = vmatpush1.bf16.msra.mxu0 0
    %254 = vmatprep.subr.bf16.mxu0 0
    %255 = vmatpush1.bf16.msra.mxu0 0
    %256 = vmatprep.subr.bf16.mxu0 0
    %257 = vmatpush1.bf16.msra.mxu0 0
    %258 = vmatprep.subr.bf16.mxu0 0
    %259 = vmatpush1.bf16.msra.mxu0 0
    %260 = vmatprep.subr.bf16.mxu0 0
    %261 = vmatpush1.bf16.msra.mxu0 0
    %262 = vmatprep.mubr.bf16.mxu0 0
    %263 = vmatmul.mubr.bf16.gmra.mrb[0].mxu0 %v219
    %v264 = vpop.f32.mrb[0].mxu0
    %v265 = vadd.f32 %v110, %v264
    %v266 = vpop.f32.mrb[0].mxu0
    %v267 = vadd.f32 %v114, %v266
    %v268 = vpop.f32.mrb[0].mxu0
    %v269 = vadd.f32 %v110, %v268
    %v270 = vpop.f32.mrb[0].mxu0
    %v271 = vadd.f32 %v114, %v270
    %272 = vmatprep.mubr.bf16.mxu0 0
    %273 = vmatmul.mubr.bf16.gmra.mrb[0].mxu0 %v222
    %v274 = vpop.f32.mrb[0].mxu0
    %v275 = vadd.f32 %v110, %v274
    %v276 = vpop.f32.mrb[0].mxu0
    %v277 = vadd.f32 %v114, %v276
    %v278 = vpop.f32.mrb[0].mxu0
    %v279 = vadd.f32 %v110, %v278
    %v280 = vpop.f32.mrb[0].mxu0
    %v281 = vadd.f32 %v114, %v280
    %282 = vmatprep.mubr.bf16.mxu0 0
    %283 = vmatmul.mubr.bf16.gmra.mrb[0].mxu0 %v225
    %v284 = vpop.f32.mrb[0].mxu0
    %v285 = vadd.f32 %v110, %v284
    %v286 = vpop.f32.mrb[0].mxu0
    %v287 = vadd.f32 %v114, %v286
    %v288 = vpop.f32.mrb[0].mxu0
    %v289 = vadd.f32 %v110, %v288
    %v290 = vpop.f32.mrb[0].mxu0
    %v291 = vadd.f32 %v114, %v290
    %292 = vmatprep.mubr.bf16.mxu0 0
    %293 = vmatmul.mubr.bf16.gmra.mrb[0].mxu0 %v228
    %v294 = vpop.f32.mrb[0].mxu0
    %v295 = vadd.f32 %v110, %v294
    %v296 = vpop.f32.mrb[0].mxu0
    %v297 = vadd.f32 %v114, %v296
    %v298 = vpop.f32.mrb[0].mxu0
    %v299 = vadd.f32 %v110, %v298
    %v300 = vpop.f32.mrb[0].mxu0
    %v301 = vadd.f32 %v114, %v300
    %302 = vdwg.mxu0
    %303 = vmatprep.subr.bf16.mxu0 %v196
    %304 = vmatpush1.bf16.msra.mxu0 %v195
    %305 = vmatprep.subr.bf16.mxu0 %v202
    %306 = vmatpush1.bf16.msra.mxu0 %v201
    %307 = vmatprep.subr.bf16.mxu0 0
    %308 = vmatpush1.bf16.msra.mxu0 0
    %309 = vmatprep.subr.bf16.mxu0 0
    %310 = vmatpush1.bf16.msra.mxu0 0
    %311 = vmatprep.subr.bf16.mxu0 0
    %312 = vmatpush1.bf16.msra.mxu0 0
    %313 = vmatprep.subr.bf16.mxu0 0
    %314 = vmatpush1.bf16.msra.mxu0 0
    %315 = vmatprep.subr.bf16.mxu0 0
    %316 = vmatpush1.bf16.msra.mxu0 0
    %317 = vmatprep.subr.bf16.mxu0 0
    %318 = vmatpush1.bf16.msra.mxu0 0
    %319 = vmatprep.subr.bf16.mxu0 0
    %320 = vmatpush1.bf16.msra.mxu0 0
    %321 = vmatprep.subr.bf16.mxu0 0
    %322 = vmatpush1.bf16.msra.mxu0 0
    %323 = vmatprep.subr.bf16.mxu0 0
    %324 = vmatpush1.bf16.msra.mxu0 0
    %325 = vmatprep.subr.bf16.mxu0 0
    %326 = vmatpush1.bf16.msra.mxu0 0
    %327 = vmatprep.subr.bf16.mxu0 0
    %328 = vmatpush1.bf16.msra.mxu0 0
    %329 = vmatprep.subr.bf16.mxu0 0
    %330 = vmatpush1.bf16.msra.mxu0 0
    %331 = vmatprep.subr.bf16.mxu0 0
    %332 = vmatpush1.bf16.msra.mxu0 0
    %333 = vmatprep.subr.bf16.mxu0 0
    %334 = vmatpush1.bf16.msra.mxu0 0
    %335 = vmatprep.mubr.bf16.mxu0 0
    %336 = vmatmul.mubr.bf16.gmra.mrb[0].mxu0 %v219
    %v337 = vpop.f32.mrb[0].mxu0
    %v338 = vadd.f32 %v118, %v337
    %v339 = vpop.f32.mrb[0].mxu0
    %v340 = vadd.f32 %v122, %v339
    %v341 = vpop.f32.mrb[0].mxu0
    %v342 = vadd.f32 %v118, %v341
    %v343 = vpop.f32.mrb[0].mxu0
    %v344 = vadd.f32 %v122, %v343
    %345 = vmatprep.mubr.bf16.mxu0 0
    %346 = vmatmul.mubr.bf16.gmra.mrb[0].mxu0 %v222
    %v347 = vpop.f32.mrb[0].mxu0
    %v348 = vadd.f32 %v118, %v347
    %v349 = vpop.f32.mrb[0].mxu0
    %v350 = vadd.f32 %v122, %v349
    %v351 = vpop.f32.mrb[0].mxu0
    %v352 = vadd.f32 %v118, %v351
    %v353 = vpop.f32.mrb[0].mxu0
    %v354 = vadd.f32 %v122, %v353
    %355 = vmatprep.mubr.bf16.mxu0 0
    %356 = vmatmul.mubr.bf16.gmra.mrb[0].mxu0 %v225
    %v357 = vpop.f32.mrb[0].mxu0
    %v358 = vadd.f32 %v118, %v357
    %v359 = vpop.f32.mrb[0].mxu0
    %v360 = vadd.f32 %v122, %v359
    %v361 = vpop.f32.mrb[0].mxu0
    %v362 = vadd.f32 %v118, %v361
    %v363 = vpop.f32.mrb[0].mxu0
    %v364 = vadd.f32 %v122, %v363
    %365 = vmatprep.mubr.bf16.mxu0 0
    %366 = vmatmul.mubr.bf16.gmra.mrb[0].mxu0 %v228
    %v367 = vpop.f32.mrb[0].mxu0
    %v368 = vadd.f32 %v118, %v367
    %v369 = vpop.f32.mrb[0].mxu0
    %v370 = vadd.f32 %v122, %v369
    %v371 = vpop.f32.mrb[0].mxu0
    %v372 = vadd.f32 %v118, %v371
    %v373 = vpop.f32.mrb[0].mxu0
    %v374 = vadd.f32 %v122, %v373
    %375 = vdwg.mxu0
    %376 = vmatprep.subr.bf16.mxu0 %v198
    %377 = vmatpush1.bf16.msra.mxu0 %v197
    %378 = vmatprep.subr.bf16.mxu0 %v204
    %379 = vmatpush1.bf16.msra.mxu0 %v203
    %380 = vmatprep.subr.bf16.mxu0 0
    %381 = vmatpush1.bf16.msra.mxu0 0
    %382 = vmatprep.subr.bf16.mxu0 0
    %383 = vmatpush1.bf16.msra.mxu0 0
    %384 = vmatprep.subr.bf16.mxu0 0
    %385 = vmatpush1.bf16.msra.mxu0 0
    %386 = vmatprep.subr.bf16.mxu0 0
    %387 = vmatpush1.bf16.msra.mxu0 0
    %388 = vmatprep.subr.bf16.mxu0 0
    %389 = vmatpush1.bf16.msra.mxu0 0
    %390 = vmatprep.subr.bf16.mxu0 0
    %391 = vmatpush1.bf16.msra.mxu0 0
    %392 = vmatprep.subr.bf16.mxu0 0
    %393 = vmatpush1.bf16.msra.mxu0 0
    %394 = vmatprep.subr.bf16.mxu0 0
    %395 = vmatpush1.bf16.msra.mxu0 0
    %396 = vmatprep.subr.bf16.mxu0 0
    %397 = vmatpush1.bf16.msra.mxu0 0
    %398 = vmatprep.subr.bf16.mxu0 0
    %399 = vmatpush1.bf16.msra.mxu0 0
    %400 = vmatprep.subr.bf16.mxu0 0
    %401 = vmatpush1.bf16.msra.mxu0 0
    %402 = vmatprep.subr.bf16.mxu0 0
    %403 = vmatpush1.bf16.msra.mxu0 0
    %404 = vmatprep.subr.bf16.mxu0 0
    %405 = vmatpush1.bf16.msra.mxu0 0
    %406 = vmatprep.subr.bf16.mxu0 0
    %407 = vmatpush1.bf16.msra.mxu0 0
    %408 = vmatprep.mubr.bf16.mxu0 0
    %409 = vmatmul.mubr.bf16.gmra.mrb[0].mxu0 %v219
    %v410 = vpop.f32.mrb[0].mxu0
    %v411 = vadd.f32 %v126, %v410
    %v412 = vpop.f32.mrb[0].mxu0
    %v413 = vadd.f32 %v130, %v412
    %v414 = vpop.f32.mrb[0].mxu0
    %v415 = vadd.f32 %v126, %v414
    %v416 = vpop.f32.mrb[0].mxu0
    %v417 = vadd.f32 %v130, %v416
    %418 = vmatprep.mubr.bf16.mxu0 0
    %419 = vmatmul.mubr.bf16.gmra.mrb[0].mxu0 %v222
    %v420 = vpop.f32.mrb[0].mxu0
    %v421 = vadd.f32 %v126, %v420
    %v422 = vpop.f32.mrb[0].mxu0
    %v423 = vadd.f32 %v130, %v422
    %v424 = vpop.f32.mrb[0].mxu0
    %v425 = vadd.f32 %v126, %v424
    %v426 = vpop.f32.mrb[0].mxu0
    %v427 = vadd.f32 %v130, %v426
    %428 = vmatprep.mubr.bf16.mxu0 0
    %429 = vmatmul.mubr.bf16.gmra.mrb[0].mxu0 %v225
    %v430 = vpop.f32.mrb[0].mxu0
    %v431 = vadd.f32 %v126, %v430
    %v432 = vpop.f32.mrb[0].mxu0
    %v433 = vadd.f32 %v130, %v432
    %v434 = vpop.f32.mrb[0].mxu0
    %v435 = vadd.f32 %v126, %v434
    %v436 = vpop.f32.mrb[0].mxu0
    %v437 = vadd.f32 %v130, %v436
    %438 = vmatprep.mubr.bf16.mxu0 0
    %439 = vmatmul.mubr.bf16.gmra.mrb[0].mxu0 %v228
    %v440 = vpop.f32.mrb[0].mxu0
    %v441 = vadd.f32 %v126, %v440
    %v442 = vpop.f32.mrb[0].mxu0
    %v443 = vadd.f32 %v130, %v442
    %v444 = vpop.f32.mrb[0].mxu0
    %v445 = vadd.f32 %v126, %v444
    %v446 = vpop.f32.mrb[0].mxu0
    %v447 = vadd.f32 %v130, %v446
    %448 = vdwg.mxu0
    %449 = vst [vmem:[#allocation2] sm:$0xff] %v265
    %450 = vst [vmem:[#allocation2 + $0x8] sm:$0xff] %v267
    %451 = vst [vmem:[#allocation2 + $0x10] sm:$0xff] %v338
    %452 = vst [vmem:[#allocation2 + $0x18] sm:$0xff] %v340
    %453 = vst [vmem:[#allocation2 + $0x20] sm:$0xff] %v411
    %454 = vst [vmem:[#allocation2 + $0x28] sm:$0xff] %v413
    %455 = vst [vmem:[#allocation2 + $0x30] sm:$0xff] %v269
    %456 = vst [vmem:[#allocation2 + $0x38] sm:$0xff] %v271
    %457 = vst [vmem:[#allocation2 + $0x40] sm:$0xff] %v342
    %458 = vst [vmem:[#allocation2 + $0x48] sm:$0xff] %v344
    %459 = vst [vmem:[#allocation2 + $0x50] sm:$0xff] %v415
    %460 = vst [vmem:[#allocation2 + $0x58] sm:$0xff] %v417
    %461 = vst [vmem:[#allocation2 + $0x60] sm:$0xff] %v275
    %462 = vst [vmem:[#allocation2 + $0x68] sm:$0xff] %v277
    %463 = vst [vmem:[#allocation2 + $0x70] sm:$0xff] %v348
    %464 = vst [vmem:[#allocation2 + $0x78] sm:$0xff] %v350
    %465 = vst [vmem:[#allocation2 + $0x80] sm:$0xff] %v421
    %466 = vst [vmem:[#allocation2 + $0x88] sm:$0xff] %v423
    %467 = vst [vmem:[#allocation2 + $0x90] sm:$0xff] %v279
    %468 = vst [vmem:[#allocation2 + $0x98] sm:$0xff] %v281
    %469 = vst [vmem:[#allocation2 + $0xa0] sm:$0xff] %v352
    %470 = vst [vmem:[#allocation2 + $0xa8] sm:$0xff] %v354
    %471 = vst [vmem:[#allocation2 + $0xb0] sm:$0xff] %v425
    %472 = vst [vmem:[#allocation2 + $0xb8] sm:$0xff] %v427
    %473 = vst [vmem:[#allocation2 + $0xc0] sm:$0xff] %v285
    %474 = vst [vmem:[#allocation2 + $0xc8] sm:$0xff] %v287
    %475 = vst [vmem:[#allocation2 + $0xd0] sm:$0xff] %v358
    %476 = vst [vmem:[#allocation2 + $0xd8] sm:$0xff] %v360
    %477 = vst [vmem:[#allocation2 + $0xe0] sm:$0xff] %v431
    %478 = vst [vmem:[#allocation2 + $0xe8] sm:$0xff] %v433
    %479 = vst [vmem:[#allocation2 + $0xf0] sm:$0xff] %v289
    %480 = vst [vmem:[#allocation2 + $0xf8] sm:$0xff] %v291
    %481 = vst [vmem:[#allocation2 + $0x100] sm:$0xff] %v362
    %482 = vst [vmem:[#allocation2 + $0x108] sm:$0xff] %v364
    %483 = vst [vmem:[#allocation2 + $0x110] sm:$0xff] %v435
    %484 = vst [vmem:[#allocation2 + $0x118] sm:$0xff] %v437
    %485 = vst [vmem:[#allocation2 + $0x120] sm:$0xff] %v295
    %486 = vst [vmem:[#allocation2 + $0x128] sm:$0xff] %v297
    %487 = vst [vmem:[#allocation2 + $0x130] sm:$0xff] %v368
    %488 = vst [vmem:[#allocation2 + $0x138] sm:$0xff] %v370
    %489 = vst [vmem:[#allocation2 + $0x140] sm:$0xff] %v441
    %490 = vst [vmem:[#allocation2 + $0x148] sm:$0xff] %v443
    %491 = vst [vmem:[#allocation2 + $0x150] sm:$0xff] %v299
    %492 = vst [vmem:[#allocation2 + $0x158] sm:$0xff] %v301
    %493 = vst [vmem:[#allocation2 + $0x160] sm:$0xff] %v372
    %494 = vst [vmem:[#allocation2 + $0x168] sm:$0xff] %v374
    %495 = vst [vmem:[#allocation2 + $0x170] sm:$0xff] %v445
    %496 = vst [vmem:[#allocation2 + $0x178] sm:$0xff] %v447
    %v497 = vld [vmem:[#allocation8] sm:$0xff]
    %v498 = vld [vmem:[#allocation8 + $0x8] sm:$0xff]
    %v499 = vld [vmem:[#allocation8 + $0x10] sm:$0xff]
    %v500 = vld [vmem:[#allocation8 + $0x18] sm:$0xff]
    %v501 = vld [vmem:[#allocation8 + $0x20] sm:$0xff]
    %v502 = vld [vmem:[#allocation8 + $0x28] sm:$0xff]
    %v503 = vld [vmem:[#allocation8 + $0x30] sm:$0xff]
    %v504 = vld [vmem:[#allocation8 + $0x38] sm:$0xff]
    %v505 = vld [vmem:[#allocation8 + $0x40] sm:$0xff]
    %v506 = vld [vmem:[#allocation8 + $0x48] sm:$0xff]
    %v507 = vld [vmem:[#allocation8 + $0x50] sm:$0xff]
    %v508 = vld [vmem:[#allocation8 + $0x58] sm:$0xff]
    %v509 = vld [vmem:[#allocation8 + $0x60] sm:$0xff]
    %v510 = vld [vmem:[#allocation8 + $0x68] sm:$0xff]
    %v511 = vld [vmem:[#allocation8 + $0x70] sm:$0xff]
    %v512 = vld [vmem:[#allocation8 + $0x78] sm:$0xff]
    %v513 = vld [vmem:[#allocation8 + $0x80] sm:$0xff]
    %v514 = vld [vmem:[#allocation8 + $0x88] sm:$0xff]
    %v515 = vld [vmem:[#allocation8 + $0x90] sm:$0xff]
    %v516 = vld [vmem:[#allocation8 + $0x98] sm:$0xff]
    %v517 = vld [vmem:[#allocation8 + $0xa0] sm:$0xff]
    %v518 = vld [vmem:[#allocation8 + $0xa8] sm:$0xff]
    %v519 = vld [vmem:[#allocation8 + $0xb0] sm:$0xff]
    %v520 = vld [vmem:[#allocation8 + $0xb8] sm:$0xff]
    %v521 = vld [vmem:[#allocation8 + $0xc0] sm:$0xff]
    %v522 = vld [vmem:[#allocation8 + $0xc8] sm:$0xff]
    %v523 = vld [vmem:[#allocation8 + $0xd0] sm:$0xff]
    %v524 = vld [vmem:[#allocation8 + $0xd8] sm:$0xff]
    %v525 = vld [vmem:[#allocation8 + $0xe0] sm:$0xff]
    %v526 = vld [vmem:[#allocation8 + $0xe8] sm:$0xff]
    %v527 = vld [vmem:[#allocation8 + $0xf0] sm:$0xff]
    %v528 = vld [vmem:[#allocation8 + $0xf8] sm:$0xff]
    %v529 = vld [vmem:[#allocation8 + $0x100] sm:$0xff]
    %v530 = vld [vmem:[#allocation8 + $0x108] sm:$0xff]
    %v531 = vld [vmem:[#allocation8 + $0x110] sm:$0xff]
    %v532 = vld [vmem:[#allocation8 + $0x118] sm:$0xff]
    %v533 = vld [vmem:[#allocation8 + $0x120] sm:$0xff]
    %v534 = vld [vmem:[#allocation8 + $0x128] sm:$0xff]
    %v535 = vld [vmem:[#allocation8 + $0x130] sm:$0xff]
    %v536 = vld [vmem:[#allocation8 + $0x138] sm:$0xff]
    %v537 = vld [vmem:[#allocation8 + $0x140] sm:$0xff]
    %v538 = vld [vmem:[#allocation8 + $0x148] sm:$0xff]
    %v539 = vld [vmem:[#allocation8 + $0x150] sm:$0xff]
    %v540 = vld [vmem:[#allocation8 + $0x158] sm:$0xff]
    %v541 = vld [vmem:[#allocation8 + $0x160] sm:$0xff]
    %v542 = vld [vmem:[#allocation8 + $0x168] sm:$0xff]
    %v543 = vld [vmem:[#allocation8 + $0x170] sm:$0xff]
    %v544 = vld [vmem:[#allocation8 + $0x178] sm:$0xff]
    %s545 = scalar_lea.vmem [#allocation8], 384
    %v546 = vld [vmem:[%s545] sm:$0xff]
    %v547 = vld [vmem:[%s545 + $0x8] sm:$0xff]
    %v548 = vld [vmem:[%s545 + $0x10] sm:$0xff]
    %v549 = vld [vmem:[%s545 + $0x18] sm:$0xff]
    %v550 = vld [vmem:[%s545 + $0x20] sm:$0xff]
    %v551 = vld [vmem:[%s545 + $0x28] sm:$0xff]
    %v552 = vld [vmem:[%s545 + $0x30] sm:$0xff]
    %v553 = vld [vmem:[%s545 + $0x38] sm:$0xff]
    %v554 = vld [vmem:[%s545 + $0x40] sm:$0xff]
    %v555 = vld [vmem:[%s545 + $0x48] sm:$0xff]
    %v556 = vld [vmem:[%s545 + $0x50] sm:$0xff]
    %v557 = vld [vmem:[%s545 + $0x58] sm:$0xff]
    %v558 = vld [vmem:[%s545 + $0x60] sm:$0xff]
    %v559 = vld [vmem:[%s545 + $0x68] sm:$0xff]
    %v560 = vld [vmem:[%s545 + $0x70] sm:$0xff]
    %v561 = vld [vmem:[%s545 + $0x78] sm:$0xff]
    %v562 = vld [vmem:[%s545 + $0x80] sm:$0xff]
    %v563 = vld [vmem:[%s545 + $0x88] sm:$0xff]
    %v564 = vld [vmem:[%s545 + $0x90] sm:$0xff]
    %v565 = vld [vmem:[%s545 + $0x98] sm:$0xff]
    %v566 = vld [vmem:[%s545 + $0xa0] sm:$0xff]
    %v567 = vld [vmem:[%s545 + $0xa8] sm:$0xff]
    %v568 = vld [vmem:[%s545 + $0xb0] sm:$0xff]
    %v569 = vld [vmem:[%s545 + $0xb8] sm:$0xff]
    %v570 = vld [vmem:[%s545 + $0xc0] sm:$0xff]
    %v571 = vld [vmem:[%s545 + $0xc8] sm:$0xff]
    %v572 = vld [vmem:[%s545 + $0xd0] sm:$0xff]
    %v573 = vld [vmem:[%s545 + $0xd8] sm:$0xff]
    %v574 = vld [vmem:[%s545 + $0xe0] sm:$0xff]
    %v575 = vld [vmem:[%s545 + $0xe8] sm:$0xff]
    %v576 = vld [vmem:[%s545 + $0xf0] sm:$0xff]
    %v577 = vld [vmem:[%s545 + $0xf8] sm:$0xff]
    %v578 = vld [vmem:[%s545 + $0x100] sm:$0xff]
    %v579 = vld [vmem:[%s545 + $0x108] sm:$0xff]
    %v580 = vld [vmem:[%s545 + $0x110] sm:$0xff]
    %v581 = vld [vmem:[%s545 + $0x118] sm:$0xff]
    %v582 = vld [vmem:[%s545 + $0x120] sm:$0xff]
    %v583 = vld [vmem:[%s545 + $0x128] sm:$0xff]
    %v584 = vld [vmem:[%s545 + $0x130] sm:$0xff]
    %v585 = vld [vmem:[%s545 + $0x138] sm:$0xff]
    %v586 = vld [vmem:[%s545 + $0x140] sm:$0xff]
    %v587 = vld [vmem:[%s545 + $0x148] sm:$0xff]
    %v588 = vld [vmem:[%s545 + $0x150] sm:$0xff]
    %v589 = vld [vmem:[%s545 + $0x158] sm:$0xff]
    %v590 = vld [vmem:[%s545 + $0x160] sm:$0xff]
    %v591 = vld [vmem:[%s545 + $0x168] sm:$0xff]
    %v592 = vld [vmem:[%s545 + $0x170] sm:$0xff]
    %v593 = vld [vmem:[%s545 + $0x178] sm:$0xff]
    %v594 = vld [vmem:[%s4] sm:$0x1]
    %v596 = vlaneseq
    %v597 = vshrl.u32 %v596, 7
    %v598 = vsub.s32 0, %v597
    %v599 = vrot.slane %v594, %v598
    %s601 = scalar_lea.vmem %s4, 1
    %v602 = vld [vmem:[%s601] sm:$0x1]
    %v604 = vlaneseq
    %v605 = vshrl.u32 %v604, 7
    %v606 = vsub.s32 0, %v605
    %v607 = vrot.slane %v602, %v606
    %v609 = vld [vmem:[#allocation2] sm:$0xff]
    %v610 = vld [vmem:[#allocation2 + $0x8] sm:$0xff]
    %v611 = vld [vmem:[#allocation2 + $0x10] sm:$0xff]
    %v612 = vld [vmem:[#allocation2 + $0x168] sm:$0xff]
    %v613 = vld [vmem:[#allocation2 + $0x170] sm:$0xff]
    %v614 = vld [vmem:[#allocation2 + $0x178] sm:$0xff]
    %615 = vmatprep.subr.mxu0 %v498
    %616 = vmatpush1.msra.mxu0 %v497
    %617 = vmatprep.subr.mxu0 %v501
    %618 = vmatpush1.msra.mxu0 %v500
    %619 = vmatprep.subr.mxu0 %v504
    %620 = vmatpush1.msra.mxu0 %v503
    %621 = vmatprep.subr.mxu0 %v507
    %622 = vmatpush1.msra.mxu0 %v506
    %623 = vmatprep.subr.mxu0 %v510
    %624 = vmatpush1.msra.mxu0 %v509
    %625 = vmatprep.subr.mxu0 %v513
    %626 = vmatpush1.msra.mxu0 %v512
    %627 = vmatprep.subr.mxu0 %v516
    %628 = vmatpush1.msra.mxu0 %v515
    %629 = vmatprep.subr.mxu0 %v519
    %630 = vmatpush1.msra.mxu0 %v518
    %631 = vmatprep.subr.mxu0 %v522
    %632 = vmatpush1.msra.mxu0 %v521
    %633 = vmatprep.subr.mxu0 %v525
    %634 = vmatpush1.msra.mxu0 %v524
    %635 = vmatprep.subr.mxu0 %v528
    %636 = vmatpush1.msra.mxu0 %v527
    %637 = vmatprep.subr.mxu0 %v531
    %638 = vmatpush1.msra.mxu0 %v530
    %639 = vmatprep.subr.mxu0 %v534
    %640 = vmatpush1.msra.mxu0 %v533
    %641 = vmatprep.subr.mxu0 %v537
    %642 = vmatpush1.msra.mxu0 %v536
    %643 = vmatprep.subr.mxu0 %v540
    %644 = vmatpush1.msra.mxu0 %v539
    %645 = vmatprep.subr.mxu0 %v543
    %646 = vmatpush1.msra.mxu0 %v542
    %647 = vmatprep.subr.mxu0 0.0
    %648 = vmatpush1.msra.mxu0 0.0
    %649 = vmatprep.subr.mxu0 0.0
    %650 = vmatpush1.msra.mxu0 0.0
    %651 = vmatprep.subr.mxu0 0.0
    %652 = vmatpush1.msra.mxu0 0.0
    %653 = vmatprep.subr.mxu0 0.0
    %654 = vmatpush1.msra.mxu0 0.0
    %655 = vmatprep.subr.mxu0 0.0
    %656 = vmatpush1.msra.mxu0 0.0
    %657 = vmatprep.subr.mxu0 0.0
    %658 = vmatpush1.msra.mxu0 0.0
    %659 = vmatprep.subr.mxu0 0.0
    %660 = vmatpush1.msra.mxu0 0.0
    %661 = vmatprep.subr.mxu0 0.0
    %662 = vmatpush1.msra.mxu0 0.0
    %663 = vmatprep.subr.mxu0 0.0
    %664 = vmatpush1.msra.mxu0 0.0
    %665 = vmatprep.subr.mxu0 0.0
    %666 = vmatpush1.msra.mxu0 0.0
    %667 = vmatprep.subr.mxu0 0.0
    %668 = vmatpush1.msra.mxu0 0.0
    %669 = vmatprep.subr.mxu0 0.0
    %670 = vmatpush1.msra.mxu0 0.0
    %671 = vmatprep.subr.mxu0 0.0
    %672 = vmatpush1.msra.mxu0 0.0
    %673 = vmatprep.subr.mxu0 0.0
    %674 = vmatpush1.msra.mxu0 0.0
    %675 = vmatprep.subr.mxu0 0.0
    %676 = vmatpush1.msra.mxu0 0.0
    %677 = vmatprep.subr.mxu0 0.0
    %678 = vmatpush1.msra.mxu0 0.0
    %679 = vmatprep.mubr.f32.mxu0 0.0
    %680 = vmatmul.mubr.f32.gmra.mrb[0].mxu0 0.0
    %v681 = vpop.f32.mrb[0].mxu0
    %v682 = vadd.f32 0.0, %v681
    %v683 = vpop.f32.mrb[0].mxu0
    %v684 = vadd.f32 0.0, %v683
    %685 = vdwg.mxu0
    %686 = vmatprep.subr.mxu0 0.0
    %687 = vmatpush1.msra.mxu0 %v499
    %688 = vmatprep.subr.mxu0 0.0
    %689 = vmatpush1.msra.mxu0 %v502
    %690 = vmatprep.subr.mxu0 0.0
    %691 = vmatpush1.msra.mxu0 %v505
    %692 = vmatprep.subr.mxu0 0.0
    %693 = vmatpush1.msra.mxu0 %v508
    %694 = vmatprep.subr.mxu0 0.0
    %695 = vmatpush1.msra.mxu0 %v511
    %696 = vmatprep.subr.mxu0 0.0
    %697 = vmatpush1.msra.mxu0 %v514
    %698 = vmatprep.subr.mxu0 0.0
    %699 = vmatpush1.msra.mxu0 %v517
    %700 = vmatprep.subr.mxu0 0.0
    %701 = vmatpush1.msra.mxu0 %v520
    %702 = vmatprep.subr.mxu0 0.0
    %703 = vmatpush1.msra.mxu0 %v523
    %704 = vmatprep.subr.mxu0 0.0
    %705 = vmatpush1.msra.mxu0 %v526
    %706 = vmatprep.subr.mxu0 0.0
    %707 = vmatpush1.msra.mxu0 %v529
    %708 = vmatprep.subr.mxu0 0.0
    %709 = vmatpush1.msra.mxu0 %v532
    %710 = vmatprep.subr.mxu0 0.0
    %711 = vmatpush1.msra.mxu0 %v535
    %712 = vmatprep.subr.mxu0 0.0
    %713 = vmatpush1.msra.mxu0 %v538
    %714 = vmatprep.subr.mxu0 0.0
    %715 = vmatpush1.msra.mxu0 %v541
    %716 = vmatprep.subr.mxu0 0.0
    %717 = vmatpush1.msra.mxu0 %v544
    %718 = vmatprep.subr.mxu0 0.0
    %719 = vmatpush1.msra.mxu0 0.0
    %720 = vmatprep.subr.mxu0 0.0
    %721 = vmatpush1.msra.mxu0 0.0
    %722 = vmatprep.subr.mxu0 0.0
    %723 = vmatpush1.msra.mxu0 0.0
    %724 = vmatprep.subr.mxu0 0.0
    %725 = vmatpush1.msra.mxu0 0.0
    %726 = vmatprep.subr.mxu0 0.0
    %727 = vmatpush1.msra.mxu0 0.0
    %728 = vmatprep.subr.mxu0 0.0
    %729 = vmatpush1.msra.mxu0 0.0
    %730 = vmatprep.subr.mxu0 0.0
    %731 = vmatpush1.msra.mxu0 0.0
    %732 = vmatprep.subr.mxu0 0.0
    %733 = vmatpush1.msra.mxu0 0.0
    %734 = vmatprep.subr.mxu0 0.0
    %735 = vmatpush1.msra.mxu0 0.0
    %736 = vmatprep.subr.mxu0 0.0
    %737 = vmatpush1.msra.mxu0 0.0
    %738 = vmatprep.subr.mxu0 0.0
    %739 = vmatpush1.msra.mxu0 0.0
    %740 = vmatprep.subr.mxu0 0.0
    %741 = vmatpush1.msra.mxu0 0.0
    %742 = vmatprep.subr.mxu0 0.0
    %743 = vmatpush1.msra.mxu0 0.0
    %744 = vmatprep.subr.mxu0 0.0
    %745 = vmatpush1.msra.mxu0 0.0
    %746 = vmatprep.subr.mxu0 0.0
    %747 = vmatpush1.msra.mxu0 0.0
    %748 = vmatprep.subr.mxu0 0.0
    %749 = vmatpush1.msra.mxu0 0.0
    %750 = vmatprep.mubr.f32.mxu0 0.0
    %751 = vmatmul.mubr.f32.gmra.mrb[0].mxu0 0.0
    %v752 = vpop.f32.mrb[0].mxu0
    %v753 = vadd.f32 0.0, %v752
    %v754 = vpop.f32.mrb[0].mxu0
    %755 = vdwg.mxu0
    %756 = vmatprep.subr.mxu0 %v547
    %757 = vmatpush1.msra.mxu0 %v546
    %758 = vmatprep.subr.mxu0 %v550
    %759 = vmatpush1.msra.mxu0 %v549
    %760 = vmatprep.subr.mxu0 %v553
    %761 = vmatpush1.msra.mxu0 %v552
    %762 = vmatprep.subr.mxu0 %v556
    %763 = vmatpush1.msra.mxu0 %v555
    %764 = vmatprep.subr.mxu0 %v559
    %765 = vmatpush1.msra.mxu0 %v558
    %766 = vmatprep.subr.mxu0 %v562
    %767 = vmatpush1.msra.mxu0 %v561
    %768 = vmatprep.subr.mxu0 %v565
    %769 = vmatpush1.msra.mxu0 %v564
    %770 = vmatprep.subr.mxu0 %v568
    %771 = vmatpush1.msra.mxu0 %v567
    %772 = vmatprep.subr.mxu0 %v571
    %773 = vmatpush1.msra.mxu0 %v570
    %774 = vmatprep.subr.mxu0 %v574
    %775 = vmatpush1.msra.mxu0 %v573
    %776 = vmatprep.subr.mxu0 %v577
    %777 = vmatpush1.msra.mxu0 %v576
    %778 = vmatprep.subr.mxu0 %v580
    %779 = vmatpush1.msra.mxu0 %v579
    %780 = vmatprep.subr.mxu0 %v583
    %781 = vmatpush1.msra.mxu0 %v582
    %782 = vmatprep.subr.mxu0 %v586
    %783 = vmatpush1.msra.mxu0 %v585
    %784 = vmatprep.subr.mxu0 %v589
    %785 = vmatpush1.msra.mxu0 %v588
    %786 = vmatprep.subr.mxu0 %v592
    %787 = vmatpush1.msra.mxu0 %v591
    %788 = vmatprep.subr.mxu0 0.0
    %789 = vmatpush1.msra.mxu0 0.0
    %790 = vmatprep.subr.mxu0 0.0
    %791 = vmatpush1.msra.mxu0 0.0
    %792 = vmatprep.subr.mxu0 0.0
    %793 = vmatpush1.msra.mxu0 0.0
    %794 = vmatprep.subr.mxu0 0.0
    %795 = vmatpush1.msra.mxu0 0.0
    %796 = vmatprep.subr.mxu0 0.0
    %797 = vmatpush1.msra.mxu0 0.0
    %798 = vmatprep.subr.mxu0 0.0
    %799 = vmatpush1.msra.mxu0 0.0
    %800 = vmatprep.subr.mxu0 0.0
    %801 = vmatpush1.msra.mxu0 0.0
    %802 = vmatprep.subr.mxu0 0.0
    %803 = vmatpush1.msra.mxu0 0.0
    %804 = vmatprep.subr.mxu0 0.0
    %805 = vmatpush1.msra.mxu0 0.0
    %806 = vmatprep.subr.mxu0 0.0
    %807 = vmatpush1.msra.mxu0 0.0
    %808 = vmatprep.subr.mxu0 0.0
    %809 = vmatpush1.msra.mxu0 0.0
    %810 = vmatprep.subr.mxu0 0.0
    %811 = vmatpush1.msra.mxu0 0.0
    %812 = vmatprep.subr.mxu0 0.0
    %813 = vmatpush1.msra.mxu0 0.0
    %814 = vmatprep.subr.mxu0 0.0
    %815 = vmatpush1.msra.mxu0 0.0
    %816 = vmatprep.subr.mxu0 0.0
    %817 = vmatpush1.msra.mxu0 0.0
    %818 = vmatprep.subr.mxu0 0.0
    %819 = vmatpush1.msra.mxu0 0.0
    %820 = vmatprep.mubr.f32.mxu0 0.0
    %821 = vmatmul.mubr.f32.gmra.mrb[0].mxu0 0.0
    %v822 = vpop.f32.mrb[0].mxu0
    %v823 = vadd.f32 0.0, %v822
    %v824 = vpop.f32.mrb[0].mxu0
    %v825 = vadd.f32 0.0, %v824
    %826 = vdwg.mxu0
    %827 = vmatprep.subr.mxu0 0.0
    %828 = vmatpush1.msra.mxu0 %v548
    %829 = vmatprep.subr.mxu0 0.0
    %830 = vmatpush1.msra.mxu0 %v551
    %831 = vmatprep.subr.mxu0 0.0
    %832 = vmatpush1.msra.mxu0 %v554
    %833 = vmatprep.subr.mxu0 0.0
    %834 = vmatpush1.msra.mxu0 %v557
    %835 = vmatprep.subr.mxu0 0.0
    %836 = vmatpush1.msra.mxu0 %v560
    %837 = vmatprep.subr.mxu0 0.0
    %838 = vmatpush1.msra.mxu0 %v563
    %839 = vmatprep.subr.mxu0 0.0
    %840 = vmatpush1.msra.mxu0 %v566
    %841 = vmatprep.subr.mxu0 0.0
    %842 = vmatpush1.msra.mxu0 %v569
    %843 = vmatprep.subr.mxu0 0.0
    %844 = vmatpush1.msra.mxu0 %v572
    %845 = vmatprep.subr.mxu0 0.0
    %846 = vmatpush1.msra.mxu0 %v575
    %847 = vmatprep.subr.mxu0 0.0
    %848 = vmatpush1.msra.mxu0 %v578
    %849 = vmatprep.subr.mxu0 0.0
    %850 = vmatpush1.msra.mxu0 %v581
    %851 = vmatprep.subr.mxu0 0.0
    %852 = vmatpush1.msra.mxu0 %v584
    %853 = vmatprep.subr.mxu0 0.0
    %854 = vmatpush1.msra.mxu0 %v587
    %855 = vmatprep.subr.mxu0 0.0
    %856 = vmatpush1.msra.mxu0 %v590
    %857 = vmatprep.subr.mxu0 0.0
    %858 = vmatpush1.msra.mxu0 %v593
    %859 = vmatprep.subr.mxu0 0.0
    %860 = vmatpush1.msra.mxu0 0.0
    %861 = vmatprep.subr.mxu0 0.0
    %862 = vmatpush1.msra.mxu0 0.0
    %863 = vmatprep.subr.mxu0 0.0
    %864 = vmatpush1.msra.mxu0 0.0
    %865 = vmatprep.subr.mxu0 0.0
    %866 = vmatpush1.msra.mxu0 0.0
    %867 = vmatprep.subr.mxu0 0.0
    %868 = vmatpush1.msra.mxu0 0.0
    %869 = vmatprep.subr.mxu0 0.0
    %870 = vmatpush1.msra.mxu0 0.0
    %871 = vmatprep.subr.mxu0 0.0
    %872 = vmatpush1.msra.mxu0 0.0
    %873 = vmatprep.subr.mxu0 0.0
    %874 = vmatpush1.msra.mxu0 0.0
    %875 = vmatprep.subr.mxu0 0.0
    %876 = vmatpush1.msra.mxu0 0.0
    %877 = vmatprep.subr.mxu0 0.0
    %878 = vmatpush1.msra.mxu0 0.0
    %879 = vmatprep.subr.mxu0 0.0
    %880 = vmatpush1.msra.mxu0 0.0
    %881 = vmatprep.subr.mxu0 0.0
    %882 = vmatpush1.msra.mxu0 0.0
    %883 = vmatprep.subr.mxu0 0.0
    %884 = vmatpush1.msra.mxu0 0.0
    %885 = vmatprep.subr.mxu0 0.0
    %886 = vmatpush1.msra.mxu0 0.0
    %887 = vmatprep.subr.mxu0 0.0
    %888 = vmatpush1.msra.mxu0 0.0
    %889 = vmatprep.subr.mxu0 0.0
    %890 = vmatpush1.msra.mxu0 0.0
    %891 = vmatprep.mubr.f32.mxu0 0.0
    %892 = vmatmul.mubr.f32.gmra.mrb[0].mxu0 0.0
    %v893 = vpop.f32.mrb[0].mxu0
    %v894 = vadd.f32 0.0, %v893
    %v895 = vpop.f32.mrb[0].mxu0
    %896 = vdwg.mxu0
    %v897 = vadd.f32 %v609, %v682
    %v898 = vsub.f32 0.0, %v897
    %v899 = vmul.f32 %v898, 1.442695
    %v900 = vpow.pop %v899
    %v901 = vadd.f32 %v900, 1.0
    %v902 = vrcp.pop %v901
    %v903 = vadd.f32 %v610, %v684
    %v904 = vsub.f32 0.0, %v903
    %v905 = vmul.f32 %v904, 1.442695
    %v906 = vpow.pop %v905
    %v907 = vadd.f32 %v906, 1.0
    %v908 = vrcp.pop %v907
    %v909 = vadd.f32 %v753, %v599
    %v910 = vmul.f32 %v902, %v909
    %v911 = vadd.f32 %v611, %v910
    %v912 = vtanh.pop %v911
    %v913 = vsub.f32 1.0, %v908
    %v914 = vmul.f32 %v913, %v912
    %v915 = vmul.f32 %v908, 0.0
    %v916 = vadd.f32 %v914, %v915
    %v917 = vadd.f32 %v612, %v823
    %v918 = vsub.f32 0.0, %v917
    %v919 = vmul.f32 %v918, 1.442695
    %v920 = vpow.pop %v919
    %v921 = vadd.f32 %v920, 1.0
    %v922 = vrcp.pop %v921
    %v923 = vadd.f32 %v613, %v825
    %v924 = vsub.f32 0.0, %v923
    %v925 = vmul.f32 %v924, 1.442695
    %v926 = vpow.pop %v925
    %v927 = vadd.f32 %v926, 1.0
    %v928 = vrcp.pop %v927
    %v929 = vadd.f32 %v894, %v607
    %v930 = vmul.f32 %v922, %v929
    %v931 = vadd.f32 %v614, %v930
    %v932 = vtanh.pop %v931
    %v933 = vsub.f32 1.0, %v928
    %v934 = vmul.f32 %v933, %v932
    %v935 = vmul.f32 %v928, 0.0
    %v936 = vadd.f32 %v934, %v935
    %937 = vst [vmem:[#allocation3] sm:$0xff] %v916
    %938 = vst [vmem:[#allocation4 + $0x38] sm:$0xff] %v936
    %v939 = vld [vmem:[#allocation2 + $0x30] sm:$0xff]
    %v940 = vld [vmem:[#allocation2 + $0x38] sm:$0xff]
    %v941 = vld [vmem:[#allocation2 + $0x40] sm:$0xff]
    %v942 = vld [vmem:[#allocation2 + $0x138] sm:$0xff]
    %v943 = vld [vmem:[#allocation2 + $0x140] sm:$0xff]
    %v944 = vld [vmem:[#allocation2 + $0x148] sm:$0xff]
    %945 = vmatprep.subr.mxu0 %v498
    %946 = vmatpush1.msra.mxu0 %v497
    %947 = vmatprep.subr.mxu0 %v501
    %948 = vmatpush1.msra.mxu0 %v500
    %949 = vmatprep.subr.mxu0 %v504
    %950 = vmatpush1.msra.mxu0 %v503
    %951 = vmatprep.subr.mxu0 %v507
    %952 = vmatpush1.msra.mxu0 %v506
    %953 = vmatprep.subr.mxu0 %v510
    %954 = vmatpush1.msra.mxu0 %v509
    %955 = vmatprep.subr.mxu0 %v513
    %956 = vmatpush1.msra.mxu0 %v512
    %957 = vmatprep.subr.mxu0 %v516
    %958 = vmatpush1.msra.mxu0 %v515
    %959 = vmatprep.subr.mxu0 %v519
    %960 = vmatpush1.msra.mxu0 %v518
    %961 = vmatprep.subr.mxu0 %v522
    %962 = vmatpush1.msra.mxu0 %v521
    %963 = vmatprep.subr.mxu0 %v525
    %964 = vmatpush1.msra.mxu0 %v524
    %965 = vmatprep.subr.mxu0 %v528
    %966 = vmatpush1.msra.mxu0 %v527
    %967 = vmatprep.subr.mxu0 %v531
    %968 = vmatpush1.msra.mxu0 %v530
    %969 = vmatprep.subr.mxu0 %v534
    %970 = vmatpush1.msra.mxu0 %v533
    %971 = vmatprep.subr.mxu0 %v537
    %972 = vmatpush1.msra.mxu0 %v536
    %973 = vmatprep.subr.mxu0 %v540
    %974 = vmatpush1.msra.mxu0 %v539
    %975 = vmatprep.subr.mxu0 %v543
    %976 = vmatpush1.msra.mxu0 %v542
    %977 = vmatprep.subr.mxu0 0.0
    %978 = vmatpush1.msra.mxu0 0.0
    %979 = vmatprep.subr.mxu0 0.0
    %980 = vmatpush1.msra.mxu0 0.0
    %981 = vmatprep.subr.mxu0 0.0
    %982 = vmatpush1.msra.mxu0 0.0
    %983 = vmatprep.subr.mxu0 0.0
    %984 = vmatpush1.msra.mxu0 0.0
    %985 = vmatprep.subr.mxu0 0.0
    %986 = vmatpush1.msra.mxu0 0.0
    %987 = vmatprep.subr.mxu0 0.0
    %988 = vmatpush1.msra.mxu0 0.0
    %989 = vmatprep.subr.mxu0 0.0
    %990 = vmatpush1.msra.mxu0 0.0
    %991 = vmatprep.subr.mxu0 0.0
    %992 = vmatpush1.msra.mxu0 0.0
    %993 = vmatprep.subr.mxu0 0.0
    %994 = vmatpush1.msra.mxu0 0.0
    %995 = vmatprep.subr.mxu0 0.0
    %996 = vmatpush1.msra.mxu0 0.0
    %997 = vmatprep.subr.mxu0 0.0
    %998 = vmatpush1.msra.mxu0 0.0
    %999 = vmatprep.subr.mxu0 0.0
    %1000 = vmatpush1.msra.mxu0 0.0
    %1001 = vmatprep.subr.mxu0 0.0
    %1002 = vmatpush1.msra.mxu0 0.0
    %1003 = vmatprep.subr.mxu0 0.0
    %1004 = vmatpush1.msra.mxu0 0.0
    %1005 = vmatprep.subr.mxu0 0.0
    %1006 = vmatpush1.msra.mxu0 0.0
    %1007 = vmatprep.subr.mxu0 0.0
    %1008 = vmatpush1.msra.mxu0 0.0
    %1009 = vmatprep.mubr.f32.mxu0 0.0
    %1010 = vmatmul.mubr.f32.gmra.mrb[0].mxu0 %v916
    %v1011 = vpop.f32.mrb[0].mxu0
    %v1012 = vadd.f32 0.0, %v1011
    %v1013 = vpop.f32.mrb[0].mxu0
    %v1014 = vadd.f32 0.0, %v1013
    %1015 = vdwg.mxu0
    %1016 = vmatprep.subr.mxu0 0.0
    %1017 = vmatpush1.msra.mxu0 %v499
    %1018 = vmatprep.subr.mxu0 0.0
    %1019 = vmatpush1.msra.mxu0 %v502
    %1020 = vmatprep.subr.mxu0 0.0
    %1021 = vmatpush1.msra.mxu0 %v505
    %1022 = vmatprep.subr.mxu0 0.0
    %1023 = vmatpush1.msra.mxu0 %v508
    %1024 = vmatprep.subr.mxu0 0.0
    %1025 = vmatpush1.msra.mxu0 %v511
    %1026 = vmatprep.subr.mxu0 0.0
    %1027 = vmatpush1.msra.mxu0 %v514
    %1028 = vmatprep.subr.mxu0 0.0
    %1029 = vmatpush1.msra.mxu0 %v517
    %1030 = vmatprep.subr.mxu0 0.0
    %1031 = vmatpush1.msra.mxu0 %v520
    %1032 = vmatprep.subr.mxu0 0.0
    %1033 = vmatpush1.msra.mxu0 %v523
    %1034 = vmatprep.subr.mxu0 0.0
    %1035 = vmatpush1.msra.mxu0 %v526
    %1036 = vmatprep.subr.mxu0 0.0
    %1037 = vmatpush1.msra.mxu0 %v529
    %1038 = vmatprep.subr.mxu0 0.0
    %1039 = vmatpush1.msra.mxu0 %v532
    %1040 = vmatprep.subr.mxu0 0.0
    %1041 = vmatpush1.msra.mxu0 %v535
    %1042 = vmatprep.subr.mxu0 0.0
    %1043 = vmatpush1.msra.mxu0 %v538
    %1044 = vmatprep.subr.mxu0 0.0
    %1045 = vmatpush1.msra.mxu0 %v541
    %1046 = vmatprep.subr.mxu0 0.0
    %1047 = vmatpush1.msra.mxu0 %v544
    %1048 = vmatprep.subr.mxu0 0.0
    %1049 = vmatpush1.msra.mxu0 0.0
    %1050 = vmatprep.subr.mxu0 0.0
    %1051 = vmatpush1.msra.mxu0 0.0
    %1052 = vmatprep.subr.mxu0 0.0
    %1053 = vmatpush1.msra.mxu0 0.0
    %1054 = vmatprep.subr.mxu0 0.0
    %1055 = vmatpush1.msra.mxu0 0.0
    %1056 = vmatprep.subr.mxu0 0.0
    %1057 = vmatpush1.msra.mxu0 0.0
    %1058 = vmatprep.subr.mxu0 0.0
    %1059 = vmatpush1.msra.mxu0 0.0
    %1060 = vmatprep.subr.mxu0 0.0
    %1061 = vmatpush1.msra.mxu0 0.0
    %1062 = vmatprep.subr.mxu0 0.0
    %1063 = vmatpush1.msra.mxu0 0.0
    %1064 = vmatprep.subr.mxu0 0.0
    %1065 = vmatpush1.msra.mxu0 0.0
    %1066 = vmatprep.subr.mxu0 0.0
    %1067 = vmatpush1.msra.mxu0 0.0
    %1068 = vmatprep.subr.mxu0 0.0
    %1069 = vmatpush1.msra.mxu0 0.0
    %1070 = vmatprep.subr.mxu0 0.0
    %1071 = vmatpush1.msra.mxu0 0.0
    %1072 = vmatprep.subr.mxu0 0.0
    %1073 = vmatpush1.msra.mxu0 0.0
    %1074 = vmatprep.subr.mxu0 0.0
    %1075 = vmatpush1.msra.mxu0 0.0
    %1076 = vmatprep.subr.mxu0 0.0
    %1077 = vmatpush1.msra.mxu0 0.0
    %1078 = vmatprep.subr.mxu0 0.0
    %1079 = vmatpush1.msra.mxu0 0.0
    %1080 = vmatprep.mubr.f32.mxu0 0.0
    %1081 = vmatmul.mubr.f32.gmra.mrb[0].mxu0 %v916
    %v1082 = vpop.f32.mrb[0].mxu0
    %v1083 = vadd.f32 0.0, %v1082
    %v1084 = vpop.f32.mrb[0].mxu0
    %1085 = vdwg.mxu0
    %1086 = vmatprep.subr.mxu0 %v547
    %1087 = vmatpush1.msra.mxu0 %v546
    %1088 = vmatprep.subr.mxu0 %v550
    %1089 = vmatpush1.msra.mxu0 %v549
    %1090 = vmatprep.subr.mxu0 %v553
    %1091 = vmatpush1.msra.mxu0 %v552
    %1092 = vmatprep.subr.mxu0 %v556
    %1093 = vmatpush1.msra.mxu0 %v555
    %1094 = vmatprep.subr.mxu0 %v559
    %1095 = vmatpush1.msra.mxu0 %v558
    %1096 = vmatprep.subr.mxu0 %v562
    %1097 = vmatpush1.msra.mxu0 %v561
    %1098 = vmatprep.subr.mxu0 %v565
    %1099 = vmatpush1.msra.mxu0 %v564
    %1100 = vmatprep.subr.mxu0 %v568
    %1101 = vmatpush1.msra.mxu0 %v567
    %1102 = vmatprep.subr.mxu0 %v571
    %1103 = vmatpush1.msra.mxu0 %v570
    %1104 = vmatprep.subr.mxu0 %v574
    %1105 = vmatpush1.msra.mxu0 %v573
    %1106 = vmatprep.subr.mxu0 %v577
    %1107 = vmatpush1.msra.mxu0 %v576
    %1108 = vmatprep.subr.mxu0 %v580
    %1109 = vmatpush1.msra.mxu0 %v579
    %1110 = vmatprep.subr.mxu0 %v583
    %1111 = vmatpush1.msra.mxu0 %v582
    %1112 = vmatprep.subr.mxu0 %v586
    %1113 = vmatpush1.msra.mxu0 %v585
    %1114 = vmatprep.subr.mxu0 %v589
    %1115 = vmatpush1.msra.mxu0 %v588
    %1116 = vmatprep.subr.mxu0 %v592
    %1117 = vmatpush1.msra.mxu0 %v591
    %1118 = vmatprep.subr.mxu0 0.0
    %1119 = vmatpush1.msra.mxu0 0.0
    %1120 = vmatprep.subr.mxu0 0.0
    %1121 = vmatpush1.msra.mxu0 0.0
    %1122 = vmatprep.subr.mxu0 0.0
    %1123 = vmatpush1.msra.mxu0 0.0
    %1124 = vmatprep.subr.mxu0 0.0
    %1125 = vmatpush1.msra.mxu0 0.0
    %1126 = vmatprep.subr.mxu0 0.0
    %1127 = vmatpush1.msra.mxu0 0.0
    %1128 = vmatprep.subr.mxu0 0.0
    %1129 = vmatpush1.msra.mxu0 0.0
    %1130 = vmatprep.subr.mxu0 0.0
    %1131 = vmatpush1.msra.mxu0 0.0
    %1132 = vmatprep.subr.mxu0 0.0
    %1133 = vmatpush1.msra.mxu0 0.0
    %1134 = vmatprep.subr.mxu0 0.0
    %1135 = vmatpush1.msra.mxu0 0.0
    %1136 = vmatprep.subr.mxu0 0.0
    %1137 = vmatpush1.msra.mxu0 0.0
    %1138 = vmatprep.subr.mxu0 0.0
    %1139 = vmatpush1.msra.mxu0 0.0
    %1140 = vmatprep.subr.mxu0 0.0
    %1141 = vmatpush1.msra.mxu0 0.0
    %1142 = vmatprep.subr.mxu0 0.0
    %1143 = vmatpush1.msra.mxu0 0.0
    %1144 = vmatprep.subr.mxu0 0.0
    %1145 = vmatpush1.msra.mxu0 0.0
    %1146 = vmatprep.subr.mxu0 0.0
    %1147 = vmatpush1.msra.mxu0 0.0
    %1148 = vmatprep.subr.mxu0 0.0
    %1149 = vmatpush1.msra.mxu0 0.0
    %1150 = vmatprep.mubr.f32.mxu0 0.0
    %1151 = vmatmul.mubr.f32.gmra.mrb[0].mxu0 %v936
    %v1152 = vpop.f32.mrb[0].mxu0
    %v1153 = vadd.f32 0.0, %v1152
    %v1154 = vpop.f32.mrb[0].mxu0
    %v1155 = vadd.f32 0.0, %v1154
    %1156 = vdwg.mxu0
    %1157 = vmatprep.subr.mxu0 0.0
    %1158 = vmatpush1.msra.mxu0 %v548
    %1159 = vmatprep.subr.mxu0 0.0
    %1160 = vmatpush1.msra.mxu0 %v551
    %1161 = vmatprep.subr.mxu0 0.0
    %1162 = vmatpush1.msra.mxu0 %v554
    %1163 = vmatprep.subr.mxu0 0.0
    %1164 = vmatpush1.msra.mxu0 %v557
    %1165 = vmatprep.subr.mxu0 0.0
    %1166 = vmatpush1.msra.mxu0 %v560
    %1167 = vmatprep.subr.mxu0 0.0
    %1168 = vmatpush1.msra.mxu0 %v563
    %1169 = vmatprep.subr.mxu0 0.0
    %1170 = vmatpush1.msra.mxu0 %v566
    %1171 = vmatprep.subr.mxu0 0.0
    %1172 = vmatpush1.msra.mxu0 %v569
    %1173 = vmatprep.subr.mxu0 0.0
    %1174 = vmatpush1.msra.mxu0 %v572
    %1175 = vmatprep.subr.mxu0 0.0
    %1176 = vmatpush1.msra.mxu0 %v575
    %1177 = vmatprep.subr.mxu0 0.0
    %1178 = vmatpush1.msra.mxu0 %v578
    %1179 = vmatprep.subr.mxu0 0.0
    %1180 = vmatpush1.msra.mxu0 %v581
    %1181 = vmatprep.subr.mxu0 0.0
    %1182 = vmatpush1.msra.mxu0 %v584
    %1183 = vmatprep.subr.mxu0 0.0
    %1184 = vmatpush1.msra.mxu0 %v587
    %1185 = vmatprep.subr.mxu0 0.0
    %1186 = vmatpush1.msra.mxu0 %v590
    %1187 = vmatprep.subr.mxu0 0.0
    %1188 = vmatpush1.msra.mxu0 %v593
    %1189 = vmatprep.subr.mxu0 0.0
    %1190 = vmatpush1.msra.mxu0 0.0
    %1191 = vmatprep.subr.mxu0 0.0
    %1192 = vmatpush1.msra.mxu0 0.0
    %1193 = vmatprep.subr.mxu0 0.0
    %1194 = vmatpush1.msra.mxu0 0.0
    %1195 = vmatprep.subr.mxu0 0.0
    %1196 = vmatpush1.msra.mxu0 0.0
    %1197 = vmatprep.subr.mxu0 0.0
    %1198 = vmatpush1.msra.mxu0 0.0
    %1199 = vmatprep.subr.mxu0 0.0
    %1200 = vmatpush1.msra.mxu0 0.0
    %1201 = vmatprep.subr.mxu0 0.0
    %1202 = vmatpush1.msra.mxu0 0.0
    %1203 = vmatprep.subr.mxu0 0.0
    %1204 = vmatpush1.msra.mxu0 0.0
    %1205 = vmatprep.subr.mxu0 0.0
    %1206 = vmatpush1.msra.mxu0 0.0
    %1207 = vmatprep.subr.mxu0 0.0
    %1208 = vmatpush1.msra.mxu0 0.0
    %1209 = vmatprep.subr.mxu0 0.0
    %1210 = vmatpush1.msra.mxu0 0.0
    %1211 = vmatprep.subr.mxu0 0.0
    %1212 = vmatpush1.msra.mxu0 0.0
    %1213 = vmatprep.subr.mxu0 0.0
    %1214 = vmatpush1.msra.mxu0 0.0
    %1215 = vmatprep.subr.mxu0 0.0
    %1216 = vmatpush1.msra.mxu0 0.0
    %1217 = vmatprep.subr.mxu0 0.0
    %1218 = vmatpush1.msra.mxu0 0.0
    %1219 = vmatprep.subr.mxu0 0.0
    %1220 = vmatpush1.msra.mxu0 0.0
    %1221 = vmatprep.mubr.f32.mxu0 0.0
    %1222 = vmatmul.mubr.f32.gmra.mrb[0].mxu0 %v936
    %v1223 = vpop.f32.mrb[0].mxu0
    %v1224 = vadd.f32 0.0, %v1223
    %v1225 = vpop.f32.mrb[0].mxu0
    %1226 = vdwg.mxu0
    %v1227 = vadd.f32 %v939, %v1012
    %v1228 = vsub.f32 0.0, %v1227
    %v1229 = vmul.f32 %v1228, 1.442695
    %v1230 = vpow.pop %v1229
    %v1231 = vadd.f32 %v1230, 1.0
    %v1232 = vrcp.pop %v1231
    %v1233 = vadd.f32 %v940, %v1014
    %v1234 = vsub.f32 0.0, %v1233
    %v1235 = vmul.f32 %v1234, 1.442695
    %v1236 = vpow.pop %v1235
    %v1237 = vadd.f32 %v1236, 1.0
    %v1238 = vrcp.pop %v1237
    %v1239 = vadd.f32 %v1083, %v599
    %v1240 = vmul.f32 %v1232, %v1239
    %v1241 = vadd.f32 %v941, %v1240
    %v1242 = vtanh.pop %v1241
    %v1243 = vsub.f32 1.0, %v1238
    %v1244 = vmul.f32 %v1243, %v1242
    %v1245 = vmul.f32 %v1238, %v916
    %v1246 = vadd.f32 %v1244, %v1245
    %v1247 = vadd.f32 %v942, %v1153
    %v1248 = vsub.f32 0.0, %v1247
    %v1249 = vmul.f32 %v1248, 1.442695
    %v1250 = vpow.pop %v1249
    %v1251 = vadd.f32 %v1250, 1.0
    %v1252 = vrcp.pop %v1251
    %v1253 = vadd.f32 %v943, %v1155
    %v1254 = vsub.f32 0.0, %v1253
    %v1255 = vmul.f32 %v1254, 1.442695
    %v1256 = vpow.pop %v1255
    %v1257 = vadd.f32 %v1256, 1.0
    %v1258 = vrcp.pop %v1257
    %v1259 = vadd.f32 %v1224, %v607
    %v1260 = vmul.f32 %v1252, %v1259
    %v1261 = vadd.f32 %v944, %v1260
    %v1262 = vtanh.pop %v1261
    %v1263 = vsub.f32 1.0, %v1258
    %v1264 = vmul.f32 %v1263, %v1262
    %v1265 = vmul.f32 %v1258, %v936
    %v1266 = vadd.f32 %v1264, %v1265
    %1267 = vst [vmem:[#allocation3 + $0x8] sm:$0xff] %v1246
    %1268 = vst [vmem:[#allocation4 + $0x30] sm:$0xff] %v1266
    %v1269 = vld [vmem:[#allocation2 + $0x60] sm:$0xff]
    %v1270 = vld [vmem:[#allocation2 + $0x68] sm:$0xff]
    %v1271 = vld [vmem:[#allocation2 + $0x70] sm:$0xff]
    %v1272 = vld [vmem:[#allocation2 + $0x108] sm:$0xff]
    %v1273 = vld [vmem:[#allocation2 + $0x110] sm:$0xff]
    %v1274 = vld [vmem:[#allocation2 + $0x118] sm:$0xff]
    %1275 = vmatprep.subr.mxu0 %v498
    %1276 = vmatpush1.msra.mxu0 %v497
    %1277 = vmatprep.subr.mxu0 %v501
    %1278 = vmatpush1.msra.mxu0 %v500
    %1279 = vmatprep.subr.mxu0 %v504
    %1280 = vmatpush1.msra.mxu0 %v503
    %1281 = vmatprep.subr.mxu0 %v507
    %1282 = vmatpush1.msra.mxu0 %v506
    %1283 = vmatprep.subr.mxu0 %v510
    %1284 = vmatpush1.msra.mxu0 %v509
    %1285 = vmatprep.subr.mxu0 %v513
    %1286 = vmatpush1.msra.mxu0 %v512
    %1287 = vmatprep.subr.mxu0 %v516
    %1288 = vmatpush1.msra.mxu0 %v515
    %1289 = vmatprep.subr.mxu0 %v519
    %1290 = vmatpush1.msra.mxu0 %v518
    %1291 = vmatprep.subr.mxu0 %v522
    %1292 = vmatpush1.msra.mxu0 %v521
    %1293 = vmatprep.subr.mxu0 %v525
    %1294 = vmatpush1.msra.mxu0 %v524
    %1295 = vmatprep.subr.mxu0 %v528
    %1296 = vmatpush1.msra.mxu0 %v527
    %1297 = vmatprep.subr.mxu0 %v531
    %1298 = vmatpush1.msra.mxu0 %v530
    %1299 = vmatprep.subr.mxu0 %v534
    %1300 = vmatpush1.msra.mxu0 %v533
    %1301 = vmatprep.subr.mxu0 %v537
    %1302 = vmatpush1.msra.mxu0 %v536
    %1303 = vmatprep.subr.mxu0 %v540
    %1304 = vmatpush1.msra.mxu0 %v539
    %1305 = vmatprep.subr.mxu0 %v543
    %1306 = vmatpush1.msra.mxu0 %v542
    %1307 = vmatprep.subr.mxu0 0.0
    %1308 = vmatpush1.msra.mxu0 0.0
    %1309 = vmatprep.subr.mxu0 0.0
    %1310 = vmatpush1.msra.mxu0 0.0
    %1311 = vmatprep.subr.mxu0 0.0
    %1312 = vmatpush1.msra.mxu0 0.0
    %1313 = vmatprep.subr.mxu0 0.0
    %1314 = vmatpush1.msra.mxu0 0.0
    %1315 = vmatprep.subr.mxu0 0.0
    %1316 = vmatpush1.msra.mxu0 0.0
    %1317 = vmatprep.subr.mxu0 0.0
    %1318 = vmatpush1.msra.mxu0 0.0
    %1319 = vmatprep.subr.mxu0 0.0
    %1320 = vmatpush1.msra.mxu0 0.0
    %1321 = vmatprep.subr.mxu0 0.0
    %1322 = vmatpush1.msra.mxu0 0.0
    %1323 = vmatprep.subr.mxu0 0.0
    %1324 = vmatpush1.msra.mxu0 0.0
    %1325 = vmatprep.subr.mxu0 0.0
    %1326 = vmatpush1.msra.mxu0 0.0
    %1327 = vmatprep.subr.mxu0 0.0
    %1328 = vmatpush1.msra.mxu0 0.0
    %1329 = vmatprep.subr.mxu0 0.0
    %1330 = vmatpush1.msra.mxu0 0.0
    %1331 = vmatprep.subr.mxu0 0.0
    %1332 = vmatpush1.msra.mxu0 0.0
    %1333 = vmatprep.subr.mxu0 0.0
    %1334 = vmatpush1.msra.mxu0 0.0
    %1335 = vmatprep.subr.mxu0 0.0
    %1336 = vmatpush1.msra.mxu0 0.0
    %1337 = vmatprep.subr.mxu0 0.0
    %1338 = vmatpush1.msra.mxu0 0.0
    %1339 = vmatprep.mubr.f32.mxu0 0.0
    %1340 = vmatmul.mubr.f32.gmra.mrb[0].mxu0 %v1246
    %v1341 = vpop.f32.mrb[0].mxu0
    %v1342 = vadd.f32 0.0, %v1341
    %v1343 = vpop.f32.mrb[0].mxu0
    %v1344 = vadd.f32 0.0, %v1343
    %1345 = vdwg.mxu0
    %1346 = vmatprep.subr.mxu0 0.0
    %1347 = vmatpush1.msra.mxu0 %v499
    %1348 = vmatprep.subr.mxu0 0.0
    %1349 = vmatpush1.msra.mxu0 %v502
    %1350 = vmatprep.subr.mxu0 0.0
    %1351 = vmatpush1.msra.mxu0 %v505
    %1352 = vmatprep.subr.mxu0 0.0
    %1353 = vmatpush1.msra.mxu0 %v508
    %1354 = vmatprep.subr.mxu0 0.0
    %1355 = vmatpush1.msra.mxu0 %v511
    %1356 = vmatprep.subr.mxu0 0.0
    %1357 = vmatpush1.msra.mxu0 %v514
    %1358 = vmatprep.subr.mxu0 0.0
    %1359 = vmatpush1.msra.mxu0 %v517
    %1360 = vmatprep.subr.mxu0 0.0
    %1361 = vmatpush1.msra.mxu0 %v520
    %1362 = vmatprep.subr.mxu0 0.0
    %1363 = vmatpush1.msra.mxu0 %v523
    %1364 = vmatprep.subr.mxu0 0.0
    %1365 = vmatpush1.msra.mxu0 %v526
    %1366 = vmatprep.subr.mxu0 0.0
    %1367 = vmatpush1.msra.mxu0 %v529
    %1368 = vmatprep.subr.mxu0 0.0
    %1369 = vmatpush1.msra.mxu0 %v532
    %1370 = vmatprep.subr.mxu0 0.0
    %1371 = vmatpush1.msra.mxu0 %v535
    %1372 = vmatprep.subr.mxu0 0.0
    %1373 = vmatpush1.msra.mxu0 %v538
    %1374 = vmatprep.subr.mxu0 0.0
    %1375 = vmatpush1.msra.mxu0 %v541
    %1376 = vmatprep.subr.mxu0 0.0
    %1377 = vmatpush1.msra.mxu0 %v544
    %1378 = vmatprep.subr.mxu0 0.0
    %1379 = vmatpush1.msra.mxu0 0.0
    %1380 = vmatprep.subr.mxu0 0.0
    %1381 = vmatpush1.msra.mxu0 0.0
    %1382 = vmatprep.subr.mxu0 0.0
    %1383 = vmatpush1.msra.mxu0 0.0
    %1384 = vmatprep.subr.mxu0 0.0
    %1385 = vmatpush1.msra.mxu0 0.0
    %1386 = vmatprep.subr.mxu0 0.0
    %1387 = vmatpush1.msra.mxu0 0.0
    %1388 = vmatprep.subr.mxu0 0.0
    %1389 = vmatpush1.msra.mxu0 0.0
    %1390 = vmatprep.subr.mxu0 0.0
    %1391 = vmatpush1.msra.mxu0 0.0
    %1392 = vmatprep.subr.mxu0 0.0
    %1393 = vmatpush1.msra.mxu0 0.0
    %1394 = vmatprep.subr.mxu0 0.0
    %1395 = vmatpush1.msra.mxu0 0.0
    %1396 = vmatprep.subr.mxu0 0.0
    %1397 = vmatpush1.msra.mxu0 0.0
    %1398 = vmatprep.subr.mxu0 0.0
    %1399 = vmatpush1.msra.mxu0 0.0
    %1400 = vmatprep.subr.mxu0 0.0
    %1401 = vmatpush1.msra.mxu0 0.0
    %1402 = vmatprep.subr.mxu0 0.0
    %1403 = vmatpush1.msra.mxu0 0.0
    %1404 = vmatprep.subr.mxu0 0.0
    %1405 = vmatpush1.msra.mxu0 0.0
    %1406 = vmatprep.subr.mxu0 0.0
    %1407 = vmatpush1.msra.mxu0 0.0
    %1408 = vmatprep.subr.mxu0 0.0
    %1409 = vmatpush1.msra.mxu0 0.0
    %1410 = vmatprep.mubr.f32.mxu0 0.0
    %1411 = vmatmul.mubr.f32.gmra.mrb[0].mxu0 %v1246
    %v1412 = vpop.f32.mrb[0].mxu0
    %v1413 = vadd.f32 0.0, %v1412
    %v1414 = vpop.f32.mrb[0].mxu0
    %1415 = vdwg.mxu0
    %1416 = vmatprep.subr.mxu0 %v547
    %1417 = vmatpush1.msra.mxu0 %v546
    %1418 = vmatprep.subr.mxu0 %v550
    %1419 = vmatpush1.msra.mxu0 %v549
    %1420 = vmatprep.subr.mxu0 %v553
    %1421 = vmatpush1.msra.mxu0 %v552
    %1422 = vmatprep.subr.mxu0 %v556
    %1423 = vmatpush1.msra.mxu0 %v555
    %1424 = vmatprep.subr.mxu0 %v559
    %1425 = vmatpush1.msra.mxu0 %v558
    %1426 = vmatprep.subr.mxu0 %v562
    %1427 = vmatpush1.msra.mxu0 %v561
    %1428 = vmatprep.subr.mxu0 %v565
    %1429 = vmatpush1.msra.mxu0 %v564
    %1430 = vmatprep.subr.mxu0 %v568
    %1431 = vmatpush1.msra.mxu0 %v567
    %1432 = vmatprep.subr.mxu0 %v571
    %1433 = vmatpush1.msra.mxu0 %v570
    %1434 = vmatprep.subr.mxu0 %v574
    %1435 = vmatpush1.msra.mxu0 %v573
    %1436 = vmatprep.subr.mxu0 %v577
    %1437 = vmatpush1.msra.mxu0 %v576
    %1438 = vmatprep.subr.mxu0 %v580
    %1439 = vmatpush1.msra.mxu0 %v579
    %1440 = vmatprep.subr.mxu0 %v583
    %1441 = vmatpush1.msra.mxu0 %v582
    %1442 = vmatprep.subr.mxu0 %v586
    %1443 = vmatpush1.msra.mxu0 %v585
    %1444 = vmatprep.subr.mxu0 %v589
    %1445 = vmatpush1.msra.mxu0 %v588
    %1446 = vmatprep.subr.mxu0 %v592
    %1447 = vmatpush1.msra.mxu0 %v591
    %1448 = vmatprep.subr.mxu0 0.0
    %1449 = vmatpush1.msra.mxu0 0.0
    %1450 = vmatprep.subr.mxu0 0.0
    %1451 = vmatpush1.msra.mxu0 0.0
    %1452 = vmatprep.subr.mxu0 0.0
    %1453 = vmatpush1.msra.mxu0 0.0
    %1454 = vmatprep.subr.mxu0 0.0
    %1455 = vmatpush1.msra.mxu0 0.0
    %1456 = vmatprep.subr.mxu0 0.0
    %1457 = vmatpush1.msra.mxu0 0.0
    %1458 = vmatprep.subr.mxu0 0.0
    %1459 = vmatpush1.msra.mxu0 0.0
    %1460 = vmatprep.subr.mxu0 0.0
    %1461 = vmatpush1.msra.mxu0 0.0
    %1462 = vmatprep.subr.mxu0 0.0
    %1463 = vmatpush1.msra.mxu0 0.0
    %1464 = vmatprep.subr.mxu0 0.0
    %1465 = vmatpush1.msra.mxu0 0.0
    %1466 = vmatprep.subr.mxu0 0.0
    %1467 = vmatpush1.msra.mxu0 0.0
    %1468 = vmatprep.subr.mxu0 0.0
    %1469 = vmatpush1.msra.mxu0 0.0
    %1470 = vmatprep.subr.mxu0 0.0
    %1471 = vmatpush1.msra.mxu0 0.0
    %1472 = vmatprep.subr.mxu0 0.0
    %1473 = vmatpush1.msra.mxu0 0.0
    %1474 = vmatprep.subr.mxu0 0.0
    %1475 = vmatpush1.msra.mxu0 0.0
    %1476 = vmatprep.subr.mxu0 0.0
    %1477 = vmatpush1.msra.mxu0 0.0
    %1478 = vmatprep.subr.mxu0 0.0
    %1479 = vmatpush1.msra.mxu0 0.0
    %1480 = vmatprep.mubr.f32.mxu0 0.0
    %1481 = vmatmul.mubr.f32.gmra.mrb[0].mxu0 %v1266
    %v1482 = vpop.f32.mrb[0].mxu0
    %v1483 = vadd.f32 0.0, %v1482
    %v1484 = vpop.f32.mrb[0].mxu0
    %v1485 = vadd.f32 0.0, %v1484
    %1486 = vdwg.mxu0
    %1487 = vmatprep.subr.mxu0 0.0
    %1488 = vmatpush1.msra.mxu0 %v548
    %1489 = vmatprep.subr.mxu0 0.0
    %1490 = vmatpush1.msra.mxu0 %v551
    %1491 = vmatprep.subr.mxu0 0.0
    %1492 = vmatpush1.msra.mxu0 %v554
    %1493 = vmatprep.subr.mxu0 0.0
    %1494 = vmatpush1.msra.mxu0 %v557
    %1495 = vmatprep.subr.mxu0 0.0
    %1496 = vmatpush1.msra.mxu0 %v560
    %1497 = vmatprep.subr.mxu0 0.0
    %1498 = vmatpush1.msra.mxu0 %v563
    %1499 = vmatprep.subr.mxu0 0.0
    %1500 = vmatpush1.msra.mxu0 %v566
    %1501 = vmatprep.subr.mxu0 0.0
    %1502 = vmatpush1.msra.mxu0 %v569
    %1503 = vmatprep.subr.mxu0 0.0
    %1504 = vmatpush1.msra.mxu0 %v572
    %1505 = vmatprep.subr.mxu0 0.0
    %1506 = vmatpush1.msra.mxu0 %v575
    %1507 = vmatprep.subr.mxu0 0.0
    %1508 = vmatpush1.msra.mxu0 %v578
    %1509 = vmatprep.subr.mxu0 0.0
    %1510 = vmatpush1.msra.mxu0 %v581
    %1511 = vmatprep.subr.mxu0 0.0
    %1512 = vmatpush1.msra.mxu0 %v584
    %1513 = vmatprep.subr.mxu0 0.0
    %1514 = vmatpush1.msra.mxu0 %v587
    %1515 = vmatprep.subr.mxu0 0.0
    %1516 = vmatpush1.msra.mxu0 %v590
    %1517 = vmatprep.subr.mxu0 0.0
    %1518 = vmatpush1.msra.mxu0 %v593
    %1519 = vmatprep.subr.mxu0 0.0
    %1520 = vmatpush1.msra.mxu0 0.0
    %1521 = vmatprep.subr.mxu0 0.0
    %1522 = vmatpush1.msra.mxu0 0.0
    %1523 = vmatprep.subr.mxu0 0.0
    %1524 = vmatpush1.msra.mxu0 0.0
    %1525 = vmatprep.subr.mxu0 0.0
    %1526 = vmatpush1.msra.mxu0 0.0
    %1527 = vmatprep.subr.mxu0 0.0
    %1528 = vmatpush1.msra.mxu0 0.0
    %1529 = vmatprep.subr.mxu0 0.0
    %1530 = vmatpush1.msra.mxu0 0.0
    %1531 = vmatprep.subr.mxu0 0.0
    %1532 = vmatpush1.msra.mxu0 0.0
    %1533 = vmatprep.subr.mxu0 0.0
    %1534 = vmatpush1.msra.mxu0 0.0
    %1535 = vmatprep.subr.mxu0 0.0
    %1536 = vmatpush1.msra.mxu0 0.0
    %1537 = vmatprep.subr.mxu0 0.0
    %1538 = vmatpush1.msra.mxu0 0.0
    %1539 = vmatprep.subr.mxu0 0.0
    %1540 = vmatpush1.msra.mxu0 0.0
    %1541 = vmatprep.subr.mxu0 0.0
    %1542 = vmatpush1.msra.mxu0 0.0
    %1543 = vmatprep.subr.mxu0 0.0
    %1544 = vmatpush1.msra.mxu0 0.0
    %1545 = vmatprep.subr.mxu0 0.0
    %1546 = vmatpush1.msra.mxu0 0.0
    %1547 = vmatprep.subr.mxu0 0.0
    %1548 = vmatpush1.msra.mxu0 0.0
    %1549 = vmatprep.subr.mxu0 0.0
    %1550 = vmatpush1.msra.mxu0 0.0
    %1551 = vmatprep.mubr.f32.mxu0 0.0
    %1552 = vmatmul.mubr.f32.gmra.mrb[0].mxu0 %v1266
    %v1553 = vpop.f32.mrb[0].mxu0
    %v1554 = vadd.f32 0.0, %v1553
    %v1555 = vpop.f32.mrb[0].mxu0
    %1556 = vdwg.mxu0
    %v1557 = vadd.f32 %v1269, %v1342
    %v1558 = vsub.f32 0.0, %v1557
    %v1559 = vmul.f32 %v1558, 1.442695
    %v1560 = vpow.pop %v1559
    %v1561 = vadd.f32 %v1560, 1.0
    %v1562 = vrcp.pop %v1561
    %v1563 = vadd.f32 %v1270, %v1344
    %v1564 = vsub.f32 0.0, %v1563
    %v1565 = vmul.f32 %v1564, 1.442695
    %v1566 = vpow.pop %v1565
    %v1567 = vadd.f32 %v1566, 1.0
    %v1568 = vrcp.pop %v1567
    %v1569 = vadd.f32 %v1413, %v599
    %v1570 = vmul.f32 %v1562, %v1569
    %v1571 = vadd.f32 %v1271, %v1570
    %v1572 = vtanh.pop %v1571
    %v1573 = vsub.f32 1.0, %v1568
    %v1574 = vmul.f32 %v1573, %v1572
    %v1575 = vmul.f32 %v1568, %v1246
    %v1576 = vadd.f32 %v1574, %v1575
    %v1577 = vadd.f32 %v1272, %v1483
    %v1578 = vsub.f32 0.0, %v1577
    %v1579 = vmul.f32 %v1578, 1.442695
    %v1580 = vpow.pop %v1579
    %v1581 = vadd.f32 %v1580, 1.0
    %v1582 = vrcp.pop %v1581
    %v1583 = vadd.f32 %v1273, %v1485
    %v1584 = vsub.f32 0.0, %v1583
    %v1585 = vmul.f32 %v1584, 1.442695
    %v1586 = vpow.pop %v1585
    %v1587 = vadd.f32 %v1586, 1.0
    %v1588 = vrcp.pop %v1587
    %v1589 = vadd.f32 %v1554, %v607
    %v1590 = vmul.f32 %v1582, %v1589
    %v1591 = vadd.f32 %v1274, %v1590
    %v1592 = vtanh.pop %v1591
    %v1593 = vsub.f32 1.0, %v1588
    %v1594 = vmul.f32 %v1593, %v1592
    %v1595 = vmul.f32 %v1588, %v1266
    %v1596 = vadd.f32 %v1594, %v1595
    %1597 = vst [vmem:[#allocation3 + $0x10] sm:$0xff] %v1576
    %1598 = vst [vmem:[#allocation4 + $0x28] sm:$0xff] %v1596
    %v1599 = vld [vmem:[#allocation2 + $0x90] sm:$0xff]
    %v1600 = vld [vmem:[#allocation2 + $0x98] sm:$0xff]
    %v1601 = vld [vmem:[#allocation2 + $0xa0] sm:$0xff]
    %v1602 = vld [vmem:[#allocation2 + $0xd8] sm:$0xff]
    %v1603 = vld [vmem:[#allocation2 + $0xe0] sm:$0xff]
    %v1604 = vld [vmem:[#allocation2 + $0xe8] sm:$0xff]
    %1605 = vmatprep.subr.mxu0 %v498
    %1606 = vmatpush1.msra.mxu0 %v497
    %1607 = vmatprep.subr.mxu0 %v501
    %1608 = vmatpush1.msra.mxu0 %v500
    %1609 = vmatprep.subr.mxu0 %v504
    %1610 = vmatpush1.msra.mxu0 %v503
    %1611 = vmatprep.subr.mxu0 %v507
    %1612 = vmatpush1.msra.mxu0 %v506
    %1613 = vmatprep.subr.mxu0 %v510
    %1614 = vmatpush1.msra.mxu0 %v509
    %1615 = vmatprep.subr.mxu0 %v513
    %1616 = vmatpush1.msra.mxu0 %v512
    %1617 = vmatprep.subr.mxu0 %v516
    %1618 = vmatpush1.msra.mxu0 %v515
    %1619 = vmatprep.subr.mxu0 %v519
    %1620 = vmatpush1.msra.mxu0 %v518
    %1621 = vmatprep.subr.mxu0 %v522
    %1622 = vmatpush1.msra.mxu0 %v521
    %1623 = vmatprep.subr.mxu0 %v525
    %1624 = vmatpush1.msra.mxu0 %v524
    %1625 = vmatprep.subr.mxu0 %v528
    %1626 = vmatpush1.msra.mxu0 %v527
    %1627 = vmatprep.subr.mxu0 %v531
    %1628 = vmatpush1.msra.mxu0 %v530
    %1629 = vmatprep.subr.mxu0 %v534
    %1630 = vmatpush1.msra.mxu0 %v533
    %1631 = vmatprep.subr.mxu0 %v537
    %1632 = vmatpush1.msra.mxu0 %v536
    %1633 = vmatprep.subr.mxu0 %v540
    %1634 = vmatpush1.msra.mxu0 %v539
    %1635 = vmatprep.subr.mxu0 %v543
    %1636 = vmatpush1.msra.mxu0 %v542
    %1637 = vmatprep.subr.mxu0 0.0
    %1638 = vmatpush1.msra.mxu0 0.0
    %1639 = vmatprep.subr.mxu0 0.0
    %1640 = vmatpush1.msra.mxu0 0.0
    %1641 = vmatprep.subr.mxu0 0.0
    %1642 = vmatpush1.msra.mxu0 0.0
    %1643 = vmatprep.subr.mxu0 0.0
    %1644 = vmatpush1.msra.mxu0 0.0
    %1645 = vmatprep.subr.mxu0 0.0
    %1646 = vmatpush1.msra.mxu0 0.0
    %1647 = vmatprep.subr.mxu0 0.0
    %1648 = vmatpush1.msra.mxu0 0.0
    %1649 = vmatprep.subr.mxu0 0.0
    %1650 = vmatpush1.msra.mxu0 0.0
    %1651 = vmatprep.subr.mxu0 0.0
    %1652 = vmatpush1.msra.mxu0 0.0
    %1653 = vmatprep.subr.mxu0 0.0
    %1654 = vmatpush1.msra.mxu0 0.0
    %1655 = vmatprep.subr.mxu0 0.0
    %1656 = vmatpush1.msra.mxu0 0.0
    %1657 = vmatprep.subr.mxu0 0.0
    %1658 = vmatpush1.msra.mxu0 0.0
    %1659 = vmatprep.subr.mxu0 0.0
    %1660 = vmatpush1.msra.mxu0 0.0
    %1661 = vmatprep.subr.mxu0 0.0
    %1662 = vmatpush1.msra.mxu0 0.0
    %1663 = vmatprep.subr.mxu0 0.0
    %1664 = vmatpush1.msra.mxu0 0.0
    %1665 = vmatprep.subr.mxu0 0.0
    %1666 = vmatpush1.msra.mxu0 0.0
    %1667 = vmatprep.subr.mxu0 0.0
    %1668 = vmatpush1.msra.mxu0 0.0
    %1669 = vmatprep.mubr.f32.mxu0 0.0
    %1670 = vmatmul.mubr.f32.gmra.mrb[0].mxu0 %v1576
    %v1671 = vpop.f32.mrb[0].mxu0
    %v1672 = vadd.f32 0.0, %v1671
    %v1673 = vpop.f32.mrb[0].mxu0
    %v1674 = vadd.f32 0.0, %v1673
    %1675 = vdwg.mxu0
    %1676 = vmatprep.subr.mxu0 0.0
    %1677 = vmatpush1.msra.mxu0 %v499
    %1678 = vmatprep.subr.mxu0 0.0
    %1679 = vmatpush1.msra.mxu0 %v502
    %1680 = vmatprep.subr.mxu0 0.0
    %1681 = vmatpush1.msra.mxu0 %v505
    %1682 = vmatprep.subr.mxu0 0.0
    %1683 = vmatpush1.msra.mxu0 %v508
    %1684 = vmatprep.subr.mxu0 0.0
    %1685 = vmatpush1.msra.mxu0 %v511
    %1686 = vmatprep.subr.mxu0 0.0
    %1687 = vmatpush1.msra.mxu0 %v514
    %1688 = vmatprep.subr.mxu0 0.0
    %1689 = vmatpush1.msra.mxu0 %v517
    %1690 = vmatprep.subr.mxu0 0.0
    %1691 = vmatpush1.msra.mxu0 %v520
    %1692 = vmatprep.subr.mxu0 0.0
    %1693 = vmatpush1.msra.mxu0 %v523
    %1694 = vmatprep.subr.mxu0 0.0
    %1695 = vmatpush1.msra.mxu0 %v526
    %1696 = vmatprep.subr.mxu0 0.0
    %1697 = vmatpush1.msra.mxu0 %v529
    %1698 = vmatprep.subr.mxu0 0.0
    %1699 = vmatpush1.msra.mxu0 %v532
    %1700 = vmatprep.subr.mxu0 0.0
    %1701 = vmatpush1.msra.mxu0 %v535
    %1702 = vmatprep.subr.mxu0 0.0
    %1703 = vmatpush1.msra.mxu0 %v538
    %1704 = vmatprep.subr.mxu0 0.0
    %1705 = vmatpush1.msra.mxu0 %v541
    %1706 = vmatprep.subr.mxu0 0.0
    %1707 = vmatpush1.msra.mxu0 %v544
    %1708 = vmatprep.subr.mxu0 0.0
    %1709 = vmatpush1.msra.mxu0 0.0
    %1710 = vmatprep.subr.mxu0 0.0
    %1711 = vmatpush1.msra.mxu0 0.0
    %1712 = vmatprep.subr.mxu0 0.0
    %1713 = vmatpush1.msra.mxu0 0.0
    %1714 = vmatprep.subr.mxu0 0.0
    %1715 = vmatpush1.msra.mxu0 0.0
    %1716 = vmatprep.subr.mxu0 0.0
    %1717 = vmatpush1.msra.mxu0 0.0
    %1718 = vmatprep.subr.mxu0 0.0
    %1719 = vmatpush1.msra.mxu0 0.0
    %1720 = vmatprep.subr.mxu0 0.0
    %1721 = vmatpush1.msra.mxu0 0.0
    %1722 = vmatprep.subr.mxu0 0.0
    %1723 = vmatpush1.msra.mxu0 0.0
    %1724 = vmatprep.subr.mxu0 0.0
    %1725 = vmatpush1.msra.mxu0 0.0
    %1726 = vmatprep.subr.mxu0 0.0
    %1727 = vmatpush1.msra.mxu0 0.0
    %1728 = vmatprep.subr.mxu0 0.0
    %1729 = vmatpush1.msra.mxu0 0.0
    %1730 = vmatprep.subr.mxu0 0.0
    %1731 = vmatpush1.msra.mxu0 0.0
    %1732 = vmatprep.subr.mxu0 0.0
    %1733 = vmatpush1.msra.mxu0 0.0
    %1734 = vmatprep.subr.mxu0 0.0
    %1735 = vmatpush1.msra.mxu0 0.0
    %1736 = vmatprep.subr.mxu0 0.0
    %1737 = vmatpush1.msra.mxu0 0.0
    %1738 = vmatprep.subr.mxu0 0.0
    %1739 = vmatpush1.msra.mxu0 0.0
    %1740 = vmatprep.mubr.f32.mxu0 0.0
    %1741 = vmatmul.mubr.f32.gmra.mrb[0].mxu0 %v1576
    %v1742 = vpop.f32.mrb[0].mxu0
    %v1743 = vadd.f32 0.0, %v1742
    %v1744 = vpop.f32.mrb[0].mxu0
    %1745 = vdwg.mxu0
    %1746 = vmatprep.subr.mxu0 %v547
    %1747 = vmatpush1.msra.mxu0 %v546
    %1748 = vmatprep.subr.mxu0 %v550
    %1749 = vmatpush1.msra.mxu0 %v549
    %1750 = vmatprep.subr.mxu0 %v553
    %1751 = vmatpush1.msra.mxu0 %v552
    %1752 = vmatprep.subr.mxu0 %v556
    %1753 = vmatpush1.msra.mxu0 %v555
    %1754 = vmatprep.subr.mxu0 %v559
    %1755 = vmatpush1.msra.mxu0 %v558
    %1756 = vmatprep.subr.mxu0 %v562
    %1757 = vmatpush1.msra.mxu0 %v561
    %1758 = vmatprep.subr.mxu0 %v565
    %1759 = vmatpush1.msra.mxu0 %v564
    %1760 = vmatprep.subr.mxu0 %v568
    %1761 = vmatpush1.msra.mxu0 %v567
    %1762 = vmatprep.subr.mxu0 %v571
    %1763 = vmatpush1.msra.mxu0 %v570
    %1764 = vmatprep.subr.mxu0 %v574
    %1765 = vmatpush1.msra.mxu0 %v573
    %1766 = vmatprep.subr.mxu0 %v577
    %1767 = vmatpush1.msra.mxu0 %v576
    %1768 = vmatprep.subr.mxu0 %v580
    %1769 = vmatpush1.msra.mxu0 %v579
    %1770 = vmatprep.subr.mxu0 %v583
    %1771 = vmatpush1.msra.mxu0 %v582
    %1772 = vmatprep.subr.mxu0 %v586
    %1773 = vmatpush1.msra.mxu0 %v585
    %1774 = vmatprep.subr.mxu0 %v589
    %1775 = vmatpush1.msra.mxu0 %v588
    %1776 = vmatprep.subr.mxu0 %v592
    %1777 = vmatpush1.msra.mxu0 %v591
    %1778 = vmatprep.subr.mxu0 0.0
    %1779 = vmatpush1.msra.mxu0 0.0
    %1780 = vmatprep.subr.mxu0 0.0
    %1781 = vmatpush1.msra.mxu0 0.0
    %1782 = vmatprep.subr.mxu0 0.0
    %1783 = vmatpush1.msra.mxu0 0.0
    %1784 = vmatprep.subr.mxu0 0.0
    %1785 = vmatpush1.msra.mxu0 0.0
    %1786 = vmatprep.subr.mxu0 0.0
    %1787 = vmatpush1.msra.mxu0 0.0
    %1788 = vmatprep.subr.mxu0 0.0
    %1789 = vmatpush1.msra.mxu0 0.0
    %1790 = vmatprep.subr.mxu0 0.0
    %1791 = vmatpush1.msra.mxu0 0.0
    %1792 = vmatprep.subr.mxu0 0.0
    %1793 = vmatpush1.msra.mxu0 0.0
    %1794 = vmatprep.subr.mxu0 0.0
    %1795 = vmatpush1.msra.mxu0 0.0
    %1796 = vmatprep.subr.mxu0 0.0
    %1797 = vmatpush1.msra.mxu0 0.0
    %1798 = vmatprep.subr.mxu0 0.0
    %1799 = vmatpush1.msra.mxu0 0.0
    %1800 = vmatprep.subr.mxu0 0.0
    %1801 = vmatpush1.msra.mxu0 0.0
    %1802 = vmatprep.subr.mxu0 0.0
    %1803 = vmatpush1.msra.mxu0 0.0
    %1804 = vmatprep.subr.mxu0 0.0
    %1805 = vmatpush1.msra.mxu0 0.0
    %1806 = vmatprep.subr.mxu0 0.0
    %1807 = vmatpush1.msra.mxu0 0.0
    %1808 = vmatprep.subr.mxu0 0.0
    %1809 = vmatpush1.msra.mxu0 0.0
    %1810 = vmatprep.mubr.f32.mxu0 0.0
    %1811 = vmatmul.mubr.f32.gmra.mrb[0].mxu0 %v1596
    %v1812 = vpop.f32.mrb[0].mxu0
    %v1813 = vadd.f32 0.0, %v1812
    %v1814 = vpop.f32.mrb[0].mxu0
    %v1815 = vadd.f32 0.0, %v1814
    %1816 = vdwg.mxu0
    %1817 = vmatprep.subr.mxu0 0.0
    %1818 = vmatpush1.msra.mxu0 %v548
    %1819 = vmatprep.subr.mxu0 0.0
    %1820 = vmatpush1.msra.mxu0 %v551
    %1821 = vmatprep.subr.mxu0 0.0
    %1822 = vmatpush1.msra.mxu0 %v554
    %1823 = vmatprep.subr.mxu0 0.0
    %1824 = vmatpush1.msra.mxu0 %v557
    %1825 = vmatprep.subr.mxu0 0.0
    %1826 = vmatpush1.msra.mxu0 %v560
    %1827 = vmatprep.subr.mxu0 0.0
    %1828 = vmatpush1.msra.mxu0 %v563
    %1829 = vmatprep.subr.mxu0 0.0
    %1830 = vmatpush1.msra.mxu0 %v566
    %1831 = vmatprep.subr.mxu0 0.0
    %1832 = vmatpush1.msra.mxu0 %v569
    %1833 = vmatprep.subr.mxu0 0.0
    %1834 = vmatpush1.msra.mxu0 %v572
    %1835 = vmatprep.subr.mxu0 0.0
    %1836 = vmatpush1.msra.mxu0 %v575
    %1837 = vmatprep.subr.mxu0 0.0
    %1838 = vmatpush1.msra.mxu0 %v578
    %1839 = vmatprep.subr.mxu0 0.0
    %1840 = vmatpush1.msra.mxu0 %v581
    %1841 = vmatprep.subr.mxu0 0.0
    %1842 = vmatpush1.msra.mxu0 %v584
    %1843 = vmatprep.subr.mxu0 0.0
    %1844 = vmatpush1.msra.mxu0 %v587
    %1845 = vmatprep.subr.mxu0 0.0
    %1846 = vmatpush1.msra.mxu0 %v590
    %1847 = vmatprep.subr.mxu0 0.0
    %1848 = vmatpush1.msra.mxu0 %v593
    %1849 = vmatprep.subr.mxu0 0.0
    %1850 = vmatpush1.msra.mxu0 0.0
    %1851 = vmatprep.subr.mxu0 0.0
    %1852 = vmatpush1.msra.mxu0 0.0
    %1853 = vmatprep.subr.mxu0 0.0
    %1854 = vmatpush1.msra.mxu0 0.0
    %1855 = vmatprep.subr.mxu0 0.0
    %1856 = vmatpush1.msra.mxu0 0.0
    %1857 = vmatprep.subr.mxu0 0.0
    %1858 = vmatpush1.msra.mxu0 0.0
    %1859 = vmatprep.subr.mxu0 0.0
    %1860 = vmatpush1.msra.mxu0 0.0
    %1861 = vmatprep.subr.mxu0 0.0
    %1862 = vmatpush1.msra.mxu0 0.0
    %1863 = vmatprep.subr.mxu0 0.0
    %1864 = vmatpush1.msra.mxu0 0.0
    %1865 = vmatprep.subr.mxu0 0.0
    %1866 = vmatpush1.msra.mxu0 0.0
    %1867 = vmatprep.subr.mxu0 0.0
    %1868 = vmatpush1.msra.mxu0 0.0
    %1869 = vmatprep.subr.mxu0 0.0
    %1870 = vmatpush1.msra.mxu0 0.0
    %1871 = vmatprep.subr.mxu0 0.0
    %1872 = vmatpush1.msra.mxu0 0.0
    %1873 = vmatprep.subr.mxu0 0.0
    %1874 = vmatpush1.msra.mxu0 0.0
    %1875 = vmatprep.subr.mxu0 0.0
    %1876 = vmatpush1.msra.mxu0 0.0
    %1877 = vmatprep.subr.mxu0 0.0
    %1878 = vmatpush1.msra.mxu0 0.0
    %1879 = vmatprep.subr.mxu0 0.0
    %1880 = vmatpush1.msra.mxu0 0.0
    %1881 = vmatprep.mubr.f32.mxu0 0.0
    %1882 = vmatmul.mubr.f32.gmra.mrb[0].mxu0 %v1596
    %v1883 = vpop.f32.mrb[0].mxu0
    %v1884 = vadd.f32 0.0, %v1883
    %v1885 = vpop.f32.mrb[0].mxu0
    %1886 = vdwg.mxu0
    %v1887 = vadd.f32 %v1599, %v1672
    %v1888 = vsub.f32 0.0, %v1887
    %v1889 = vmul.f32 %v1888, 1.442695
    %v1890 = vpow.pop %v1889
    %v1891 = vadd.f32 %v1890, 1.0
    %v1892 = vrcp.pop %v1891
    %v1893 = vadd.f32 %v1600, %v1674
    %v1894 = vsub.f32 0.0, %v1893
    %v1895 = vmul.f32 %v1894, 1.442695
    %v1896 = vpow.pop %v1895
    %v1897 = vadd.f32 %v1896, 1.0
    %v1898 = vrcp.pop %v1897
    %v1899 = vadd.f32 %v1743, %v599
    %v1900 = vmul.f32 %v1892, %v1899
    %v1901 = vadd.f32 %v1601, %v1900
    %v1902 = vtanh.pop %v1901
    %v1903 = vsub.f32 1.0, %v1898
    %v1904 = vmul.f32 %v1903, %v1902
    %v1905 = vmul.f32 %v1898, %v1576
    %v1906 = vadd.f32 %v1904, %v1905
    %v1907 = vadd.f32 %v1602, %v1813
    %v1908 = vsub.f32 0.0, %v1907
    %v1909 = vmul.f32 %v1908, 1.442695
    %v1910 = vpow.pop %v1909
    %v1911 = vadd.f32 %v1910, 1.0
    %v1912 = vrcp.pop %v1911
    %v1913 = vadd.f32 %v1603, %v1815
    %v1914 = vsub.f32 0.0, %v1913
    %v1915 = vmul.f32 %v1914, 1.442695
    %v1916 = vpow.pop %v1915
    %v1917 = vadd.f32 %v1916, 1.0
    %v1918 = vrcp.pop %v1917
    %v1919 = vadd.f32 %v1884, %v607
    %v1920 = vmul.f32 %v1912, %v1919
    %v1921 = vadd.f32 %v1604, %v1920
    %v1922 = vtanh.pop %v1921
    %v1923 = vsub.f32 1.0, %v1918
    %v1924 = vmul.f32 %v1923, %v1922
    %v1925 = vmul.f32 %v1918, %v1596
    %v1926 = vadd.f32 %v1924, %v1925
    %1927 = vst [vmem:[#allocation3 + $0x18] sm:$0xff] %v1906
    %1928 = vst [vmem:[#allocation4 + $0x20] sm:$0xff] %v1926
    %v1929 = vld [vmem:[#allocation2 + $0xc0] sm:$0xff]
    %v1930 = vld [vmem:[#allocation2 + $0xc8] sm:$0xff]
    %v1931 = vld [vmem:[#allocation2 + $0xd0] sm:$0xff]
    %v1932 = vld [vmem:[#allocation2 + $0xa8] sm:$0xff]
    %v1933 = vld [vmem:[#allocation2 + $0xb0] sm:$0xff]
    %v1934 = vld [vmem:[#allocation2 + $0xb8] sm:$0xff]
    %1935 = vmatprep.subr.mxu0 %v498
    %1936 = vmatpush1.msra.mxu0 %v497
    %1937 = vmatprep.subr.mxu0 %v501
    %1938 = vmatpush1.msra.mxu0 %v500
    %1939 = vmatprep.subr.mxu0 %v504
    %1940 = vmatpush1.msra.mxu0 %v503
    %1941 = vmatprep.subr.mxu0 %v507
    %1942 = vmatpush1.msra.mxu0 %v506
    %1943 = vmatprep.subr.mxu0 %v510
    %1944 = vmatpush1.msra.mxu0 %v509
    %1945 = vmatprep.subr.mxu0 %v513
    %1946 = vmatpush1.msra.mxu0 %v512
    %1947 = vmatprep.subr.mxu0 %v516
    %1948 = vmatpush1.msra.mxu0 %v515
    %1949 = vmatprep.subr.mxu0 %v519
    %1950 = vmatpush1.msra.mxu0 %v518
    %1951 = vmatprep.subr.mxu0 %v522
    %1952 = vmatpush1.msra.mxu0 %v521
    %1953 = vmatprep.subr.mxu0 %v525
    %1954 = vmatpush1.msra.mxu0 %v524
    %1955 = vmatprep.subr.mxu0 %v528
    %1956 = vmatpush1.msra.mxu0 %v527
    %1957 = vmatprep.subr.mxu0 %v531
    %1958 = vmatpush1.msra.mxu0 %v530
    %1959 = vmatprep.subr.mxu0 %v534
    %1960 = vmatpush1.msra.mxu0 %v533
    %1961 = vmatprep.subr.mxu0 %v537
    %1962 = vmatpush1.msra.mxu0 %v536
    %1963 = vmatprep.subr.mxu0 %v540
    %1964 = vmatpush1.msra.mxu0 %v539
    %1965 = vmatprep.subr.mxu0 %v543
    %1966 = vmatpush1.msra.mxu0 %v542
    %1967 = vmatprep.subr.mxu0 0.0
    %1968 = vmatpush1.msra.mxu0 0.0
    %1969 = vmatprep.subr.mxu0 0.0
    %1970 = vmatpush1.msra.mxu0 0.0
    %1971 = vmatprep.subr.mxu0 0.0
    %1972 = vmatpush1.msra.mxu0 0.0
    %1973 = vmatprep.subr.mxu0 0.0
    %1974 = vmatpush1.msra.mxu0 0.0
    %1975 = vmatprep.subr.mxu0 0.0
    %1976 = vmatpush1.msra.mxu0 0.0
    %1977 = vmatprep.subr.mxu0 0.0
    %1978 = vmatpush1.msra.mxu0 0.0
    %1979 = vmatprep.subr.mxu0 0.0
    %1980 = vmatpush1.msra.mxu0 0.0
    %1981 = vmatprep.subr.mxu0 0.0
    %1982 = vmatpush1.msra.mxu0 0.0
    %1983 = vmatprep.subr.mxu0 0.0
    %1984 = vmatpush1.msra.mxu0 0.0
    %1985 = vmatprep.subr.mxu0 0.0
    %1986 = vmatpush1.msra.mxu0 0.0
    %1987 = vmatprep.subr.mxu0 0.0
    %1988 = vmatpush1.msra.mxu0 0.0
    %1989 = vmatprep.subr.mxu0 0.0
    %1990 = vmatpush1.msra.mxu0 0.0
    %1991 = vmatprep.subr.mxu0 0.0
    %1992 = vmatpush1.msra.mxu0 0.0
    %1993 = vmatprep.subr.mxu0 0.0
    %1994 = vmatpush1.msra.mxu0 0.0
    %1995 = vmatprep.subr.mxu0 0.0
    %1996 = vmatpush1.msra.mxu0 0.0
    %1997 = vmatprep.subr.mxu0 0.0
    %1998 = vmatpush1.msra.mxu0 0.0
    %1999 = vmatprep.mubr.f32.mxu0 0.0
    %2000 = vmatmul.mubr.f32.gmra.mrb[0].mxu0 %v1906
    %v2001 = vpop.f32.mrb[0].mxu0
    %v2002 = vadd.f32 0.0, %v2001
    %v2003 = vpop.f32.mrb[0].mxu0
    %v2004 = vadd.f32 0.0, %v2003
    %2005 = vdwg.mxu0
    %2006 = vmatprep.subr.mxu0 0.0
    %2007 = vmatpush1.msra.mxu0 %v499
    %2008 = vmatprep.subr.mxu0 0.0
    %2009 = vmatpush1.msra.mxu0 %v502
    %2010 = vmatprep.subr.mxu0 0.0
    %2011 = vmatpush1.msra.mxu0 %v505
    %2012 = vmatprep.subr.mxu0 0.0
    %2013 = vmatpush1.msra.mxu0 %v508
    %2014 = vmatprep.subr.mxu0 0.0
    %2015 = vmatpush1.msra.mxu0 %v511
    %2016 = vmatprep.subr.mxu0 0.0
    %2017 = vmatpush1.msra.mxu0 %v514
    %2018 = vmatprep.subr.mxu0 0.0
    %2019 = vmatpush1.msra.mxu0 %v517
    %2020 = vmatprep.subr.mxu0 0.0
    %2021 = vmatpush1.msra.mxu0 %v520
    %2022 = vmatprep.subr.mxu0 0.0
    %2023 = vmatpush1.msra.mxu0 %v523
    %2024 = vmatprep.subr.mxu0 0.0
    %2025 = vmatpush1.msra.mxu0 %v526
    %2026 = vmatprep.subr.mxu0 0.0
    %2027 = vmatpush1.msra.mxu0 %v529
    %2028 = vmatprep.subr.mxu0 0.0
    %2029 = vmatpush1.msra.mxu0 %v532
    %2030 = vmatprep.subr.mxu0 0.0
    %2031 = vmatpush1.msra.mxu0 %v535
    %2032 = vmatprep.subr.mxu0 0.0
    %2033 = vmatpush1.msra.mxu0 %v538
    %2034 = vmatprep.subr.mxu0 0.0
    %2035 = vmatpush1.msra.mxu0 %v541
    %2036 = vmatprep.subr.mxu0 0.0
    %2037 = vmatpush1.msra.mxu0 %v544
    %2038 = vmatprep.subr.mxu0 0.0
    %2039 = vmatpush1.msra.mxu0 0.0
    %2040 = vmatprep.subr.mxu0 0.0
    %2041 = vmatpush1.msra.mxu0 0.0
    %2042 = vmatprep.subr.mxu0 0.0
    %2043 = vmatpush1.msra.mxu0 0.0
    %2044 = vmatprep.subr.mxu0 0.0
    %2045 = vmatpush1.msra.mxu0 0.0
    %2046 = vmatprep.subr.mxu0 0.0
    %2047 = vmatpush1.msra.mxu0 0.0
    %2048 = vmatprep.subr.mxu0 0.0
    %2049 = vmatpush1.msra.mxu0 0.0
    %2050 = vmatprep.subr.mxu0 0.0
    %2051 = vmatpush1.msra.mxu0 0.0
    %2052 = vmatprep.subr.mxu0 0.0
    %2053 = vmatpush1.msra.mxu0 0.0
    %2054 = vmatprep.subr.mxu0 0.0
    %2055 = vmatpush1.msra.mxu0 0.0
    %2056 = vmatprep.subr.mxu0 0.0
    %2057 = vmatpush1.msra.mxu0 0.0
    %2058 = vmatprep.subr.mxu0 0.0
    %2059 = vmatpush1.msra.mxu0 0.0
    %2060 = vmatprep.subr.mxu0 0.0
    %2061 = vmatpush1.msra.mxu0 0.0
    %2062 = vmatprep.subr.mxu0 0.0
    %2063 = vmatpush1.msra.mxu0 0.0
    %2064 = vmatprep.subr.mxu0 0.0
    %2065 = vmatpush1.msra.mxu0 0.0
    %2066 = vmatprep.subr.mxu0 0.0
    %2067 = vmatpush1.msra.mxu0 0.0
    %2068 = vmatprep.subr.mxu0 0.0
    %2069 = vmatpush1.msra.mxu0 0.0
    %2070 = vmatprep.mubr.f32.mxu0 0.0
    %2071 = vmatmul.mubr.f32.gmra.mrb[0].mxu0 %v1906
    %v2072 = vpop.f32.mrb[0].mxu0
    %v2073 = vadd.f32 0.0, %v2072
    %v2074 = vpop.f32.mrb[0].mxu0
    %2075 = vdwg.mxu0
    %2076 = vmatprep.subr.mxu0 %v547
    %2077 = vmatpush1.msra.mxu0 %v546
    %2078 = vmatprep.subr.mxu0 %v550
    %2079 = vmatpush1.msra.mxu0 %v549
    %2080 = vmatprep.subr.mxu0 %v553
    %2081 = vmatpush1.msra.mxu0 %v552
    %2082 = vmatprep.subr.mxu0 %v556
    %2083 = vmatpush1.msra.mxu0 %v555
    %2084 = vmatprep.subr.mxu0 %v559
    %2085 = vmatpush1.msra.mxu0 %v558
    %2086 = vmatprep.subr.mxu0 %v562
    %2087 = vmatpush1.msra.mxu0 %v561
    %2088 = vmatprep.subr.mxu0 %v565
    %2089 = vmatpush1.msra.mxu0 %v564
    %2090 = vmatprep.subr.mxu0 %v568
    %2091 = vmatpush1.msra.mxu0 %v567
    %2092 = vmatprep.subr.mxu0 %v571
    %2093 = vmatpush1.msra.mxu0 %v570
    %2094 = vmatprep.subr.mxu0 %v574
    %2095 = vmatpush1.msra.mxu0 %v573
    %2096 = vmatprep.subr.mxu0 %v577
    %2097 = vmatpush1.msra.mxu0 %v576
    %2098 = vmatprep.subr.mxu0 %v580
    %2099 = vmatpush1.msra.mxu0 %v579
    %2100 = vmatprep.subr.mxu0 %v583
    %2101 = vmatpush1.msra.mxu0 %v582
    %2102 = vmatprep.subr.mxu0 %v586
    %2103 = vmatpush1.msra.mxu0 %v585
    %2104 = vmatprep.subr.mxu0 %v589
    %2105 = vmatpush1.msra.mxu0 %v588
    %2106 = vmatprep.subr.mxu0 %v592
    %2107 = vmatpush1.msra.mxu0 %v591
    %2108 = vmatprep.subr.mxu0 0.0
    %2109 = vmatpush1.msra.mxu0 0.0
    %2110 = vmatprep.subr.mxu0 0.0
    %2111 = vmatpush1.msra.mxu0 0.0
    %2112 = vmatprep.subr.mxu0 0.0
    %2113 = vmatpush1.msra.mxu0 0.0
    %2114 = vmatprep.subr.mxu0 0.0
    %2115 = vmatpush1.msra.mxu0 0.0
    %2116 = vmatprep.subr.mxu0 0.0
    %2117 = vmatpush1.msra.mxu0 0.0
    %2118 = vmatprep.subr.mxu0 0.0
    %2119 = vmatpush1.msra.mxu0 0.0
    %2120 = vmatprep.subr.mxu0 0.0
    %2121 = vmatpush1.msra.mxu0 0.0
    %2122 = vmatprep.subr.mxu0 0.0
    %2123 = vmatpush1.msra.mxu0 0.0
    %2124 = vmatprep.subr.mxu0 0.0
    %2125 = vmatpush1.msra.mxu0 0.0
    %2126 = vmatprep.subr.mxu0 0.0
    %2127 = vmatpush1.msra.mxu0 0.0
    %2128 = vmatprep.subr.mxu0 0.0
    %2129 = vmatpush1.msra.mxu0 0.0
    %2130 = vmatprep.subr.mxu0 0.0
    %2131 = vmatpush1.msra.mxu0 0.0
    %2132 = vmatprep.subr.mxu0 0.0
    %2133 = vmatpush1.msra.mxu0 0.0
    %2134 = vmatprep.subr.mxu0 0.0
    %2135 = vmatpush1.msra.mxu0 0.0
    %2136 = vmatprep.subr.mxu0 0.0
    %2137 = vmatpush1.msra.mxu0 0.0
    %2138 = vmatprep.subr.mxu0 0.0
    %2139 = vmatpush1.msra.mxu0 0.0
    %2140 = vmatprep.mubr.f32.mxu0 0.0
    %2141 = vmatmul.mubr.f32.gmra.mrb[0].mxu0 %v1926
    %v2142 = vpop.f32.mrb[0].mxu0
    %v2143 = vadd.f32 0.0, %v2142
    %v2144 = vpop.f32.mrb[0].mxu0
    %v2145 = vadd.f32 0.0, %v2144
    %2146 = vdwg.mxu0
    %2147 = vmatprep.subr.mxu0 0.0
    %2148 = vmatpush1.msra.mxu0 %v548
    %2149 = vmatprep.subr.mxu0 0.0
    %2150 = vmatpush1.msra.mxu0 %v551
    %2151 = vmatprep.subr.mxu0 0.0
    %2152 = vmatpush1.msra.mxu0 %v554
    %2153 = vmatprep.subr.mxu0 0.0
    %2154 = vmatpush1.msra.mxu0 %v557
    %2155 = vmatprep.subr.mxu0 0.0
    %2156 = vmatpush1.msra.mxu0 %v560
    %2157 = vmatprep.subr.mxu0 0.0
    %2158 = vmatpush1.msra.mxu0 %v563
    %2159 = vmatprep.subr.mxu0 0.0
    %2160 = vmatpush1.msra.mxu0 %v566
    %2161 = vmatprep.subr.mxu0 0.0
    %2162 = vmatpush1.msra.mxu0 %v569
    %2163 = vmatprep.subr.mxu0 0.0
    %2164 = vmatpush1.msra.mxu0 %v572
    %2165 = vmatprep.subr.mxu0 0.0
    %2166 = vmatpush1.msra.mxu0 %v575
    %2167 = vmatprep.subr.mxu0 0.0
    %2168 = vmatpush1.msra.mxu0 %v578
    %2169 = vmatprep.subr.mxu0 0.0
    %2170 = vmatpush1.msra.mxu0 %v581
    %2171 = vmatprep.subr.mxu0 0.0
    %2172 = vmatpush1.msra.mxu0 %v584
    %2173 = vmatprep.subr.mxu0 0.0
    %2174 = vmatpush1.msra.mxu0 %v587
    %2175 = vmatprep.subr.mxu0 0.0
    %2176 = vmatpush1.msra.mxu0 %v590
    %2177 = vmatprep.subr.mxu0 0.0
    %2178 = vmatpush1.msra.mxu0 %v593
    %2179 = vmatprep.subr.mxu0 0.0
    %2180 = vmatpush1.msra.mxu0 0.0
    %2181 = vmatprep.subr.mxu0 0.0
    %2182 = vmatpush1.msra.mxu0 0.0
    %2183 = vmatprep.subr.mxu0 0.0
    %2184 = vmatpush1.msra.mxu0 0.0
    %2185 = vmatprep.subr.mxu0 0.0
    %2186 = vmatpush1.msra.mxu0 0.0
    %2187 = vmatprep.subr.mxu0 0.0
    %2188 = vmatpush1.msra.mxu0 0.0
    %2189 = vmatprep.subr.mxu0 0.0
    %2190 = vmatpush1.msra.mxu0 0.0
    %2191 = vmatprep.subr.mxu0 0.0
    %2192 = vmatpush1.msra.mxu0 0.0
    %2193 = vmatprep.subr.mxu0 0.0
    %2194 = vmatpush1.msra.mxu0 0.0
    %2195 = vmatprep.subr.mxu0 0.0
    %2196 = vmatpush1.msra.mxu0 0.0
    %2197 = vmatprep.subr.mxu0 0.0
    %2198 = vmatpush1.msra.mxu0 0.0
    %2199 = vmatprep.subr.mxu0 0.0
    %2200 = vmatpush1.msra.mxu0 0.0
    %2201 = vmatprep.subr.mxu0 0.0
    %2202 = vmatpush1.msra.mxu0 0.0
    %2203 = vmatprep.subr.mxu0 0.0
    %2204 = vmatpush1.msra.mxu0 0.0
    %2205 = vmatprep.subr.mxu0 0.0
    %2206 = vmatpush1.msra.mxu0 0.0
    %2207 = vmatprep.subr.mxu0 0.0
    %2208 = vmatpush1.msra.mxu0 0.0
    %2209 = vmatprep.subr.mxu0 0.0
    %2210 = vmatpush1.msra.mxu0 0.0
    %2211 = vmatprep.mubr.f32.mxu0 0.0
    %2212 = vmatmul.mubr.f32.gmra.mrb[0].mxu0 %v1926
    %v2213 = vpop.f32.mrb[0].mxu0
    %v2214 = vadd.f32 0.0, %v2213
    %v2215 = vpop.f32.mrb[0].mxu0
    %2216 = vdwg.mxu0
    %v2217 = vadd.f32 %v1929, %v2002
    %v2218 = vsub.f32 0.0, %v2217
    %v2219 = vmul.f32 %v2218, 1.442695
    %v2220 = vpow.pop %v2219
    %v2221 = vadd.f32 %v2220, 1.0
    %v2222 = vrcp.pop %v2221
    %v2223 = vadd.f32 %v1930, %v2004
    %v2224 = vsub.f32 0.0, %v2223
    %v2225 = vmul.f32 %v2224, 1.442695
    %v2226 = vpow.pop %v2225
    %v2227 = vadd.f32 %v2226, 1.0
    %v2228 = vrcp.pop %v2227
    %v2229 = vadd.f32 %v2073, %v599
    %v2230 = vmul.f32 %v2222, %v2229
    %v2231 = vadd.f32 %v1931, %v2230
    %v2232 = vtanh.pop %v2231
    %v2233 = vsub.f32 1.0, %v2228
    %v2234 = vmul.f32 %v2233, %v2232
    %v2235 = vmul.f32 %v2228, %v1906
    %v2236 = vadd.f32 %v2234, %v2235
    %v2237 = vadd.f32 %v1932, %v2143
    %v2238 = vsub.f32 0.0, %v2237
    %v2239 = vmul.f32 %v2238, 1.442695
    %v2240 = vpow.pop %v2239
    %v2241 = vadd.f32 %v2240, 1.0
    %v2242 = vrcp.pop %v2241
    %v2243 = vadd.f32 %v1933, %v2145
    %v2244 = vsub.f32 0.0, %v2243
    %v2245 = vmul.f32 %v2244, 1.442695
    %v2246 = vpow.pop %v2245
    %v2247 = vadd.f32 %v2246, 1.0
    %v2248 = vrcp.pop %v2247
    %v2249 = vadd.f32 %v2214, %v607
    %v2250 = vmul.f32 %v2242, %v2249
    %v2251 = vadd.f32 %v1934, %v2250
    %v2252 = vtanh.pop %v2251
    %v2253 = vsub.f32 1.0, %v2248
    %v2254 = vmul.f32 %v2253, %v2252
    %v2255 = vmul.f32 %v2248, %v1926
    %v2256 = vadd.f32 %v2254, %v2255
    %2257 = vst [vmem:[#allocation3 + $0x20] sm:$0xff] %v2236
    %2258 = vst [vmem:[#allocation4 + $0x18] sm:$0xff] %v2256
    %v2259 = vld [vmem:[#allocation2 + $0xf0] sm:$0xff]
    %v2260 = vld [vmem:[#allocation2 + $0xf8] sm:$0xff]
    %v2261 = vld [vmem:[#allocation2 + $0x100] sm:$0xff]
    %v2262 = vld [vmem:[#allocation2 + $0x78] sm:$0xff]
    %v2263 = vld [vmem:[#allocation2 + $0x80] sm:$0xff]
    %v2264 = vld [vmem:[#allocation2 + $0x88] sm:$0xff]
    %2265 = vmatprep.subr.mxu0 %v498
    %2266 = vmatpush1.msra.mxu0 %v497
    %2267 = vmatprep.subr.mxu0 %v501
    %2268 = vmatpush1.msra.mxu0 %v500
    %2269 = vmatprep.subr.mxu0 %v504
    %2270 = vmatpush1.msra.mxu0 %v503
    %2271 = vmatprep.subr.mxu0 %v507
    %2272 = vmatpush1.msra.mxu0 %v506
    %2273 = vmatprep.subr.mxu0 %v510
    %2274 = vmatpush1.msra.mxu0 %v509
    %2275 = vmatprep.subr.mxu0 %v513
    %2276 = vmatpush1.msra.mxu0 %v512
    %2277 = vmatprep.subr.mxu0 %v516
    %2278 = vmatpush1.msra.mxu0 %v515
    %2279 = vmatprep.subr.mxu0 %v519
    %2280 = vmatpush1.msra.mxu0 %v518
    %2281 = vmatprep.subr.mxu0 %v522
    %2282 = vmatpush1.msra.mxu0 %v521
    %2283 = vmatprep.subr.mxu0 %v525
    %2284 = vmatpush1.msra.mxu0 %v524
    %2285 = vmatprep.subr.mxu0 %v528
    %2286 = vmatpush1.msra.mxu0 %v527
    %2287 = vmatprep.subr.mxu0 %v531
    %2288 = vmatpush1.msra.mxu0 %v530
    %2289 = vmatprep.subr.mxu0 %v534
    %2290 = vmatpush1.msra.mxu0 %v533
    %2291 = vmatprep.subr.mxu0 %v537
    %2292 = vmatpush1.msra.mxu0 %v536
    %2293 = vmatprep.subr.mxu0 %v540
    %2294 = vmatpush1.msra.mxu0 %v539
    %2295 = vmatprep.subr.mxu0 %v543
    %2296 = vmatpush1.msra.mxu0 %v542
    %2297 = vmatprep.subr.mxu0 0.0
    %2298 = vmatpush1.msra.mxu0 0.0
    %2299 = vmatprep.subr.mxu0 0.0
    %2300 = vmatpush1.msra.mxu0 0.0
    %2301 = vmatprep.subr.mxu0 0.0
    %2302 = vmatpush1.msra.mxu0 0.0
    %2303 = vmatprep.subr.mxu0 0.0
    %2304 = vmatpush1.msra.mxu0 0.0
    %2305 = vmatprep.subr.mxu0 0.0
    %2306 = vmatpush1.msra.mxu0 0.0
    %2307 = vmatprep.subr.mxu0 0.0
    %2308 = vmatpush1.msra.mxu0 0.0
    %2309 = vmatprep.subr.mxu0 0.0
    %2310 = vmatpush1.msra.mxu0 0.0
    %2311 = vmatprep.subr.mxu0 0.0
    %2312 = vmatpush1.msra.mxu0 0.0
    %2313 = vmatprep.subr.mxu0 0.0
    %2314 = vmatpush1.msra.mxu0 0.0
    %2315 = vmatprep.subr.mxu0 0.0
    %2316 = vmatpush1.msra.mxu0 0.0
    %2317 = vmatprep.subr.mxu0 0.0
    %2318 = vmatpush1.msra.mxu0 0.0
    %2319 = vmatprep.subr.mxu0 0.0
    %2320 = vmatpush1.msra.mxu0 0.0
    %2321 = vmatprep.subr.mxu0 0.0
    %2322 = vmatpush1.msra.mxu0 0.0
    %2323 = vmatprep.subr.mxu0 0.0
    %2324 = vmatpush1.msra.mxu0 0.0
    %2325 = vmatprep.subr.mxu0 0.0
    %2326 = vmatpush1.msra.mxu0 0.0
    %2327 = vmatprep.subr.mxu0 0.0
    %2328 = vmatpush1.msra.mxu0 0.0
    %2329 = vmatprep.mubr.f32.mxu0 0.0
    %2330 = vmatmul.mubr.f32.gmra.mrb[0].mxu0 %v2236
    %v2331 = vpop.f32.mrb[0].mxu0
    %v2332 = vadd.f32 0.0, %v2331
    %v2333 = vpop.f32.mrb[0].mxu0
    %v2334 = vadd.f32 0.0, %v2333
    %2335 = vdwg.mxu0
    %2336 = vmatprep.subr.mxu0 0.0
    %2337 = vmatpush1.msra.mxu0 %v499
    %2338 = vmatprep.subr.mxu0 0.0
    %2339 = vmatpush1.msra.mxu0 %v502
    %2340 = vmatprep.subr.mxu0 0.0
    %2341 = vmatpush1.msra.mxu0 %v505
    %2342 = vmatprep.subr.mxu0 0.0
    %2343 = vmatpush1.msra.mxu0 %v508
    %2344 = vmatprep.subr.mxu0 0.0
    %2345 = vmatpush1.msra.mxu0 %v511
    %2346 = vmatprep.subr.mxu0 0.0
    %2347 = vmatpush1.msra.mxu0 %v514
    %2348 = vmatprep.subr.mxu0 0.0
    %2349 = vmatpush1.msra.mxu0 %v517
    %2350 = vmatprep.subr.mxu0 0.0
    %2351 = vmatpush1.msra.mxu0 %v520
    %2352 = vmatprep.subr.mxu0 0.0
    %2353 = vmatpush1.msra.mxu0 %v523
    %2354 = vmatprep.subr.mxu0 0.0
    %2355 = vmatpush1.msra.mxu0 %v526
    %2356 = vmatprep.subr.mxu0 0.0
    %2357 = vmatpush1.msra.mxu0 %v529
    %2358 = vmatprep.subr.mxu0 0.0
    %2359 = vmatpush1.msra.mxu0 %v532
    %2360 = vmatprep.subr.mxu0 0.0
    %2361 = vmatpush1.msra.mxu0 %v535
    %2362 = vmatprep.subr.mxu0 0.0
    %2363 = vmatpush1.msra.mxu0 %v538
    %2364 = vmatprep.subr.mxu0 0.0
    %2365 = vmatpush1.msra.mxu0 %v541
    %2366 = vmatprep.subr.mxu0 0.0
    %2367 = vmatpush1.msra.mxu0 %v544
    %2368 = vmatprep.subr.mxu0 0.0
    %2369 = vmatpush1.msra.mxu0 0.0
    %2370 = vmatprep.subr.mxu0 0.0
    %2371 = vmatpush1.msra.mxu0 0.0
    %2372 = vmatprep.subr.mxu0 0.0
    %2373 = vmatpush1.msra.mxu0 0.0
    %2374 = vmatprep.subr.mxu0 0.0
    %2375 = vmatpush1.msra.mxu0 0.0
    %2376 = vmatprep.subr.mxu0 0.0
    %2377 = vmatpush1.msra.mxu0 0.0
    %2378 = vmatprep.subr.mxu0 0.0
    %2379 = vmatpush1.msra.mxu0 0.0
    %2380 = vmatprep.subr.mxu0 0.0
    %2381 = vmatpush1.msra.mxu0 0.0
    %2382 = vmatprep.subr.mxu0 0.0
    %2383 = vmatpush1.msra.mxu0 0.0
    %2384 = vmatprep.subr.mxu0 0.0
    %2385 = vmatpush1.msra.mxu0 0.0
    %2386 = vmatprep.subr.mxu0 0.0
    %2387 = vmatpush1.msra.mxu0 0.0
    %2388 = vmatprep.subr.mxu0 0.0
    %2389 = vmatpush1.msra.mxu0 0.0
    %2390 = vmatprep.subr.mxu0 0.0
    %2391 = vmatpush1.msra.mxu0 0.0
    %2392 = vmatprep.subr.mxu0 0.0
    %2393 = vmatpush1.msra.mxu0 0.0
    %2394 = vmatprep.subr.mxu0 0.0
    %2395 = vmatpush1.msra.mxu0 0.0
    %2396 = vmatprep.subr.mxu0 0.0
    %2397 = vmatpush1.msra.mxu0 0.0
    %2398 = vmatprep.subr.mxu0 0.0
    %2399 = vmatpush1.msra.mxu0 0.0
    %2400 = vmatprep.mubr.f32.mxu0 0.0
    %2401 = vmatmul.mubr.f32.gmra.mrb[0].mxu0 %v2236
    %v2402 = vpop.f32.mrb[0].mxu0
    %v2403 = vadd.f32 0.0, %v2402
    %v2404 = vpop.f32.mrb[0].mxu0
    %2405 = vdwg.mxu0
    %2406 = vmatprep.subr.mxu0 %v547
    %2407 = vmatpush1.msra.mxu0 %v546
    %2408 = vmatprep.subr.mxu0 %v550
    %2409 = vmatpush1.msra.mxu0 %v549
    %2410 = vmatprep.subr.mxu0 %v553
    %2411 = vmatpush1.msra.mxu0 %v552
    %2412 = vmatprep.subr.mxu0 %v556
    %2413 = vmatpush1.msra.mxu0 %v555
    %2414 = vmatprep.subr.mxu0 %v559
    %2415 = vmatpush1.msra.mxu0 %v558
    %2416 = vmatprep.subr.mxu0 %v562
    %2417 = vmatpush1.msra.mxu0 %v561
    %2418 = vmatprep.subr.mxu0 %v565
    %2419 = vmatpush1.msra.mxu0 %v564
    %2420 = vmatprep.subr.mxu0 %v568
    %2421 = vmatpush1.msra.mxu0 %v567
    %2422 = vmatprep.subr.mxu0 %v571
    %2423 = vmatpush1.msra.mxu0 %v570
    %2424 = vmatprep.subr.mxu0 %v574
    %2425 = vmatpush1.msra.mxu0 %v573
    %2426 = vmatprep.subr.mxu0 %v577
    %2427 = vmatpush1.msra.mxu0 %v576
    %2428 = vmatprep.subr.mxu0 %v580
    %2429 = vmatpush1.msra.mxu0 %v579
    %2430 = vmatprep.subr.mxu0 %v583
    %2431 = vmatpush1.msra.mxu0 %v582
    %2432 = vmatprep.subr.mxu0 %v586
    %2433 = vmatpush1.msra.mxu0 %v585
    %2434 = vmatprep.subr.mxu0 %v589
    %2435 = vmatpush1.msra.mxu0 %v588
    %2436 = vmatprep.subr.mxu0 %v592
    %2437 = vmatpush1.msra.mxu0 %v591
    %2438 = vmatprep.subr.mxu0 0.0
    %2439 = vmatpush1.msra.mxu0 0.0
    %2440 = vmatprep.subr.mxu0 0.0
    %2441 = vmatpush1.msra.mxu0 0.0
    %2442 = vmatprep.subr.mxu0 0.0
    %2443 = vmatpush1.msra.mxu0 0.0
    %2444 = vmatprep.subr.mxu0 0.0
    %2445 = vmatpush1.msra.mxu0 0.0
    %2446 = vmatprep.subr.mxu0 0.0
    %2447 = vmatpush1.msra.mxu0 0.0
    %2448 = vmatprep.subr.mxu0 0.0
    %2449 = vmatpush1.msra.mxu0 0.0
    %2450 = vmatprep.subr.mxu0 0.0
    %2451 = vmatpush1.msra.mxu0 0.0
    %2452 = vmatprep.subr.mxu0 0.0
    %2453 = vmatpush1.msra.mxu0 0.0
    %2454 = vmatprep.subr.mxu0 0.0
    %2455 = vmatpush1.msra.mxu0 0.0
    %2456 = vmatprep.subr.mxu0 0.0
    %2457 = vmatpush1.msra.mxu0 0.0
    %2458 = vmatprep.subr.mxu0 0.0
    %2459 = vmatpush1.msra.mxu0 0.0
    %2460 = vmatprep.subr.mxu0 0.0
    %2461 = vmatpush1.msra.mxu0 0.0
    %2462 = vmatprep.subr.mxu0 0.0
    %2463 = vmatpush1.msra.mxu0 0.0
    %2464 = vmatprep.subr.mxu0 0.0
    %2465 = vmatpush1.msra.mxu0 0.0
    %2466 = vmatprep.subr.mxu0 0.0
    %2467 = vmatpush1.msra.mxu0 0.0
    %2468 = vmatprep.subr.mxu0 0.0
    %2469 = vmatpush1.msra.mxu0 0.0
    %2470 = vmatprep.mubr.f32.mxu0 0.0
    %2471 = vmatmul.mubr.f32.gmra.mrb[0].mxu0 %v2256
    %v2472 = vpop.f32.mrb[0].mxu0
    %v2473 = vadd.f32 0.0, %v2472
    %v2474 = vpop.f32.mrb[0].mxu0
    %v2475 = vadd.f32 0.0, %v2474
    %2476 = vdwg.mxu0
    %2477 = vmatprep.subr.mxu0 0.0
    %2478 = vmatpush1.msra.mxu0 %v548
    %2479 = vmatprep.subr.mxu0 0.0
    %2480 = vmatpush1.msra.mxu0 %v551
    %2481 = vmatprep.subr.mxu0 0.0
    %2482 = vmatpush1.msra.mxu0 %v554
    %2483 = vmatprep.subr.mxu0 0.0
    %2484 = vmatpush1.msra.mxu0 %v557
    %2485 = vmatprep.subr.mxu0 0.0
    %2486 = vmatpush1.msra.mxu0 %v560
    %2487 = vmatprep.subr.mxu0 0.0
    %2488 = vmatpush1.msra.mxu0 %v563
    %2489 = vmatprep.subr.mxu0 0.0
    %2490 = vmatpush1.msra.mxu0 %v566
    %2491 = vmatprep.subr.mxu0 0.0
    %2492 = vmatpush1.msra.mxu0 %v569
    %2493 = vmatprep.subr.mxu0 0.0
    %2494 = vmatpush1.msra.mxu0 %v572
    %2495 = vmatprep.subr.mxu0 0.0
    %2496 = vmatpush1.msra.mxu0 %v575
    %2497 = vmatprep.subr.mxu0 0.0
    %2498 = vmatpush1.msra.mxu0 %v578
    %2499 = vmatprep.subr.mxu0 0.0
    %2500 = vmatpush1.msra.mxu0 %v581
    %2501 = vmatprep.subr.mxu0 0.0
    %2502 = vmatpush1.msra.mxu0 %v584
    %2503 = vmatprep.subr.mxu0 0.0
    %2504 = vmatpush1.msra.mxu0 %v587
    %2505 = vmatprep.subr.mxu0 0.0
    %2506 = vmatpush1.msra.mxu0 %v590
    %2507 = vmatprep.subr.mxu0 0.0
    %2508 = vmatpush1.msra.mxu0 %v593
    %2509 = vmatprep.subr.mxu0 0.0
    %2510 = vmatpush1.msra.mxu0 0.0
    %2511 = vmatprep.subr.mxu0 0.0
    %2512 = vmatpush1.msra.mxu0 0.0
    %2513 = vmatprep.subr.mxu0 0.0
    %2514 = vmatpush1.msra.mxu0 0.0
    %2515 = vmatprep.subr.mxu0 0.0
    %2516 = vmatpush1.msra.mxu0 0.0
    %2517 = vmatprep.subr.mxu0 0.0
    %2518 = vmatpush1.msra.mxu0 0.0
    %2519 = vmatprep.subr.mxu0 0.0
    %2520 = vmatpush1.msra.mxu0 0.0
    %2521 = vmatprep.subr.mxu0 0.0
    %2522 = vmatpush1.msra.mxu0 0.0
    %2523 = vmatprep.subr.mxu0 0.0
    %2524 = vmatpush1.msra.mxu0 0.0
    %2525 = vmatprep.subr.mxu0 0.0
    %2526 = vmatpush1.msra.mxu0 0.0
    %2527 = vmatprep.subr.mxu0 0.0
    %2528 = vmatpush1.msra.mxu0 0.0
    %2529 = vmatprep.subr.mxu0 0.0
    %2530 = vmatpush1.msra.mxu0 0.0
    %2531 = vmatprep.subr.mxu0 0.0
    %2532 = vmatpush1.msra.mxu0 0.0
    %2533 = vmatprep.subr.mxu0 0.0
    %2534 = vmatpush1.msra.mxu0 0.0
    %2535 = vmatprep.subr.mxu0 0.0
    %2536 = vmatpush1.msra.mxu0 0.0
    %2537 = vmatprep.subr.mxu0 0.0
    %2538 = vmatpush1.msra.mxu0 0.0
    %2539 = vmatprep.subr.mxu0 0.0
    %2540 = vmatpush1.msra.mxu0 0.0
    %2541 = vmatprep.mubr.f32.mxu0 0.0
    %2542 = vmatmul.mubr.f32.gmra.mrb[0].mxu0 %v2256
    %v2543 = vpop.f32.mrb[0].mxu0
    %v2544 = vadd.f32 0.0, %v2543
    %v2545 = vpop.f32.mrb[0].mxu0
    %2546 = vdwg.mxu0
    %v2547 = vadd.f32 %v2259, %v2332
    %v2548 = vsub.f32 0.0, %v2547
    %v2549 = vmul.f32 %v2548, 1.442695
    %v2550 = vpow.pop %v2549
    %v2551 = vadd.f32 %v2550, 1.0
    %v2552 = vrcp.pop %v2551
    %v2553 = vadd.f32 %v2260, %v2334
    %v2554 = vsub.f32 0.0, %v2553
    %v2555 = vmul.f32 %v2554, 1.442695
    %v2556 = vpow.pop %v2555
    %v2557 = vadd.f32 %v2556, 1.0
    %v2558 = vrcp.pop %v2557
    %v2559 = vadd.f32 %v2403, %v599
    %v2560 = vmul.f32 %v2552, %v2559
    %v2561 = vadd.f32 %v2261, %v2560
    %v2562 = vtanh.pop %v2561
    %v2563 = vsub.f32 1.0, %v2558
    %v2564 = vmul.f32 %v2563, %v2562
    %v2565 = vmul.f32 %v2558, %v2236
    %v2566 = vadd.f32 %v2564, %v2565
    %v2567 = vadd.f32 %v2262, %v2473
    %v2568 = vsub.f32 0.0, %v2567
    %v2569 = vmul.f32 %v2568, 1.442695
    %v2570 = vpow.pop %v2569
    %v2571 = vadd.f32 %v2570, 1.0
    %v2572 = vrcp.pop %v2571
    %v2573 = vadd.f32 %v2263, %v2475
    %v2574 = vsub.f32 0.0, %v2573
    %v2575 = vmul.f32 %v2574, 1.442695
    %v2576 = vpow.pop %v2575
    %v2577 = vadd.f32 %v2576, 1.0
    %v2578 = vrcp.pop %v2577
    %v2579 = vadd.f32 %v2544, %v607
    %v2580 = vmul.f32 %v2572, %v2579
    %v2581 = vadd.f32 %v2264, %v2580
    %v2582 = vtanh.pop %v2581
    %v2583 = vsub.f32 1.0, %v2578
    %v2584 = vmul.f32 %v2583, %v2582
    %v2585 = vmul.f32 %v2578, %v2256
    %v2586 = vadd.f32 %v2584, %v2585
    %2587 = vst [vmem:[#allocation3 + $0x28] sm:$0xff] %v2566
    %2588 = vst [vmem:[#allocation4 + $0x10] sm:$0xff] %v2586
    %v2589 = vld [vmem:[#allocation2 + $0x120] sm:$0xff]
    %v2590 = vld [vmem:[#allocation2 + $0x128] sm:$0xff]
    %v2591 = vld [vmem:[#allocation2 + $0x130] sm:$0xff]
    %v2592 = vld [vmem:[#allocation2 + $0x48] sm:$0xff]
    %v2593 = vld [vmem:[#allocation2 + $0x50] sm:$0xff]
    %v2594 = vld [vmem:[#allocation2 + $0x58] sm:$0xff]
    %2595 = vmatprep.subr.mxu0 %v498
    %2596 = vmatpush1.msra.mxu0 %v497
    %2597 = vmatprep.subr.mxu0 %v501
    %2598 = vmatpush1.msra.mxu0 %v500
    %2599 = vmatprep.subr.mxu0 %v504
    %2600 = vmatpush1.msra.mxu0 %v503
    %2601 = vmatprep.subr.mxu0 %v507
    %2602 = vmatpush1.msra.mxu0 %v506
    %2603 = vmatprep.subr.mxu0 %v510
    %2604 = vmatpush1.msra.mxu0 %v509
    %2605 = vmatprep.subr.mxu0 %v513
    %2606 = vmatpush1.msra.mxu0 %v512
    %2607 = vmatprep.subr.mxu0 %v516
    %2608 = vmatpush1.msra.mxu0 %v515
    %2609 = vmatprep.subr.mxu0 %v519
    %2610 = vmatpush1.msra.mxu0 %v518
    %2611 = vmatprep.subr.mxu0 %v522
    %2612 = vmatpush1.msra.mxu0 %v521
    %2613 = vmatprep.subr.mxu0 %v525
    %2614 = vmatpush1.msra.mxu0 %v524
    %2615 = vmatprep.subr.mxu0 %v528
    %2616 = vmatpush1.msra.mxu0 %v527
    %2617 = vmatprep.subr.mxu0 %v531
    %2618 = vmatpush1.msra.mxu0 %v530
    %2619 = vmatprep.subr.mxu0 %v534
    %2620 = vmatpush1.msra.mxu0 %v533
    %2621 = vmatprep.subr.mxu0 %v537
    %2622 = vmatpush1.msra.mxu0 %v536
    %2623 = vmatprep.subr.mxu0 %v540
    %2624 = vmatpush1.msra.mxu0 %v539
    %2625 = vmatprep.subr.mxu0 %v543
    %2626 = vmatpush1.msra.mxu0 %v542
    %2627 = vmatprep.subr.mxu0 0.0
    %2628 = vmatpush1.msra.mxu0 0.0
    %2629 = vmatprep.subr.mxu0 0.0
    %2630 = vmatpush1.msra.mxu0 0.0
    %2631 = vmatprep.subr.mxu0 0.0
    %2632 = vmatpush1.msra.mxu0 0.0
    %2633 = vmatprep.subr.mxu0 0.0
    %2634 = vmatpush1.msra.mxu0 0.0
    %2635 = vmatprep.subr.mxu0 0.0
    %2636 = vmatpush1.msra.mxu0 0.0
    %2637 = vmatprep.subr.mxu0 0.0
    %2638 = vmatpush1.msra.mxu0 0.0
    %2639 = vmatprep.subr.mxu0 0.0
    %2640 = vmatpush1.msra.mxu0 0.0
    %2641 = vmatprep.subr.mxu0 0.0
    %2642 = vmatpush1.msra.mxu0 0.0
    %2643 = vmatprep.subr.mxu0 0.0
    %2644 = vmatpush1.msra.mxu0 0.0
    %2645 = vmatprep.subr.mxu0 0.0
    %2646 = vmatpush1.msra.mxu0 0.0
    %2647 = vmatprep.subr.mxu0 0.0
    %2648 = vmatpush1.msra.mxu0 0.0
    %2649 = vmatprep.subr.mxu0 0.0
    %2650 = vmatpush1.msra.mxu0 0.0
    %2651 = vmatprep.subr.mxu0 0.0
    %2652 = vmatpush1.msra.mxu0 0.0
    %2653 = vmatprep.subr.mxu0 0.0
    %2654 = vmatpush1.msra.mxu0 0.0
    %2655 = vmatprep.subr.mxu0 0.0
    %2656 = vmatpush1.msra.mxu0 0.0
    %2657 = vmatprep.subr.mxu0 0.0
    %2658 = vmatpush1.msra.mxu0 0.0
    %2659 = vmatprep.mubr.f32.mxu0 0.0
    %2660 = vmatmul.mubr.f32.gmra.mrb[0].mxu0 %v2566
    %v2661 = vpop.f32.mrb[0].mxu0
    %v2662 = vadd.f32 0.0, %v2661
    %v2663 = vpop.f32.mrb[0].mxu0
    %v2664 = vadd.f32 0.0, %v2663
    %2665 = vdwg.mxu0
    %2666 = vmatprep.subr.mxu0 0.0
    %2667 = vmatpush1.msra.mxu0 %v499
    %2668 = vmatprep.subr.mxu0 0.0
    %2669 = vmatpush1.msra.mxu0 %v502
    %2670 = vmatprep.subr.mxu0 0.0
    %2671 = vmatpush1.msra.mxu0 %v505
    %2672 = vmatprep.subr.mxu0 0.0
    %2673 = vmatpush1.msra.mxu0 %v508
    %2674 = vmatprep.subr.mxu0 0.0
    %2675 = vmatpush1.msra.mxu0 %v511
    %2676 = vmatprep.subr.mxu0 0.0
    %2677 = vmatpush1.msra.mxu0 %v514
    %2678 = vmatprep.subr.mxu0 0.0
    %2679 = vmatpush1.msra.mxu0 %v517
    %2680 = vmatprep.subr.mxu0 0.0
    %2681 = vmatpush1.msra.mxu0 %v520
    %2682 = vmatprep.subr.mxu0 0.0
    %2683 = vmatpush1.msra.mxu0 %v523
    %2684 = vmatprep.subr.mxu0 0.0
    %2685 = vmatpush1.msra.mxu0 %v526
    %2686 = vmatprep.subr.mxu0 0.0
    %2687 = vmatpush1.msra.mxu0 %v529
    %2688 = vmatprep.subr.mxu0 0.0
    %2689 = vmatpush1.msra.mxu0 %v532
    %2690 = vmatprep.subr.mxu0 0.0
    %2691 = vmatpush1.msra.mxu0 %v535
    %2692 = vmatprep.subr.mxu0 0.0
    %2693 = vmatpush1.msra.mxu0 %v538
    %2694 = vmatprep.subr.mxu0 0.0
    %2695 = vmatpush1.msra.mxu0 %v541
    %2696 = vmatprep.subr.mxu0 0.0
    %2697 = vmatpush1.msra.mxu0 %v544
    %2698 = vmatprep.subr.mxu0 0.0
    %2699 = vmatpush1.msra.mxu0 0.0
    %2700 = vmatprep.subr.mxu0 0.0
    %2701 = vmatpush1.msra.mxu0 0.0
    %2702 = vmatprep.subr.mxu0 0.0
    %2703 = vmatpush1.msra.mxu0 0.0
    %2704 = vmatprep.subr.mxu0 0.0
    %2705 = vmatpush1.msra.mxu0 0.0
    %2706 = vmatprep.subr.mxu0 0.0
    %2707 = vmatpush1.msra.mxu0 0.0
    %2708 = vmatprep.subr.mxu0 0.0
    %2709 = vmatpush1.msra.mxu0 0.0
    %2710 = vmatprep.subr.mxu0 0.0
    %2711 = vmatpush1.msra.mxu0 0.0
    %2712 = vmatprep.subr.mxu0 0.0
    %2713 = vmatpush1.msra.mxu0 0.0
    %2714 = vmatprep.subr.mxu0 0.0
    %2715 = vmatpush1.msra.mxu0 0.0
    %2716 = vmatprep.subr.mxu0 0.0
    %2717 = vmatpush1.msra.mxu0 0.0
    %2718 = vmatprep.subr.mxu0 0.0
    %2719 = vmatpush1.msra.mxu0 0.0
    %2720 = vmatprep.subr.mxu0 0.0
    %2721 = vmatpush1.msra.mxu0 0.0
    %2722 = vmatprep.subr.mxu0 0.0
    %2723 = vmatpush1.msra.mxu0 0.0
    %2724 = vmatprep.subr.mxu0 0.0
    %2725 = vmatpush1.msra.mxu0 0.0
    %2726 = vmatprep.subr.mxu0 0.0
    %2727 = vmatpush1.msra.mxu0 0.0
    %2728 = vmatprep.subr.mxu0 0.0
    %2729 = vmatpush1.msra.mxu0 0.0
    %2730 = vmatprep.mubr.f32.mxu0 0.0
    %2731 = vmatmul.mubr.f32.gmra.mrb[0].mxu0 %v2566
    %v2732 = vpop.f32.mrb[0].mxu0
    %v2733 = vadd.f32 0.0, %v2732
    %v2734 = vpop.f32.mrb[0].mxu0
    %2735 = vdwg.mxu0
    %2736 = vmatprep.subr.mxu0 %v547
    %2737 = vmatpush1.msra.mxu0 %v546
    %2738 = vmatprep.subr.mxu0 %v550
    %2739 = vmatpush1.msra.mxu0 %v549
    %2740 = vmatprep.subr.mxu0 %v553
    %2741 = vmatpush1.msra.mxu0 %v552
    %2742 = vmatprep.subr.mxu0 %v556
    %2743 = vmatpush1.msra.mxu0 %v555
    %2744 = vmatprep.subr.mxu0 %v559
    %2745 = vmatpush1.msra.mxu0 %v558
    %2746 = vmatprep.subr.mxu0 %v562
    %2747 = vmatpush1.msra.mxu0 %v561
    %2748 = vmatprep.subr.mxu0 %v565
    %2749 = vmatpush1.msra.mxu0 %v564
    %2750 = vmatprep.subr.mxu0 %v568
    %2751 = vmatpush1.msra.mxu0 %v567
    %2752 = vmatprep.subr.mxu0 %v571
    %2753 = vmatpush1.msra.mxu0 %v570
    %2754 = vmatprep.subr.mxu0 %v574
    %2755 = vmatpush1.msra.mxu0 %v573
    %2756 = vmatprep.subr.mxu0 %v577
    %2757 = vmatpush1.msra.mxu0 %v576
    %2758 = vmatprep.subr.mxu0 %v580
    %2759 = vmatpush1.msra.mxu0 %v579
    %2760 = vmatprep.subr.mxu0 %v583
    %2761 = vmatpush1.msra.mxu0 %v582
    %2762 = vmatprep.subr.mxu0 %v586
    %2763 = vmatpush1.msra.mxu0 %v585
    %2764 = vmatprep.subr.mxu0 %v589
    %2765 = vmatpush1.msra.mxu0 %v588
    %2766 = vmatprep.subr.mxu0 %v592
    %2767 = vmatpush1.msra.mxu0 %v591
    %2768 = vmatprep.subr.mxu0 0.0
    %2769 = vmatpush1.msra.mxu0 0.0
    %2770 = vmatprep.subr.mxu0 0.0
    %2771 = vmatpush1.msra.mxu0 0.0
    %2772 = vmatprep.subr.mxu0 0.0
    %2773 = vmatpush1.msra.mxu0 0.0
    %2774 = vmatprep.subr.mxu0 0.0
    %2775 = vmatpush1.msra.mxu0 0.0
    %2776 = vmatprep.subr.mxu0 0.0
    %2777 = vmatpush1.msra.mxu0 0.0
    %2778 = vmatprep.subr.mxu0 0.0
    %2779 = vmatpush1.msra.mxu0 0.0
    %2780 = vmatprep.subr.mxu0 0.0
    %2781 = vmatpush1.msra.mxu0 0.0
    %2782 = vmatprep.subr.mxu0 0.0
    %2783 = vmatpush1.msra.mxu0 0.0
    %2784 = vmatprep.subr.mxu0 0.0
    %2785 = vmatpush1.msra.mxu0 0.0
    %2786 = vmatprep.subr.mxu0 0.0
    %2787 = vmatpush1.msra.mxu0 0.0
    %2788 = vmatprep.subr.mxu0 0.0
    %2789 = vmatpush1.msra.mxu0 0.0
    %2790 = vmatprep.subr.mxu0 0.0
    %2791 = vmatpush1.msra.mxu0 0.0
    %2792 = vmatprep.subr.mxu0 0.0
    %2793 = vmatpush1.msra.mxu0 0.0
    %2794 = vmatprep.subr.mxu0 0.0
    %2795 = vmatpush1.msra.mxu0 0.0
    %2796 = vmatprep.subr.mxu0 0.0
    %2797 = vmatpush1.msra.mxu0 0.0
    %2798 = vmatprep.subr.mxu0 0.0
    %2799 = vmatpush1.msra.mxu0 0.0
    %2800 = vmatprep.mubr.f32.mxu0 0.0
    %2801 = vmatmul.mubr.f32.gmra.mrb[0].mxu0 %v2586
    %v2802 = vpop.f32.mrb[0].mxu0
    %v2803 = vadd.f32 0.0, %v2802
    %v2804 = vpop.f32.mrb[0].mxu0
    %v2805 = vadd.f32 0.0, %v2804
    %2806 = vdwg.mxu0
    %2807 = vmatprep.subr.mxu0 0.0
    %2808 = vmatpush1.msra.mxu0 %v548
    %2809 = vmatprep.subr.mxu0 0.0
    %2810 = vmatpush1.msra.mxu0 %v551
    %2811 = vmatprep.subr.mxu0 0.0
    %2812 = vmatpush1.msra.mxu0 %v554
    %2813 = vmatprep.subr.mxu0 0.0
    %2814 = vmatpush1.msra.mxu0 %v557
    %2815 = vmatprep.subr.mxu0 0.0
    %2816 = vmatpush1.msra.mxu0 %v560
    %2817 = vmatprep.subr.mxu0 0.0
    %2818 = vmatpush1.msra.mxu0 %v563
    %2819 = vmatprep.subr.mxu0 0.0
    %2820 = vmatpush1.msra.mxu0 %v566
    %2821 = vmatprep.subr.mxu0 0.0
    %2822 = vmatpush1.msra.mxu0 %v569
    %2823 = vmatprep.subr.mxu0 0.0
    %2824 = vmatpush1.msra.mxu0 %v572
    %2825 = vmatprep.subr.mxu0 0.0
    %2826 = vmatpush1.msra.mxu0 %v575
    %2827 = vmatprep.subr.mxu0 0.0
    %2828 = vmatpush1.msra.mxu0 %v578
    %2829 = vmatprep.subr.mxu0 0.0
    %2830 = vmatpush1.msra.mxu0 %v581
    %2831 = vmatprep.subr.mxu0 0.0
    %2832 = vmatpush1.msra.mxu0 %v584
    %2833 = vmatprep.subr.mxu0 0.0
    %2834 = vmatpush1.msra.mxu0 %v587
    %2835 = vmatprep.subr.mxu0 0.0
    %2836 = vmatpush1.msra.mxu0 %v590
    %2837 = vmatprep.subr.mxu0 0.0
    %2838 = vmatpush1.msra.mxu0 %v593
    %2839 = vmatprep.subr.mxu0 0.0
    %2840 = vmatpush1.msra.mxu0 0.0
    %2841 = vmatprep.subr.mxu0 0.0
    %2842 = vmatpush1.msra.mxu0 0.0
    %2843 = vmatprep.subr.mxu0 0.0
    %2844 = vmatpush1.msra.mxu0 0.0
    %2845 = vmatprep.subr.mxu0 0.0
    %2846 = vmatpush1.msra.mxu0 0.0
    %2847 = vmatprep.subr.mxu0 0.0
    %2848 = vmatpush1.msra.mxu0 0.0
    %2849 = vmatprep.subr.mxu0 0.0
    %2850 = vmatpush1.msra.mxu0 0.0
    %2851 = vmatprep.subr.mxu0 0.0
    %2852 = vmatpush1.msra.mxu0 0.0
    %2853 = vmatprep.subr.mxu0 0.0
    %2854 = vmatpush1.msra.mxu0 0.0
    %2855 = vmatprep.subr.mxu0 0.0
    %2856 = vmatpush1.msra.mxu0 0.0
    %2857 = vmatprep.subr.mxu0 0.0
    %2858 = vmatpush1.msra.mxu0 0.0
    %2859 = vmatprep.subr.mxu0 0.0
    %2860 = vmatpush1.msra.mxu0 0.0
    %2861 = vmatprep.subr.mxu0 0.0
    %2862 = vmatpush1.msra.mxu0 0.0
    %2863 = vmatprep.subr.mxu0 0.0
    %2864 = vmatpush1.msra.mxu0 0.0
    %2865 = vmatprep.subr.mxu0 0.0
    %2866 = vmatpush1.msra.mxu0 0.0
    %2867 = vmatprep.subr.mxu0 0.0
    %2868 = vmatpush1.msra.mxu0 0.0
    %2869 = vmatprep.subr.mxu0 0.0
    %2870 = vmatpush1.msra.mxu0 0.0
    %2871 = vmatprep.mubr.f32.mxu0 0.0
    %2872 = vmatmul.mubr.f32.gmra.mrb[0].mxu0 %v2586
    %v2873 = vpop.f32.mrb[0].mxu0
    %v2874 = vadd.f32 0.0, %v2873
    %v2875 = vpop.f32.mrb[0].mxu0
    %2876 = vdwg.mxu0
    %v2877 = vadd.f32 %v2589, %v2662
    %v2878 = vsub.f32 0.0, %v2877
    %v2879 = vmul.f32 %v2878, 1.442695
    %v2880 = vpow.pop %v2879
    %v2881 = vadd.f32 %v2880, 1.0
    %v2882 = vrcp.pop %v2881
    %v2883 = vadd.f32 %v2590, %v2664
    %v2884 = vsub.f32 0.0, %v2883
    %v2885 = vmul.f32 %v2884, 1.442695
    %v2886 = vpow.pop %v2885
    %v2887 = vadd.f32 %v2886, 1.0
    %v2888 = vrcp.pop %v2887
    %v2889 = vadd.f32 %v2733, %v599
    %v2890 = vmul.f32 %v2882, %v2889
    %v2891 = vadd.f32 %v2591, %v2890
    %v2892 = vtanh.pop %v2891
    %v2893 = vsub.f32 1.0, %v2888
    %v2894 = vmul.f32 %v2893, %v2892
    %v2895 = vmul.f32 %v2888, %v2566
    %v2896 = vadd.f32 %v2894, %v2895
    %v2897 = vadd.f32 %v2592, %v2803
    %v2898 = vsub.f32 0.0, %v2897
    %v2899 = vmul.f32 %v2898, 1.442695
    %v2900 = vpow.pop %v2899
    %v2901 = vadd.f32 %v2900, 1.0
    %v2902 = vrcp.pop %v2901
    %v2903 = vadd.f32 %v2593, %v2805
    %v2904 = vsub.f32 0.0, %v2903
    %v2905 = vmul.f32 %v2904, 1.442695
    %v2906 = vpow.pop %v2905
    %v2907 = vadd.f32 %v2906, 1.0
    %v2908 = vrcp.pop %v2907
    %v2909 = vadd.f32 %v2874, %v607
    %v2910 = vmul.f32 %v2902, %v2909
    %v2911 = vadd.f32 %v2594, %v2910
    %v2912 = vtanh.pop %v2911
    %v2913 = vsub.f32 1.0, %v2908
    %v2914 = vmul.f32 %v2913, %v2912
    %v2915 = vmul.f32 %v2908, %v2586
    %v2916 = vadd.f32 %v2914, %v2915
    %2917 = vst [vmem:[#allocation3 + $0x30] sm:$0xff] %v2896
    %2918 = vst [vmem:[#allocation4 + $0x8] sm:$0xff] %v2916
    %v2919 = vld [vmem:[#allocation2 + $0x150] sm:$0xff]
    %v2920 = vld [vmem:[#allocation2 + $0x158] sm:$0xff]
    %v2921 = vld [vmem:[#allocation2 + $0x160] sm:$0xff]
    %v2922 = vld [vmem:[#allocation2 + $0x18] sm:$0xff]
    %v2923 = vld [vmem:[#allocation2 + $0x20] sm:$0xff]
    %v2924 = vld [vmem:[#allocation2 + $0x28] sm:$0xff]
    %2925 = vmatprep.subr.mxu0 %v498
    %2926 = vmatpush1.msra.mxu0 %v497
    %2927 = vmatprep.subr.mxu0 %v501
    %2928 = vmatpush1.msra.mxu0 %v500
    %2929 = vmatprep.subr.mxu0 %v504
    %2930 = vmatpush1.msra.mxu0 %v503
    %2931 = vmatprep.subr.mxu0 %v507
    %2932 = vmatpush1.msra.mxu0 %v506
    %2933 = vmatprep.subr.mxu0 %v510
    %2934 = vmatpush1.msra.mxu0 %v509
    %2935 = vmatprep.subr.mxu0 %v513
    %2936 = vmatpush1.msra.mxu0 %v512
    %2937 = vmatprep.subr.mxu0 %v516
    %2938 = vmatpush1.msra.mxu0 %v515
    %2939 = vmatprep.subr.mxu0 %v519
    %2940 = vmatpush1.msra.mxu0 %v518
    %2941 = vmatprep.subr.mxu0 %v522
    %2942 = vmatpush1.msra.mxu0 %v521
    %2943 = vmatprep.subr.mxu0 %v525
    %2944 = vmatpush1.msra.mxu0 %v524
    %2945 = vmatprep.subr.mxu0 %v528
    %2946 = vmatpush1.msra.mxu0 %v527
    %2947 = vmatprep.subr.mxu0 %v531
    %2948 = vmatpush1.msra.mxu0 %v530
    %2949 = vmatprep.subr.mxu0 %v534
    %2950 = vmatpush1.msra.mxu0 %v533
    %2951 = vmatprep.subr.mxu0 %v537
    %2952 = vmatpush1.msra.mxu0 %v536
    %2953 = vmatprep.subr.mxu0 %v540
    %2954 = vmatpush1.msra.mxu0 %v539
    %2955 = vmatprep.subr.mxu0 %v543
    %2956 = vmatpush1.msra.mxu0 %v542
    %2957 = vmatprep.subr.mxu0 0.0
    %2958 = vmatpush1.msra.mxu0 0.0
    %2959 = vmatprep.subr.mxu0 0.0
    %2960 = vmatpush1.msra.mxu0 0.0
    %2961 = vmatprep.subr.mxu0 0.0
    %2962 = vmatpush1.msra.mxu0 0.0
    %2963 = vmatprep.subr.mxu0 0.0
    %2964 = vmatpush1.msra.mxu0 0.0
    %2965 = vmatprep.subr.mxu0 0.0
    %2966 = vmatpush1.msra.mxu0 0.0
    %2967 = vmatprep.subr.mxu0 0.0
    %2968 = vmatpush1.msra.mxu0 0.0
    %2969 = vmatprep.subr.mxu0 0.0
    %2970 = vmatpush1.msra.mxu0 0.0
    %2971 = vmatprep.subr.mxu0 0.0
    %2972 = vmatpush1.msra.mxu0 0.0
    %2973 = vmatprep.subr.mxu0 0.0
    %2974 = vmatpush1.msra.mxu0 0.0
    %2975 = vmatprep.subr.mxu0 0.0
    %2976 = vmatpush1.msra.mxu0 0.0
    %2977 = vmatprep.subr.mxu0 0.0
    %2978 = vmatpush1.msra.mxu0 0.0
    %2979 = vmatprep.subr.mxu0 0.0
    %2980 = vmatpush1.msra.mxu0 0.0
    %2981 = vmatprep.subr.mxu0 0.0
    %2982 = vmatpush1.msra.mxu0 0.0
    %2983 = vmatprep.subr.mxu0 0.0
    %2984 = vmatpush1.msra.mxu0 0.0
    %2985 = vmatprep.subr.mxu0 0.0
    %2986 = vmatpush1.msra.mxu0 0.0
    %2987 = vmatprep.subr.mxu0 0.0
    %2988 = vmatpush1.msra.mxu0 0.0
    %2989 = vmatprep.mubr.f32.mxu0 0.0
    %2990 = vmatmul.mubr.f32.gmra.mrb[0].mxu0 %v2896
    %v2991 = vpop.f32.mrb[0].mxu0
    %v2992 = vadd.f32 0.0, %v2991
    %v2993 = vpop.f32.mrb[0].mxu0
    %v2994 = vadd.f32 0.0, %v2993
    %2995 = vdwg.mxu0
    %2996 = vmatprep.subr.mxu0 0.0
    %2997 = vmatpush1.msra.mxu0 %v499
    %2998 = vmatprep.subr.mxu0 0.0
    %2999 = vmatpush1.msra.mxu0 %v502
    %3000 = vmatprep.subr.mxu0 0.0
    %3001 = vmatpush1.msra.mxu0 %v505
    %3002 = vmatprep.subr.mxu0 0.0
    %3003 = vmatpush1.msra.mxu0 %v508
    %3004 = vmatprep.subr.mxu0 0.0
    %3005 = vmatpush1.msra.mxu0 %v511
    %3006 = vmatprep.subr.mxu0 0.0
    %3007 = vmatpush1.msra.mxu0 %v514
    %3008 = vmatprep.subr.mxu0 0.0
    %3009 = vmatpush1.msra.mxu0 %v517
    %3010 = vmatprep.subr.mxu0 0.0
    %3011 = vmatpush1.msra.mxu0 %v520
    %3012 = vmatprep.subr.mxu0 0.0
    %3013 = vmatpush1.msra.mxu0 %v523
    %3014 = vmatprep.subr.mxu0 0.0
    %3015 = vmatpush1.msra.mxu0 %v526
    %3016 = vmatprep.subr.mxu0 0.0
    %3017 = vmatpush1.msra.mxu0 %v529
    %3018 = vmatprep.subr.mxu0 0.0
    %3019 = vmatpush1.msra.mxu0 %v532
    %3020 = vmatprep.subr.mxu0 0.0
    %3021 = vmatpush1.msra.mxu0 %v535
    %3022 = vmatprep.subr.mxu0 0.0
    %3023 = vmatpush1.msra.mxu0 %v538
    %3024 = vmatprep.subr.mxu0 0.0
    %3025 = vmatpush1.msra.mxu0 %v541
    %3026 = vmatprep.subr.mxu0 0.0
    %3027 = vmatpush1.msra.mxu0 %v544
    %3028 = vmatprep.subr.mxu0 0.0
    %3029 = vmatpush1.msra.mxu0 0.0
    %3030 = vmatprep.subr.mxu0 0.0
    %3031 = vmatpush1.msra.mxu0 0.0
    %3032 = vmatprep.subr.mxu0 0.0
    %3033 = vmatpush1.msra.mxu0 0.0
    %3034 = vmatprep.subr.mxu0 0.0
    %3035 = vmatpush1.msra.mxu0 0.0
    %3036 = vmatprep.subr.mxu0 0.0
    %3037 = vmatpush1.msra.mxu0 0.0
    %3038 = vmatprep.subr.mxu0 0.0
    %3039 = vmatpush1.msra.mxu0 0.0
    %3040 = vmatprep.subr.mxu0 0.0
    %3041 = vmatpush1.msra.mxu0 0.0
    %3042 = vmatprep.subr.mxu0 0.0
    %3043 = vmatpush1.msra.mxu0 0.0
    %3044 = vmatprep.subr.mxu0 0.0
    %3045 = vmatpush1.msra.mxu0 0.0
    %3046 = vmatprep.subr.mxu0 0.0
    %3047 = vmatpush1.msra.mxu0 0.0
    %3048 = vmatprep.subr.mxu0 0.0
    %3049 = vmatpush1.msra.mxu0 0.0
    %3050 = vmatprep.subr.mxu0 0.0
    %3051 = vmatpush1.msra.mxu0 0.0
    %3052 = vmatprep.subr.mxu0 0.0
    %3053 = vmatpush1.msra.mxu0 0.0
    %3054 = vmatprep.subr.mxu0 0.0
    %3055 = vmatpush1.msra.mxu0 0.0
    %3056 = vmatprep.subr.mxu0 0.0
    %3057 = vmatpush1.msra.mxu0 0.0
    %3058 = vmatprep.subr.mxu0 0.0
    %3059 = vmatpush1.msra.mxu0 0.0
    %3060 = vmatprep.mubr.f32.mxu0 0.0
    %3061 = vmatmul.mubr.f32.gmra.mrb[0].mxu0 %v2896
    %v3062 = vpop.f32.mrb[0].mxu0
    %v3063 = vadd.f32 0.0, %v3062
    %v3064 = vpop.f32.mrb[0].mxu0
    %3065 = vdwg.mxu0
    %3066 = vmatprep.subr.mxu0 %v547
    %3067 = vmatpush1.msra.mxu0 %v546
    %3068 = vmatprep.subr.mxu0 %v550
    %3069 = vmatpush1.msra.mxu0 %v549
    %3070 = vmatprep.subr.mxu0 %v553
    %3071 = vmatpush1.msra.mxu0 %v552
    %3072 = vmatprep.subr.mxu0 %v556
    %3073 = vmatpush1.msra.mxu0 %v555
    %3074 = vmatprep.subr.mxu0 %v559
    %3075 = vmatpush1.msra.mxu0 %v558
    %3076 = vmatprep.subr.mxu0 %v562
    %3077 = vmatpush1.msra.mxu0 %v561
    %3078 = vmatprep.subr.mxu0 %v565
    %3079 = vmatpush1.msra.mxu0 %v564
    %3080 = vmatprep.subr.mxu0 %v568
    %3081 = vmatpush1.msra.mxu0 %v567
    %3082 = vmatprep.subr.mxu0 %v571
    %3083 = vmatpush1.msra.mxu0 %v570
    %3084 = vmatprep.subr.mxu0 %v574
    %3085 = vmatpush1.msra.mxu0 %v573
    %3086 = vmatprep.subr.mxu0 %v577
    %3087 = vmatpush1.msra.mxu0 %v576
    %3088 = vmatprep.subr.mxu0 %v580
    %3089 = vmatpush1.msra.mxu0 %v579
    %3090 = vmatprep.subr.mxu0 %v583
    %3091 = vmatpush1.msra.mxu0 %v582
    %3092 = vmatprep.subr.mxu0 %v586
    %3093 = vmatpush1.msra.mxu0 %v585
    %3094 = vmatprep.subr.mxu0 %v589
    %3095 = vmatpush1.msra.mxu0 %v588
    %3096 = vmatprep.subr.mxu0 %v592
    %3097 = vmatpush1.msra.mxu0 %v591
    %3098 = vmatprep.subr.mxu0 0.0
    %3099 = vmatpush1.msra.mxu0 0.0
    %3100 = vmatprep.subr.mxu0 0.0
    %3101 = vmatpush1.msra.mxu0 0.0
    %3102 = vmatprep.subr.mxu0 0.0
    %3103 = vmatpush1.msra.mxu0 0.0
    %3104 = vmatprep.subr.mxu0 0.0
    %3105 = vmatpush1.msra.mxu0 0.0
    %3106 = vmatprep.subr.mxu0 0.0
    %3107 = vmatpush1.msra.mxu0 0.0
    %3108 = vmatprep.subr.mxu0 0.0
    %3109 = vmatpush1.msra.mxu0 0.0
    %3110 = vmatprep.subr.mxu0 0.0
    %3111 = vmatpush1.msra.mxu0 0.0
    %3112 = vmatprep.subr.mxu0 0.0
    %3113 = vmatpush1.msra.mxu0 0.0
    %3114 = vmatprep.subr.mxu0 0.0
    %3115 = vmatpush1.msra.mxu0 0.0
    %3116 = vmatprep.subr.mxu0 0.0
    %3117 = vmatpush1.msra.mxu0 0.0
    %3118 = vmatprep.subr.mxu0 0.0
    %3119 = vmatpush1.msra.mxu0 0.0
    %3120 = vmatprep.subr.mxu0 0.0
    %3121 = vmatpush1.msra.mxu0 0.0
    %3122 = vmatprep.subr.mxu0 0.0
    %3123 = vmatpush1.msra.mxu0 0.0
    %3124 = vmatprep.subr.mxu0 0.0
    %3125 = vmatpush1.msra.mxu0 0.0
    %3126 = vmatprep.subr.mxu0 0.0
    %3127 = vmatpush1.msra.mxu0 0.0
    %3128 = vmatprep.subr.mxu0 0.0
    %3129 = vmatpush1.msra.mxu0 0.0
    %3130 = vmatprep.mubr.f32.mxu0 0.0
    %3131 = vmatmul.mubr.f32.gmra.mrb[0].mxu0 %v2916
    %v3132 = vpop.f32.mrb[0].mxu0
    %v3133 = vadd.f32 0.0, %v3132
    %v3134 = vpop.f32.mrb[0].mxu0
    %v3135 = vadd.f32 0.0, %v3134
    %3136 = vdwg.mxu0
    %3137 = vmatprep.subr.mxu0 0.0
    %3138 = vmatpush1.msra.mxu0 %v548
    %3139 = vmatprep.subr.mxu0 0.0
    %3140 = vmatpush1.msra.mxu0 %v551
    %3141 = vmatprep.subr.mxu0 0.0
    %3142 = vmatpush1.msra.mxu0 %v554
    %3143 = vmatprep.subr.mxu0 0.0
    %3144 = vmatpush1.msra.mxu0 %v557
    %3145 = vmatprep.subr.mxu0 0.0
    %3146 = vmatpush1.msra.mxu0 %v560
    %3147 = vmatprep.subr.mxu0 0.0
    %3148 = vmatpush1.msra.mxu0 %v563
    %3149 = vmatprep.subr.mxu0 0.0
    %3150 = vmatpush1.msra.mxu0 %v566
    %3151 = vmatprep.subr.mxu0 0.0
    %3152 = vmatpush1.msra.mxu0 %v569
    %3153 = vmatprep.subr.mxu0 0.0
    %3154 = vmatpush1.msra.mxu0 %v572
    %3155 = vmatprep.subr.mxu0 0.0
    %3156 = vmatpush1.msra.mxu0 %v575
    %3157 = vmatprep.subr.mxu0 0.0
    %3158 = vmatpush1.msra.mxu0 %v578
    %3159 = vmatprep.subr.mxu0 0.0
    %3160 = vmatpush1.msra.mxu0 %v581
    %3161 = vmatprep.subr.mxu0 0.0
    %3162 = vmatpush1.msra.mxu0 %v584
    %3163 = vmatprep.subr.mxu0 0.0
    %3164 = vmatpush1.msra.mxu0 %v587
    %3165 = vmatprep.subr.mxu0 0.0
    %3166 = vmatpush1.msra.mxu0 %v590
    %3167 = vmatprep.subr.mxu0 0.0
    %3168 = vmatpush1.msra.mxu0 %v593
    %3169 = vmatprep.subr.mxu0 0.0
    %3170 = vmatpush1.msra.mxu0 0.0
    %3171 = vmatprep.subr.mxu0 0.0
    %3172 = vmatpush1.msra.mxu0 0.0
    %3173 = vmatprep.subr.mxu0 0.0
    %3174 = vmatpush1.msra.mxu0 0.0
    %3175 = vmatprep.subr.mxu0 0.0
    %3176 = vmatpush1.msra.mxu0 0.0
    %3177 = vmatprep.subr.mxu0 0.0
    %3178 = vmatpush1.msra.mxu0 0.0
    %3179 = vmatprep.subr.mxu0 0.0
    %3180 = vmatpush1.msra.mxu0 0.0
    %3181 = vmatprep.subr.mxu0 0.0
    %3182 = vmatpush1.msra.mxu0 0.0
    %3183 = vmatprep.subr.mxu0 0.0
    %3184 = vmatpush1.msra.mxu0 0.0
    %3185 = vmatprep.subr.mxu0 0.0
    %3186 = vmatpush1.msra.mxu0 0.0
    %3187 = vmatprep.subr.mxu0 0.0
    %3188 = vmatpush1.msra.mxu0 0.0
    %3189 = vmatprep.subr.mxu0 0.0
    %3190 = vmatpush1.msra.mxu0 0.0
    %3191 = vmatprep.subr.mxu0 0.0
    %3192 = vmatpush1.msra.mxu0 0.0
    %3193 = vmatprep.subr.mxu0 0.0
    %3194 = vmatpush1.msra.mxu0 0.0
    %3195 = vmatprep.subr.mxu0 0.0
    %3196 = vmatpush1.msra.mxu0 0.0
    %3197 = vmatprep.subr.mxu0 0.0
    %3198 = vmatpush1.msra.mxu0 0.0
    %3199 = vmatprep.subr.mxu0 0.0
    %3200 = vmatpush1.msra.mxu0 0.0
    %3201 = vmatprep.mubr.f32.mxu0 0.0
    %3202 = vmatmul.mubr.f32.gmra.mrb[0].mxu0 %v2916
    %v3203 = vpop.f32.mrb[0].mxu0
    %v3204 = vadd.f32 0.0, %v3203
    %v3205 = vpop.f32.mrb[0].mxu0
    %3206 = vdwg.mxu0
    %v3207 = vadd.f32 %v2919, %v2992
    %v3208 = vsub.f32 0.0, %v3207
    %v3209 = vmul.f32 %v3208, 1.442695
    %v3210 = vpow.pop %v3209
    %v3211 = vadd.f32 %v3210, 1.0
    %v3212 = vrcp.pop %v3211
    %v3213 = vadd.f32 %v2920, %v2994
    %v3214 = vsub.f32 0.0, %v3213
    %v3215 = vmul.f32 %v3214, 1.442695
    %v3216 = vpow.pop %v3215
    %v3217 = vadd.f32 %v3216, 1.0
    %v3218 = vrcp.pop %v3217
    %v3219 = vadd.f32 %v3063, %v599
    %v3220 = vmul.f32 %v3212, %v3219
    %v3221 = vadd.f32 %v2921, %v3220
    %v3222 = vtanh.pop %v3221
    %v3223 = vsub.f32 1.0, %v3218
    %v3224 = vmul.f32 %v3223, %v3222
    %v3225 = vmul.f32 %v3218, %v2896
    %v3226 = vadd.f32 %v3224, %v3225
    %v3227 = vadd.f32 %v2922, %v3133
    %v3228 = vsub.f32 0.0, %v3227
    %v3229 = vmul.f32 %v3228, 1.442695
    %v3230 = vpow.pop %v3229
    %v3231 = vadd.f32 %v3230, 1.0
    %v3232 = vrcp.pop %v3231
    %v3233 = vadd.f32 %v2923, %v3135
    %v3234 = vsub.f32 0.0, %v3233
    %v3235 = vmul.f32 %v3234, 1.442695
    %v3236 = vpow.pop %v3235
    %v3237 = vadd.f32 %v3236, 1.0
    %v3238 = vrcp.pop %v3237
    %v3239 = vadd.f32 %v3204, %v607
    %v3240 = vmul.f32 %v3232, %v3239
    %v3241 = vadd.f32 %v2924, %v3240
    %v3242 = vtanh.pop %v3241
    %v3243 = vsub.f32 1.0, %v3238
    %v3244 = vmul.f32 %v3243, %v3242
    %v3245 = vmul.f32 %v3238, %v2916
    %v3246 = vadd.f32 %v3244, %v3245
    %3247 = vst [vmem:[#allocation3 + $0x38] sm:$0xff] %v3226
    %3248 = vst [vmem:[#allocation4] sm:$0xff] %v3246
    %v3249 = vld [vmem:[#allocation3] sm:$0xff]
    %v3250 = vld [vmem:[#allocation3 + $0x8] sm:$0xff]
    %v3251 = vld [vmem:[#allocation3 + $0x10] sm:$0xff]
    %v3252 = vld [vmem:[#allocation3 + $0x18] sm:$0xff]
    %v3253 = vld [vmem:[#allocation3 + $0x20] sm:$0xff]
    %v3254 = vld [vmem:[#allocation3 + $0x28] sm:$0xff]
    %v3255 = vld [vmem:[#allocation3 + $0x30] sm:$0xff]
    %v3256 = vld [vmem:[#allocation3 + $0x38] sm:$0xff]
    %v3257 = vpack.c.bf16 %v3250, %v3249
    %v3258 = vpack.c.bf16 %v3252, %v3251
    %v3259 = vpack.c.bf16 %v3254, %v3253
    %v3260 = vpack.c.bf16 %v3256, %v3255
    %v3261 = vld [vmem:[#allocation4] sm:$0xff]
    %v3262 = vld [vmem:[#allocation4 + $0x8] sm:$0xff]
    %v3263 = vld [vmem:[#allocation4 + $0x10] sm:$0xff]
    %v3264 = vld [vmem:[#allocation4 + $0x18] sm:$0xff]
    %v3265 = vld [vmem:[#allocation4 + $0x20] sm:$0xff]
    %v3266 = vld [vmem:[#allocation4 + $0x28] sm:$0xff]
    %v3267 = vld [vmem:[#allocation4 + $0x30] sm:$0xff]
    %v3268 = vld [vmem:[#allocation4 + $0x38] sm:$0xff]
    %v3269 = vpack.c.bf16 %v3262, %v3261
    %v3270 = vpack.c.bf16 %v3264, %v3263
    %v3271 = vpack.c.bf16 %v3266, %v3265
    %v3272 = vpack.c.bf16 %v3268, %v3267
    %v3273 = vld [vmem:[%s5] sm:$0xff]
    %v3274 = vld [vmem:[%s5 + $0x8] sm:$0xff]
    %v3275 = vld [vmem:[%s5 + $0x10] sm:$0xff]
    %v3276 = vld [vmem:[%s5 + $0x18] sm:$0xff]
    %v3277 = vld [vmem:[%s5 + $0x20] sm:$0xff]
    %v3278 = vld [vmem:[%s5 + $0x28] sm:$0xff]
    %v3279 = vld [vmem:[%s5 + $0x30] sm:$0xff]
    %v3280 = vld [vmem:[%s5 + $0x38] sm:$0xff]
    %v3281 = vld [vmem:[%s5 + $0x40] sm:$0xff]
    %v3282 = vld [vmem:[%s5 + $0x48] sm:$0xff]
    %v3283 = vld [vmem:[%s5 + $0x50] sm:$0xff]
    %v3284 = vld [vmem:[%s5 + $0x58] sm:$0xff]
    %v3285 = vld [vmem:[%s5 + $0x60] sm:$0xff]
    %v3286 = vld [vmem:[%s5 + $0x68] sm:$0xff]
    %v3287 = vld [vmem:[%s5 + $0x70] sm:$0xff]
    %v3288 = vld [vmem:[%s5 + $0x78] sm:$0xff]
    %v3289 = vld [vmem:[%s5 + $0x80] sm:$0xff]
    %v3290 = vld [vmem:[%s5 + $0x88] sm:$0xff]
    %v3291 = vld [vmem:[%s5 + $0x90] sm:$0xff]
    %v3292 = vld [vmem:[%s5 + $0x98] sm:$0xff]
    %v3293 = vld [vmem:[%s5 + $0xa0] sm:$0xff]
    %v3294 = vld [vmem:[%s5 + $0xa8] sm:$0xff]
    %v3295 = vld [vmem:[%s5 + $0xb0] sm:$0xff]
    %v3296 = vld [vmem:[%s5 + $0xb8] sm:$0xff]
    %v3297 = vld [vmem:[%s5 + $0xc0] sm:$0xff]
    %v3298 = vld [vmem:[%s5 + $0xc8] sm:$0xff]
    %v3299 = vld [vmem:[%s5 + $0xd0] sm:$0xff]
    %v3300 = vld [vmem:[%s5 + $0xd8] sm:$0xff]
    %v3301 = vld [vmem:[%s5 + $0xe0] sm:$0xff]
    %v3302 = vld [vmem:[%s5 + $0xe8] sm:$0xff]
    %v3303 = vld [vmem:[%s5 + $0xf0] sm:$0xff]
    %v3304 = vld [vmem:[%s5 + $0xf8] sm:$0xff]
    %v3305 = vld [vmem:[%s5 + $0x100] sm:$0xff]
    %v3306 = vld [vmem:[%s5 + $0x108] sm:$0xff]
    %v3307 = vld [vmem:[%s5 + $0x110] sm:$0xff]
    %v3308 = vld [vmem:[%s5 + $0x118] sm:$0xff]
    %v3309 = vld [vmem:[%s5 + $0x120] sm:$0xff]
    %v3310 = vld [vmem:[%s5 + $0x128] sm:$0xff]
    %v3311 = vld [vmem:[%s5 + $0x130] sm:$0xff]
    %v3312 = vld [vmem:[%s5 + $0x138] sm:$0xff]
    %v3313 = vld [vmem:[%s5 + $0x140] sm:$0xff]
    %v3314 = vld [vmem:[%s5 + $0x148] sm:$0xff]
    %v3315 = vld [vmem:[%s5 + $0x150] sm:$0xff]
    %v3316 = vld [vmem:[%s5 + $0x158] sm:$0xff]
    %v3317 = vld [vmem:[%s5 + $0x160] sm:$0xff]
    %v3318 = vld [vmem:[%s5 + $0x168] sm:$0xff]
    %v3319 = vld [vmem:[%s5 + $0x170] sm:$0xff]
    %v3320 = vld [vmem:[%s5 + $0x178] sm:$0xff]
    %v3321 = vld [vmem:[#allocation10] sm:$0xff]
    %v3322 = vld [vmem:[#allocation10 + $0x8] sm:$0xff]
    %v3323 = vld [vmem:[#allocation10 + $0x10] sm:$0xff]
    %v3324 = vld [vmem:[#allocation10 + $0x18] sm:$0xff]
    %v3325 = vld [vmem:[#allocation10 + $0x20] sm:$0xff]
    %v3326 = vld [vmem:[#allocation10 + $0x28] sm:$0xff]
    %v3327 = vld [vmem:[#allocation10 + $0x30] sm:$0xff]
    %v3328 = vld [vmem:[#allocation10 + $0x38] sm:$0xff]
    %v3329 = vld [vmem:[#allocation10 + $0x40] sm:$0xff]
    %v3330 = vld [vmem:[#allocation10 + $0x48] sm:$0xff]
    %v3331 = vld [vmem:[#allocation10 + $0x50] sm:$0xff]
    %v3332 = vld [vmem:[#allocation10 + $0x58] sm:$0xff]
    %v3333 = vld [vmem:[#allocation10 + $0x60] sm:$0xff]
    %v3334 = vld [vmem:[#allocation10 + $0x68] sm:$0xff]
    %v3335 = vld [vmem:[#allocation10 + $0x70] sm:$0xff]
    %v3336 = vld [vmem:[#allocation10 + $0x78] sm:$0xff]
    %v3337 = vld [vmem:[#allocation10 + $0x80] sm:$0xff]
    %v3338 = vld [vmem:[#allocation10 + $0x88] sm:$0xff]
    %v3339 = vld [vmem:[#allocation10 + $0x90] sm:$0xff]
    %v3340 = vld [vmem:[#allocation10 + $0x98] sm:$0xff]
    %v3341 = vld [vmem:[#allocation10 + $0xa0] sm:$0xff]
    %v3342 = vld [vmem:[#allocation10 + $0xa8] sm:$0xff]
    %v3343 = vld [vmem:[#allocation10 + $0xb0] sm:$0xff]
    %v3344 = vld [vmem:[#allocation10 + $0xb8] sm:$0xff]
    %v3345 = vld [vmem:[#allocation10 + $0xc0] sm:$0xff]
    %v3346 = vld [vmem:[#allocation10 + $0xc8] sm:$0xff]
    %v3347 = vld [vmem:[#allocation10 + $0xd0] sm:$0xff]
    %v3348 = vld [vmem:[#allocation10 + $0xd8] sm:$0xff]
    %v3349 = vld [vmem:[#allocation10 + $0xe0] sm:$0xff]
    %v3350 = vld [vmem:[#allocation10 + $0xe8] sm:$0xff]
    %v3351 = vld [vmem:[#allocation10 + $0xf0] sm:$0xff]
    %v3352 = vld [vmem:[#allocation10 + $0xf8] sm:$0xff]
    %v3353 = vld [vmem:[#allocation10 + $0x100] sm:$0xff]
    %v3354 = vld [vmem:[#allocation10 + $0x108] sm:$0xff]
    %v3355 = vld [vmem:[#allocation10 + $0x110] sm:$0xff]
    %v3356 = vld [vmem:[#allocation10 + $0x118] sm:$0xff]
    %v3357 = vld [vmem:[#allocation10 + $0x120] sm:$0xff]
    %v3358 = vld [vmem:[#allocation10 + $0x128] sm:$0xff]
    %v3359 = vld [vmem:[#allocation10 + $0x130] sm:$0xff]
    %v3360 = vld [vmem:[#allocation10 + $0x138] sm:$0xff]
    %v3361 = vld [vmem:[#allocation10 + $0x140] sm:$0xff]
    %v3362 = vld [vmem:[#allocation10 + $0x148] sm:$0xff]
    %v3363 = vld [vmem:[#allocation10 + $0x150] sm:$0xff]
    %v3364 = vld [vmem:[#allocation10 + $0x158] sm:$0xff]
    %v3365 = vld [vmem:[#allocation10 + $0x160] sm:$0xff]
    %v3366 = vld [vmem:[#allocation10 + $0x168] sm:$0xff]
    %v3367 = vld [vmem:[#allocation10 + $0x170] sm:$0xff]
    %v3368 = vld [vmem:[#allocation10 + $0x178] sm:$0xff]
    %v3417 = vunpack.c.l.b16 %v3321
    %v3418 = vunpack.c.h.b16 %v3321
    %v3419 = vunpack.c.l.b16 %v3322
    %v3420 = vunpack.c.h.b16 %v3322
    %v3421 = vunpack.c.l.b16 %v3323
    %v3422 = vunpack.c.h.b16 %v3323
    %v3423 = vunpack.c.l.b16 %v3324
    %v3424 = vunpack.c.h.b16 %v3324
    %v3425 = vunpack.c.l.b16 %v3325
    %v3426 = vunpack.c.h.b16 %v3325
    %v3427 = vunpack.c.l.b16 %v3326
    %v3428 = vunpack.c.h.b16 %v3326
    %v3429 = vunpack.c.l.b16 %v3327
    %v3430 = vunpack.c.h.b16 %v3327
    %v3431 = vunpack.c.l.b16 %v3328
    %v3432 = vunpack.c.h.b16 %v3328
    %v3433 = vunpack.c.l.b16 %v3329
    %v3434 = vunpack.c.h.b16 %v3329
    %v3435 = vunpack.c.l.b16 %v3330
    %v3436 = vunpack.c.h.b16 %v3330
    %v3437 = vunpack.c.l.b16 %v3331
    %v3438 = vunpack.c.h.b16 %v3331
    %v3439 = vunpack.c.l.b16 %v3332
    %v3440 = vunpack.c.h.b16 %v3332
    %v3441 = vunpack.c.l.b16 %v3333
    %v3442 = vunpack.c.h.b16 %v3333
    %v3443 = vunpack.c.l.b16 %v3334
    %v3444 = vunpack.c.h.b16 %v3334
    %v3445 = vunpack.c.l.b16 %v3335
    %v3446 = vunpack.c.h.b16 %v3335
    %v3447 = vunpack.c.l.b16 %v3336
    %v3448 = vunpack.c.h.b16 %v3336
    %v3449 = vunpack.c.l.b16 %v3337
    %v3450 = vunpack.c.h.b16 %v3337
    %v3451 = vunpack.c.l.b16 %v3338
    %v3452 = vunpack.c.h.b16 %v3338
    %v3453 = vunpack.c.l.b16 %v3339
    %v3454 = vunpack.c.h.b16 %v3339
    %v3455 = vunpack.c.l.b16 %v3340
    %v3456 = vunpack.c.h.b16 %v3340
    %v3457 = vunpack.c.l.b16 %v3341
    %v3458 = vunpack.c.h.b16 %v3341
    %v3459 = vunpack.c.l.b16 %v3342
    %v3460 = vunpack.c.h.b16 %v3342
    %v3461 = vunpack.c.l.b16 %v3343
    %v3462 = vunpack.c.h.b16 %v3343
    %v3463 = vunpack.c.l.b16 %v3344
    %v3464 = vunpack.c.h.b16 %v3344
    %v3465 = vunpack.c.l.b16 %v3345
    %v3466 = vunpack.c.h.b16 %v3345
    %v3467 = vunpack.c.l.b16 %v3346
    %v3468 = vunpack.c.h.b16 %v3346
    %v3469 = vunpack.c.l.b16 %v3347
    %v3470 = vunpack.c.h.b16 %v3347
    %v3471 = vunpack.c.l.b16 %v3348
    %v3472 = vunpack.c.h.b16 %v3348
    %v3473 = vunpack.c.l.b16 %v3349
    %v3474 = vunpack.c.h.b16 %v3349
    %v3475 = vunpack.c.l.b16 %v3350
    %v3476 = vunpack.c.h.b16 %v3350
    %v3477 = vunpack.c.l.b16 %v3351
    %v3478 = vunpack.c.h.b16 %v3351
    %v3479 = vunpack.c.l.b16 %v3352
    %v3480 = vunpack.c.h.b16 %v3352
    %v3481 = vunpack.c.l.b16 %v3353
    %v3482 = vunpack.c.h.b16 %v3353
    %v3483 = vunpack.c.l.b16 %v3354
    %v3484 = vunpack.c.h.b16 %v3354
    %v3485 = vunpack.c.l.b16 %v3355
    %v3486 = vunpack.c.h.b16 %v3355
    %v3487 = vunpack.c.l.b16 %v3356
    %v3488 = vunpack.c.h.b16 %v3356
    %v3489 = vunpack.c.l.b16 %v3357
    %v3490 = vunpack.c.h.b16 %v3357
    %v3491 = vunpack.c.l.b16 %v3358
    %v3492 = vunpack.c.h.b16 %v3358
    %v3493 = vunpack.c.l.b16 %v3359
    %v3494 = vunpack.c.h.b16 %v3359
    %v3495 = vunpack.c.l.b16 %v3360
    %v3496 = vunpack.c.h.b16 %v3360
    %v3497 = vunpack.c.l.b16 %v3361
    %v3498 = vunpack.c.h.b16 %v3361
    %v3499 = vunpack.c.l.b16 %v3362
    %v3500 = vunpack.c.h.b16 %v3362
    %v3501 = vunpack.c.l.b16 %v3363
    %v3502 = vunpack.c.h.b16 %v3363
    %v3503 = vunpack.c.l.b16 %v3364
    %v3504 = vunpack.c.h.b16 %v3364
    %v3505 = vunpack.c.l.b16 %v3365
    %v3506 = vunpack.c.h.b16 %v3365
    %v3507 = vunpack.c.l.b16 %v3366
    %v3508 = vunpack.c.h.b16 %v3366
    %v3509 = vunpack.c.l.b16 %v3367
    %v3510 = vunpack.c.h.b16 %v3367
    %v3511 = vunpack.c.l.b16 %v3368
    %v3512 = vunpack.c.h.b16 %v3368
    %v3513 = vpack.c.b16 %v3423, %v3417
    %v3514 = vpack.c.b16 %v3424, %v3418
    %v3515 = vpack.c.b16 %v3425, %v3419
    %v3516 = vpack.c.b16 %v3426, %v3420
    %v3517 = vpack.c.b16 %v3427, %v3421
    %v3518 = vpack.c.b16 %v3428, %v3422
    %v3519 = vpack.c.b16 %v3435, %v3429
    %v3520 = vpack.c.b16 %v3436, %v3430
    %v3521 = vpack.c.b16 %v3437, %v3431
    %v3522 = vpack.c.b16 %v3438, %v3432
    %v3523 = vpack.c.b16 %v3439, %v3433
    %v3524 = vpack.c.b16 %v3440, %v3434
    %v3525 = vpack.c.b16 %v3447, %v3441
    %v3526 = vpack.c.b16 %v3448, %v3442
    %v3527 = vpack.c.b16 %v3449, %v3443
    %v3528 = vpack.c.b16 %v3450, %v3444
    %v3529 = vpack.c.b16 %v3451, %v3445
    %v3530 = vpack.c.b16 %v3452, %v3446
    %v3531 = vpack.c.b16 %v3459, %v3453
    %v3532 = vpack.c.b16 %v3460, %v3454
    %v3533 = vpack.c.b16 %v3461, %v3455
    %v3534 = vpack.c.b16 %v3462, %v3456
    %v3535 = vpack.c.b16 %v3463, %v3457
    %v3536 = vpack.c.b16 %v3464, %v3458
    %v3537 = vpack.c.b16 %v3471, %v3465
    %v3538 = vpack.c.b16 %v3472, %v3466
    %v3539 = vpack.c.b16 %v3473, %v3467
    %v3540 = vpack.c.b16 %v3474, %v3468
    %v3541 = vpack.c.b16 %v3475, %v3469
    %v3542 = vpack.c.b16 %v3476, %v3470
    %v3543 = vpack.c.b16 %v3483, %v3477
    %v3544 = vpack.c.b16 %v3484, %v3478
    %v3545 = vpack.c.b16 %v3485, %v3479
    %v3546 = vpack.c.b16 %v3486, %v3480
    %v3547 = vpack.c.b16 %v3487, %v3481
    %v3548 = vpack.c.b16 %v3488, %v3482
    %v3549 = vpack.c.b16 %v3495, %v3489
    %v3550 = vpack.c.b16 %v3496, %v3490
    %v3551 = vpack.c.b16 %v3497, %v3491
    %v3552 = vpack.c.b16 %v3498, %v3492
    %v3553 = vpack.c.b16 %v3499, %v3493
    %v3554 = vpack.c.b16 %v3500, %v3494
    %v3555 = vpack.c.b16 %v3507, %v3501
    %v3556 = vpack.c.b16 %v3508, %v3502
    %v3557 = vpack.c.b16 %v3509, %v3503
    %v3558 = vpack.c.b16 %v3510, %v3504
    %v3559 = vpack.c.b16 %v3511, %v3505
    %v3560 = vpack.c.b16 %v3512, %v3506
    %3609 = vmatprep.subr.bf16.mxu0 %v3514
    %3610 = vmatpush1.bf16.msra.mxu0 %v3513
    %3611 = vmatprep.subr.bf16.mxu0 %v3520
    %3612 = vmatpush1.bf16.msra.mxu0 %v3519
    %3613 = vmatprep.subr.bf16.mxu0 %v3526
    %3614 = vmatpush1.bf16.msra.mxu0 %v3525
    %3615 = vmatprep.subr.bf16.mxu0 %v3532
    %3616 = vmatpush1.bf16.msra.mxu0 %v3531
    %3617 = vmatprep.subr.bf16.mxu0 %v3538
    %3618 = vmatpush1.bf16.msra.mxu0 %v3537
    %3619 = vmatprep.subr.bf16.mxu0 %v3544
    %3620 = vmatpush1.bf16.msra.mxu0 %v3543
    %3621 = vmatprep.subr.bf16.mxu0 %v3550
    %3622 = vmatpush1.bf16.msra.mxu0 %v3549
    %3623 = vmatprep.subr.bf16.mxu0 %v3556
    %3624 = vmatpush1.bf16.msra.mxu0 %v3555
    %3625 = vmatprep.subr.bf16.mxu0 0
    %3626 = vmatpush1.bf16.msra.mxu0 0
    %3627 = vmatprep.subr.bf16.mxu0 0
    %3628 = vmatpush1.bf16.msra.mxu0 0
    %3629 = vmatprep.subr.bf16.mxu0 0
    %3630 = vmatpush1.bf16.msra.mxu0 0
    %3631 = vmatprep.subr.bf16.mxu0 0
    %3632 = vmatpush1.bf16.msra.mxu0 0
    %3633 = vmatprep.subr.bf16.mxu0 0
    %3634 = vmatpush1.bf16.msra.mxu0 0
    %3635 = vmatprep.subr.bf16.mxu0 0
    %3636 = vmatpush1.bf16.msra.mxu0 0
    %3637 = vmatprep.subr.bf16.mxu0 0
    %3638 = vmatpush1.bf16.msra.mxu0 0
    %3639 = vmatprep.subr.bf16.mxu0 0
    %3640 = vmatpush1.bf16.msra.mxu0 0
    %3641 = vmatprep.mubr.bf16.mxu0 0
    %3642 = vmatmul.mubr.bf16.gmra.mrb[0].mxu0 %v3269
    %v3643 = vpop.f32.mrb[0].mxu0
    %v3644 = vadd.f32 0.0, %v3643
    %v3645 = vpop.f32.mrb[0].mxu0
    %v3646 = vadd.f32 0.0, %v3645
    %v3647 = vpop.f32.mrb[0].mxu0
    %v3648 = vadd.f32 0.0, %v3647
    %v3649 = vpop.f32.mrb[0].mxu0
    %v3650 = vadd.f32 0.0, %v3649
    %3651 = vmatprep.mubr.bf16.mxu0 0
    %3652 = vmatmul.mubr.bf16.gmra.mrb[0].mxu0 %v3270
    %v3653 = vpop.f32.mrb[0].mxu0
    %v3654 = vadd.f32 0.0, %v3653
    %v3655 = vpop.f32.mrb[0].mxu0
    %v3656 = vadd.f32 0.0, %v3655
    %v3657 = vpop.f32.mrb[0].mxu0
    %v3658 = vadd.f32 0.0, %v3657
    %v3659 = vpop.f32.mrb[0].mxu0
    %v3660 = vadd.f32 0.0, %v3659
    %3661 = vmatprep.mubr.bf16.mxu0 0
    %3662 = vmatmul.mubr.bf16.gmra.mrb[0].mxu0 %v3271
    %v3663 = vpop.f32.mrb[0].mxu0
    %v3664 = vadd.f32 0.0, %v3663
    %v3665 = vpop.f32.mrb[0].mxu0
    %v3666 = vadd.f32 0.0, %v3665
    %v3667 = vpop.f32.mrb[0].mxu0
    %v3668 = vadd.f32 0.0, %v3667
    %v3669 = vpop.f32.mrb[0].mxu0
    %v3670 = vadd.f32 0.0, %v3669
    %3671 = vmatprep.mubr.bf16.mxu0 0
    %3672 = vmatmul.mubr.bf16.gmra.mrb[0].mxu0 %v3272
    %v3673 = vpop.f32.mrb[0].mxu0
    %v3674 = vadd.f32 0.0, %v3673
    %v3675 = vpop.f32.mrb[0].mxu0
    %v3676 = vadd.f32 0.0, %v3675
    %v3677 = vpop.f32.mrb[0].mxu0
    %v3678 = vadd.f32 0.0, %v3677
    %v3679 = vpop.f32.mrb[0].mxu0
    %v3680 = vadd.f32 0.0, %v3679
    %3681 = vdwg.mxu0
    %3682 = vmatprep.subr.bf16.mxu0 %v3516
    %3683 = vmatpush1.bf16.msra.mxu0 %v3515
    %3684 = vmatprep.subr.bf16.mxu0 %v3522
    %3685 = vmatpush1.bf16.msra.mxu0 %v3521
    %3686 = vmatprep.subr.bf16.mxu0 %v3528
    %3687 = vmatpush1.bf16.msra.mxu0 %v3527
    %3688 = vmatprep.subr.bf16.mxu0 %v3534
    %3689 = vmatpush1.bf16.msra.mxu0 %v3533
    %3690 = vmatprep.subr.bf16.mxu0 %v3540
    %3691 = vmatpush1.bf16.msra.mxu0 %v3539
    %3692 = vmatprep.subr.bf16.mxu0 %v3546
    %3693 = vmatpush1.bf16.msra.mxu0 %v3545
    %3694 = vmatprep.subr.bf16.mxu0 %v3552
    %3695 = vmatpush1.bf16.msra.mxu0 %v3551
    %3696 = vmatprep.subr.bf16.mxu0 %v3558
    %3697 = vmatpush1.bf16.msra.mxu0 %v3557
    %3698 = vmatprep.subr.bf16.mxu0 0
    %3699 = vmatpush1.bf16.msra.mxu0 0
    %3700 = vmatprep.subr.bf16.mxu0 0
    %3701 = vmatpush1.bf16.msra.mxu0 0
    %3702 = vmatprep.subr.bf16.mxu0 0
    %3703 = vmatpush1.bf16.msra.mxu0 0
    %3704 = vmatprep.subr.bf16.mxu0 0
    %3705 = vmatpush1.bf16.msra.mxu0 0
    %3706 = vmatprep.subr.bf16.mxu0 0
    %3707 = vmatpush1.bf16.msra.mxu0 0
    %3708 = vmatprep.subr.bf16.mxu0 0
    %3709 = vmatpush1.bf16.msra.mxu0 0
    %3710 = vmatprep.subr.bf16.mxu0 0
    %3711 = vmatpush1.bf16.msra.mxu0 0
    %3712 = vmatprep.subr.bf16.mxu0 0
    %3713 = vmatpush1.bf16.msra.mxu0 0
    %3714 = vmatprep.mubr.bf16.mxu0 0
    %3715 = vmatmul.mubr.bf16.gmra.mrb[0].mxu0 %v3269
    %v3716 = vpop.f32.mrb[0].mxu0
    %v3717 = vadd.f32 0.0, %v3716
    %v3718 = vpop.f32.mrb[0].mxu0
    %v3719 = vadd.f32 0.0, %v3718
    %v3720 = vpop.f32.mrb[0].mxu0
    %v3721 = vadd.f32 0.0, %v3720
    %v3722 = vpop.f32.mrb[0].mxu0
    %v3723 = vadd.f32 0.0, %v3722
    %3724 = vmatprep.mubr.bf16.mxu0 0
    %3725 = vmatmul.mubr.bf16.gmra.mrb[0].mxu0 %v3270
    %v3726 = vpop.f32.mrb[0].mxu0
    %v3727 = vadd.f32 0.0, %v3726
    %v3728 = vpop.f32.mrb[0].mxu0
    %v3729 = vadd.f32 0.0, %v3728
    %v3730 = vpop.f32.mrb[0].mxu0
    %v3731 = vadd.f32 0.0, %v3730
    %v3732 = vpop.f32.mrb[0].mxu0
    %v3733 = vadd.f32 0.0, %v3732
    %3734 = vmatprep.mubr.bf16.mxu0 0
    %3735 = vmatmul.mubr.bf16.gmra.mrb[0].mxu0 %v3271
    %v3736 = vpop.f32.mrb[0].mxu0
    %v3737 = vadd.f32 0.0, %v3736
    %v3738 = vpop.f32.mrb[0].mxu0
    %v3739 = vadd.f32 0.0, %v3738
    %v3740 = vpop.f32.mrb[0].mxu0
    %v3741 = vadd.f32 0.0, %v3740
    %v3742 = vpop.f32.mrb[0].mxu0
    %v3743 = vadd.f32 0.0, %v3742
    %3744 = vmatprep.mubr.bf16.mxu0 0
    %3745 = vmatmul.mubr.bf16.gmra.mrb[0].mxu0 %v3272
    %v3746 = vpop.f32.mrb[0].mxu0
    %v3747 = vadd.f32 0.0, %v3746
    %v3748 = vpop.f32.mrb[0].mxu0
    %v3749 = vadd.f32 0.0, %v3748
    %v3750 = vpop.f32.mrb[0].mxu0
    %v3751 = vadd.f32 0.0, %v3750
    %v3752 = vpop.f32.mrb[0].mxu0
    %v3753 = vadd.f32 0.0, %v3752
    %3754 = vdwg.mxu0
    %3755 = vmatprep.subr.bf16.mxu0 %v3518
    %3756 = vmatpush1.bf16.msra.mxu0 %v3517
    %3757 = vmatprep.subr.bf16.mxu0 %v3524
    %3758 = vmatpush1.bf16.msra.mxu0 %v3523
    %3759 = vmatprep.subr.bf16.mxu0 %v3530
    %3760 = vmatpush1.bf16.msra.mxu0 %v3529
    %3761 = vmatprep.subr.bf16.mxu0 %v3536
    %3762 = vmatpush1.bf16.msra.mxu0 %v3535
    %3763 = vmatprep.subr.bf16.mxu0 %v3542
    %3764 = vmatpush1.bf16.msra.mxu0 %v3541
    %3765 = vmatprep.subr.bf16.mxu0 %v3548
    %3766 = vmatpush1.bf16.msra.mxu0 %v3547
    %3767 = vmatprep.subr.bf16.mxu0 %v3554
    %3768 = vmatpush1.bf16.msra.mxu0 %v3553
    %3769 = vmatprep.subr.bf16.mxu0 %v3560
    %3770 = vmatpush1.bf16.msra.mxu0 %v3559
    %3771 = vmatprep.subr.bf16.mxu0 0
    %3772 = vmatpush1.bf16.msra.mxu0 0
    %3773 = vmatprep.subr.bf16.mxu0 0
    %3774 = vmatpush1.bf16.msra.mxu0 0
    %3775 = vmatprep.subr.bf16.mxu0 0
    %3776 = vmatpush1.bf16.msra.mxu0 0
    %3777 = vmatprep.subr.bf16.mxu0 0
    %3778 = vmatpush1.bf16.msra.mxu0 0
    %3779 = vmatprep.subr.bf16.mxu0 0
    %3780 = vmatpush1.bf16.msra.mxu0 0
    %3781 = vmatprep.subr.bf16.mxu0 0
    %3782 = vmatpush1.bf16.msra.mxu0 0
    %3783 = vmatprep.subr.bf16.mxu0 0
    %3784 = vmatpush1.bf16.msra.mxu0 0
    %3785 = vmatprep.subr.bf16.mxu0 0
    %3786 = vmatpush1.bf16.msra.mxu0 0
    %3787 = vmatprep.mubr.bf16.mxu0 0
    %3788 = vmatmul.mubr.bf16.gmra.mrb[0].mxu0 %v3269
    %v3789 = vpop.f32.mrb[0].mxu0
    %v3790 = vadd.f32 0.0, %v3789
    %v3791 = vpop.f32.mrb[0].mxu0
    %v3792 = vadd.f32 0.0, %v3791
    %v3793 = vpop.f32.mrb[0].mxu0
    %v3794 = vadd.f32 0.0, %v3793
    %v3795 = vpop.f32.mrb[0].mxu0
    %v3796 = vadd.f32 0.0, %v3795
    %3797 = vmatprep.mubr.bf16.mxu0 0
    %3798 = vmatmul.mubr.bf16.gmra.mrb[0].mxu0 %v3270
    %v3799 = vpop.f32.mrb[0].mxu0
    %v3800 = vadd.f32 0.0, %v3799
    %v3801 = vpop.f32.mrb[0].mxu0
    %v3802 = vadd.f32 0.0, %v3801
    %v3803 = vpop.f32.mrb[0].mxu0
    %v3804 = vadd.f32 0.0, %v3803
    %v3805 = vpop.f32.mrb[0].mxu0
    %v3806 = vadd.f32 0.0, %v3805
    %3807 = vmatprep.mubr.bf16.mxu0 0
    %3808 = vmatmul.mubr.bf16.gmra.mrb[0].mxu0 %v3271
    %v3809 = vpop.f32.mrb[0].mxu0
    %v3810 = vadd.f32 0.0, %v3809
    %v3811 = vpop.f32.mrb[0].mxu0
    %v3812 = vadd.f32 0.0, %v3811
    %v3813 = vpop.f32.mrb[0].mxu0
    %v3814 = vadd.f32 0.0, %v3813
    %v3815 = vpop.f32.mrb[0].mxu0
    %v3816 = vadd.f32 0.0, %v3815
    %3817 = vmatprep.mubr.bf16.mxu0 0
    %3818 = vmatmul.mubr.bf16.gmra.mrb[0].mxu0 %v3272
    %v3819 = vpop.f32.mrb[0].mxu0
    %v3820 = vadd.f32 0.0, %v3819
    %v3821 = vpop.f32.mrb[0].mxu0
    %v3822 = vadd.f32 0.0, %v3821
    %v3823 = vpop.f32.mrb[0].mxu0
    %v3824 = vadd.f32 0.0, %v3823
    %v3825 = vpop.f32.mrb[0].mxu0
    %v3826 = vadd.f32 0.0, %v3825
    %3827 = vdwg.mxu0
    %v3876 = vunpack.c.l.b16 %v3273
    %v3877 = vunpack.c.h.b16 %v3273
    %v3878 = vunpack.c.l.b16 %v3274
    %v3879 = vunpack.c.h.b16 %v3274
    %v3880 = vunpack.c.l.b16 %v3275
    %v3881 = vunpack.c.h.b16 %v3275
    %v3882 = vunpack.c.l.b16 %v3276
    %v3883 = vunpack.c.h.b16 %v3276
    %v3884 = vunpack.c.l.b16 %v3277
    %v3885 = vunpack.c.h.b16 %v3277
    %v3886 = vunpack.c.l.b16 %v3278
    %v3887 = vunpack.c.h.b16 %v3278
    %v3888 = vunpack.c.l.b16 %v3279
    %v3889 = vunpack.c.h.b16 %v3279
    %v3890 = vunpack.c.l.b16 %v3280
    %v3891 = vunpack.c.h.b16 %v3280
    %v3892 = vunpack.c.l.b16 %v3281
    %v3893 = vunpack.c.h.b16 %v3281
    %v3894 = vunpack.c.l.b16 %v3282
    %v3895 = vunpack.c.h.b16 %v3282
    %v3896 = vunpack.c.l.b16 %v3283
    %v3897 = vunpack.c.h.b16 %v3283
    %v3898 = vunpack.c.l.b16 %v3284
    %v3899 = vunpack.c.h.b16 %v3284
    %v3900 = vunpack.c.l.b16 %v3285
    %v3901 = vunpack.c.h.b16 %v3285
    %v3902 = vunpack.c.l.b16 %v3286
    %v3903 = vunpack.c.h.b16 %v3286
    %v3904 = vunpack.c.l.b16 %v3287
    %v3905 = vunpack.c.h.b16 %v3287
    %v3906 = vunpack.c.l.b16 %v3288
    %v3907 = vunpack.c.h.b16 %v3288
    %v3908 = vunpack.c.l.b16 %v3289
    %v3909 = vunpack.c.h.b16 %v3289
    %v3910 = vunpack.c.l.b16 %v3290
    %v3911 = vunpack.c.h.b16 %v3290
    %v3912 = vunpack.c.l.b16 %v3291
    %v3913 = vunpack.c.h.b16 %v3291
    %v3914 = vunpack.c.l.b16 %v3292
    %v3915 = vunpack.c.h.b16 %v3292
    %v3916 = vunpack.c.l.b16 %v3293
    %v3917 = vunpack.c.h.b16 %v3293
    %v3918 = vunpack.c.l.b16 %v3294
    %v3919 = vunpack.c.h.b16 %v3294
    %v3920 = vunpack.c.l.b16 %v3295
    %v3921 = vunpack.c.h.b16 %v3295
    %v3922 = vunpack.c.l.b16 %v3296
    %v3923 = vunpack.c.h.b16 %v3296
    %v3924 = vunpack.c.l.b16 %v3297
    %v3925 = vunpack.c.h.b16 %v3297
    %v3926 = vunpack.c.l.b16 %v3298
    %v3927 = vunpack.c.h.b16 %v3298
    %v3928 = vunpack.c.l.b16 %v3299
    %v3929 = vunpack.c.h.b16 %v3299
    %v3930 = vunpack.c.l.b16 %v3300
    %v3931 = vunpack.c.h.b16 %v3300
    %v3932 = vunpack.c.l.b16 %v3301
    %v3933 = vunpack.c.h.b16 %v3301
    %v3934 = vunpack.c.l.b16 %v3302
    %v3935 = vunpack.c.h.b16 %v3302
    %v3936 = vunpack.c.l.b16 %v3303
    %v3937 = vunpack.c.h.b16 %v3303
    %v3938 = vunpack.c.l.b16 %v3304
    %v3939 = vunpack.c.h.b16 %v3304
    %v3940 = vunpack.c.l.b16 %v3305
    %v3941 = vunpack.c.h.b16 %v3305
    %v3942 = vunpack.c.l.b16 %v3306
    %v3943 = vunpack.c.h.b16 %v3306
    %v3944 = vunpack.c.l.b16 %v3307
    %v3945 = vunpack.c.h.b16 %v3307
    %v3946 = vunpack.c.l.b16 %v3308
    %v3947 = vunpack.c.h.b16 %v3308
    %v3948 = vunpack.c.l.b16 %v3309
    %v3949 = vunpack.c.h.b16 %v3309
    %v3950 = vunpack.c.l.b16 %v3310
    %v3951 = vunpack.c.h.b16 %v3310
    %v3952 = vunpack.c.l.b16 %v3311
    %v3953 = vunpack.c.h.b16 %v3311
    %v3954 = vunpack.c.l.b16 %v3312
    %v3955 = vunpack.c.h.b16 %v3312
    %v3956 = vunpack.c.l.b16 %v3313
    %v3957 = vunpack.c.h.b16 %v3313
    %v3958 = vunpack.c.l.b16 %v3314
    %v3959 = vunpack.c.h.b16 %v3314
    %v3960 = vunpack.c.l.b16 %v3315
    %v3961 = vunpack.c.h.b16 %v3315
    %v3962 = vunpack.c.l.b16 %v3316
    %v3963 = vunpack.c.h.b16 %v3316
    %v3964 = vunpack.c.l.b16 %v3317
    %v3965 = vunpack.c.h.b16 %v3317
    %v3966 = vunpack.c.l.b16 %v3318
    %v3967 = vunpack.c.h.b16 %v3318
    %v3968 = vunpack.c.l.b16 %v3319
    %v3969 = vunpack.c.h.b16 %v3319
    %v3970 = vunpack.c.l.b16 %v3320
    %v3971 = vunpack.c.h.b16 %v3320
    %v3972 = vpack.c.b16 %v3882, %v3876
    %v3973 = vpack.c.b16 %v3883, %v3877
    %v3974 = vpack.c.b16 %v3884, %v3878
    %v3975 = vpack.c.b16 %v3885, %v3879
    %v3976 = vpack.c.b16 %v3886, %v3880
    %v3977 = vpack.c.b16 %v3887, %v3881
    %v3978 = vpack.c.b16 %v3894, %v3888
    %v3979 = vpack.c.b16 %v3895, %v3889
    %v3980 = vpack.c.b16 %v3896, %v3890
    %v3981 = vpack.c.b16 %v3897, %v3891
    %v3982 = vpack.c.b16 %v3898, %v3892
    %v3983 = vpack.c.b16 %v3899, %v3893
    %v3984 = vpack.c.b16 %v3906, %v3900
    %v3985 = vpack.c.b16 %v3907, %v3901
    %v3986 = vpack.c.b16 %v3908, %v3902
    %v3987 = vpack.c.b16 %v3909, %v3903
    %v3988 = vpack.c.b16 %v3910, %v3904
    %v3989 = vpack.c.b16 %v3911, %v3905
    %v3990 = vpack.c.b16 %v3918, %v3912
    %v3991 = vpack.c.b16 %v3919, %v3913
    %v3992 = vpack.c.b16 %v3920, %v3914
    %v3993 = vpack.c.b16 %v3921, %v3915
    %v3994 = vpack.c.b16 %v3922, %v3916
    %v3995 = vpack.c.b16 %v3923, %v3917
    %v3996 = vpack.c.b16 %v3930, %v3924
    %v3997 = vpack.c.b16 %v3931, %v3925
    %v3998 = vpack.c.b16 %v3932, %v3926
    %v3999 = vpack.c.b16 %v3933, %v3927
    %v4000 = vpack.c.b16 %v3934, %v3928
    %v4001 = vpack.c.b16 %v3935, %v3929
    %v4002 = vpack.c.b16 %v3942, %v3936
    %v4003 = vpack.c.b16 %v3943, %v3937
    %v4004 = vpack.c.b16 %v3944, %v3938
    %v4005 = vpack.c.b16 %v3945, %v3939
    %v4006 = vpack.c.b16 %v3946, %v3940
    %v4007 = vpack.c.b16 %v3947, %v3941
    %v4008 = vpack.c.b16 %v3954, %v3948
    %v4009 = vpack.c.b16 %v3955, %v3949
    %v4010 = vpack.c.b16 %v3956, %v3950
    %v4011 = vpack.c.b16 %v3957, %v3951
    %v4012 = vpack.c.b16 %v3958, %v3952
    %v4013 = vpack.c.b16 %v3959, %v3953
    %v4014 = vpack.c.b16 %v3966, %v3960
    %v4015 = vpack.c.b16 %v3967, %v3961
    %v4016 = vpack.c.b16 %v3968, %v3962
    %v4017 = vpack.c.b16 %v3969, %v3963
    %v4018 = vpack.c.b16 %v3970, %v3964
    %v4019 = vpack.c.b16 %v3971, %v3965
    %4068 = vmatprep.subr.bf16.mxu0 %v3973
    %4069 = vmatpush1.bf16.msra.mxu0 %v3972
    %4070 = vmatprep.subr.bf16.mxu0 %v3979
    %4071 = vmatpush1.bf16.msra.mxu0 %v3978
    %4072 = vmatprep.subr.bf16.mxu0 %v3985
    %4073 = vmatpush1.bf16.msra.mxu0 %v3984
    %4074 = vmatprep.subr.bf16.mxu0 %v3991
    %4075 = vmatpush1.bf16.msra.mxu0 %v3990
    %4076 = vmatprep.subr.bf16.mxu0 %v3997
    %4077 = vmatpush1.bf16.msra.mxu0 %v3996
    %4078 = vmatprep.subr.bf16.mxu0 %v4003
    %4079 = vmatpush1.bf16.msra.mxu0 %v4002
    %4080 = vmatprep.subr.bf16.mxu0 %v4009
    %4081 = vmatpush1.bf16.msra.mxu0 %v4008
    %4082 = vmatprep.subr.bf16.mxu0 %v4015
    %4083 = vmatpush1.bf16.msra.mxu0 %v4014
    %4084 = vmatprep.subr.bf16.mxu0 0
    %4085 = vmatpush1.bf16.msra.mxu0 0
    %4086 = vmatprep.subr.bf16.mxu0 0
    %4087 = vmatpush1.bf16.msra.mxu0 0
    %4088 = vmatprep.subr.bf16.mxu0 0
    %4089 = vmatpush1.bf16.msra.mxu0 0
    %4090 = vmatprep.subr.bf16.mxu0 0
    %4091 = vmatpush1.bf16.msra.mxu0 0
    %4092 = vmatprep.subr.bf16.mxu0 0
    %4093 = vmatpush1.bf16.msra.mxu0 0
    %4094 = vmatprep.subr.bf16.mxu0 0
    %4095 = vmatpush1.bf16.msra.mxu0 0
    %4096 = vmatprep.subr.bf16.mxu0 0
    %4097 = vmatpush1.bf16.msra.mxu0 0
    %4098 = vmatprep.subr.bf16.mxu0 0
    %4099 = vmatpush1.bf16.msra.mxu0 0
    %4100 = vmatprep.mubr.bf16.mxu0 0
    %4101 = vmatmul.mubr.bf16.gmra.mrb[0].mxu0 %v3257
    %v4102 = vpop.f32.mrb[0].mxu0
    %v4103 = vadd.f32 %v3644, %v4102
    %v4104 = vpop.f32.mrb[0].mxu0
    %v4105 = vadd.f32 %v3646, %v4104
    %v4106 = vpop.f32.mrb[0].mxu0
    %v4107 = vadd.f32 %v3648, %v4106
    %v4108 = vpop.f32.mrb[0].mxu0
    %v4109 = vadd.f32 %v3650, %v4108
    %4110 = vmatprep.mubr.bf16.mxu0 0
    %4111 = vmatmul.mubr.bf16.gmra.mrb[0].mxu0 %v3258
    %v4112 = vpop.f32.mrb[0].mxu0
    %v4113 = vadd.f32 %v3654, %v4112
    %v4114 = vpop.f32.mrb[0].mxu0
    %v4115 = vadd.f32 %v3656, %v4114
    %v4116 = vpop.f32.mrb[0].mxu0
    %v4117 = vadd.f32 %v3658, %v4116
    %v4118 = vpop.f32.mrb[0].mxu0
    %v4119 = vadd.f32 %v3660, %v4118
    %4120 = vmatprep.mubr.bf16.mxu0 0
    %4121 = vmatmul.mubr.bf16.gmra.mrb[0].mxu0 %v3259
    %v4122 = vpop.f32.mrb[0].mxu0
    %v4123 = vadd.f32 %v3664, %v4122
    %v4124 = vpop.f32.mrb[0].mxu0
    %v4125 = vadd.f32 %v3666, %v4124
    %v4126 = vpop.f32.mrb[0].mxu0
    %v4127 = vadd.f32 %v3668, %v4126
    %v4128 = vpop.f32.mrb[0].mxu0
    %v4129 = vadd.f32 %v3670, %v4128
    %4130 = vmatprep.mubr.bf16.mxu0 0
    %4131 = vmatmul.mubr.bf16.gmra.mrb[0].mxu0 %v3260
    %v4132 = vpop.f32.mrb[0].mxu0
    %v4133 = vadd.f32 %v3674, %v4132
    %v4134 = vpop.f32.mrb[0].mxu0
    %v4135 = vadd.f32 %v3676, %v4134
    %v4136 = vpop.f32.mrb[0].mxu0
    %v4137 = vadd.f32 %v3678, %v4136
    %v4138 = vpop.f32.mrb[0].mxu0
    %v4139 = vadd.f32 %v3680, %v4138
    %4140 = vdwg.mxu0
    %4141 = vmatprep.subr.bf16.mxu0 %v3975
    %4142 = vmatpush1.bf16.msra.mxu0 %v3974
    %4143 = vmatprep.subr.bf16.mxu0 %v3981
    %4144 = vmatpush1.bf16.msra.mxu0 %v3980
    %4145 = vmatprep.subr.bf16.mxu0 %v3987
    %4146 = vmatpush1.bf16.msra.mxu0 %v3986
    %4147 = vmatprep.subr.bf16.mxu0 %v3993
    %4148 = vmatpush1.bf16.msra.mxu0 %v3992
    %4149 = vmatprep.subr.bf16.mxu0 %v3999
    %4150 = vmatpush1.bf16.msra.mxu0 %v3998
    %4151 = vmatprep.subr.bf16.mxu0 %v4005
    %4152 = vmatpush1.bf16.msra.mxu0 %v4004
    %4153 = vmatprep.subr.bf16.mxu0 %v4011
    %4154 = vmatpush1.bf16.msra.mxu0 %v4010
    %4155 = vmatprep.subr.bf16.mxu0 %v4017
    %4156 = vmatpush1.bf16.msra.mxu0 %v4016
    %4157 = vmatprep.subr.bf16.mxu0 0
    %4158 = vmatpush1.bf16.msra.mxu0 0
    %4159 = vmatprep.subr.bf16.mxu0 0
    %4160 = vmatpush1.bf16.msra.mxu0 0
    %4161 = vmatprep.subr.bf16.mxu0 0
    %4162 = vmatpush1.bf16.msra.mxu0 0
    %4163 = vmatprep.subr.bf16.mxu0 0
    %4164 = vmatpush1.bf16.msra.mxu0 0
    %4165 = vmatprep.subr.bf16.mxu0 0
    %4166 = vmatpush1.bf16.msra.mxu0 0
    %4167 = vmatprep.subr.bf16.mxu0 0
    %4168 = vmatpush1.bf16.msra.mxu0 0
    %4169 = vmatprep.subr.bf16.mxu0 0
    %4170 = vmatpush1.bf16.msra.mxu0 0
    %4171 = vmatprep.subr.bf16.mxu0 0
    %4172 = vmatpush1.bf16.msra.mxu0 0
    %4173 = vmatprep.mubr.bf16.mxu0 0
    %4174 = vmatmul.mubr.bf16.gmra.mrb[0].mxu0 %v3257
    %v4175 = vpop.f32.mrb[0].mxu0
    %v4176 = vadd.f32 %v3717, %v4175
    %v4177 = vpop.f32.mrb[0].mxu0
    %v4178 = vadd.f32 %v3719, %v4177
    %v4179 = vpop.f32.mrb[0].mxu0
    %v4180 = vadd.f32 %v3721, %v4179
    %v4181 = vpop.f32.mrb[0].mxu0
    %v4182 = vadd.f32 %v3723, %v4181
    %4183 = vmatprep.mubr.bf16.mxu0 0
    %4184 = vmatmul.mubr.bf16.gmra.mrb[0].mxu0 %v3258
    %v4185 = vpop.f32.mrb[0].mxu0
    %v4186 = vadd.f32 %v3727, %v4185
    %v4187 = vpop.f32.mrb[0].mxu0
    %v4188 = vadd.f32 %v3729, %v4187
    %v4189 = vpop.f32.mrb[0].mxu0
    %v4190 = vadd.f32 %v3731, %v4189
    %v4191 = vpop.f32.mrb[0].mxu0
    %v4192 = vadd.f32 %v3733, %v4191
    %4193 = vmatprep.mubr.bf16.mxu0 0
    %4194 = vmatmul.mubr.bf16.gmra.mrb[0].mxu0 %v3259
    %v4195 = vpop.f32.mrb[0].mxu0
    %v4196 = vadd.f32 %v3737, %v4195
    %v4197 = vpop.f32.mrb[0].mxu0
    %v4198 = vadd.f32 %v3739, %v4197
    %v4199 = vpop.f32.mrb[0].mxu0
    %v4200 = vadd.f32 %v3741, %v4199
    %v4201 = vpop.f32.mrb[0].mxu0
    %v4202 = vadd.f32 %v3743, %v4201
    %4203 = vmatprep.mubr.bf16.mxu0 0
    %4204 = vmatmul.mubr.bf16.gmra.mrb[0].mxu0 %v3260
    %v4205 = vpop.f32.mrb[0].mxu0
    %v4206 = vadd.f32 %v3747, %v4205
    %v4207 = vpop.f32.mrb[0].mxu0
    %v4208 = vadd.f32 %v3749, %v4207
    %v4209 = vpop.f32.mrb[0].mxu0
    %v4210 = vadd.f32 %v3751, %v4209
    %v4211 = vpop.f32.mrb[0].mxu0
    %v4212 = vadd.f32 %v3753, %v4211
    %4213 = vdwg.mxu0
    %4214 = vmatprep.subr.bf16.mxu0 %v3977
    %4215 = vmatpush1.bf16.msra.mxu0 %v3976
    %4216 = vmatprep.subr.bf16.mxu0 %v3983
    %4217 = vmatpush1.bf16.msra.mxu0 %v3982
    %4218 = vmatprep.subr.bf16.mxu0 %v3989
    %4219 = vmatpush1.bf16.msra.mxu0 %v3988
    %4220 = vmatprep.subr.bf16.mxu0 %v3995
    %4221 = vmatpush1.bf16.msra.mxu0 %v3994
    %4222 = vmatprep.subr.bf16.mxu0 %v4001
    %4223 = vmatpush1.bf16.msra.mxu0 %v4000
    %4224 = vmatprep.subr.bf16.mxu0 %v4007
    %4225 = vmatpush1.bf16.msra.mxu0 %v4006
    %4226 = vmatprep.subr.bf16.mxu0 %v4013
    %4227 = vmatpush1.bf16.msra.mxu0 %v4012
    %4228 = vmatprep.subr.bf16.mxu0 %v4019
    %4229 = vmatpush1.bf16.msra.mxu0 %v4018
    %4230 = vmatprep.subr.bf16.mxu0 0
    %4231 = vmatpush1.bf16.msra.mxu0 0
    %4232 = vmatprep.subr.bf16.mxu0 0
    %4233 = vmatpush1.bf16.msra.mxu0 0
    %4234 = vmatprep.subr.bf16.mxu0 0
    %4235 = vmatpush1.bf16.msra.mxu0 0
    %4236 = vmatprep.subr.bf16.mxu0 0
    %4237 = vmatpush1.bf16.msra.mxu0 0
    %4238 = vmatprep.subr.bf16.mxu0 0
    %4239 = vmatpush1.bf16.msra.mxu0 0
    %4240 = vmatprep.subr.bf16.mxu0 0
    %4241 = vmatpush1.bf16.msra.mxu0 0
    %4242 = vmatprep.subr.bf16.mxu0 0
    %4243 = vmatpush1.bf16.msra.mxu0 0
    %4244 = vmatprep.subr.bf16.mxu0 0
    %4245 = vmatpush1.bf16.msra.mxu0 0
    %4246 = vmatprep.mubr.bf16.mxu0 0
    %4247 = vmatmul.mubr.bf16.gmra.mrb[0].mxu0 %v3257
    %v4248 = vpop.f32.mrb[0].mxu0
    %v4249 = vadd.f32 %v3790, %v4248
    %v4250 = vpop.f32.mrb[0].mxu0
    %v4251 = vadd.f32 %v3792, %v4250
    %v4252 = vpop.f32.mrb[0].mxu0
    %v4253 = vadd.f32 %v3794, %v4252
    %v4254 = vpop.f32.mrb[0].mxu0
    %v4255 = vadd.f32 %v3796, %v4254
    %4256 = vmatprep.mubr.bf16.mxu0 0
    %4257 = vmatmul.mubr.bf16.gmra.mrb[0].mxu0 %v3258
    %v4258 = vpop.f32.mrb[0].mxu0
    %v4259 = vadd.f32 %v3800, %v4258
    %v4260 = vpop.f32.mrb[0].mxu0
    %v4261 = vadd.f32 %v3802, %v4260
    %v4262 = vpop.f32.mrb[0].mxu0
    %v4263 = vadd.f32 %v3804, %v4262
    %v4264 = vpop.f32.mrb[0].mxu0
    %v4265 = vadd.f32 %v3806, %v4264
    %4266 = vmatprep.mubr.bf16.mxu0 0
    %4267 = vmatmul.mubr.bf16.gmra.mrb[0].mxu0 %v3259
    %v4268 = vpop.f32.mrb[0].mxu0
    %v4269 = vadd.f32 %v3810, %v4268
    %v4270 = vpop.f32.mrb[0].mxu0
    %v4271 = vadd.f32 %v3812, %v4270
    %v4272 = vpop.f32.mrb[0].mxu0
    %v4273 = vadd.f32 %v3814, %v4272
    %v4274 = vpop.f32.mrb[0].mxu0
    %v4275 = vadd.f32 %v3816, %v4274
    %4276 = vmatprep.mubr.bf16.mxu0 0
    %4277 = vmatmul.mubr.bf16.gmra.mrb[0].mxu0 %v3260
    %v4278 = vpop.f32.mrb[0].mxu0
    %v4279 = vadd.f32 %v3820, %v4278
    %v4280 = vpop.f32.mrb[0].mxu0
    %v4281 = vadd.f32 %v3822, %v4280
    %v4282 = vpop.f32.mrb[0].mxu0
    %v4283 = vadd.f32 %v3824, %v4282
    %v4284 = vpop.f32.mrb[0].mxu0
    %v4285 = vadd.f32 %v3826, %v4284
    %4286 = vdwg.mxu0
    %v4287 = vld [vmem:[%s7] sm:$0x3f]
    %v4289 = vlaneseq
    %v4290 = vshrl.u32 %v4289, 7
    %v4291 = vsub.s32 0, %v4290
    %v4292 = vrot.slane %v4287, %v4291
    %v4293 = vlaneseq
    %v4294 = vshrl.u32 %v4293, 7
    %v4295 = vsub.s32 1, %v4294
    %v4296 = vrot.slane %v4287, %v4295
    %v4297 = vlaneseq
    %v4298 = vshrl.u32 %v4297, 7
    %v4299 = vsub.s32 2, %v4298
    %v4300 = vrot.slane %v4287, %v4299
    %v4301 = vlaneseq
    %v4302 = vshrl.u32 %v4301, 7
    %v4303 = vsub.s32 3, %v4302
    %v4304 = vrot.slane %v4287, %v4303
    %v4305 = vlaneseq
    %v4306 = vshrl.u32 %v4305, 7
    %v4307 = vsub.s32 4, %v4306
    %v4308 = vrot.slane %v4287, %v4307
    %v4309 = vlaneseq
    %v4310 = vshrl.u32 %v4309, 7
    %v4311 = vsub.s32 5, %v4310
    %v4312 = vrot.slane %v4287, %v4311
    %v4319 = vadd.f32 %v4103, %v4292
    %v4320 = vadd.f32 %v4105, %v4296
    %v4321 = vadd.f32 %v4176, %v4300
    %v4322 = vadd.f32 %v4178, %v4304
    %v4323 = vadd.f32 %v4249, %v4308
    %v4324 = vadd.f32 %v4251, %v4312
    %v4325 = vadd.f32 %v4107, %v4292
    %v4326 = vadd.f32 %v4109, %v4296
    %v4327 = vadd.f32 %v4180, %v4300
    %v4328 = vadd.f32 %v4182, %v4304
    %v4329 = vadd.f32 %v4253, %v4308
    %v4330 = vadd.f32 %v4255, %v4312
    %v4331 = vadd.f32 %v4113, %v4292
    %v4332 = vadd.f32 %v4115, %v4296
    %v4333 = vadd.f32 %v4186, %v4300
    %v4334 = vadd.f32 %v4188, %v4304
    %v4335 = vadd.f32 %v4259, %v4308
    %v4336 = vadd.f32 %v4261, %v4312
    %v4337 = vadd.f32 %v4117, %v4292
    %v4338 = vadd.f32 %v4119, %v4296
    %v4339 = vadd.f32 %v4190, %v4300
    %v4340 = vadd.f32 %v4192, %v4304
    %v4341 = vadd.f32 %v4263, %v4308
    %v4342 = vadd.f32 %v4265, %v4312
    %v4343 = vadd.f32 %v4123, %v4292
    %v4344 = vadd.f32 %v4125, %v4296
    %v4345 = vadd.f32 %v4196, %v4300
    %v4346 = vadd.f32 %v4198, %v4304
    %v4347 = vadd.f32 %v4269, %v4308
    %v4348 = vadd.f32 %v4271, %v4312
    %v4349 = vadd.f32 %v4127, %v4292
    %v4350 = vadd.f32 %v4129, %v4296
    %v4351 = vadd.f32 %v4200, %v4300
    %v4352 = vadd.f32 %v4202, %v4304
    %v4353 = vadd.f32 %v4273, %v4308
    %v4354 = vadd.f32 %v4275, %v4312
    %v4355 = vadd.f32 %v4133, %v4292
    %v4356 = vadd.f32 %v4135, %v4296
    %v4357 = vadd.f32 %v4206, %v4300
    %v4358 = vadd.f32 %v4208, %v4304
    %v4359 = vadd.f32 %v4279, %v4308
    %v4360 = vadd.f32 %v4281, %v4312
    %v4361 = vadd.f32 %v4137, %v4292
    %v4362 = vadd.f32 %v4139, %v4296
    %v4363 = vadd.f32 %v4210, %v4300
    %v4364 = vadd.f32 %v4212, %v4304
    %v4365 = vadd.f32 %v4283, %v4308
    %v4366 = vadd.f32 %v4285, %v4312
    %4367 = vst [vmem:[#allocation2] sm:$0xff] %v4319
    %4368 = vst [vmem:[#allocation2 + $0x8] sm:$0xff] %v4320
    %4369 = vst [vmem:[#allocation2 + $0x10] sm:$0xff] %v4321
    %4370 = vst [vmem:[#allocation2 + $0x18] sm:$0xff] %v4322
    %4371 = vst [vmem:[#allocation2 + $0x20] sm:$0xff] %v4323
    %4372 = vst [vmem:[#allocation2 + $0x28] sm:$0xff] %v4324
    %4373 = vst [vmem:[#allocation2 + $0x30] sm:$0xff] %v4325
    %4374 = vst [vmem:[#allocation2 + $0x38] sm:$0xff] %v4326
    %4375 = vst [vmem:[#allocation2 + $0x40] sm:$0xff] %v4327
    %4376 = vst [vmem:[#allocation2 + $0x48] sm:$0xff] %v4328
    %4377 = vst [vmem:[#allocation2 + $0x50] sm:$0xff] %v4329
    %4378 = vst [vmem:[#allocation2 + $0x58] sm:$0xff] %v4330
    %4379 = vst [vmem:[#allocation2 + $0x60] sm:$0xff] %v4331
    %4380 = vst [vmem:[#allocation2 + $0x68] sm:$0xff] %v4332
    %4381 = vst [vmem:[#allocation2 + $0x70] sm:$0xff] %v4333
    %4382 = vst [vmem:[#allocation2 + $0x78] sm:$0xff] %v4334
    %4383 = vst [vmem:[#allocation2 + $0x80] sm:$0xff] %v4335
    %4384 = vst [vmem:[#allocation2 + $0x88] sm:$0xff] %v4336
    %4385 = vst [vmem:[#allocation2 + $0x90] sm:$0xff] %v4337
    %4386 = vst [vmem:[#allocation2 + $0x98] sm:$0xff] %v4338
    %4387 = vst [vmem:[#allocation2 + $0xa0] sm:$0xff] %v4339
    %4388 = vst [vmem:[#allocation2 + $0xa8] sm:$0xff] %v4340
    %4389 = vst [vmem:[#allocation2 + $0xb0] sm:$0xff] %v4341
    %4390 = vst [vmem:[#allocation2 + $0xb8] sm:$0xff] %v4342
    %4391 = vst [vmem:[#allocation2 + $0xc0] sm:$0xff] %v4343
    %4392 = vst [vmem:[#allocation2 + $0xc8] sm:$0xff] %v4344
    %4393 = vst [vmem:[#allocation2 + $0xd0] sm:$0xff] %v4345
    %4394 = vst [vmem:[#allocation2 + $0xd8] sm:$0xff] %v4346
    %4395 = vst [vmem:[#allocation2 + $0xe0] sm:$0xff] %v4347
    %4396 = vst [vmem:[#allocation2 + $0xe8] sm:$0xff] %v4348
    %4397 = vst [vmem:[#allocation2 + $0xf0] sm:$0xff] %v4349
    %4398 = vst [vmem:[#allocation2 + $0xf8] sm:$0xff] %v4350
    %4399 = vst [vmem:[#allocation2 + $0x100] sm:$0xff] %v4351
    %4400 = vst [vmem:[#allocation2 + $0x108] sm:$0xff] %v4352
    %4401 = vst [vmem:[#allocation2 + $0x110] sm:$0xff] %v4353
    %4402 = vst [vmem:[#allocation2 + $0x118] sm:$0xff] %v4354
    %4403 = vst [vmem:[#allocation2 + $0x120] sm:$0xff] %v4355
    %4404 = vst [vmem:[#allocation2 + $0x128] sm:$0xff] %v4356
    %4405 = vst [vmem:[#allocation2 + $0x130] sm:$0xff] %v4357
    %4406 = vst [vmem:[#allocation2 + $0x138] sm:$0xff] %v4358
    %4407 = vst [vmem:[#allocation2 + $0x140] sm:$0xff] %v4359
    %4408 = vst [vmem:[#allocation2 + $0x148] sm:$0xff] %v4360
    %4409 = vst [vmem:[#allocation2 + $0x150] sm:$0xff] %v4361
    %4410 = vst [vmem:[#allocation2 + $0x158] sm:$0xff] %v4362
    %4411 = vst [vmem:[#allocation2 + $0x160] sm:$0xff] %v4363
    %4412 = vst [vmem:[#allocation2 + $0x168] sm:$0xff] %v4364
    %4413 = vst [vmem:[#allocation2 + $0x170] sm:$0xff] %v4365
    %4414 = vst [vmem:[#allocation2 + $0x178] sm:$0xff] %v4366
    %v4415 = vld [vmem:[#allocation12] sm:$0xff]
    %v4416 = vld [vmem:[#allocation12 + $0x8] sm:$0xff]
    %v4417 = vld [vmem:[#allocation12 + $0x10] sm:$0xff]
    %v4418 = vld [vmem:[#allocation12 + $0x18] sm:$0xff]
    %v4419 = vld [vmem:[#allocation12 + $0x20] sm:$0xff]
    %v4420 = vld [vmem:[#allocation12 + $0x28] sm:$0xff]
    %v4421 = vld [vmem:[#allocation12 + $0x30] sm:$0xff]
    %v4422 = vld [vmem:[#allocation12 + $0x38] sm:$0xff]
    %v4423 = vld [vmem:[#allocation12 + $0x40] sm:$0xff]
    %v4424 = vld [vmem:[#allocation12 + $0x48] sm:$0xff]
    %v4425 = vld [vmem:[#allocation12 + $0x50] sm:$0xff]
    %v4426 = vld [vmem:[#allocation12 + $0x58] sm:$0xff]
    %v4427 = vld [vmem:[#allocation12 + $0x60] sm:$0xff]
    %v4428 = vld [vmem:[#allocation12 + $0x68] sm:$0xff]
    %v4429 = vld [vmem:[#allocation12 + $0x70] sm:$0xff]
    %v4430 = vld [vmem:[#allocation12 + $0x78] sm:$0xff]
    %v4431 = vld [vmem:[#allocation12 + $0x80] sm:$0xff]
    %v4432 = vld [vmem:[#allocation12 + $0x88] sm:$0xff]
    %v4433 = vld [vmem:[#allocation12 + $0x90] sm:$0xff]
    %v4434 = vld [vmem:[#allocation12 + $0x98] sm:$0xff]
    %v4435 = vld [vmem:[#allocation12 + $0xa0] sm:$0xff]
    %v4436 = vld [vmem:[#allocation12 + $0xa8] sm:$0xff]
    %v4437 = vld [vmem:[#allocation12 + $0xb0] sm:$0xff]
    %v4438 = vld [vmem:[#allocation12 + $0xb8] sm:$0xff]
    %v4439 = vld [vmem:[#allocation12 + $0xc0] sm:$0xff]
    %v4440 = vld [vmem:[#allocation12 + $0xc8] sm:$0xff]
    %v4441 = vld [vmem:[#allocation12 + $0xd0] sm:$0xff]
    %v4442 = vld [vmem:[#allocation12 + $0xd8] sm:$0xff]
    %v4443 = vld [vmem:[#allocation12 + $0xe0] sm:$0xff]
    %v4444 = vld [vmem:[#allocation12 + $0xe8] sm:$0xff]
    %v4445 = vld [vmem:[#allocation12 + $0xf0] sm:$0xff]
    %v4446 = vld [vmem:[#allocation12 + $0xf8] sm:$0xff]
    %v4447 = vld [vmem:[#allocation12 + $0x100] sm:$0xff]
    %v4448 = vld [vmem:[#allocation12 + $0x108] sm:$0xff]
    %v4449 = vld [vmem:[#allocation12 + $0x110] sm:$0xff]
    %v4450 = vld [vmem:[#allocation12 + $0x118] sm:$0xff]
    %v4451 = vld [vmem:[#allocation12 + $0x120] sm:$0xff]
    %v4452 = vld [vmem:[#allocation12 + $0x128] sm:$0xff]
    %v4453 = vld [vmem:[#allocation12 + $0x130] sm:$0xff]
    %v4454 = vld [vmem:[#allocation12 + $0x138] sm:$0xff]
    %v4455 = vld [vmem:[#allocation12 + $0x140] sm:$0xff]
    %v4456 = vld [vmem:[#allocation12 + $0x148] sm:$0xff]
    %v4457 = vld [vmem:[#allocation12 + $0x150] sm:$0xff]
    %v4458 = vld [vmem:[#allocation12 + $0x158] sm:$0xff]
    %v4459 = vld [vmem:[#allocation12 + $0x160] sm:$0xff]
    %v4460 = vld [vmem:[#allocation12 + $0x168] sm:$0xff]
    %v4461 = vld [vmem:[#allocation12 + $0x170] sm:$0xff]
    %v4462 = vld [vmem:[#allocation12 + $0x178] sm:$0xff]
    %s4463 = scalar_lea.vmem [#allocation12], 384
    %v4464 = vld [vmem:[%s4463] sm:$0xff]
    %v4465 = vld [vmem:[%s4463 + $0x8] sm:$0xff]
    %v4466 = vld [vmem:[%s4463 + $0x10] sm:$0xff]
    %v4467 = vld [vmem:[%s4463 + $0x18] sm:$0xff]
    %v4468 = vld [vmem:[%s4463 + $0x20] sm:$0xff]
    %v4469 = vld [vmem:[%s4463 + $0x28] sm:$0xff]
    %v4470 = vld [vmem:[%s4463 + $0x30] sm:$0xff]
    %v4471 = vld [vmem:[%s4463 + $0x38] sm:$0xff]
    %v4472 = vld [vmem:[%s4463 + $0x40] sm:$0xff]
    %v4473 = vld [vmem:[%s4463 + $0x48] sm:$0xff]
    %v4474 = vld [vmem:[%s4463 + $0x50] sm:$0xff]
    %v4475 = vld [vmem:[%s4463 + $0x58] sm:$0xff]
    %v4476 = vld [vmem:[%s4463 + $0x60] sm:$0xff]
    %v4477 = vld [vmem:[%s4463 + $0x68] sm:$0xff]
    %v4478 = vld [vmem:[%s4463 + $0x70] sm:$0xff]
    %v4479 = vld [vmem:[%s4463 + $0x78] sm:$0xff]
    %v4480 = vld [vmem:[%s4463 + $0x80] sm:$0xff]
    %v4481 = vld [vmem:[%s4463 + $0x88] sm:$0xff]
    %v4482 = vld [vmem:[%s4463 + $0x90] sm:$0xff]
    %v4483 = vld [vmem:[%s4463 + $0x98] sm:$0xff]
    %v4484 = vld [vmem:[%s4463 + $0xa0] sm:$0xff]
    %v4485 = vld [vmem:[%s4463 + $0xa8] sm:$0xff]
    %v4486 = vld [vmem:[%s4463 + $0xb0] sm:$0xff]
    %v4487 = vld [vmem:[%s4463 + $0xb8] sm:$0xff]
    %v4488 = vld [vmem:[%s4463 + $0xc0] sm:$0xff]
    %v4489 = vld [vmem:[%s4463 + $0xc8] sm:$0xff]
    %v4490 = vld [vmem:[%s4463 + $0xd0] sm:$0xff]
    %v4491 = vld [vmem:[%s4463 + $0xd8] sm:$0xff]
    %v4492 = vld [vmem:[%s4463 + $0xe0] sm:$0xff]
    %v4493 = vld [vmem:[%s4463 + $0xe8] sm:$0xff]
    %v4494 = vld [vmem:[%s4463 + $0xf0] sm:$0xff]
    %v4495 = vld [vmem:[%s4463 + $0xf8] sm:$0xff]
    %v4496 = vld [vmem:[%s4463 + $0x100] sm:$0xff]
    %v4497 = vld [vmem:[%s4463 + $0x108] sm:$0xff]
    %v4498 = vld [vmem:[%s4463 + $0x110] sm:$0xff]
    %v4499 = vld [vmem:[%s4463 + $0x118] sm:$0xff]
    %v4500 = vld [vmem:[%s4463 + $0x120] sm:$0xff]
    %v4501 = vld [vmem:[%s4463 + $0x128] sm:$0xff]
    %v4502 = vld [vmem:[%s4463 + $0x130] sm:$0xff]
    %v4503 = vld [vmem:[%s4463 + $0x138] sm:$0xff]
    %v4504 = vld [vmem:[%s4463 + $0x140] sm:$0xff]
    %v4505 = vld [vmem:[%s4463 + $0x148] sm:$0xff]
    %v4506 = vld [vmem:[%s4463 + $0x150] sm:$0xff]
    %v4507 = vld [vmem:[%s4463 + $0x158] sm:$0xff]
    %v4508 = vld [vmem:[%s4463 + $0x160] sm:$0xff]
    %v4509 = vld [vmem:[%s4463 + $0x168] sm:$0xff]
    %v4510 = vld [vmem:[%s4463 + $0x170] sm:$0xff]
    %v4511 = vld [vmem:[%s4463 + $0x178] sm:$0xff]
    %v4512 = vld [vmem:[%s9] sm:$0x1]
    %v4514 = vlaneseq
    %v4515 = vshrl.u32 %v4514, 7
    %v4516 = vsub.s32 0, %v4515
    %v4517 = vrot.slane %v4512, %v4516
    %s4519 = scalar_lea.vmem %s9, 1
    %v4520 = vld [vmem:[%s4519] sm:$0x1]
    %v4522 = vlaneseq
    %v4523 = vshrl.u32 %v4522, 7
    %v4524 = vsub.s32 0, %v4523
    %v4525 = vrot.slane %v4520, %v4524
    %v4527 = vld [vmem:[#allocation2] sm:$0xff]
    %v4528 = vld [vmem:[#allocation2 + $0x8] sm:$0xff]
    %v4529 = vld [vmem:[#allocation2 + $0x10] sm:$0xff]
    %v4530 = vld [vmem:[#allocation2 + $0x168] sm:$0xff]
    %v4531 = vld [vmem:[#allocation2 + $0x170] sm:$0xff]
    %v4532 = vld [vmem:[#allocation2 + $0x178] sm:$0xff]
    %4533 = vmatprep.subr.mxu0 %v4416
    %4534 = vmatpush1.msra.mxu0 %v4415
    %4535 = vmatprep.subr.mxu0 %v4419
    %4536 = vmatpush1.msra.mxu0 %v4418
    %4537 = vmatprep.subr.mxu0 %v4422
    %4538 = vmatpush1.msra.mxu0 %v4421
    %4539 = vmatprep.subr.mxu0 %v4425
    %4540 = vmatpush1.msra.mxu0 %v4424
    %4541 = vmatprep.subr.mxu0 %v4428
    %4542 = vmatpush1.msra.mxu0 %v4427
    %4543 = vmatprep.subr.mxu0 %v4431
    %4544 = vmatpush1.msra.mxu0 %v4430
    %4545 = vmatprep.subr.mxu0 %v4434
    %4546 = vmatpush1.msra.mxu0 %v4433
    %4547 = vmatprep.subr.mxu0 %v4437
    %4548 = vmatpush1.msra.mxu0 %v4436
    %4549 = vmatprep.subr.mxu0 %v4440
    %4550 = vmatpush1.msra.mxu0 %v4439
    %4551 = vmatprep.subr.mxu0 %v4443
    %4552 = vmatpush1.msra.mxu0 %v4442
    %4553 = vmatprep.subr.mxu0 %v4446
    %4554 = vmatpush1.msra.mxu0 %v4445
    %4555 = vmatprep.subr.mxu0 %v4449
    %4556 = vmatpush1.msra.mxu0 %v4448
    %4557 = vmatprep.subr.mxu0 %v4452
    %4558 = vmatpush1.msra.mxu0 %v4451
    %4559 = vmatprep.subr.mxu0 %v4455
    %4560 = vmatpush1.msra.mxu0 %v4454
    %4561 = vmatprep.subr.mxu0 %v4458
    %4562 = vmatpush1.msra.mxu0 %v4457
    %4563 = vmatprep.subr.mxu0 %v4461
    %4564 = vmatpush1.msra.mxu0 %v4460
    %4565 = vmatprep.subr.mxu0 0.0
    %4566 = vmatpush1.msra.mxu0 0.0
    %4567 = vmatprep.subr.mxu0 0.0
    %4568 = vmatpush1.msra.mxu0 0.0
    %4569 = vmatprep.subr.mxu0 0.0
    %4570 = vmatpush1.msra.mxu0 0.0
    %4571 = vmatprep.subr.mxu0 0.0
    %4572 = vmatpush1.msra.mxu0 0.0
    %4573 = vmatprep.subr.mxu0 0.0
    %4574 = vmatpush1.msra.mxu0 0.0
    %4575 = vmatprep.subr.mxu0 0.0
    %4576 = vmatpush1.msra.mxu0 0.0
    %4577 = vmatprep.subr.mxu0 0.0
    %4578 = vmatpush1.msra.mxu0 0.0
    %4579 = vmatprep.subr.mxu0 0.0
    %4580 = vmatpush1.msra.mxu0 0.0
    %4581 = vmatprep.subr.mxu0 0.0
    %4582 = vmatpush1.msra.mxu0 0.0
    %4583 = vmatprep.subr.mxu0 0.0
    %4584 = vmatpush1.msra.mxu0 0.0
    %4585 = vmatprep.subr.mxu0 0.0
    %4586 = vmatpush1.msra.mxu0 0.0
    %4587 = vmatprep.subr.mxu0 0.0
    %4588 = vmatpush1.msra.mxu0 0.0
    %4589 = vmatprep.subr.mxu0 0.0
    %4590 = vmatpush1.msra.mxu0 0.0
    %4591 = vmatprep.subr.mxu0 0.0
    %4592 = vmatpush1.msra.mxu0 0.0
    %4593 = vmatprep.subr.mxu0 0.0
    %4594 = vmatpush1.msra.mxu0 0.0
    %4595 = vmatprep.subr.mxu0 0.0
    %4596 = vmatpush1.msra.mxu0 0.0
    %4597 = vmatprep.mubr.f32.mxu0 0.0
    %4598 = vmatmul.mubr.f32.gmra.mrb[0].mxu0 0.0
    %v4599 = vpop.f32.mrb[0].mxu0
    %v4600 = vadd.f32 0.0, %v4599
    %v4601 = vpop.f32.mrb[0].mxu0
    %v4602 = vadd.f32 0.0, %v4601
    %4603 = vdwg.mxu0
    %4604 = vmatprep.subr.mxu0 0.0
    %4605 = vmatpush1.msra.mxu0 %v4417
    %4606 = vmatprep.subr.mxu0 0.0
    %4607 = vmatpush1.msra.mxu0 %v4420
    %4608 = vmatprep.subr.mxu0 0.0
    %4609 = vmatpush1.msra.mxu0 %v4423
    %4610 = vmatprep.subr.mxu0 0.0
    %4611 = vmatpush1.msra.mxu0 %v4426
    %4612 = vmatprep.subr.mxu0 0.0
    %4613 = vmatpush1.msra.mxu0 %v4429
    %4614 = vmatprep.subr.mxu0 0.0
    %4615 = vmatpush1.msra.mxu0 %v4432
    %4616 = vmatprep.subr.mxu0 0.0
    %4617 = vmatpush1.msra.mxu0 %v4435
    %4618 = vmatprep.subr.mxu0 0.0
    %4619 = vmatpush1.msra.mxu0 %v4438
    %4620 = vmatprep.subr.mxu0 0.0
    %4621 = vmatpush1.msra.mxu0 %v4441
    %4622 = vmatprep.subr.mxu0 0.0
    %4623 = vmatpush1.msra.mxu0 %v4444
    %4624 = vmatprep.subr.mxu0 0.0
    %4625 = vmatpush1.msra.mxu0 %v4447
    %4626 = vmatprep.subr.mxu0 0.0
    %4627 = vmatpush1.msra.mxu0 %v4450
    %4628 = vmatprep.subr.mxu0 0.0
    %4629 = vmatpush1.msra.mxu0 %v4453
    %4630 = vmatprep.subr.mxu0 0.0
    %4631 = vmatpush1.msra.mxu0 %v4456
    %4632 = vmatprep.subr.mxu0 0.0
    %4633 = vmatpush1.msra.mxu0 %v4459
    %4634 = vmatprep.subr.mxu0 0.0
    %4635 = vmatpush1.msra.mxu0 %v4462
    %4636 = vmatprep.subr.mxu0 0.0
    %4637 = vmatpush1.msra.mxu0 0.0
    %4638 = vmatprep.subr.mxu0 0.0
    %4639 = vmatpush1.msra.mxu0 0.0
    %4640 = vmatprep.subr.mxu0 0.0
    %4641 = vmatpush1.msra.mxu0 0.0
    %4642 = vmatprep.subr.mxu0 0.0
    %4643 = vmatpush1.msra.mxu0 0.0
    %4644 = vmatprep.subr.mxu0 0.0
    %4645 = vmatpush1.msra.mxu0 0.0
    %4646 = vmatprep.subr.mxu0 0.0
    %4647 = vmatpush1.msra.mxu0 0.0
    %4648 = vmatprep.subr.mxu0 0.0
    %4649 = vmatpush1.msra.mxu0 0.0
    %4650 = vmatprep.subr.mxu0 0.0
    %4651 = vmatpush1.msra.mxu0 0.0
    %4652 = vmatprep.subr.mxu0 0.0
    %4653 = vmatpush1.msra.mxu0 0.0
    %4654 = vmatprep.subr.mxu0 0.0
    %4655 = vmatpush1.msra.mxu0 0.0
    %4656 = vmatprep.subr.mxu0 0.0
    %4657 = vmatpush1.msra.mxu0 0.0
    %4658 = vmatprep.subr.mxu0 0.0
    %4659 = vmatpush1.msra.mxu0 0.0
    %4660 = vmatprep.subr.mxu0 0.0
    %4661 = vmatpush1.msra.mxu0 0.0
    %4662 = vmatprep.subr.mxu0 0.0
    %4663 = vmatpush1.msra.mxu0 0.0
    %4664 = vmatprep.subr.mxu0 0.0
    %4665 = vmatpush1.msra.mxu0 0.0
    %4666 = vmatprep.subr.mxu0 0.0
    %4667 = vmatpush1.msra.mxu0 0.0
    %4668 = vmatprep.mubr.f32.mxu0 0.0
    %4669 = vmatmul.mubr.f32.gmra.mrb[0].mxu0 0.0
    %v4670 = vpop.f32.mrb[0].mxu0
    %v4671 = vadd.f32 0.0, %v4670
    %v4672 = vpop.f32.mrb[0].mxu0
    %4673 = vdwg.mxu0
    %4674 = vmatprep.subr.mxu0 %v4465
    %4675 = vmatpush1.msra.mxu0 %v4464
    %4676 = vmatprep.subr.mxu0 %v4468
    %4677 = vmatpush1.msra.mxu0 %v4467
    %4678 = vmatprep.subr.mxu0 %v4471
    %4679 = vmatpush1.msra.mxu0 %v4470
    %4680 = vmatprep.subr.mxu0 %v4474
    %4681 = vmatpush1.msra.mxu0 %v4473
    %4682 = vmatprep.subr.mxu0 %v4477
    %4683 = vmatpush1.msra.mxu0 %v4476
    %4684 = vmatprep.subr.mxu0 %v4480
    %4685 = vmatpush1.msra.mxu0 %v4479
    %4686 = vmatprep.subr.mxu0 %v4483
    %4687 = vmatpush1.msra.mxu0 %v4482
    %4688 = vmatprep.subr.mxu0 %v4486
    %4689 = vmatpush1.msra.mxu0 %v4485
    %4690 = vmatprep.subr.mxu0 %v4489
    %4691 = vmatpush1.msra.mxu0 %v4488
    %4692 = vmatprep.subr.mxu0 %v4492
    %4693 = vmatpush1.msra.mxu0 %v4491
    %4694 = vmatprep.subr.mxu0 %v4495
    %4695 = vmatpush1.msra.mxu0 %v4494
    %4696 = vmatprep.subr.mxu0 %v4498
    %4697 = vmatpush1.msra.mxu0 %v4497
    %4698 = vmatprep.subr.mxu0 %v4501
    %4699 = vmatpush1.msra.mxu0 %v4500
    %4700 = vmatprep.subr.mxu0 %v4504
    %4701 = vmatpush1.msra.mxu0 %v4503
    %4702 = vmatprep.subr.mxu0 %v4507
    %4703 = vmatpush1.msra.mxu0 %v4506
    %4704 = vmatprep.subr.mxu0 %v4510
    %4705 = vmatpush1.msra.mxu0 %v4509
    %4706 = vmatprep.subr.mxu0 0.0
    %4707 = vmatpush1.msra.mxu0 0.0
    %4708 = vmatprep.subr.mxu0 0.0
    %4709 = vmatpush1.msra.mxu0 0.0
    %4710 = vmatprep.subr.mxu0 0.0
    %4711 = vmatpush1.msra.mxu0 0.0
    %4712 = vmatprep.subr.mxu0 0.0
    %4713 = vmatpush1.msra.mxu0 0.0
    %4714 = vmatprep.subr.mxu0 0.0
    %4715 = vmatpush1.msra.mxu0 0.0
    %4716 = vmatprep.subr.mxu0 0.0
    %4717 = vmatpush1.msra.mxu0 0.0
    %4718 = vmatprep.subr.mxu0 0.0
    %4719 = vmatpush1.msra.mxu0 0.0
    %4720 = vmatprep.subr.mxu0 0.0
    %4721 = vmatpush1.msra.mxu0 0.0
    %4722 = vmatprep.subr.mxu0 0.0
    %4723 = vmatpush1.msra.mxu0 0.0
    %4724 = vmatprep.subr.mxu0 0.0
    %4725 = vmatpush1.msra.mxu0 0.0
    %4726 = vmatprep.subr.mxu0 0.0
    %4727 = vmatpush1.msra.mxu0 0.0
    %4728 = vmatprep.subr.mxu0 0.0
    %4729 = vmatpush1.msra.mxu0 0.0
    %4730 = vmatprep.subr.mxu0 0.0
    %4731 = vmatpush1.msra.mxu0 0.0
    %4732 = vmatprep.subr.mxu0 0.0
    %4733 = vmatpush1.msra.mxu0 0.0
    %4734 = vmatprep.subr.mxu0 0.0
    %4735 = vmatpush1.msra.mxu0 0.0
    %4736 = vmatprep.subr.mxu0 0.0
    %4737 = vmatpush1.msra.mxu0 0.0
    %4738 = vmatprep.mubr.f32.mxu0 0.0
    %4739 = vmatmul.mubr.f32.gmra.mrb[0].mxu0 0.0
    %v4740 = vpop.f32.mrb[0].mxu0
    %v4741 = vadd.f32 0.0, %v4740
    %v4742 = vpop.f32.mrb[0].mxu0
    %v4743 = vadd.f32 0.0, %v4742
    %4744 = vdwg.mxu0
    %4745 = vmatprep.subr.mxu0 0.0
    %4746 = vmatpush1.msra.mxu0 %v4466
    %4747 = vmatprep.subr.mxu0 0.0
    %4748 = vmatpush1.msra.mxu0 %v4469
    %4749 = vmatprep.subr.mxu0 0.0
    %4750 = vmatpush1.msra.mxu0 %v4472
    %4751 = vmatprep.subr.mxu0 0.0
    %4752 = vmatpush1.msra.mxu0 %v4475
    %4753 = vmatprep.subr.mxu0 0.0
    %4754 = vmatpush1.msra.mxu0 %v4478
    %4755 = vmatprep.subr.mxu0 0.0
    %4756 = vmatpush1.msra.mxu0 %v4481
    %4757 = vmatprep.subr.mxu0 0.0
    %4758 = vmatpush1.msra.mxu0 %v4484
    %4759 = vmatprep.subr.mxu0 0.0
    %4760 = vmatpush1.msra.mxu0 %v4487
    %4761 = vmatprep.subr.mxu0 0.0
    %4762 = vmatpush1.msra.mxu0 %v4490
    %4763 = vmatprep.subr.mxu0 0.0
    %4764 = vmatpush1.msra.mxu0 %v4493
    %4765 = vmatprep.subr.mxu0 0.0
    %4766 = vmatpush1.msra.mxu0 %v4496
    %4767 = vmatprep.subr.mxu0 0.0
    %4768 = vmatpush1.msra.mxu0 %v4499
    %4769 = vmatprep.subr.mxu0 0.0
    %4770 = vmatpush1.msra.mxu0 %v4502
    %4771 = vmatprep.subr.mxu0 0.0
    %4772 = vmatpush1.msra.mxu0 %v4505
    %4773 = vmatprep.subr.mxu0 0.0
    %4774 = vmatpush1.msra.mxu0 %v4508
    %4775 = vmatprep.subr.mxu0 0.0
    %4776 = vmatpush1.msra.mxu0 %v4511
    %4777 = vmatprep.subr.mxu0 0.0
    %4778 = vmatpush1.msra.mxu0 0.0
    %4779 = vmatprep.subr.mxu0 0.0
    %4780 = vmatpush1.msra.mxu0 0.0
    %4781 = vmatprep.subr.mxu0 0.0
    %4782 = vmatpush1.msra.mxu0 0.0
    %4783 = vmatprep.subr.mxu0 0.0
    %4784 = vmatpush1.msra.mxu0 0.0
    %4785 = vmatprep.subr.mxu0 0.0
    %4786 = vmatpush1.msra.mxu0 0.0
    %4787 = vmatprep.subr.mxu0 0.0
    %4788 = vmatpush1.msra.mxu0 0.0
    %4789 = vmatprep.subr.mxu0 0.0
    %4790 = vmatpush1.msra.mxu0 0.0
    %4791 = vmatprep.subr.mxu0 0.0
    %4792 = vmatpush1.msra.mxu0 0.0
    %4793 = vmatprep.subr.mxu0 0.0
    %4794 = vmatpush1.msra.mxu0 0.0
    %4795 = vmatprep.subr.mxu0 0.0
    %4796 = vmatpush1.msra.mxu0 0.0
    %4797 = vmatprep.subr.mxu0 0.0
    %4798 = vmatpush1.msra.mxu0 0.0
    %4799 = vmatprep.subr.mxu0 0.0
    %4800 = vmatpush1.msra.mxu0 0.0
    %4801 = vmatprep.subr.mxu0 0.0
    %4802 = vmatpush1.msra.mxu0 0.0
    %4803 = vmatprep.subr.mxu0 0.0
    %4804 = vmatpush1.msra.mxu0 0.0
    %4805 = vmatprep.subr.mxu0 0.0
    %4806 = vmatpush1.msra.mxu0 0.0
    %4807 = vmatprep.subr.mxu0 0.0
    %4808 = vmatpush1.msra.mxu0 0.0
    %4809 = vmatprep.mubr.f32.mxu0 0.0
    %4810 = vmatmul.mubr.f32.gmra.mrb[0].mxu0 0.0
    %v4811 = vpop.f32.mrb[0].mxu0
    %v4812 = vadd.f32 0.0, %v4811
    %v4813 = vpop.f32.mrb[0].mxu0
    %4814 = vdwg.mxu0
    %v4815 = vadd.f32 %v4527, %v4600
    %v4816 = vsub.f32 0.0, %v4815
    %v4817 = vmul.f32 %v4816, 1.442695
    %v4818 = vpow.pop %v4817
    %v4819 = vadd.f32 %v4818, 1.0
    %v4820 = vrcp.pop %v4819
    %v4821 = vadd.f32 %v4528, %v4602
    %v4822 = vsub.f32 0.0, %v4821
    %v4823 = vmul.f32 %v4822, 1.442695
    %v4824 = vpow.pop %v4823
    %v4825 = vadd.f32 %v4824, 1.0
    %v4826 = vrcp.pop %v4825
    %v4827 = vadd.f32 %v4671, %v4517
    %v4828 = vmul.f32 %v4820, %v4827
    %v4829 = vadd.f32 %v4529, %v4828
    %v4830 = vtanh.pop %v4829
    %v4831 = vsub.f32 1.0, %v4826
    %v4832 = vmul.f32 %v4831, %v4830
    %v4833 = vmul.f32 %v4826, 0.0
    %v4834 = vadd.f32 %v4832, %v4833
    %v4835 = vadd.f32 %v4530, %v4741
    %v4836 = vsub.f32 0.0, %v4835
    %v4837 = vmul.f32 %v4836, 1.442695
    %v4838 = vpow.pop %v4837
    %v4839 = vadd.f32 %v4838, 1.0
    %v4840 = vrcp.pop %v4839
    %v4841 = vadd.f32 %v4531, %v4743
    %v4842 = vsub.f32 0.0, %v4841
    %v4843 = vmul.f32 %v4842, 1.442695
    %v4844 = vpow.pop %v4843
    %v4845 = vadd.f32 %v4844, 1.0
    %v4846 = vrcp.pop %v4845
    %v4847 = vadd.f32 %v4812, %v4525
    %v4848 = vmul.f32 %v4840, %v4847
    %v4849 = vadd.f32 %v4532, %v4848
    %v4850 = vtanh.pop %v4849
    %v4851 = vsub.f32 1.0, %v4846
    %v4852 = vmul.f32 %v4851, %v4850
    %v4853 = vmul.f32 %v4846, 0.0
    %v4854 = vadd.f32 %v4852, %v4853
    %4855 = vst [vmem:[#allocation5] sm:$0xff] %v4834
    %4856 = vst [vmem:[#allocation6 + $0x38] sm:$0xff] %v4854
    %v4857 = vld [vmem:[#allocation2 + $0x30] sm:$0xff]
    %v4858 = vld [vmem:[#allocation2 + $0x38] sm:$0xff]
    %v4859 = vld [vmem:[#allocation2 + $0x40] sm:$0xff]
    %v4860 = vld [vmem:[#allocation2 + $0x138] sm:$0xff]
    %v4861 = vld [vmem:[#allocation2 + $0x140] sm:$0xff]
    %v4862 = vld [vmem:[#allocation2 + $0x148] sm:$0xff]
    %4863 = vmatprep.subr.mxu0 %v4416
    %4864 = vmatpush1.msra.mxu0 %v4415
    %4865 = vmatprep.subr.mxu0 %v4419
    %4866 = vmatpush1.msra.mxu0 %v4418
    %4867 = vmatprep.subr.mxu0 %v4422
    %4868 = vmatpush1.msra.mxu0 %v4421
    %4869 = vmatprep.subr.mxu0 %v4425
    %4870 = vmatpush1.msra.mxu0 %v4424
    %4871 = vmatprep.subr.mxu0 %v4428
    %4872 = vmatpush1.msra.mxu0 %v4427
    %4873 = vmatprep.subr.mxu0 %v4431
    %4874 = vmatpush1.msra.mxu0 %v4430
    %4875 = vmatprep.subr.mxu0 %v4434
    %4876 = vmatpush1.msra.mxu0 %v4433
    %4877 = vmatprep.subr.mxu0 %v4437
    %4878 = vmatpush1.msra.mxu0 %v4436
    %4879 = vmatprep.subr.mxu0 %v4440
    %4880 = vmatpush1.msra.mxu0 %v4439
    %4881 = vmatprep.subr.mxu0 %v4443
    %4882 = vmatpush1.msra.mxu0 %v4442
    %4883 = vmatprep.subr.mxu0 %v4446
    %4884 = vmatpush1.msra.mxu0 %v4445
    %4885 = vmatprep.subr.mxu0 %v4449
    %4886 = vmatpush1.msra.mxu0 %v4448
    %4887 = vmatprep.subr.mxu0 %v4452
    %4888 = vmatpush1.msra.mxu0 %v4451
    %4889 = vmatprep.subr.mxu0 %v4455
    %4890 = vmatpush1.msra.mxu0 %v4454
    %4891 = vmatprep.subr.mxu0 %v4458
    %4892 = vmatpush1.msra.mxu0 %v4457
    %4893 = vmatprep.subr.mxu0 %v4461
    %4894 = vmatpush1.msra.mxu0 %v4460
    %4895 = vmatprep.subr.mxu0 0.0
    %4896 = vmatpush1.msra.mxu0 0.0
    %4897 = vmatprep.subr.mxu0 0.0
    %4898 = vmatpush1.msra.mxu0 0.0
    %4899 = vmatprep.subr.mxu0 0.0
    %4900 = vmatpush1.msra.mxu0 0.0
    %4901 = vmatprep.subr.mxu0 0.0
    %4902 = vmatpush1.msra.mxu0 0.0
    %4903 = vmatprep.subr.mxu0 0.0
    %4904 = vmatpush1.msra.mxu0 0.0
    %4905 = vmatprep.subr.mxu0 0.0
    %4906 = vmatpush1.msra.mxu0 0.0
    %4907 = vmatprep.subr.mxu0 0.0
    %4908 = vmatpush1.msra.mxu0 0.0
    %4909 = vmatprep.subr.mxu0 0.0
    %4910 = vmatpush1.msra.mxu0 0.0
    %4911 = vmatprep.subr.mxu0 0.0
    %4912 = vmatpush1.msra.mxu0 0.0
    %4913 = vmatprep.subr.mxu0 0.0
    %4914 = vmatpush1.msra.mxu0 0.0
    %4915 = vmatprep.subr.mxu0 0.0
    %4916 = vmatpush1.msra.mxu0 0.0
    %4917 = vmatprep.subr.mxu0 0.0
    %4918 = vmatpush1.msra.mxu0 0.0
    %4919 = vmatprep.subr.mxu0 0.0
    %4920 = vmatpush1.msra.mxu0 0.0
    %4921 = vmatprep.subr.mxu0 0.0
    %4922 = vmatpush1.msra.mxu0 0.0
    %4923 = vmatprep.subr.mxu0 0.0
    %4924 = vmatpush1.msra.mxu0 0.0
    %4925 = vmatprep.subr.mxu0 0.0
    %4926 = vmatpush1.msra.mxu0 0.0
    %4927 = vmatprep.mubr.f32.mxu0 0.0
    %4928 = vmatmul.mubr.f32.gmra.mrb[0].mxu0 %v4834
    %v4929 = vpop.f32.mrb[0].mxu0
    %v4930 = vadd.f32 0.0, %v4929
    %v4931 = vpop.f32.mrb[0].mxu0
    %v4932 = vadd.f32 0.0, %v4931
    %4933 = vdwg.mxu0
    %4934 = vmatprep.subr.mxu0 0.0
    %4935 = vmatpush1.msra.mxu0 %v4417
    %4936 = vmatprep.subr.mxu0 0.0
    %4937 = vmatpush1.msra.mxu0 %v4420
    %4938 = vmatprep.subr.mxu0 0.0
    %4939 = vmatpush1.msra.mxu0 %v4423
    %4940 = vmatprep.subr.mxu0 0.0
    %4941 = vmatpush1.msra.mxu0 %v4426
    %4942 = vmatprep.subr.mxu0 0.0
    %4943 = vmatpush1.msra.mxu0 %v4429
    %4944 = vmatprep.subr.mxu0 0.0
    %4945 = vmatpush1.msra.mxu0 %v4432
    %4946 = vmatprep.subr.mxu0 0.0
    %4947 = vmatpush1.msra.mxu0 %v4435
    %4948 = vmatprep.subr.mxu0 0.0
    %4949 = vmatpush1.msra.mxu0 %v4438
    %4950 = vmatprep.subr.mxu0 0.0
    %4951 = vmatpush1.msra.mxu0 %v4441
    %4952 = vmatprep.subr.mxu0 0.0
    %4953 = vmatpush1.msra.mxu0 %v4444
    %4954 = vmatprep.subr.mxu0 0.0
    %4955 = vmatpush1.msra.mxu0 %v4447
    %4956 = vmatprep.subr.mxu0 0.0
    %4957 = vmatpush1.msra.mxu0 %v4450
    %4958 = vmatprep.subr.mxu0 0.0
    %4959 = vmatpush1.msra.mxu0 %v4453
    %4960 = vmatprep.subr.mxu0 0.0
    %4961 = vmatpush1.msra.mxu0 %v4456
    %4962 = vmatprep.subr.mxu0 0.0
    %4963 = vmatpush1.msra.mxu0 %v4459
    %4964 = vmatprep.subr.mxu0 0.0
    %4965 = vmatpush1.msra.mxu0 %v4462
    %4966 = vmatprep.subr.mxu0 0.0
    %4967 = vmatpush1.msra.mxu0 0.0
    %4968 = vmatprep.subr.mxu0 0.0
    %4969 = vmatpush1.msra.mxu0 0.0
    %4970 = vmatprep.subr.mxu0 0.0
    %4971 = vmatpush1.msra.mxu0 0.0
    %4972 = vmatprep.subr.mxu0 0.0
    %4973 = vmatpush1.msra.mxu0 0.0
    %4974 = vmatprep.subr.mxu0 0.0
    %4975 = vmatpush1.msra.mxu0 0.0
    %4976 = vmatprep.subr.mxu0 0.0
    %4977 = vmatpush1.msra.mxu0 0.0
    %4978 = vmatprep.subr.mxu0 0.0
    %4979 = vmatpush1.msra.mxu0 0.0
    %4980 = vmatprep.subr.mxu0 0.0
    %4981 = vmatpush1.msra.mxu0 0.0
    %4982 = vmatprep.subr.mxu0 0.0
    %4983 = vmatpush1.msra.mxu0 0.0
    %4984 = vmatprep.subr.mxu0 0.0
    %4985 = vmatpush1.msra.mxu0 0.0
    %4986 = vmatprep.subr.mxu0 0.0
    %4987 = vmatpush1.msra.mxu0 0.0
    %4988 = vmatprep.subr.mxu0 0.0
    %4989 = vmatpush1.msra.mxu0 0.0
    %4990 = vmatprep.subr.mxu0 0.0
    %4991 = vmatpush1.msra.mxu0 0.0
    %4992 = vmatprep.subr.mxu0 0.0
    %4993 = vmatpush1.msra.mxu0 0.0
    %4994 = vmatprep.subr.mxu0 0.0
    %4995 = vmatpush1.msra.mxu0 0.0
    %4996 = vmatprep.subr.mxu0 0.0
    %4997 = vmatpush1.msra.mxu0 0.0
    %4998 = vmatprep.mubr.f32.mxu0 0.0
    %4999 = vmatmul.mubr.f32.gmra.mrb[0].mxu0 %v4834
    %v5000 = vpop.f32.mrb[0].mxu0
    %v5001 = vadd.f32 0.0, %v5000
    %v5002 = vpop.f32.mrb[0].mxu0
    %5003 = vdwg.mxu0
    %5004 = vmatprep.subr.mxu0 %v4465
    %5005 = vmatpush1.msra.mxu0 %v4464
    %5006 = vmatprep.subr.mxu0 %v4468
    %5007 = vmatpush1.msra.mxu0 %v4467
    %5008 = vmatprep.subr.mxu0 %v4471
    %5009 = vmatpush1.msra.mxu0 %v4470
    %5010 = vmatprep.subr.mxu0 %v4474
    %5011 = vmatpush1.msra.mxu0 %v4473
    %5012 = vmatprep.subr.mxu0 %v4477
    %5013 = vmatpush1.msra.mxu0 %v4476
    %5014 = vmatprep.subr.mxu0 %v4480
    %5015 = vmatpush1.msra.mxu0 %v4479
    %5016 = vmatprep.subr.mxu0 %v4483
    %5017 = vmatpush1.msra.mxu0 %v4482
    %5018 = vmatprep.subr.mxu0 %v4486
    %5019 = vmatpush1.msra.mxu0 %v4485
    %5020 = vmatprep.subr.mxu0 %v4489
    %5021 = vmatpush1.msra.mxu0 %v4488
    %5022 = vmatprep.subr.mxu0 %v4492
    %5023 = vmatpush1.msra.mxu0 %v4491
    %5024 = vmatprep.subr.mxu0 %v4495
    %5025 = vmatpush1.msra.mxu0 %v4494
    %5026 = vmatprep.subr.mxu0 %v4498
    %5027 = vmatpush1.msra.mxu0 %v4497
    %5028 = vmatprep.subr.mxu0 %v4501
    %5029 = vmatpush1.msra.mxu0 %v4500
    %5030 = vmatprep.subr.mxu0 %v4504
    %5031 = vmatpush1.msra.mxu0 %v4503
    %5032 = vmatprep.subr.mxu0 %v4507
    %5033 = vmatpush1.msra.mxu0 %v4506
    %5034 = vmatprep.subr.mxu0 %v4510
    %5035 = vmatpush1.msra.mxu0 %v4509
    %5036 = vmatprep.subr.mxu0 0.0
    %5037 = vmatpush1.msra.mxu0 0.0
    %5038 = vmatprep.subr.mxu0 0.0
    %5039 = vmatpush1.msra.mxu0 0.0
    %5040 = vmatprep.subr.mxu0 0.0
    %5041 = vmatpush1.msra.mxu0 0.0
    %5042 = vmatprep.subr.mxu0 0.0
    %5043 = vmatpush1.msra.mxu0 0.0
    %5044 = vmatprep.subr.mxu0 0.0
    %5045 = vmatpush1.msra.mxu0 0.0
    %5046 = vmatprep.subr.mxu0 0.0
    %5047 = vmatpush1.msra.mxu0 0.0
    %5048 = vmatprep.subr.mxu0 0.0
    %5049 = vmatpush1.msra.mxu0 0.0
    %5050 = vmatprep.subr.mxu0 0.0
    %5051 = vmatpush1.msra.mxu0 0.0
    %5052 = vmatprep.subr.mxu0 0.0
    %5053 = vmatpush1.msra.mxu0 0.0
    %5054 = vmatprep.subr.mxu0 0.0
    %5055 = vmatpush1.msra.mxu0 0.0
    %5056 = vmatprep.subr.mxu0 0.0
    %5057 = vmatpush1.msra.mxu0 0.0
    %5058 = vmatprep.subr.mxu0 0.0
    %5059 = vmatpush1.msra.mxu0 0.0
    %5060 = vmatprep.subr.mxu0 0.0
    %5061 = vmatpush1.msra.mxu0 0.0
    %5062 = vmatprep.subr.mxu0 0.0
    %5063 = vmatpush1.msra.mxu0 0.0
    %5064 = vmatprep.subr.mxu0 0.0
    %5065 = vmatpush1.msra.mxu0 0.0
    %5066 = vmatprep.subr.mxu0 0.0
    %5067 = vmatpush1.msra.mxu0 0.0
    %5068 = vmatprep.mubr.f32.mxu0 0.0
    %5069 = vmatmul.mubr.f32.gmra.mrb[0].mxu0 %v4854
    %v5070 = vpop.f32.mrb[0].mxu0
    %v5071 = vadd.f32 0.0, %v5070
    %v5072 = vpop.f32.mrb[0].mxu0
    %v5073 = vadd.f32 0.0, %v5072
    %5074 = vdwg.mxu0
    %5075 = vmatprep.subr.mxu0 0.0
    %5076 = vmatpush1.msra.mxu0 %v4466
    %5077 = vmatprep.subr.mxu0 0.0
    %5078 = vmatpush1.msra.mxu0 %v4469
    %5079 = vmatprep.subr.mxu0 0.0
    %5080 = vmatpush1.msra.mxu0 %v4472
    %5081 = vmatprep.subr.mxu0 0.0
    %5082 = vmatpush1.msra.mxu0 %v4475
    %5083 = vmatprep.subr.mxu0 0.0
    %5084 = vmatpush1.msra.mxu0 %v4478
    %5085 = vmatprep.subr.mxu0 0.0
    %5086 = vmatpush1.msra.mxu0 %v4481
    %5087 = vmatprep.subr.mxu0 0.0
    %5088 = vmatpush1.msra.mxu0 %v4484
    %5089 = vmatprep.subr.mxu0 0.0
    %5090 = vmatpush1.msra.mxu0 %v4487
    %5091 = vmatprep.subr.mxu0 0.0
    %5092 = vmatpush1.msra.mxu0 %v4490
    %5093 = vmatprep.subr.mxu0 0.0
    %5094 = vmatpush1.msra.mxu0 %v4493
    %5095 = vmatprep.subr.mxu0 0.0
    %5096 = vmatpush1.msra.mxu0 %v4496
    %5097 = vmatprep.subr.mxu0 0.0
    %5098 = vmatpush1.msra.mxu0 %v4499
    %5099 = vmatprep.subr.mxu0 0.0
    %5100 = vmatpush1.msra.mxu0 %v4502
    %5101 = vmatprep.subr.mxu0 0.0
    %5102 = vmatpush1.msra.mxu0 %v4505
    %5103 = vmatprep.subr.mxu0 0.0
    %5104 = vmatpush1.msra.mxu0 %v4508
    %5105 = vmatprep.subr.mxu0 0.0
    %5106 = vmatpush1.msra.mxu0 %v4511
    %5107 = vmatprep.subr.mxu0 0.0
    %5108 = vmatpush1.msra.mxu0 0.0
    %5109 = vmatprep.subr.mxu0 0.0
    %5110 = vmatpush1.msra.mxu0 0.0
    %5111 = vmatprep.subr.mxu0 0.0
    %5112 = vmatpush1.msra.mxu0 0.0
    %5113 = vmatprep.subr.mxu0 0.0
    %5114 = vmatpush1.msra.mxu0 0.0
    %5115 = vmatprep.subr.mxu0 0.0
    %5116 = vmatpush1.msra.mxu0 0.0
    %5117 = vmatprep.subr.mxu0 0.0
    %5118 = vmatpush1.msra.mxu0 0.0
    %5119 = vmatprep.subr.mxu0 0.0
    %5120 = vmatpush1.msra.mxu0 0.0
    %5121 = vmatprep.subr.mxu0 0.0
    %5122 = vmatpush1.msra.mxu0 0.0
    %5123 = vmatprep.subr.mxu0 0.0
    %5124 = vmatpush1.msra.mxu0 0.0
    %5125 = vmatprep.subr.mxu0 0.0
    %5126 = vmatpush1.msra.mxu0 0.0
    %5127 = vmatprep.subr.mxu0 0.0
    %5128 = vmatpush1.msra.mxu0 0.0
    %5129 = vmatprep.subr.mxu0 0.0
    %5130 = vmatpush1.msra.mxu0 0.0
    %5131 = vmatprep.subr.mxu0 0.0
    %5132 = vmatpush1.msra.mxu0 0.0
    %5133 = vmatprep.subr.mxu0 0.0
    %5134 = vmatpush1.msra.mxu0 0.0
    %5135 = vmatprep.subr.mxu0 0.0
    %5136 = vmatpush1.msra.mxu0 0.0
    %5137 = vmatprep.subr.mxu0 0.0
    %5138 = vmatpush1.msra.mxu0 0.0
    %5139 = vmatprep.mubr.f32.mxu0 0.0
    %5140 = vmatmul.mubr.f32.gmra.mrb[0].mxu0 %v4854
    %v5141 = vpop.f32.mrb[0].mxu0
    %v5142 = vadd.f32 0.0, %v5141
    %v5143 = vpop.f32.mrb[0].mxu0
    %5144 = vdwg.mxu0
    %v5145 = vadd.f32 %v4857, %v4930
    %v5146 = vsub.f32 0.0, %v5145
    %v5147 = vmul.f32 %v5146, 1.442695
    %v5148 = vpow.pop %v5147
    %v5149 = vadd.f32 %v5148, 1.0
    %v5150 = vrcp.pop %v5149
    %v5151 = vadd.f32 %v4858, %v4932
    %v5152 = vsub.f32 0.0, %v5151
    %v5153 = vmul.f32 %v5152, 1.442695
    %v5154 = vpow.pop %v5153
    %v5155 = vadd.f32 %v5154, 1.0
    %v5156 = vrcp.pop %v5155
    %v5157 = vadd.f32 %v5001, %v4517
    %v5158 = vmul.f32 %v5150, %v5157
    %v5159 = vadd.f32 %v4859, %v5158
    %v5160 = vtanh.pop %v5159
    %v5161 = vsub.f32 1.0, %v5156
    %v5162 = vmul.f32 %v5161, %v5160
    %v5163 = vmul.f32 %v5156, %v4834
    %v5164 = vadd.f32 %v5162, %v5163
    %v5165 = vadd.f32 %v4860, %v5071
    %v5166 = vsub.f32 0.0, %v5165
    %v5167 = vmul.f32 %v5166, 1.442695
    %v5168 = vpow.pop %v5167
    %v5169 = vadd.f32 %v5168, 1.0
    %v5170 = vrcp.pop %v5169
    %v5171 = vadd.f32 %v4861, %v5073
    %v5172 = vsub.f32 0.0, %v5171
    %v5173 = vmul.f32 %v5172, 1.442695
    %v5174 = vpow.pop %v5173
    %v5175 = vadd.f32 %v5174, 1.0
    %v5176 = vrcp.pop %v5175
    %v5177 = vadd.f32 %v5142, %v4525
    %v5178 = vmul.f32 %v5170, %v5177
    %v5179 = vadd.f32 %v4862, %v5178
    %v5180 = vtanh.pop %v5179
    %v5181 = vsub.f32 1.0, %v5176
    %v5182 = vmul.f32 %v5181, %v5180
    %v5183 = vmul.f32 %v5176, %v4854
    %v5184 = vadd.f32 %v5182, %v5183
    %5185 = vst [vmem:[#allocation5 + $0x8] sm:$0xff] %v5164
    %5186 = vst [vmem:[#allocation6 + $0x30] sm:$0xff] %v5184
    %v5187 = vld [vmem:[#allocation2 + $0x60] sm:$0xff]
    %v5188 = vld [vmem:[#allocation2 + $0x68] sm:$0xff]
    %v5189 = vld [vmem:[#allocation2 + $0x70] sm:$0xff]
    %v5190 = vld [vmem:[#allocation2 + $0x108] sm:$0xff]
    %v5191 = vld [vmem:[#allocation2 + $0x110] sm:$0xff]
    %v5192 = vld [vmem:[#allocation2 + $0x118] sm:$0xff]
    %5193 = vmatprep.subr.mxu0 %v4416
    %5194 = vmatpush1.msra.mxu0 %v4415
    %5195 = vmatprep.subr.mxu0 %v4419
    %5196 = vmatpush1.msra.mxu0 %v4418
    %5197 = vmatprep.subr.mxu0 %v4422
    %5198 = vmatpush1.msra.mxu0 %v4421
    %5199 = vmatprep.subr.mxu0 %v4425
    %5200 = vmatpush1.msra.mxu0 %v4424
    %5201 = vmatprep.subr.mxu0 %v4428
    %5202 = vmatpush1.msra.mxu0 %v4427
    %5203 = vmatprep.subr.mxu0 %v4431
    %5204 = vmatpush1.msra.mxu0 %v4430
    %5205 = vmatprep.subr.mxu0 %v4434
    %5206 = vmatpush1.msra.mxu0 %v4433
    %5207 = vmatprep.subr.mxu0 %v4437
    %5208 = vmatpush1.msra.mxu0 %v4436
    %5209 = vmatprep.subr.mxu0 %v4440
    %5210 = vmatpush1.msra.mxu0 %v4439
    %5211 = vmatprep.subr.mxu0 %v4443
    %5212 = vmatpush1.msra.mxu0 %v4442
    %5213 = vmatprep.subr.mxu0 %v4446
    %5214 = vmatpush1.msra.mxu0 %v4445
    %5215 = vmatprep.subr.mxu0 %v4449
    %5216 = vmatpush1.msra.mxu0 %v4448
    %5217 = vmatprep.subr.mxu0 %v4452
    %5218 = vmatpush1.msra.mxu0 %v4451
    %5219 = vmatprep.subr.mxu0 %v4455
    %5220 = vmatpush1.msra.mxu0 %v4454
    %5221 = vmatprep.subr.mxu0 %v4458
    %5222 = vmatpush1.msra.mxu0 %v4457
    %5223 = vmatprep.subr.mxu0 %v4461
    %5224 = vmatpush1.msra.mxu0 %v4460
    %5225 = vmatprep.subr.mxu0 0.0
    %5226 = vmatpush1.msra.mxu0 0.0
    %5227 = vmatprep.subr.mxu0 0.0
    %5228 = vmatpush1.msra.mxu0 0.0
    %5229 = vmatprep.subr.mxu0 0.0
    %5230 = vmatpush1.msra.mxu0 0.0
    %5231 = vmatprep.subr.mxu0 0.0
    %5232 = vmatpush1.msra.mxu0 0.0
    %5233 = vmatprep.subr.mxu0 0.0
    %5234 = vmatpush1.msra.mxu0 0.0
    %5235 = vmatprep.subr.mxu0 0.0
    %5236 = vmatpush1.msra.mxu0 0.0
    %5237 = vmatprep.subr.mxu0 0.0
    %5238 = vmatpush1.msra.mxu0 0.0
    %5239 = vmatprep.subr.mxu0 0.0
    %5240 = vmatpush1.msra.mxu0 0.0
    %5241 = vmatprep.subr.mxu0 0.0
    %5242 = vmatpush1.msra.mxu0 0.0
    %5243 = vmatprep.subr.mxu0 0.0
    %5244 = vmatpush1.msra.mxu0 0.0
    %5245 = vmatprep.subr.mxu0 0.0
    %5246 = vmatpush1.msra.mxu0 0.0
    %5247 = vmatprep.subr.mxu0 0.0
    %5248 = vmatpush1.msra.mxu0 0.0
    %5249 = vmatprep.subr.mxu0 0.0
    %5250 = vmatpush1.msra.mxu0 0.0
    %5251 = vmatprep.subr.mxu0 0.0
    %5252 = vmatpush1.msra.mxu0 0.0
    %5253 = vmatprep.subr.mxu0 0.0
    %5254 = vmatpush1.msra.mxu0 0.0
    %5255 = vmatprep.subr.mxu0 0.0
    %5256 = vmatpush1.msra.mxu0 0.0
    %5257 = vmatprep.mubr.f32.mxu0 0.0
    %5258 = vmatmul.mubr.f32.gmra.mrb[0].mxu0 %v5164
    %v5259 = vpop.f32.mrb[0].mxu0
    %v5260 = vadd.f32 0.0, %v5259
    %v5261 = vpop.f32.mrb[0].mxu0
    %v5262 = vadd.f32 0.0, %v5261
    %5263 = vdwg.mxu0
    %5264 = vmatprep.subr.mxu0 0.0
    %5265 = vmatpush1.msra.mxu0 %v4417
    %5266 = vmatprep.subr.mxu0 0.0
    %5267 = vmatpush1.msra.mxu0 %v4420
    %5268 = vmatprep.subr.mxu0 0.0
    %5269 = vmatpush1.msra.mxu0 %v4423
    %5270 = vmatprep.subr.mxu0 0.0
    %5271 = vmatpush1.msra.mxu0 %v4426
    %5272 = vmatprep.subr.mxu0 0.0
    %5273 = vmatpush1.msra.mxu0 %v4429
    %5274 = vmatprep.subr.mxu0 0.0
    %5275 = vmatpush1.msra.mxu0 %v4432
    %5276 = vmatprep.subr.mxu0 0.0
    %5277 = vmatpush1.msra.mxu0 %v4435
    %5278 = vmatprep.subr.mxu0 0.0
    %5279 = vmatpush1.msra.mxu0 %v4438
    %5280 = vmatprep.subr.mxu0 0.0
    %5281 = vmatpush1.msra.mxu0 %v4441
    %5282 = vmatprep.subr.mxu0 0.0
    %5283 = vmatpush1.msra.mxu0 %v4444
    %5284 = vmatprep.subr.mxu0 0.0
    %5285 = vmatpush1.msra.mxu0 %v4447
    %5286 = vmatprep.subr.mxu0 0.0
    %5287 = vmatpush1.msra.mxu0 %v4450
    %5288 = vmatprep.subr.mxu0 0.0
    %5289 = vmatpush1.msra.mxu0 %v4453
    %5290 = vmatprep.subr.mxu0 0.0
    %5291 = vmatpush1.msra.mxu0 %v4456
    %5292 = vmatprep.subr.mxu0 0.0
    %5293 = vmatpush1.msra.mxu0 %v4459
    %5294 = vmatprep.subr.mxu0 0.0
    %5295 = vmatpush1.msra.mxu0 %v4462
    %5296 = vmatprep.subr.mxu0 0.0
    %5297 = vmatpush1.msra.mxu0 0.0
    %5298 = vmatprep.subr.mxu0 0.0
    %5299 = vmatpush1.msra.mxu0 0.0
    %5300 = vmatprep.subr.mxu0 0.0
    %5301 = vmatpush1.msra.mxu0 0.0
    %5302 = vmatprep.subr.mxu0 0.0
    %5303 = vmatpush1.msra.mxu0 0.0
    %5304 = vmatprep.subr.mxu0 0.0
    %5305 = vmatpush1.msra.mxu0 0.0
    %5306 = vmatprep.subr.mxu0 0.0
    %5307 = vmatpush1.msra.mxu0 0.0
    %5308 = vmatprep.subr.mxu0 0.0
    %5309 = vmatpush1.msra.mxu0 0.0
    %5310 = vmatprep.subr.mxu0 0.0
    %5311 = vmatpush1.msra.mxu0 0.0
    %5312 = vmatprep.subr.mxu0 0.0
    %5313 = vmatpush1.msra.mxu0 0.0
    %5314 = vmatprep.subr.mxu0 0.0
    %5315 = vmatpush1.msra.mxu0 0.0
    %5316 = vmatprep.subr.mxu0 0.0
    %5317 = vmatpush1.msra.mxu0 0.0
    %5318 = vmatprep.subr.mxu0 0.0
    %5319 = vmatpush1.msra.mxu0 0.0
    %5320 = vmatprep.subr.mxu0 0.0
    %5321 = vmatpush1.msra.mxu0 0.0
    %5322 = vmatprep.subr.mxu0 0.0
    %5323 = vmatpush1.msra.mxu0 0.0
    %5324 = vmatprep.subr.mxu0 0.0
    %5325 = vmatpush1.msra.mxu0 0.0
    %5326 = vmatprep.subr.mxu0 0.0
    %5327 = vmatpush1.msra.mxu0 0.0
    %5328 = vmatprep.mubr.f32.mxu0 0.0
    %5329 = vmatmul.mubr.f32.gmra.mrb[0].mxu0 %v5164
    %v5330 = vpop.f32.mrb[0].mxu0
    %v5331 = vadd.f32 0.0, %v5330
    %v5332 = vpop.f32.mrb[0].mxu0
    %5333 = vdwg.mxu0
    %5334 = vmatprep.subr.mxu0 %v4465
    %5335 = vmatpush1.msra.mxu0 %v4464
    %5336 = vmatprep.subr.mxu0 %v4468
    %5337 = vmatpush1.msra.mxu0 %v4467
    %5338 = vmatprep.subr.mxu0 %v4471
    %5339 = vmatpush1.msra.mxu0 %v4470
    %5340 = vmatprep.subr.mxu0 %v4474
    %5341 = vmatpush1.msra.mxu0 %v4473
    %5342 = vmatprep.subr.mxu0 %v4477
    %5343 = vmatpush1.msra.mxu0 %v4476
    %5344 = vmatprep.subr.mxu0 %v4480
    %5345 = vmatpush1.msra.mxu0 %v4479
    %5346 = vmatprep.subr.mxu0 %v4483
    %5347 = vmatpush1.msra.mxu0 %v4482
    %5348 = vmatprep.subr.mxu0 %v4486
    %5349 = vmatpush1.msra.mxu0 %v4485
    %5350 = vmatprep.subr.mxu0 %v4489
    %5351 = vmatpush1.msra.mxu0 %v4488
    %5352 = vmatprep.subr.mxu0 %v4492
    %5353 = vmatpush1.msra.mxu0 %v4491
    %5354 = vmatprep.subr.mxu0 %v4495
    %5355 = vmatpush1.msra.mxu0 %v4494
    %5356 = vmatprep.subr.mxu0 %v4498
    %5357 = vmatpush1.msra.mxu0 %v4497
    %5358 = vmatprep.subr.mxu0 %v4501
    %5359 = vmatpush1.msra.mxu0 %v4500
    %5360 = vmatprep.subr.mxu0 %v4504
    %5361 = vmatpush1.msra.mxu0 %v4503
    %5362 = vmatprep.subr.mxu0 %v4507
    %5363 = vmatpush1.msra.mxu0 %v4506
    %5364 = vmatprep.subr.mxu0 %v4510
    %5365 = vmatpush1.msra.mxu0 %v4509
    %5366 = vmatprep.subr.mxu0 0.0
    %5367 = vmatpush1.msra.mxu0 0.0
    %5368 = vmatprep.subr.mxu0 0.0
    %5369 = vmatpush1.msra.mxu0 0.0
    %5370 = vmatprep.subr.mxu0 0.0
    %5371 = vmatpush1.msra.mxu0 0.0
    %5372 = vmatprep.subr.mxu0 0.0
    %5373 = vmatpush1.msra.mxu0 0.0
    %5374 = vmatprep.subr.mxu0 0.0
    %5375 = vmatpush1.msra.mxu0 0.0
    %5376 = vmatprep.subr.mxu0 0.0
    %5377 = vmatpush1.msra.mxu0 0.0
    %5378 = vmatprep.subr.mxu0 0.0
    %5379 = vmatpush1.msra.mxu0 0.0
    %5380 = vmatprep.subr.mxu0 0.0
    %5381 = vmatpush1.msra.mxu0 0.0
    %5382 = vmatprep.subr.mxu0 0.0
    %5383 = vmatpush1.msra.mxu0 0.0
    %5384 = vmatprep.subr.mxu0 0.0
    %5385 = vmatpush1.msra.mxu0 0.0
    %5386 = vmatprep.subr.mxu0 0.0
    %5387 = vmatpush1.msra.mxu0 0.0
    %5388 = vmatprep.subr.mxu0 0.0
    %5389 = vmatpush1.msra.mxu0 0.0
    %5390 = vmatprep.subr.mxu0 0.0
    %5391 = vmatpush1.msra.mxu0 0.0
    %5392 = vmatprep.subr.mxu0 0.0
    %5393 = vmatpush1.msra.mxu0 0.0
    %5394 = vmatprep.subr.mxu0 0.0
    %5395 = vmatpush1.msra.mxu0 0.0
    %5396 = vmatprep.subr.mxu0 0.0
    %5397 = vmatpush1.msra.mxu0 0.0
    %5398 = vmatprep.mubr.f32.mxu0 0.0
    %5399 = vmatmul.mubr.f32.gmra.mrb[0].mxu0 %v5184
    %v5400 = vpop.f32.mrb[0].mxu0
    %v5401 = vadd.f32 0.0, %v5400
    %v5402 = vpop.f32.mrb[0].mxu0
    %v5403 = vadd.f32 0.0, %v5402
    %5404 = vdwg.mxu0
    %5405 = vmatprep.subr.mxu0 0.0
    %5406 = vmatpush1.msra.mxu0 %v4466
    %5407 = vmatprep.subr.mxu0 0.0
    %5408 = vmatpush1.msra.mxu0 %v4469
    %5409 = vmatprep.subr.mxu0 0.0
    %5410 = vmatpush1.msra.mxu0 %v4472
    %5411 = vmatprep.subr.mxu0 0.0
    %5412 = vmatpush1.msra.mxu0 %v4475
    %5413 = vmatprep.subr.mxu0 0.0
    %5414 = vmatpush1.msra.mxu0 %v4478
    %5415 = vmatprep.subr.mxu0 0.0
    %5416 = vmatpush1.msra.mxu0 %v4481
    %5417 = vmatprep.subr.mxu0 0.0
    %5418 = vmatpush1.msra.mxu0 %v4484
    %5419 = vmatprep.subr.mxu0 0.0
    %5420 = vmatpush1.msra.mxu0 %v4487
    %5421 = vmatprep.subr.mxu0 0.0
    %5422 = vmatpush1.msra.mxu0 %v4490
    %5423 = vmatprep.subr.mxu0 0.0
    %5424 = vmatpush1.msra.mxu0 %v4493
    %5425 = vmatprep.subr.mxu0 0.0
    %5426 = vmatpush1.msra.mxu0 %v4496
    %5427 = vmatprep.subr.mxu0 0.0
    %5428 = vmatpush1.msra.mxu0 %v4499
    %5429 = vmatprep.subr.mxu0 0.0
    %5430 = vmatpush1.msra.mxu0 %v4502
    %5431 = vmatprep.subr.mxu0 0.0
    %5432 = vmatpush1.msra.mxu0 %v4505
    %5433 = vmatprep.subr.mxu0 0.0
    %5434 = vmatpush1.msra.mxu0 %v4508
    %5435 = vmatprep.subr.mxu0 0.0
    %5436 = vmatpush1.msra.mxu0 %v4511
    %5437 = vmatprep.subr.mxu0 0.0
    %5438 = vmatpush1.msra.mxu0 0.0
    %5439 = vmatprep.subr.mxu0 0.0
    %5440 = vmatpush1.msra.mxu0 0.0
    %5441 = vmatprep.subr.mxu0 0.0
    %5442 = vmatpush1.msra.mxu0 0.0
    %5443 = vmatprep.subr.mxu0 0.0
    %5444 = vmatpush1.msra.mxu0 0.0
    %5445 = vmatprep.subr.mxu0 0.0
    %5446 = vmatpush1.msra.mxu0 0.0
    %5447 = vmatprep.subr.mxu0 0.0
    %5448 = vmatpush1.msra.mxu0 0.0
    %5449 = vmatprep.subr.mxu0 0.0
    %5450 = vmatpush1.msra.mxu0 0.0
    %5451 = vmatprep.subr.mxu0 0.0
    %5452 = vmatpush1.msra.mxu0 0.0
    %5453 = vmatprep.subr.mxu0 0.0
    %5454 = vmatpush1.msra.mxu0 0.0
    %5455 = vmatprep.subr.mxu0 0.0
    %5456 = vmatpush1.msra.mxu0 0.0
    %5457 = vmatprep.subr.mxu0 0.0
    %5458 = vmatpush1.msra.mxu0 0.0
    %5459 = vmatprep.subr.mxu0 0.0
    %5460 = vmatpush1.msra.mxu0 0.0
    %5461 = vmatprep.subr.mxu0 0.0
    %5462 = vmatpush1.msra.mxu0 0.0
    %5463 = vmatprep.subr.mxu0 0.0
    %5464 = vmatpush1.msra.mxu0 0.0
    %5465 = vmatprep.subr.mxu0 0.0
    %5466 = vmatpush1.msra.mxu0 0.0
    %5467 = vmatprep.subr.mxu0 0.0
    %5468 = vmatpush1.msra.mxu0 0.0
    %5469 = vmatprep.mubr.f32.mxu0 0.0
    %5470 = vmatmul.mubr.f32.gmra.mrb[0].mxu0 %v5184
    %v5471 = vpop.f32.mrb[0].mxu0
    %v5472 = vadd.f32 0.0, %v5471
    %v5473 = vpop.f32.mrb[0].mxu0
    %5474 = vdwg.mxu0
    %v5475 = vadd.f32 %v5187, %v5260
    %v5476 = vsub.f32 0.0, %v5475
    %v5477 = vmul.f32 %v5476, 1.442695
    %v5478 = vpow.pop %v5477
    %v5479 = vadd.f32 %v5478, 1.0
    %v5480 = vrcp.pop %v5479
    %v5481 = vadd.f32 %v5188, %v5262
    %v5482 = vsub.f32 0.0, %v5481
    %v5483 = vmul.f32 %v5482, 1.442695
    %v5484 = vpow.pop %v5483
    %v5485 = vadd.f32 %v5484, 1.0
    %v5486 = vrcp.pop %v5485
    %v5487 = vadd.f32 %v5331, %v4517
    %v5488 = vmul.f32 %v5480, %v5487
    %v5489 = vadd.f32 %v5189, %v5488
    %v5490 = vtanh.pop %v5489
    %v5491 = vsub.f32 1.0, %v5486
    %v5492 = vmul.f32 %v5491, %v5490
    %v5493 = vmul.f32 %v5486, %v5164
    %v5494 = vadd.f32 %v5492, %v5493
    %v5495 = vadd.f32 %v5190, %v5401
    %v5496 = vsub.f32 0.0, %v5495
    %v5497 = vmul.f32 %v5496, 1.442695
    %v5498 = vpow.pop %v5497
    %v5499 = vadd.f32 %v5498, 1.0
    %v5500 = vrcp.pop %v5499
    %v5501 = vadd.f32 %v5191, %v5403
    %v5502 = vsub.f32 0.0, %v5501
    %v5503 = vmul.f32 %v5502, 1.442695
    %v5504 = vpow.pop %v5503
    %v5505 = vadd.f32 %v5504, 1.0
    %v5506 = vrcp.pop %v5505
    %v5507 = vadd.f32 %v5472, %v4525
    %v5508 = vmul.f32 %v5500, %v5507
    %v5509 = vadd.f32 %v5192, %v5508
    %v5510 = vtanh.pop %v5509
    %v5511 = vsub.f32 1.0, %v5506
    %v5512 = vmul.f32 %v5511, %v5510
    %v5513 = vmul.f32 %v5506, %v5184
    %v5514 = vadd.f32 %v5512, %v5513
    %5515 = vst [vmem:[#allocation5 + $0x10] sm:$0xff] %v5494
    %5516 = vst [vmem:[#allocation6 + $0x28] sm:$0xff] %v5514
    %v5517 = vld [vmem:[#allocation2 + $0x90] sm:$0xff]
    %v5518 = vld [vmem:[#allocation2 + $0x98] sm:$0xff]
    %v5519 = vld [vmem:[#allocation2 + $0xa0] sm:$0xff]
    %v5520 = vld [vmem:[#allocation2 + $0xd8] sm:$0xff]
    %v5521 = vld [vmem:[#allocation2 + $0xe0] sm:$0xff]
    %v5522 = vld [vmem:[#allocation2 + $0xe8] sm:$0xff]
    %5523 = vmatprep.subr.mxu0 %v4416
    %5524 = vmatpush1.msra.mxu0 %v4415
    %5525 = vmatprep.subr.mxu0 %v4419
    %5526 = vmatpush1.msra.mxu0 %v4418
    %5527 = vmatprep.subr.mxu0 %v4422
    %5528 = vmatpush1.msra.mxu0 %v4421
    %5529 = vmatprep.subr.mxu0 %v4425
    %5530 = vmatpush1.msra.mxu0 %v4424
    %5531 = vmatprep.subr.mxu0 %v4428
    %5532 = vmatpush1.msra.mxu0 %v4427
    %5533 = vmatprep.subr.mxu0 %v4431
    %5534 = vmatpush1.msra.mxu0 %v4430
    %5535 = vmatprep.subr.mxu0 %v4434
    %5536 = vmatpush1.msra.mxu0 %v4433
    %5537 = vmatprep.subr.mxu0 %v4437
    %5538 = vmatpush1.msra.mxu0 %v4436
    %5539 = vmatprep.subr.mxu0 %v4440
    %5540 = vmatpush1.msra.mxu0 %v4439
    %5541 = vmatprep.subr.mxu0 %v4443
    %5542 = vmatpush1.msra.mxu0 %v4442
    %5543 = vmatprep.subr.mxu0 %v4446
    %5544 = vmatpush1.msra.mxu0 %v4445
    %5545 = vmatprep.subr.mxu0 %v4449
    %5546 = vmatpush1.msra.mxu0 %v4448
    %5547 = vmatprep.subr.mxu0 %v4452
    %5548 = vmatpush1.msra.mxu0 %v4451
    %5549 = vmatprep.subr.mxu0 %v4455
    %5550 = vmatpush1.msra.mxu0 %v4454
    %5551 = vmatprep.subr.mxu0 %v4458
    %5552 = vmatpush1.msra.mxu0 %v4457
    %5553 = vmatprep.subr.mxu0 %v4461
    %5554 = vmatpush1.msra.mxu0 %v4460
    %5555 = vmatprep.subr.mxu0 0.0
    %5556 = vmatpush1.msra.mxu0 0.0
    %5557 = vmatprep.subr.mxu0 0.0
    %5558 = vmatpush1.msra.mxu0 0.0
    %5559 = vmatprep.subr.mxu0 0.0
    %5560 = vmatpush1.msra.mxu0 0.0
    %5561 = vmatprep.subr.mxu0 0.0
    %5562 = vmatpush1.msra.mxu0 0.0
    %5563 = vmatprep.subr.mxu0 0.0
    %5564 = vmatpush1.msra.mxu0 0.0
    %5565 = vmatprep.subr.mxu0 0.0
    %5566 = vmatpush1.msra.mxu0 0.0
    %5567 = vmatprep.subr.mxu0 0.0
    %5568 = vmatpush1.msra.mxu0 0.0
    %5569 = vmatprep.subr.mxu0 0.0
    %5570 = vmatpush1.msra.mxu0 0.0
    %5571 = vmatprep.subr.mxu0 0.0
    %5572 = vmatpush1.msra.mxu0 0.0
    %5573 = vmatprep.subr.mxu0 0.0
    %5574 = vmatpush1.msra.mxu0 0.0
    %5575 = vmatprep.subr.mxu0 0.0
    %5576 = vmatpush1.msra.mxu0 0.0
    %5577 = vmatprep.subr.mxu0 0.0
    %5578 = vmatpush1.msra.mxu0 0.0
    %5579 = vmatprep.subr.mxu0 0.0
    %5580 = vmatpush1.msra.mxu0 0.0
    %5581 = vmatprep.subr.mxu0 0.0
    %5582 = vmatpush1.msra.mxu0 0.0
    %5583 = vmatprep.subr.mxu0 0.0
    %5584 = vmatpush1.msra.mxu0 0.0
    %5585 = vmatprep.subr.mxu0 0.0
    %5586 = vmatpush1.msra.mxu0 0.0
    %5587 = vmatprep.mubr.f32.mxu0 0.0
    %5588 = vmatmul.mubr.f32.gmra.mrb[0].mxu0 %v5494
    %v5589 = vpop.f32.mrb[0].mxu0
    %v5590 = vadd.f32 0.0, %v5589
    %v5591 = vpop.f32.mrb[0].mxu0
    %v5592 = vadd.f32 0.0, %v5591
    %5593 = vdwg.mxu0
    %5594 = vmatprep.subr.mxu0 0.0
    %5595 = vmatpush1.msra.mxu0 %v4417
    %5596 = vmatprep.subr.mxu0 0.0
    %5597 = vmatpush1.msra.mxu0 %v4420
    %5598 = vmatprep.subr.mxu0 0.0
    %5599 = vmatpush1.msra.mxu0 %v4423
    %5600 = vmatprep.subr.mxu0 0.0
    %5601 = vmatpush1.msra.mxu0 %v4426
    %5602 = vmatprep.subr.mxu0 0.0
    %5603 = vmatpush1.msra.mxu0 %v4429
    %5604 = vmatprep.subr.mxu0 0.0
    %5605 = vmatpush1.msra.mxu0 %v4432
    %5606 = vmatprep.subr.mxu0 0.0
    %5607 = vmatpush1.msra.mxu0 %v4435
    %5608 = vmatprep.subr.mxu0 0.0
    %5609 = vmatpush1.msra.mxu0 %v4438
    %5610 = vmatprep.subr.mxu0 0.0
    %5611 = vmatpush1.msra.mxu0 %v4441
    %5612 = vmatprep.subr.mxu0 0.0
    %5613 = vmatpush1.msra.mxu0 %v4444
    %5614 = vmatprep.subr.mxu0 0.0
    %5615 = vmatpush1.msra.mxu0 %v4447
    %5616 = vmatprep.subr.mxu0 0.0
    %5617 = vmatpush1.msra.mxu0 %v4450
    %5618 = vmatprep.subr.mxu0 0.0
    %5619 = vmatpush1.msra.mxu0 %v4453
    %5620 = vmatprep.subr.mxu0 0.0
    %5621 = vmatpush1.msra.mxu0 %v4456
    %5622 = vmatprep.subr.mxu0 0.0
    %5623 = vmatpush1.msra.mxu0 %v4459
    %5624 = vmatprep.subr.mxu0 0.0
    %5625 = vmatpush1.msra.mxu0 %v4462
    %5626 = vmatprep.subr.mxu0 0.0
    %5627 = vmatpush1.msra.mxu0 0.0
    %5628 = vmatprep.subr.mxu0 0.0
    %5629 = vmatpush1.msra.mxu0 0.0
    %5630 = vmatprep.subr.mxu0 0.0
    %5631 = vmatpush1.msra.mxu0 0.0
    %5632 = vmatprep.subr.mxu0 0.0
    %5633 = vmatpush1.msra.mxu0 0.0
    %5634 = vmatprep.subr.mxu0 0.0
    %5635 = vmatpush1.msra.mxu0 0.0
    %5636 = vmatprep.subr.mxu0 0.0
    %5637 = vmatpush1.msra.mxu0 0.0
    %5638 = vmatprep.subr.mxu0 0.0
    %5639 = vmatpush1.msra.mxu0 0.0
    %5640 = vmatprep.subr.mxu0 0.0
    %5641 = vmatpush1.msra.mxu0 0.0
    %5642 = vmatprep.subr.mxu0 0.0
    %5643 = vmatpush1.msra.mxu0 0.0
    %5644 = vmatprep.subr.mxu0 0.0
    %5645 = vmatpush1.msra.mxu0 0.0
    %5646 = vmatprep.subr.mxu0 0.0
    %5647 = vmatpush1.msra.mxu0 0.0
    %5648 = vmatprep.subr.mxu0 0.0
    %5649 = vmatpush1.msra.mxu0 0.0
    %5650 = vmatprep.subr.mxu0 0.0
    %5651 = vmatpush1.msra.mxu0 0.0
    %5652 = vmatprep.subr.mxu0 0.0
    %5653 = vmatpush1.msra.mxu0 0.0
    %5654 = vmatprep.subr.mxu0 0.0
    %5655 = vmatpush1.msra.mxu0 0.0
    %5656 = vmatprep.subr.mxu0 0.0
    %5657 = vmatpush1.msra.mxu0 0.0
    %5658 = vmatprep.mubr.f32.mxu0 0.0
    %5659 = vmatmul.mubr.f32.gmra.mrb[0].mxu0 %v5494
    %v5660 = vpop.f32.mrb[0].mxu0
    %v5661 = vadd.f32 0.0, %v5660
    %v5662 = vpop.f32.mrb[0].mxu0
    %5663 = vdwg.mxu0
    %5664 = vmatprep.subr.mxu0 %v4465
    %5665 = vmatpush1.msra.mxu0 %v4464
    %5666 = vmatprep.subr.mxu0 %v4468
    %5667 = vmatpush1.msra.mxu0 %v4467
    %5668 = vmatprep.subr.mxu0 %v4471
    %5669 = vmatpush1.msra.mxu0 %v4470
    %5670 = vmatprep.subr.mxu0 %v4474
    %5671 = vmatpush1.msra.mxu0 %v4473
    %5672 = vmatprep.subr.mxu0 %v4477
    %5673 = vmatpush1.msra.mxu0 %v4476
    %5674 = vmatprep.subr.mxu0 %v4480
    %5675 = vmatpush1.msra.mxu0 %v4479
    %5676 = vmatprep.subr.mxu0 %v4483
    %5677 = vmatpush1.msra.mxu0 %v4482
    %5678 = vmatprep.subr.mxu0 %v4486
    %5679 = vmatpush1.msra.mxu0 %v4485
    %5680 = vmatprep.subr.mxu0 %v4489
    %5681 = vmatpush1.msra.mxu0 %v4488
    %5682 = vmatprep.subr.mxu0 %v4492
    %5683 = vmatpush1.msra.mxu0 %v4491
    %5684 = vmatprep.subr.mxu0 %v4495
    %5685 = vmatpush1.msra.mxu0 %v4494
    %5686 = vmatprep.subr.mxu0 %v4498
    %5687 = vmatpush1.msra.mxu0 %v4497
    %5688 = vmatprep.subr.mxu0 %v4501
    %5689 = vmatpush1.msra.mxu0 %v4500
    %5690 = vmatprep.subr.mxu0 %v4504
    %5691 = vmatpush1.msra.mxu0 %v4503
    %5692 = vmatprep.subr.mxu0 %v4507
    %5693 = vmatpush1.msra.mxu0 %v4506
    %5694 = vmatprep.subr.mxu0 %v4510
    %5695 = vmatpush1.msra.mxu0 %v4509
    %5696 = vmatprep.subr.mxu0 0.0
    %5697 = vmatpush1.msra.mxu0 0.0
    %5698 = vmatprep.subr.mxu0 0.0
    %5699 = vmatpush1.msra.mxu0 0.0
    %5700 = vmatprep.subr.mxu0 0.0
    %5701 = vmatpush1.msra.mxu0 0.0
    %5702 = vmatprep.subr.mxu0 0.0
    %5703 = vmatpush1.msra.mxu0 0.0
    %5704 = vmatprep.subr.mxu0 0.0
    %5705 = vmatpush1.msra.mxu0 0.0
    %5706 = vmatprep.subr.mxu0 0.0
    %5707 = vmatpush1.msra.mxu0 0.0
    %5708 = vmatprep.subr.mxu0 0.0
    %5709 = vmatpush1.msra.mxu0 0.0
    %5710 = vmatprep.subr.mxu0 0.0
    %5711 = vmatpush1.msra.mxu0 0.0
    %5712 = vmatprep.subr.mxu0 0.0
    %5713 = vmatpush1.msra.mxu0 0.0
    %5714 = vmatprep.subr.mxu0 0.0
    %5715 = vmatpush1.msra.mxu0 0.0
    %5716 = vmatprep.subr.mxu0 0.0
    %5717 = vmatpush1.msra.mxu0 0.0
    %5718 = vmatprep.subr.mxu0 0.0
    %5719 = vmatpush1.msra.mxu0 0.0
    %5720 = vmatprep.subr.mxu0 0.0
    %5721 = vmatpush1.msra.mxu0 0.0
    %5722 = vmatprep.subr.mxu0 0.0
    %5723 = vmatpush1.msra.mxu0 0.0
    %5724 = vmatprep.subr.mxu0 0.0
    %5725 = vmatpush1.msra.mxu0 0.0
    %5726 = vmatprep.subr.mxu0 0.0
    %5727 = vmatpush1.msra.mxu0 0.0
    %5728 = vmatprep.mubr.f32.mxu0 0.0
    %5729 = vmatmul.mubr.f32.gmra.mrb[0].mxu0 %v5514
    %v5730 = vpop.f32.mrb[0].mxu0
    %v5731 = vadd.f32 0.0, %v5730
    %v5732 = vpop.f32.mrb[0].mxu0
    %v5733 = vadd.f32 0.0, %v5732
    %5734 = vdwg.mxu0
    %5735 = vmatprep.subr.mxu0 0.0
    %5736 = vmatpush1.msra.mxu0 %v4466
    %5737 = vmatprep.subr.mxu0 0.0
    %5738 = vmatpush1.msra.mxu0 %v4469
    %5739 = vmatprep.subr.mxu0 0.0
    %5740 = vmatpush1.msra.mxu0 %v4472
    %5741 = vmatprep.subr.mxu0 0.0
    %5742 = vmatpush1.msra.mxu0 %v4475
    %5743 = vmatprep.subr.mxu0 0.0
    %5744 = vmatpush1.msra.mxu0 %v4478
    %5745 = vmatprep.subr.mxu0 0.0
    %5746 = vmatpush1.msra.mxu0 %v4481
    %5747 = vmatprep.subr.mxu0 0.0
    %5748 = vmatpush1.msra.mxu0 %v4484
    %5749 = vmatprep.subr.mxu0 0.0
    %5750 = vmatpush1.msra.mxu0 %v4487
    %5751 = vmatprep.subr.mxu0 0.0
    %5752 = vmatpush1.msra.mxu0 %v4490
    %5753 = vmatprep.subr.mxu0 0.0
    %5754 = vmatpush1.msra.mxu0 %v4493
    %5755 = vmatprep.subr.mxu0 0.0
    %5756 = vmatpush1.msra.mxu0 %v4496
    %5757 = vmatprep.subr.mxu0 0.0
    %5758 = vmatpush1.msra.mxu0 %v4499
    %5759 = vmatprep.subr.mxu0 0.0
    %5760 = vmatpush1.msra.mxu0 %v4502
    %5761 = vmatprep.subr.mxu0 0.0
    %5762 = vmatpush1.msra.mxu0 %v4505
    %5763 = vmatprep.subr.mxu0 0.0
    %5764 = vmatpush1.msra.mxu0 %v4508
    %5765 = vmatprep.subr.mxu0 0.0
    %5766 = vmatpush1.msra.mxu0 %v4511
    %5767 = vmatprep.subr.mxu0 0.0
    %5768 = vmatpush1.msra.mxu0 0.0
    %5769 = vmatprep.subr.mxu0 0.0
    %5770 = vmatpush1.msra.mxu0 0.0
    %5771 = vmatprep.subr.mxu0 0.0
    %5772 = vmatpush1.msra.mxu0 0.0
    %5773 = vmatprep.subr.mxu0 0.0
    %5774 = vmatpush1.msra.mxu0 0.0
    %5775 = vmatprep.subr.mxu0 0.0
    %5776 = vmatpush1.msra.mxu0 0.0
    %5777 = vmatprep.subr.mxu0 0.0
    %5778 = vmatpush1.msra.mxu0 0.0
    %5779 = vmatprep.subr.mxu0 0.0
    %5780 = vmatpush1.msra.mxu0 0.0
    %5781 = vmatprep.subr.mxu0 0.0
    %5782 = vmatpush1.msra.mxu0 0.0
    %5783 = vmatprep.subr.mxu0 0.0
    %5784 = vmatpush1.msra.mxu0 0.0
    %5785 = vmatprep.subr.mxu0 0.0
    %5786 = vmatpush1.msra.mxu0 0.0
    %5787 = vmatprep.subr.mxu0 0.0
    %5788 = vmatpush1.msra.mxu0 0.0
    %5789 = vmatprep.subr.mxu0 0.0
    %5790 = vmatpush1.msra.mxu0 0.0
    %5791 = vmatprep.subr.mxu0 0.0
    %5792 = vmatpush1.msra.mxu0 0.0
    %5793 = vmatprep.subr.mxu0 0.0
    %5794 = vmatpush1.msra.mxu0 0.0
    %5795 = vmatprep.subr.mxu0 0.0
    %5796 = vmatpush1.msra.mxu0 0.0
    %5797 = vmatprep.subr.mxu0 0.0
    %5798 = vmatpush1.msra.mxu0 0.0
    %5799 = vmatprep.mubr.f32.mxu0 0.0
    %5800 = vmatmul.mubr.f32.gmra.mrb[0].mxu0 %v5514
    %v5801 = vpop.f32.mrb[0].mxu0
    %v5802 = vadd.f32 0.0, %v5801
    %v5803 = vpop.f32.mrb[0].mxu0
    %5804 = vdwg.mxu0
    %v5805 = vadd.f32 %v5517, %v5590
    %v5806 = vsub.f32 0.0, %v5805
    %v5807 = vmul.f32 %v5806, 1.442695
    %v5808 = vpow.pop %v5807
    %v5809 = vadd.f32 %v5808, 1.0
    %v5810 = vrcp.pop %v5809
    %v5811 = vadd.f32 %v5518, %v5592
    %v5812 = vsub.f32 0.0, %v5811
    %v5813 = vmul.f32 %v5812, 1.442695
    %v5814 = vpow.pop %v5813
    %v5815 = vadd.f32 %v5814, 1.0
    %v5816 = vrcp.pop %v5815
    %v5817 = vadd.f32 %v5661, %v4517
    %v5818 = vmul.f32 %v5810, %v5817
    %v5819 = vadd.f32 %v5519, %v5818
    %v5820 = vtanh.pop %v5819
    %v5821 = vsub.f32 1.0, %v5816
    %v5822 = vmul.f32 %v5821, %v5820
    %v5823 = vmul.f32 %v5816, %v5494
    %v5824 = vadd.f32 %v5822, %v5823
    %v5825 = vadd.f32 %v5520, %v5731
    %v5826 = vsub.f32 0.0, %v5825
    %v5827 = vmul.f32 %v5826, 1.442695
    %v5828 = vpow.pop %v5827
    %v5829 = vadd.f32 %v5828, 1.0
    %v5830 = vrcp.pop %v5829
    %v5831 = vadd.f32 %v5521, %v5733
    %v5832 = vsub.f32 0.0, %v5831
    %v5833 = vmul.f32 %v5832, 1.442695
    %v5834 = vpow.pop %v5833
    %v5835 = vadd.f32 %v5834, 1.0
    %v5836 = vrcp.pop %v5835
    %v5837 = vadd.f32 %v5802, %v4525
    %v5838 = vmul.f32 %v5830, %v5837
    %v5839 = vadd.f32 %v5522, %v5838
    %v5840 = vtanh.pop %v5839
    %v5841 = vsub.f32 1.0, %v5836
    %v5842 = vmul.f32 %v5841, %v5840
    %v5843 = vmul.f32 %v5836, %v5514
    %v5844 = vadd.f32 %v5842, %v5843
    %5845 = vst [vmem:[#allocation5 + $0x18] sm:$0xff] %v5824
    %5846 = vst [vmem:[#allocation6 + $0x20] sm:$0xff] %v5844
    %v5847 = vld [vmem:[#allocation2 + $0xc0] sm:$0xff]
    %v5848 = vld [vmem:[#allocation2 + $0xc8] sm:$0xff]
    %v5849 = vld [vmem:[#allocation2 + $0xd0] sm:$0xff]
    %v5850 = vld [vmem:[#allocation2 + $0xa8] sm:$0xff]
    %v5851 = vld [vmem:[#allocation2 + $0xb0] sm:$0xff]
    %v5852 = vld [vmem:[#allocation2 + $0xb8] sm:$0xff]
    %5853 = vmatprep.subr.mxu0 %v4416
    %5854 = vmatpush1.msra.mxu0 %v4415
    %5855 = vmatprep.subr.mxu0 %v4419
    %5856 = vmatpush1.msra.mxu0 %v4418
    %5857 = vmatprep.subr.mxu0 %v4422
    %5858 = vmatpush1.msra.mxu0 %v4421
    %5859 = vmatprep.subr.mxu0 %v4425
    %5860 = vmatpush1.msra.mxu0 %v4424
    %5861 = vmatprep.subr.mxu0 %v4428
    %5862 = vmatpush1.msra.mxu0 %v4427
    %5863 = vmatprep.subr.mxu0 %v4431
    %5864 = vmatpush1.msra.mxu0 %v4430
    %5865 = vmatprep.subr.mxu0 %v4434
    %5866 = vmatpush1.msra.mxu0 %v4433
    %5867 = vmatprep.subr.mxu0 %v4437
    %5868 = vmatpush1.msra.mxu0 %v4436
    %5869 = vmatprep.subr.mxu0 %v4440
    %5870 = vmatpush1.msra.mxu0 %v4439
    %5871 = vmatprep.subr.mxu0 %v4443
    %5872 = vmatpush1.msra.mxu0 %v4442
    %5873 = vmatprep.subr.mxu0 %v4446
    %5874 = vmatpush1.msra.mxu0 %v4445
    %5875 = vmatprep.subr.mxu0 %v4449
    %5876 = vmatpush1.msra.mxu0 %v4448
    %5877 = vmatprep.subr.mxu0 %v4452
    %5878 = vmatpush1.msra.mxu0 %v4451
    %5879 = vmatprep.subr.mxu0 %v4455
    %5880 = vmatpush1.msra.mxu0 %v4454
    %5881 = vmatprep.subr.mxu0 %v4458
    %5882 = vmatpush1.msra.mxu0 %v4457
    %5883 = vmatprep.subr.mxu0 %v4461
    %5884 = vmatpush1.msra.mxu0 %v4460
    %5885 = vmatprep.subr.mxu0 0.0
    %5886 = vmatpush1.msra.mxu0 0.0
    %5887 = vmatprep.subr.mxu0 0.0
    %5888 = vmatpush1.msra.mxu0 0.0
    %5889 = vmatprep.subr.mxu0 0.0
    %5890 = vmatpush1.msra.mxu0 0.0
    %5891 = vmatprep.subr.mxu0 0.0
    %5892 = vmatpush1.msra.mxu0 0.0
    %5893 = vmatprep.subr.mxu0 0.0
    %5894 = vmatpush1.msra.mxu0 0.0
    %5895 = vmatprep.subr.mxu0 0.0
    %5896 = vmatpush1.msra.mxu0 0.0
    %5897 = vmatprep.subr.mxu0 0.0
    %5898 = vmatpush1.msra.mxu0 0.0
    %5899 = vmatprep.subr.mxu0 0.0
    %5900 = vmatpush1.msra.mxu0 0.0
    %5901 = vmatprep.subr.mxu0 0.0
    %5902 = vmatpush1.msra.mxu0 0.0
    %5903 = vmatprep.subr.mxu0 0.0
    %5904 = vmatpush1.msra.mxu0 0.0
    %5905 = vmatprep.subr.mxu0 0.0
    %5906 = vmatpush1.msra.mxu0 0.0
    %5907 = vmatprep.subr.mxu0 0.0
    %5908 = vmatpush1.msra.mxu0 0.0
    %5909 = vmatprep.subr.mxu0 0.0
    %5910 = vmatpush1.msra.mxu0 0.0
    %5911 = vmatprep.subr.mxu0 0.0
    %5912 = vmatpush1.msra.mxu0 0.0
    %5913 = vmatprep.subr.mxu0 0.0
    %5914 = vmatpush1.msra.mxu0 0.0
    %5915 = vmatprep.subr.mxu0 0.0
    %5916 = vmatpush1.msra.mxu0 0.0
    %5917 = vmatprep.mubr.f32.mxu0 0.0
    %5918 = vmatmul.mubr.f32.gmra.mrb[0].mxu0 %v5824
    %v5919 = vpop.f32.mrb[0].mxu0
    %v5920 = vadd.f32 0.0, %v5919
    %v5921 = vpop.f32.mrb[0].mxu0
    %v5922 = vadd.f32 0.0, %v5921
    %5923 = vdwg.mxu0
    %5924 = vmatprep.subr.mxu0 0.0
    %5925 = vmatpush1.msra.mxu0 %v4417
    %5926 = vmatprep.subr.mxu0 0.0
    %5927 = vmatpush1.msra.mxu0 %v4420
    %5928 = vmatprep.subr.mxu0 0.0
    %5929 = vmatpush1.msra.mxu0 %v4423
    %5930 = vmatprep.subr.mxu0 0.0
    %5931 = vmatpush1.msra.mxu0 %v4426
    %5932 = vmatprep.subr.mxu0 0.0
    %5933 = vmatpush1.msra.mxu0 %v4429
    %5934 = vmatprep.subr.mxu0 0.0
    %5935 = vmatpush1.msra.mxu0 %v4432
    %5936 = vmatprep.subr.mxu0 0.0
    %5937 = vmatpush1.msra.mxu0 %v4435
    %5938 = vmatprep.subr.mxu0 0.0
    %5939 = vmatpush1.msra.mxu0 %v4438
    %5940 = vmatprep.subr.mxu0 0.0
    %5941 = vmatpush1.msra.mxu0 %v4441
    %5942 = vmatprep.subr.mxu0 0.0
    %5943 = vmatpush1.msra.mxu0 %v4444
    %5944 = vmatprep.subr.mxu0 0.0
    %5945 = vmatpush1.msra.mxu0 %v4447
    %5946 = vmatprep.subr.mxu0 0.0
    %5947 = vmatpush1.msra.mxu0 %v4450
    %5948 = vmatprep.subr.mxu0 0.0
    %5949 = vmatpush1.msra.mxu0 %v4453
    %5950 = vmatprep.subr.mxu0 0.0
    %5951 = vmatpush1.msra.mxu0 %v4456
    %5952 = vmatprep.subr.mxu0 0.0
    %5953 = vmatpush1.msra.mxu0 %v4459
    %5954 = vmatprep.subr.mxu0 0.0
    %5955 = vmatpush1.msra.mxu0 %v4462
    %5956 = vmatprep.subr.mxu0 0.0
    %5957 = vmatpush1.msra.mxu0 0.0
    %5958 = vmatprep.subr.mxu0 0.0
    %5959 = vmatpush1.msra.mxu0 0.0
    %5960 = vmatprep.subr.mxu0 0.0
    %5961 = vmatpush1.msra.mxu0 0.0
    %5962 = vmatprep.subr.mxu0 0.0
    %5963 = vmatpush1.msra.mxu0 0.0
    %5964 = vmatprep.subr.mxu0 0.0
    %5965 = vmatpush1.msra.mxu0 0.0
    %5966 = vmatprep.subr.mxu0 0.0
    %5967 = vmatpush1.msra.mxu0 0.0
    %5968 = vmatprep.subr.mxu0 0.0
    %5969 = vmatpush1.msra.mxu0 0.0
    %5970 = vmatprep.subr.mxu0 0.0
    %5971 = vmatpush1.msra.mxu0 0.0
    %5972 = vmatprep.subr.mxu0 0.0
    %5973 = vmatpush1.msra.mxu0 0.0
    %5974 = vmatprep.subr.mxu0 0.0
    %5975 = vmatpush1.msra.mxu0 0.0
    %5976 = vmatprep.subr.mxu0 0.0
    %5977 = vmatpush1.msra.mxu0 0.0
    %5978 = vmatprep.subr.mxu0 0.0
    %5979 = vmatpush1.msra.mxu0 0.0
    %5980 = vmatprep.subr.mxu0 0.0
    %5981 = vmatpush1.msra.mxu0 0.0
    %5982 = vmatprep.subr.mxu0 0.0
    %5983 = vmatpush1.msra.mxu0 0.0
    %5984 = vmatprep.subr.mxu0 0.0
    %5985 = vmatpush1.msra.mxu0 0.0
    %5986 = vmatprep.subr.mxu0 0.0
    %5987 = vmatpush1.msra.mxu0 0.0
    %5988 = vmatprep.mubr.f32.mxu0 0.0
    %5989 = vmatmul.mubr.f32.gmra.mrb[0].mxu0 %v5824
    %v5990 = vpop.f32.mrb[0].mxu0
    %v5991 = vadd.f32 0.0, %v5990
    %v5992 = vpop.f32.mrb[0].mxu0
    %5993 = vdwg.mxu0
    %5994 = vmatprep.subr.mxu0 %v4465
    %5995 = vmatpush1.msra.mxu0 %v4464
    %5996 = vmatprep.subr.mxu0 %v4468
    %5997 = vmatpush1.msra.mxu0 %v4467
    %5998 = vmatprep.subr.mxu0 %v4471
    %5999 = vmatpush1.msra.mxu0 %v4470
    %6000 = vmatprep.subr.mxu0 %v4474
    %6001 = vmatpush1.msra.mxu0 %v4473
    %6002 = vmatprep.subr.mxu0 %v4477
    %6003 = vmatpush1.msra.mxu0 %v4476
    %6004 = vmatprep.subr.mxu0 %v4480
    %6005 = vmatpush1.msra.mxu0 %v4479
    %6006 = vmatprep.subr.mxu0 %v4483
    %6007 = vmatpush1.msra.mxu0 %v4482
    %6008 = vmatprep.subr.mxu0 %v4486
    %6009 = vmatpush1.msra.mxu0 %v4485
    %6010 = vmatprep.subr.mxu0 %v4489
    %6011 = vmatpush1.msra.mxu0 %v4488
    %6012 = vmatprep.subr.mxu0 %v4492
    %6013 = vmatpush1.msra.mxu0 %v4491
    %6014 = vmatprep.subr.mxu0 %v4495
    %6015 = vmatpush1.msra.mxu0 %v4494
    %6016 = vmatprep.subr.mxu0 %v4498
    %6017 = vmatpush1.msra.mxu0 %v4497
    %6018 = vmatprep.subr.mxu0 %v4501
    %6019 = vmatpush1.msra.mxu0 %v4500
    %6020 = vmatprep.subr.mxu0 %v4504
    %6021 = vmatpush1.msra.mxu0 %v4503
    %6022 = vmatprep.subr.mxu0 %v4507
    %6023 = vmatpush1.msra.mxu0 %v4506
    %6024 = vmatprep.subr.mxu0 %v4510
    %6025 = vmatpush1.msra.mxu0 %v4509
    %6026 = vmatprep.subr.mxu0 0.0
    %6027 = vmatpush1.msra.mxu0 0.0
    %6028 = vmatprep.subr.mxu0 0.0
    %6029 = vmatpush1.msra.mxu0 0.0
    %6030 = vmatprep.subr.mxu0 0.0
    %6031 = vmatpush1.msra.mxu0 0.0
    %6032 = vmatprep.subr.mxu0 0.0
    %6033 = vmatpush1.msra.mxu0 0.0
    %6034 = vmatprep.subr.mxu0 0.0
    %6035 = vmatpush1.msra.mxu0 0.0
    %6036 = vmatprep.subr.mxu0 0.0
    %6037 = vmatpush1.msra.mxu0 0.0
    %6038 = vmatprep.subr.mxu0 0.0
    %6039 = vmatpush1.msra.mxu0 0.0
    %6040 = vmatprep.subr.mxu0 0.0
    %6041 = vmatpush1.msra.mxu0 0.0
    %6042 = vmatprep.subr.mxu0 0.0
    %6043 = vmatpush1.msra.mxu0 0.0
    %6044 = vmatprep.subr.mxu0 0.0
    %6045 = vmatpush1.msra.mxu0 0.0
    %6046 = vmatprep.subr.mxu0 0.0
    %6047 = vmatpush1.msra.mxu0 0.0
    %6048 = vmatprep.subr.mxu0 0.0
    %6049 = vmatpush1.msra.mxu0 0.0
    %6050 = vmatprep.subr.mxu0 0.0
    %6051 = vmatpush1.msra.mxu0 0.0
    %6052 = vmatprep.subr.mxu0 0.0
    %6053 = vmatpush1.msra.mxu0 0.0
    %6054 = vmatprep.subr.mxu0 0.0
    %6055 = vmatpush1.msra.mxu0 0.0
    %6056 = vmatprep.subr.mxu0 0.0
    %6057 = vmatpush1.msra.mxu0 0.0
    %6058 = vmatprep.mubr.f32.mxu0 0.0
    %6059 = vmatmul.mubr.f32.gmra.mrb[0].mxu0 %v5844
    %v6060 = vpop.f32.mrb[0].mxu0
    %v6061 = vadd.f32 0.0, %v6060
    %v6062 = vpop.f32.mrb[0].mxu0
    %v6063 = vadd.f32 0.0, %v6062
    %6064 = vdwg.mxu0
    %6065 = vmatprep.subr.mxu0 0.0
    %6066 = vmatpush1.msra.mxu0 %v4466
    %6067 = vmatprep.subr.mxu0 0.0
    %6068 = vmatpush1.msra.mxu0 %v4469
    %6069 = vmatprep.subr.mxu0 0.0
    %6070 = vmatpush1.msra.mxu0 %v4472
    %6071 = vmatprep.subr.mxu0 0.0
    %6072 = vmatpush1.msra.mxu0 %v4475
    %6073 = vmatprep.subr.mxu0 0.0
    %6074 = vmatpush1.msra.mxu0 %v4478
    %6075 = vmatprep.subr.mxu0 0.0
    %6076 = vmatpush1.msra.mxu0 %v4481
    %6077 = vmatprep.subr.mxu0 0.0
    %6078 = vmatpush1.msra.mxu0 %v4484
    %6079 = vmatprep.subr.mxu0 0.0
    %6080 = vmatpush1.msra.mxu0 %v4487
    %6081 = vmatprep.subr.mxu0 0.0
    %6082 = vmatpush1.msra.mxu0 %v4490
    %6083 = vmatprep.subr.mxu0 0.0
    %6084 = vmatpush1.msra.mxu0 %v4493
    %6085 = vmatprep.subr.mxu0 0.0
    %6086 = vmatpush1.msra.mxu0 %v4496
    %6087 = vmatprep.subr.mxu0 0.0
    %6088 = vmatpush1.msra.mxu0 %v4499
    %6089 = vmatprep.subr.mxu0 0.0
    %6090 = vmatpush1.msra.mxu0 %v4502
    %6091 = vmatprep.subr.mxu0 0.0
    %6092 = vmatpush1.msra.mxu0 %v4505
    %6093 = vmatprep.subr.mxu0 0.0
    %6094 = vmatpush1.msra.mxu0 %v4508
    %6095 = vmatprep.subr.mxu0 0.0
    %6096 = vmatpush1.msra.mxu0 %v4511
    %6097 = vmatprep.subr.mxu0 0.0
    %6098 = vmatpush1.msra.mxu0 0.0
    %6099 = vmatprep.subr.mxu0 0.0
    %6100 = vmatpush1.msra.mxu0 0.0
    %6101 = vmatprep.subr.mxu0 0.0
    %6102 = vmatpush1.msra.mxu0 0.0
    %6103 = vmatprep.subr.mxu0 0.0
    %6104 = vmatpush1.msra.mxu0 0.0
    %6105 = vmatprep.subr.mxu0 0.0
    %6106 = vmatpush1.msra.mxu0 0.0
    %6107 = vmatprep.subr.mxu0 0.0
    %6108 = vmatpush1.msra.mxu0 0.0
    %6109 = vmatprep.subr.mxu0 0.0
    %6110 = vmatpush1.msra.mxu0 0.0
    %6111 = vmatprep.subr.mxu0 0.0
    %6112 = vmatpush1.msra.mxu0 0.0
    %6113 = vmatprep.subr.mxu0 0.0
    %6114 = vmatpush1.msra.mxu0 0.0
    %6115 = vmatprep.subr.mxu0 0.0
    %6116 = vmatpush1.msra.mxu0 0.0
    %6117 = vmatprep.subr.mxu0 0.0
    %6118 = vmatpush1.msra.mxu0 0.0
    %6119 = vmatprep.subr.mxu0 0.0
    %6120 = vmatpush1.msra.mxu0 0.0
    %6121 = vmatprep.subr.mxu0 0.0
    %6122 = vmatpush1.msra.mxu0 0.0
    %6123 = vmatprep.subr.mxu0 0.0
    %6124 = vmatpush1.msra.mxu0 0.0
    %6125 = vmatprep.subr.mxu0 0.0
    %6126 = vmatpush1.msra.mxu0 0.0
    %6127 = vmatprep.subr.mxu0 0.0
    %6128 = vmatpush1.msra.mxu0 0.0
    %6129 = vmatprep.mubr.f32.mxu0 0.0
    %6130 = vmatmul.mubr.f32.gmra.mrb[0].mxu0 %v5844
    %v6131 = vpop.f32.mrb[0].mxu0
    %v6132 = vadd.f32 0.0, %v6131
    %v6133 = vpop.f32.mrb[0].mxu0
    %6134 = vdwg.mxu0
    %v6135 = vadd.f32 %v5847, %v5920
    %v6136 = vsub.f32 0.0, %v6135
    %v6137 = vmul.f32 %v6136, 1.442695
    %v6138 = vpow.pop %v6137
    %v6139 = vadd.f32 %v6138, 1.0
    %v6140 = vrcp.pop %v6139
    %v6141 = vadd.f32 %v5848, %v5922
    %v6142 = vsub.f32 0.0, %v6141
    %v6143 = vmul.f32 %v6142, 1.442695
    %v6144 = vpow.pop %v6143
    %v6145 = vadd.f32 %v6144, 1.0
    %v6146 = vrcp.pop %v6145
    %v6147 = vadd.f32 %v5991, %v4517
    %v6148 = vmul.f32 %v6140, %v6147
    %v6149 = vadd.f32 %v5849, %v6148
    %v6150 = vtanh.pop %v6149
    %v6151 = vsub.f32 1.0, %v6146
    %v6152 = vmul.f32 %v6151, %v6150
    %v6153 = vmul.f32 %v6146, %v5824
    %v6154 = vadd.f32 %v6152, %v6153
    %v6155 = vadd.f32 %v5850, %v6061
    %v6156 = vsub.f32 0.0, %v6155
    %v6157 = vmul.f32 %v6156, 1.442695
    %v6158 = vpow.pop %v6157
    %v6159 = vadd.f32 %v6158, 1.0
    %v6160 = vrcp.pop %v6159
    %v6161 = vadd.f32 %v5851, %v6063
    %v6162 = vsub.f32 0.0, %v6161
    %v6163 = vmul.f32 %v6162, 1.442695
    %v6164 = vpow.pop %v6163
    %v6165 = vadd.f32 %v6164, 1.0
    %v6166 = vrcp.pop %v6165
    %v6167 = vadd.f32 %v6132, %v4525
    %v6168 = vmul.f32 %v6160, %v6167
    %v6169 = vadd.f32 %v5852, %v6168
    %v6170 = vtanh.pop %v6169
    %v6171 = vsub.f32 1.0, %v6166
    %v6172 = vmul.f32 %v6171, %v6170
    %v6173 = vmul.f32 %v6166, %v5844
    %v6174 = vadd.f32 %v6172, %v6173
    %6175 = vst [vmem:[#allocation5 + $0x20] sm:$0xff] %v6154
    %6176 = vst [vmem:[#allocation6 + $0x18] sm:$0xff] %v6174
    %v6177 = vld [vmem:[#allocation2 + $0xf0] sm:$0xff]
    %v6178 = vld [vmem:[#allocation2 + $0xf8] sm:$0xff]
    %v6179 = vld [vmem:[#allocation2 + $0x100] sm:$0xff]
    %v6180 = vld [vmem:[#allocation2 + $0x78] sm:$0xff]
    %v6181 = vld [vmem:[#allocation2 + $0x80] sm:$0xff]
    %v6182 = vld [vmem:[#allocation2 + $0x88] sm:$0xff]
    %6183 = vmatprep.subr.mxu0 %v4416
    %6184 = vmatpush1.msra.mxu0 %v4415
    %6185 = vmatprep.subr.mxu0 %v4419
    %6186 = vmatpush1.msra.mxu0 %v4418
    %6187 = vmatprep.subr.mxu0 %v4422
    %6188 = vmatpush1.msra.mxu0 %v4421
    %6189 = vmatprep.subr.mxu0 %v4425
    %6190 = vmatpush1.msra.mxu0 %v4424
    %6191 = vmatprep.subr.mxu0 %v4428
    %6192 = vmatpush1.msra.mxu0 %v4427
    %6193 = vmatprep.subr.mxu0 %v4431
    %6194 = vmatpush1.msra.mxu0 %v4430
    %6195 = vmatprep.subr.mxu0 %v4434
    %6196 = vmatpush1.msra.mxu0 %v4433
    %6197 = vmatprep.subr.mxu0 %v4437
    %6198 = vmatpush1.msra.mxu0 %v4436
    %6199 = vmatprep.subr.mxu0 %v4440
    %6200 = vmatpush1.msra.mxu0 %v4439
    %6201 = vmatprep.subr.mxu0 %v4443
    %6202 = vmatpush1.msra.mxu0 %v4442
    %6203 = vmatprep.subr.mxu0 %v4446
    %6204 = vmatpush1.msra.mxu0 %v4445
    %6205 = vmatprep.subr.mxu0 %v4449
    %6206 = vmatpush1.msra.mxu0 %v4448
    %6207 = vmatprep.subr.mxu0 %v4452
    %6208 = vmatpush1.msra.mxu0 %v4451
    %6209 = vmatprep.subr.mxu0 %v4455
    %6210 = vmatpush1.msra.mxu0 %v4454
    %6211 = vmatprep.subr.mxu0 %v4458
    %6212 = vmatpush1.msra.mxu0 %v4457
    %6213 = vmatprep.subr.mxu0 %v4461
    %6214 = vmatpush1.msra.mxu0 %v4460
    %6215 = vmatprep.subr.mxu0 0.0
    %6216 = vmatpush1.msra.mxu0 0.0
    %6217 = vmatprep.subr.mxu0 0.0
    %6218 = vmatpush1.msra.mxu0 0.0
    %6219 = vmatprep.subr.mxu0 0.0
    %6220 = vmatpush1.msra.mxu0 0.0
    %6221 = vmatprep.subr.mxu0 0.0
    %6222 = vmatpush1.msra.mxu0 0.0
    %6223 = vmatprep.subr.mxu0 0.0
    %6224 = vmatpush1.msra.mxu0 0.0
    %6225 = vmatprep.subr.mxu0 0.0
    %6226 = vmatpush1.msra.mxu0 0.0
    %6227 = vmatprep.subr.mxu0 0.0
    %6228 = vmatpush1.msra.mxu0 0.0
    %6229 = vmatprep.subr.mxu0 0.0
    %6230 = vmatpush1.msra.mxu0 0.0
    %6231 = vmatprep.subr.mxu0 0.0
    %6232 = vmatpush1.msra.mxu0 0.0
    %6233 = vmatprep.subr.mxu0 0.0
    %6234 = vmatpush1.msra.mxu0 0.0
    %6235 = vmatprep.subr.mxu0 0.0
    %6236 = vmatpush1.msra.mxu0 0.0
    %6237 = vmatprep.subr.mxu0 0.0
    %6238 = vmatpush1.msra.mxu0 0.0
    %6239 = vmatprep.subr.mxu0 0.0
    %6240 = vmatpush1.msra.mxu0 0.0
    %6241 = vmatprep.subr.mxu0 0.0
    %6242 = vmatpush1.msra.mxu0 0.0
    %6243 = vmatprep.subr.mxu0 0.0
    %6244 = vmatpush1.msra.mxu0 0.0
    %6245 = vmatprep.subr.mxu0 0.0
    %6246 = vmatpush1.msra.mxu0 0.0
    %6247 = vmatprep.mubr.f32.mxu0 0.0
    %6248 = vmatmul.mubr.f32.gmra.mrb[0].mxu0 %v6154
    %v6249 = vpop.f32.mrb[0].mxu0
    %v6250 = vadd.f32 0.0, %v6249
    %v6251 = vpop.f32.mrb[0].mxu0
    %v6252 = vadd.f32 0.0, %v6251
    %6253 = vdwg.mxu0
    %6254 = vmatprep.subr.mxu0 0.0
    %6255 = vmatpush1.msra.mxu0 %v4417
    %6256 = vmatprep.subr.mxu0 0.0
    %6257 = vmatpush1.msra.mxu0 %v4420
    %6258 = vmatprep.subr.mxu0 0.0
    %6259 = vmatpush1.msra.mxu0 %v4423
    %6260 = vmatprep.subr.mxu0 0.0
    %6261 = vmatpush1.msra.mxu0 %v4426
    %6262 = vmatprep.subr.mxu0 0.0
    %6263 = vmatpush1.msra.mxu0 %v4429
    %6264 = vmatprep.subr.mxu0 0.0
    %6265 = vmatpush1.msra.mxu0 %v4432
    %6266 = vmatprep.subr.mxu0 0.0
    %6267 = vmatpush1.msra.mxu0 %v4435
    %6268 = vmatprep.subr.mxu0 0.0
    %6269 = vmatpush1.msra.mxu0 %v4438
    %6270 = vmatprep.subr.mxu0 0.0
    %6271 = vmatpush1.msra.mxu0 %v4441
    %6272 = vmatprep.subr.mxu0 0.0
    %6273 = vmatpush1.msra.mxu0 %v4444
    %6274 = vmatprep.subr.mxu0 0.0
    %6275 = vmatpush1.msra.mxu0 %v4447
    %6276 = vmatprep.subr.mxu0 0.0
    %6277 = vmatpush1.msra.mxu0 %v4450
    %6278 = vmatprep.subr.mxu0 0.0
    %6279 = vmatpush1.msra.mxu0 %v4453
    %6280 = vmatprep.subr.mxu0 0.0
    %6281 = vmatpush1.msra.mxu0 %v4456
    %6282 = vmatprep.subr.mxu0 0.0
    %6283 = vmatpush1.msra.mxu0 %v4459
    %6284 = vmatprep.subr.mxu0 0.0
    %6285 = vmatpush1.msra.mxu0 %v4462
    %6286 = vmatprep.subr.mxu0 0.0
    %6287 = vmatpush1.msra.mxu0 0.0
    %6288 = vmatprep.subr.mxu0 0.0
    %6289 = vmatpush1.msra.mxu0 0.0
    %6290 = vmatprep.subr.mxu0 0.0
    %6291 = vmatpush1.msra.mxu0 0.0
    %6292 = vmatprep.subr.mxu0 0.0
    %6293 = vmatpush1.msra.mxu0 0.0
    %6294 = vmatprep.subr.mxu0 0.0
    %6295 = vmatpush1.msra.mxu0 0.0
    %6296 = vmatprep.subr.mxu0 0.0
    %6297 = vmatpush1.msra.mxu0 0.0
    %6298 = vmatprep.subr.mxu0 0.0
    %6299 = vmatpush1.msra.mxu0 0.0
    %6300 = vmatprep.subr.mxu0 0.0
    %6301 = vmatpush1.msra.mxu0 0.0
    %6302 = vmatprep.subr.mxu0 0.0
    %6303 = vmatpush1.msra.mxu0 0.0
    %6304 = vmatprep.subr.mxu0 0.0
    %6305 = vmatpush1.msra.mxu0 0.0
    %6306 = vmatprep.subr.mxu0 0.0
    %6307 = vmatpush1.msra.mxu0 0.0
    %6308 = vmatprep.subr.mxu0 0.0
    %6309 = vmatpush1.msra.mxu0 0.0
    %6310 = vmatprep.subr.mxu0 0.0
    %6311 = vmatpush1.msra.mxu0 0.0
    %6312 = vmatprep.subr.mxu0 0.0
    %6313 = vmatpush1.msra.mxu0 0.0
    %6314 = vmatprep.subr.mxu0 0.0
    %6315 = vmatpush1.msra.mxu0 0.0
    %6316 = vmatprep.subr.mxu0 0.0
    %6317 = vmatpush1.msra.mxu0 0.0
    %6318 = vmatprep.mubr.f32.mxu0 0.0
    %6319 = vmatmul.mubr.f32.gmra.mrb[0].mxu0 %v6154
    %v6320 = vpop.f32.mrb[0].mxu0
    %v6321 = vadd.f32 0.0, %v6320
    %v6322 = vpop.f32.mrb[0].mxu0
    %6323 = vdwg.mxu0
    %6324 = vmatprep.subr.mxu0 %v4465
    %6325 = vmatpush1.msra.mxu0 %v4464
    %6326 = vmatprep.subr.mxu0 %v4468
    %6327 = vmatpush1.msra.mxu0 %v4467
    %6328 = vmatprep.subr.mxu0 %v4471
    %6329 = vmatpush1.msra.mxu0 %v4470
    %6330 = vmatprep.subr.mxu0 %v4474
    %6331 = vmatpush1.msra.mxu0 %v4473
    %6332 = vmatprep.subr.mxu0 %v4477
    %6333 = vmatpush1.msra.mxu0 %v4476
    %6334 = vmatprep.subr.mxu0 %v4480
    %6335 = vmatpush1.msra.mxu0 %v4479
    %6336 = vmatprep.subr.mxu0 %v4483
    %6337 = vmatpush1.msra.mxu0 %v4482
    %6338 = vmatprep.subr.mxu0 %v4486
    %6339 = vmatpush1.msra.mxu0 %v4485
    %6340 = vmatprep.subr.mxu0 %v4489
    %6341 = vmatpush1.msra.mxu0 %v4488
    %6342 = vmatprep.subr.mxu0 %v4492
    %6343 = vmatpush1.msra.mxu0 %v4491
    %6344 = vmatprep.subr.mxu0 %v4495
    %6345 = vmatpush1.msra.mxu0 %v4494
    %6346 = vmatprep.subr.mxu0 %v4498
    %6347 = vmatpush1.msra.mxu0 %v4497
    %6348 = vmatprep.subr.mxu0 %v4501
    %6349 = vmatpush1.msra.mxu0 %v4500
    %6350 = vmatprep.subr.mxu0 %v4504
    %6351 = vmatpush1.msra.mxu0 %v4503
    %6352 = vmatprep.subr.mxu0 %v4507
    %6353 = vmatpush1.msra.mxu0 %v4506
    %6354 = vmatprep.subr.mxu0 %v4510
    %6355 = vmatpush1.msra.mxu0 %v4509
    %6356 = vmatprep.subr.mxu0 0.0
    %6357 = vmatpush1.msra.mxu0 0.0
    %6358 = vmatprep.subr.mxu0 0.0
    %6359 = vmatpush1.msra.mxu0 0.0
    %6360 = vmatprep.subr.mxu0 0.0
    %6361 = vmatpush1.msra.mxu0 0.0
    %6362 = vmatprep.subr.mxu0 0.0
    %6363 = vmatpush1.msra.mxu0 0.0
    %6364 = vmatprep.subr.mxu0 0.0
    %6365 = vmatpush1.msra.mxu0 0.0
    %6366 = vmatprep.subr.mxu0 0.0
    %6367 = vmatpush1.msra.mxu0 0.0
    %6368 = vmatprep.subr.mxu0 0.0
    %6369 = vmatpush1.msra.mxu0 0.0
    %6370 = vmatprep.subr.mxu0 0.0
    %6371 = vmatpush1.msra.mxu0 0.0
    %6372 = vmatprep.subr.mxu0 0.0
    %6373 = vmatpush1.msra.mxu0 0.0
    %6374 = vmatprep.subr.mxu0 0.0
    %6375 = vmatpush1.msra.mxu0 0.0
    %6376 = vmatprep.subr.mxu0 0.0
    %6377 = vmatpush1.msra.mxu0 0.0
    %6378 = vmatprep.subr.mxu0 0.0
    %6379 = vmatpush1.msra.mxu0 0.0
    %6380 = vmatprep.subr.mxu0 0.0
    %6381 = vmatpush1.msra.mxu0 0.0
    %6382 = vmatprep.subr.mxu0 0.0
    %6383 = vmatpush1.msra.mxu0 0.0
    %6384 = vmatprep.subr.mxu0 0.0
    %6385 = vmatpush1.msra.mxu0 0.0
    %6386 = vmatprep.subr.mxu0 0.0
    %6387 = vmatpush1.msra.mxu0 0.0
    %6388 = vmatprep.mubr.f32.mxu0 0.0
    %6389 = vmatmul.mubr.f32.gmra.mrb[0].mxu0 %v6174
    %v6390 = vpop.f32.mrb[0].mxu0
    %v6391 = vadd.f32 0.0, %v6390
    %v6392 = vpop.f32.mrb[0].mxu0
    %v6393 = vadd.f32 0.0, %v6392
    %6394 = vdwg.mxu0
    %6395 = vmatprep.subr.mxu0 0.0
    %6396 = vmatpush1.msra.mxu0 %v4466
    %6397 = vmatprep.subr.mxu0 0.0
    %6398 = vmatpush1.msra.mxu0 %v4469
    %6399 = vmatprep.subr.mxu0 0.0
    %6400 = vmatpush1.msra.mxu0 %v4472
    %6401 = vmatprep.subr.mxu0 0.0
    %6402 = vmatpush1.msra.mxu0 %v4475
    %6403 = vmatprep.subr.mxu0 0.0
    %6404 = vmatpush1.msra.mxu0 %v4478
    %6405 = vmatprep.subr.mxu0 0.0
    %6406 = vmatpush1.msra.mxu0 %v4481
    %6407 = vmatprep.subr.mxu0 0.0
    %6408 = vmatpush1.msra.mxu0 %v4484
    %6409 = vmatprep.subr.mxu0 0.0
    %6410 = vmatpush1.msra.mxu0 %v4487
    %6411 = vmatprep.subr.mxu0 0.0
    %6412 = vmatpush1.msra.mxu0 %v4490
    %6413 = vmatprep.subr.mxu0 0.0
    %6414 = vmatpush1.msra.mxu0 %v4493
    %6415 = vmatprep.subr.mxu0 0.0
    %6416 = vmatpush1.msra.mxu0 %v4496
    %6417 = vmatprep.subr.mxu0 0.0
    %6418 = vmatpush1.msra.mxu0 %v4499
    %6419 = vmatprep.subr.mxu0 0.0
    %6420 = vmatpush1.msra.mxu0 %v4502
    %6421 = vmatprep.subr.mxu0 0.0
    %6422 = vmatpush1.msra.mxu0 %v4505
    %6423 = vmatprep.subr.mxu0 0.0
    %6424 = vmatpush1.msra.mxu0 %v4508
    %6425 = vmatprep.subr.mxu0 0.0
    %6426 = vmatpush1.msra.mxu0 %v4511
    %6427 = vmatprep.subr.mxu0 0.0
    %6428 = vmatpush1.msra.mxu0 0.0
    %6429 = vmatprep.subr.mxu0 0.0
    %6430 = vmatpush1.msra.mxu0 0.0
    %6431 = vmatprep.subr.mxu0 0.0
    %6432 = vmatpush1.msra.mxu0 0.0
    %6433 = vmatprep.subr.mxu0 0.0
    %6434 = vmatpush1.msra.mxu0 0.0
    %6435 = vmatprep.subr.mxu0 0.0
    %6436 = vmatpush1.msra.mxu0 0.0
    %6437 = vmatprep.subr.mxu0 0.0
    %6438 = vmatpush1.msra.mxu0 0.0
    %6439 = vmatprep.subr.mxu0 0.0
    %6440 = vmatpush1.msra.mxu0 0.0
    %6441 = vmatprep.subr.mxu0 0.0
    %6442 = vmatpush1.msra.mxu0 0.0
    %6443 = vmatprep.subr.mxu0 0.0
    %6444 = vmatpush1.msra.mxu0 0.0
    %6445 = vmatprep.subr.mxu0 0.0
    %6446 = vmatpush1.msra.mxu0 0.0
    %6447 = vmatprep.subr.mxu0 0.0
    %6448 = vmatpush1.msra.mxu0 0.0
    %6449 = vmatprep.subr.mxu0 0.0
    %6450 = vmatpush1.msra.mxu0 0.0
    %6451 = vmatprep.subr.mxu0 0.0
    %6452 = vmatpush1.msra.mxu0 0.0
    %6453 = vmatprep.subr.mxu0 0.0
    %6454 = vmatpush1.msra.mxu0 0.0
    %6455 = vmatprep.subr.mxu0 0.0
    %6456 = vmatpush1.msra.mxu0 0.0
    %6457 = vmatprep.subr.mxu0 0.0
    %6458 = vmatpush1.msra.mxu0 0.0
    %6459 = vmatprep.mubr.f32.mxu0 0.0
    %6460 = vmatmul.mubr.f32.gmra.mrb[0].mxu0 %v6174
    %v6461 = vpop.f32.mrb[0].mxu0
    %v6462 = vadd.f32 0.0, %v6461
    %v6463 = vpop.f32.mrb[0].mxu0
    %6464 = vdwg.mxu0
    %v6465 = vadd.f32 %v6177, %v6250
    %v6466 = vsub.f32 0.0, %v6465
    %v6467 = vmul.f32 %v6466, 1.442695
    %v6468 = vpow.pop %v6467
    %v6469 = vadd.f32 %v6468, 1.0
    %v6470 = vrcp.pop %v6469
    %v6471 = vadd.f32 %v6178, %v6252
    %v6472 = vsub.f32 0.0, %v6471
    %v6473 = vmul.f32 %v6472, 1.442695
    %v6474 = vpow.pop %v6473
    %v6475 = vadd.f32 %v6474, 1.0
    %v6476 = vrcp.pop %v6475
    %v6477 = vadd.f32 %v6321, %v4517
    %v6478 = vmul.f32 %v6470, %v6477
    %v6479 = vadd.f32 %v6179, %v6478
    %v6480 = vtanh.pop %v6479
    %v6481 = vsub.f32 1.0, %v6476
    %v6482 = vmul.f32 %v6481, %v6480
    %v6483 = vmul.f32 %v6476, %v6154
    %v6484 = vadd.f32 %v6482, %v6483
    %v6485 = vadd.f32 %v6180, %v6391
    %v6486 = vsub.f32 0.0, %v6485
    %v6487 = vmul.f32 %v6486, 1.442695
    %v6488 = vpow.pop %v6487
    %v6489 = vadd.f32 %v6488, 1.0
    %v6490 = vrcp.pop %v6489
    %v6491 = vadd.f32 %v6181, %v6393
    %v6492 = vsub.f32 0.0, %v6491
    %v6493 = vmul.f32 %v6492, 1.442695
    %v6494 = vpow.pop %v6493
    %v6495 = vadd.f32 %v6494, 1.0
    %v6496 = vrcp.pop %v6495
    %v6497 = vadd.f32 %v6462, %v4525
    %v6498 = vmul.f32 %v6490, %v6497
    %v6499 = vadd.f32 %v6182, %v6498
    %v6500 = vtanh.pop %v6499
    %v6501 = vsub.f32 1.0, %v6496
    %v6502 = vmul.f32 %v6501, %v6500
    %v6503 = vmul.f32 %v6496, %v6174
    %v6504 = vadd.f32 %v6502, %v6503
    %6505 = vst [vmem:[#allocation5 + $0x28] sm:$0xff] %v6484
    %6506 = vst [vmem:[#allocation6 + $0x10] sm:$0xff] %v6504
    %v6507 = vld [vmem:[#allocation2 + $0x120] sm:$0xff]
    %v6508 = vld [vmem:[#allocation2 + $0x128] sm:$0xff]
    %v6509 = vld [vmem:[#allocation2 + $0x130] sm:$0xff]
    %v6510 = vld [vmem:[#allocation2 + $0x48] sm:$0xff]
    %v6511 = vld [vmem:[#allocation2 + $0x50] sm:$0xff]
    %v6512 = vld [vmem:[#allocation2 + $0x58] sm:$0xff]
    %6513 = vmatprep.subr.mxu0 %v4416
    %6514 = vmatpush1.msra.mxu0 %v4415
    %6515 = vmatprep.subr.mxu0 %v4419
    %6516 = vmatpush1.msra.mxu0 %v4418
    %6517 = vmatprep.subr.mxu0 %v4422
    %6518 = vmatpush1.msra.mxu0 %v4421
    %6519 = vmatprep.subr.mxu0 %v4425
    %6520 = vmatpush1.msra.mxu0 %v4424
    %6521 = vmatprep.subr.mxu0 %v4428
    %6522 = vmatpush1.msra.mxu0 %v4427
    %6523 = vmatprep.subr.mxu0 %v4431
    %6524 = vmatpush1.msra.mxu0 %v4430
    %6525 = vmatprep.subr.mxu0 %v4434
    %6526 = vmatpush1.msra.mxu0 %v4433
    %6527 = vmatprep.subr.mxu0 %v4437
    %6528 = vmatpush1.msra.mxu0 %v4436
    %6529 = vmatprep.subr.mxu0 %v4440
    %6530 = vmatpush1.msra.mxu0 %v4439
    %6531 = vmatprep.subr.mxu0 %v4443
    %6532 = vmatpush1.msra.mxu0 %v4442
    %6533 = vmatprep.subr.mxu0 %v4446
    %6534 = vmatpush1.msra.mxu0 %v4445
    %6535 = vmatprep.subr.mxu0 %v4449
    %6536 = vmatpush1.msra.mxu0 %v4448
    %6537 = vmatprep.subr.mxu0 %v4452
    %6538 = vmatpush1.msra.mxu0 %v4451
    %6539 = vmatprep.subr.mxu0 %v4455
    %6540 = vmatpush1.msra.mxu0 %v4454
    %6541 = vmatprep.subr.mxu0 %v4458
    %6542 = vmatpush1.msra.mxu0 %v4457
    %6543 = vmatprep.subr.mxu0 %v4461
    %6544 = vmatpush1.msra.mxu0 %v4460
    %6545 = vmatprep.subr.mxu0 0.0
    %6546 = vmatpush1.msra.mxu0 0.0
    %6547 = vmatprep.subr.mxu0 0.0
    %6548 = vmatpush1.msra.mxu0 0.0
    %6549 = vmatprep.subr.mxu0 0.0
    %6550 = vmatpush1.msra.mxu0 0.0
    %6551 = vmatprep.subr.mxu0 0.0
    %6552 = vmatpush1.msra.mxu0 0.0
    %6553 = vmatprep.subr.mxu0 0.0
    %6554 = vmatpush1.msra.mxu0 0.0
    %6555 = vmatprep.subr.mxu0 0.0
    %6556 = vmatpush1.msra.mxu0 0.0
    %6557 = vmatprep.subr.mxu0 0.0
    %6558 = vmatpush1.msra.mxu0 0.0
    %6559 = vmatprep.subr.mxu0 0.0
    %6560 = vmatpush1.msra.mxu0 0.0
    %6561 = vmatprep.subr.mxu0 0.0
    %6562 = vmatpush1.msra.mxu0 0.0
    %6563 = vmatprep.subr.mxu0 0.0
    %6564 = vmatpush1.msra.mxu0 0.0
    %6565 = vmatprep.subr.mxu0 0.0
    %6566 = vmatpush1.msra.mxu0 0.0
    %6567 = vmatprep.subr.mxu0 0.0
    %6568 = vmatpush1.msra.mxu0 0.0
    %6569 = vmatprep.subr.mxu0 0.0
    %6570 = vmatpush1.msra.mxu0 0.0
    %6571 = vmatprep.subr.mxu0 0.0
    %6572 = vmatpush1.msra.mxu0 0.0
    %6573 = vmatprep.subr.mxu0 0.0
    %6574 = vmatpush1.msra.mxu0 0.0
    %6575 = vmatprep.subr.mxu0 0.0
    %6576 = vmatpush1.msra.mxu0 0.0
    %6577 = vmatprep.mubr.f32.mxu0 0.0
    %6578 = vmatmul.mubr.f32.gmra.mrb[0].mxu0 %v6484
    %v6579 = vpop.f32.mrb[0].mxu0
    %v6580 = vadd.f32 0.0, %v6579
    %v6581 = vpop.f32.mrb[0].mxu0
    %v6582 = vadd.f32 0.0, %v6581
    %6583 = vdwg.mxu0
    %6584 = vmatprep.subr.mxu0 0.0
    %6585 = vmatpush1.msra.mxu0 %v4417
    %6586 = vmatprep.subr.mxu0 0.0
    %6587 = vmatpush1.msra.mxu0 %v4420
    %6588 = vmatprep.subr.mxu0 0.0
    %6589 = vmatpush1.msra.mxu0 %v4423
    %6590 = vmatprep.subr.mxu0 0.0
    %6591 = vmatpush1.msra.mxu0 %v4426
    %6592 = vmatprep.subr.mxu0 0.0
    %6593 = vmatpush1.msra.mxu0 %v4429
    %6594 = vmatprep.subr.mxu0 0.0
    %6595 = vmatpush1.msra.mxu0 %v4432
    %6596 = vmatprep.subr.mxu0 0.0
    %6597 = vmatpush1.msra.mxu0 %v4435
    %6598 = vmatprep.subr.mxu0 0.0
    %6599 = vmatpush1.msra.mxu0 %v4438
    %6600 = vmatprep.subr.mxu0 0.0
    %6601 = vmatpush1.msra.mxu0 %v4441
    %6602 = vmatprep.subr.mxu0 0.0
    %6603 = vmatpush1.msra.mxu0 %v4444
    %6604 = vmatprep.subr.mxu0 0.0
    %6605 = vmatpush1.msra.mxu0 %v4447
    %6606 = vmatprep.subr.mxu0 0.0
    %6607 = vmatpush1.msra.mxu0 %v4450
    %6608 = vmatprep.subr.mxu0 0.0
    %6609 = vmatpush1.msra.mxu0 %v4453
    %6610 = vmatprep.subr.mxu0 0.0
    %6611 = vmatpush1.msra.mxu0 %v4456
    %6612 = vmatprep.subr.mxu0 0.0
    %6613 = vmatpush1.msra.mxu0 %v4459
    %6614 = vmatprep.subr.mxu0 0.0
    %6615 = vmatpush1.msra.mxu0 %v4462
    %6616 = vmatprep.subr.mxu0 0.0
    %6617 = vmatpush1.msra.mxu0 0.0
    %6618 = vmatprep.subr.mxu0 0.0
    %6619 = vmatpush1.msra.mxu0 0.0
    %6620 = vmatprep.subr.mxu0 0.0
    %6621 = vmatpush1.msra.mxu0 0.0
    %6622 = vmatprep.subr.mxu0 0.0
    %6623 = vmatpush1.msra.mxu0 0.0
    %6624 = vmatprep.subr.mxu0 0.0
    %6625 = vmatpush1.msra.mxu0 0.0
    %6626 = vmatprep.subr.mxu0 0.0
    %6627 = vmatpush1.msra.mxu0 0.0
    %6628 = vmatprep.subr.mxu0 0.0
    %6629 = vmatpush1.msra.mxu0 0.0
    %6630 = vmatprep.subr.mxu0 0.0
    %6631 = vmatpush1.msra.mxu0 0.0
    %6632 = vmatprep.subr.mxu0 0.0
    %6633 = vmatpush1.msra.mxu0 0.0
    %6634 = vmatprep.subr.mxu0 0.0
    %6635 = vmatpush1.msra.mxu0 0.0
    %6636 = vmatprep.subr.mxu0 0.0
    %6637 = vmatpush1.msra.mxu0 0.0
    %6638 = vmatprep.subr.mxu0 0.0
    %6639 = vmatpush1.msra.mxu0 0.0
    %6640 = vmatprep.subr.mxu0 0.0
    %6641 = vmatpush1.msra.mxu0 0.0
    %6642 = vmatprep.subr.mxu0 0.0
    %6643 = vmatpush1.msra.mxu0 0.0
    %6644 = vmatprep.subr.mxu0 0.0
    %6645 = vmatpush1.msra.mxu0 0.0
    %6646 = vmatprep.subr.mxu0 0.0
    %6647 = vmatpush1.msra.mxu0 0.0
    %6648 = vmatprep.mubr.f32.mxu0 0.0
    %6649 = vmatmul.mubr.f32.gmra.mrb[0].mxu0 %v6484
    %v6650 = vpop.f32.mrb[0].mxu0
    %v6651 = vadd.f32 0.0, %v6650
    %v6652 = vpop.f32.mrb[0].mxu0
    %6653 = vdwg.mxu0
    %6654 = vmatprep.subr.mxu0 %v4465
    %6655 = vmatpush1.msra.mxu0 %v4464
    %6656 = vmatprep.subr.mxu0 %v4468
    %6657 = vmatpush1.msra.mxu0 %v4467
    %6658 = vmatprep.subr.mxu0 %v4471
    %6659 = vmatpush1.msra.mxu0 %v4470
    %6660 = vmatprep.subr.mxu0 %v4474
    %6661 = vmatpush1.msra.mxu0 %v4473
    %6662 = vmatprep.subr.mxu0 %v4477
    %6663 = vmatpush1.msra.mxu0 %v4476
    %6664 = vmatprep.subr.mxu0 %v4480
    %6665 = vmatpush1.msra.mxu0 %v4479
    %6666 = vmatprep.subr.mxu0 %v4483
    %6667 = vmatpush1.msra.mxu0 %v4482
    %6668 = vmatprep.subr.mxu0 %v4486
    %6669 = vmatpush1.msra.mxu0 %v4485
    %6670 = vmatprep.subr.mxu0 %v4489
    %6671 = vmatpush1.msra.mxu0 %v4488
    %6672 = vmatprep.subr.mxu0 %v4492
    %6673 = vmatpush1.msra.mxu0 %v4491
    %6674 = vmatprep.subr.mxu0 %v4495
    %6675 = vmatpush1.msra.mxu0 %v4494
    %6676 = vmatprep.subr.mxu0 %v4498
    %6677 = vmatpush1.msra.mxu0 %v4497
    %6678 = vmatprep.subr.mxu0 %v4501
    %6679 = vmatpush1.msra.mxu0 %v4500
    %6680 = vmatprep.subr.mxu0 %v4504
    %6681 = vmatpush1.msra.mxu0 %v4503
    %6682 = vmatprep.subr.mxu0 %v4507
    %6683 = vmatpush1.msra.mxu0 %v4506
    %6684 = vmatprep.subr.mxu0 %v4510
    %6685 = vmatpush1.msra.mxu0 %v4509
    %6686 = vmatprep.subr.mxu0 0.0
    %6687 = vmatpush1.msra.mxu0 0.0
    %6688 = vmatprep.subr.mxu0 0.0
    %6689 = vmatpush1.msra.mxu0 0.0
    %6690 = vmatprep.subr.mxu0 0.0
    %6691 = vmatpush1.msra.mxu0 0.0
    %6692 = vmatprep.subr.mxu0 0.0
    %6693 = vmatpush1.msra.mxu0 0.0
    %6694 = vmatprep.subr.mxu0 0.0
    %6695 = vmatpush1.msra.mxu0 0.0
    %6696 = vmatprep.subr.mxu0 0.0
    %6697 = vmatpush1.msra.mxu0 0.0
    %6698 = vmatprep.subr.mxu0 0.0
    %6699 = vmatpush1.msra.mxu0 0.0
    %6700 = vmatprep.subr.mxu0 0.0
    %6701 = vmatpush1.msra.mxu0 0.0
    %6702 = vmatprep.subr.mxu0 0.0
    %6703 = vmatpush1.msra.mxu0 0.0
    %6704 = vmatprep.subr.mxu0 0.0
    %6705 = vmatpush1.msra.mxu0 0.0
    %6706 = vmatprep.subr.mxu0 0.0
    %6707 = vmatpush1.msra.mxu0 0.0
    %6708 = vmatprep.subr.mxu0 0.0
    %6709 = vmatpush1.msra.mxu0 0.0
    %6710 = vmatprep.subr.mxu0 0.0
    %6711 = vmatpush1.msra.mxu0 0.0
    %6712 = vmatprep.subr.mxu0 0.0
    %6713 = vmatpush1.msra.mxu0 0.0
    %6714 = vmatprep.subr.mxu0 0.0
    %6715 = vmatpush1.msra.mxu0 0.0
    %6716 = vmatprep.subr.mxu0 0.0
    %6717 = vmatpush1.msra.mxu0 0.0
    %6718 = vmatprep.mubr.f32.mxu0 0.0
    %6719 = vmatmul.mubr.f32.gmra.mrb[0].mxu0 %v6504
    %v6720 = vpop.f32.mrb[0].mxu0
    %v6721 = vadd.f32 0.0, %v6720
    %v6722 = vpop.f32.mrb[0].mxu0
    %v6723 = vadd.f32 0.0, %v6722
    %6724 = vdwg.mxu0
    %6725 = vmatprep.subr.mxu0 0.0
    %6726 = vmatpush1.msra.mxu0 %v4466
    %6727 = vmatprep.subr.mxu0 0.0
    %6728 = vmatpush1.msra.mxu0 %v4469
    %6729 = vmatprep.subr.mxu0 0.0
    %6730 = vmatpush1.msra.mxu0 %v4472
    %6731 = vmatprep.subr.mxu0 0.0
    %6732 = vmatpush1.msra.mxu0 %v4475
    %6733 = vmatprep.subr.mxu0 0.0
    %6734 = vmatpush1.msra.mxu0 %v4478
    %6735 = vmatprep.subr.mxu0 0.0
    %6736 = vmatpush1.msra.mxu0 %v4481
    %6737 = vmatprep.subr.mxu0 0.0
    %6738 = vmatpush1.msra.mxu0 %v4484
    %6739 = vmatprep.subr.mxu0 0.0
    %6740 = vmatpush1.msra.mxu0 %v4487
    %6741 = vmatprep.subr.mxu0 0.0
    %6742 = vmatpush1.msra.mxu0 %v4490
    %6743 = vmatprep.subr.mxu0 0.0
    %6744 = vmatpush1.msra.mxu0 %v4493
    %6745 = vmatprep.subr.mxu0 0.0
    %6746 = vmatpush1.msra.mxu0 %v4496
    %6747 = vmatprep.subr.mxu0 0.0
    %6748 = vmatpush1.msra.mxu0 %v4499
    %6749 = vmatprep.subr.mxu0 0.0
    %6750 = vmatpush1.msra.mxu0 %v4502
    %6751 = vmatprep.subr.mxu0 0.0
    %6752 = vmatpush1.msra.mxu0 %v4505
    %6753 = vmatprep.subr.mxu0 0.0
    %6754 = vmatpush1.msra.mxu0 %v4508
    %6755 = vmatprep.subr.mxu0 0.0
    %6756 = vmatpush1.msra.mxu0 %v4511
    %6757 = vmatprep.subr.mxu0 0.0
    %6758 = vmatpush1.msra.mxu0 0.0
    %6759 = vmatprep.subr.mxu0 0.0
    %6760 = vmatpush1.msra.mxu0 0.0
    %6761 = vmatprep.subr.mxu0 0.0
    %6762 = vmatpush1.msra.mxu0 0.0
    %6763 = vmatprep.subr.mxu0 0.0
    %6764 = vmatpush1.msra.mxu0 0.0
    %6765 = vmatprep.subr.mxu0 0.0
    %6766 = vmatpush1.msra.mxu0 0.0
    %6767 = vmatprep.subr.mxu0 0.0
    %6768 = vmatpush1.msra.mxu0 0.0
    %6769 = vmatprep.subr.mxu0 0.0
    %6770 = vmatpush1.msra.mxu0 0.0
    %6771 = vmatprep.subr.mxu0 0.0
    %6772 = vmatpush1.msra.mxu0 0.0
    %6773 = vmatprep.subr.mxu0 0.0
    %6774 = vmatpush1.msra.mxu0 0.0
    %6775 = vmatprep.subr.mxu0 0.0
    %6776 = vmatpush1.msra.mxu0 0.0
    %6777 = vmatprep.subr.mxu0 0.0
    %6778 = vmatpush1.msra.mxu0 0.0
    %6779 = vmatprep.subr.mxu0 0.0
    %6780 = vmatpush1.msra.mxu0 0.0
    %6781 = vmatprep.subr.mxu0 0.0
    %6782 = vmatpush1.msra.mxu0 0.0
    %6783 = vmatprep.subr.mxu0 0.0
    %6784 = vmatpush1.msra.mxu0 0.0
    %6785 = vmatprep.subr.mxu0 0.0
    %6786 = vmatpush1.msra.mxu0 0.0
    %6787 = vmatprep.subr.mxu0 0.0
    %6788 = vmatpush1.msra.mxu0 0.0
    %6789 = vmatprep.mubr.f32.mxu0 0.0
    %6790 = vmatmul.mubr.f32.gmra.mrb[0].mxu0 %v6504
    %v6791 = vpop.f32.mrb[0].mxu0
    %v6792 = vadd.f32 0.0, %v6791
    %v6793 = vpop.f32.mrb[0].mxu0
    %6794 = vdwg.mxu0
    %v6795 = vadd.f32 %v6507, %v6580
    %v6796 = vsub.f32 0.0, %v6795
    %v6797 = vmul.f32 %v6796, 1.442695
    %v6798 = vpow.pop %v6797
    %v6799 = vadd.f32 %v6798, 1.0
    %v6800 = vrcp.pop %v6799
    %v6801 = vadd.f32 %v6508, %v6582
    %v6802 = vsub.f32 0.0, %v6801
    %v6803 = vmul.f32 %v6802, 1.442695
    %v6804 = vpow.pop %v6803
    %v6805 = vadd.f32 %v6804, 1.0
    %v6806 = vrcp.pop %v6805
    %v6807 = vadd.f32 %v6651, %v4517
    %v6808 = vmul.f32 %v6800, %v6807
    %v6809 = vadd.f32 %v6509, %v6808
    %v6810 = vtanh.pop %v6809
    %v6811 = vsub.f32 1.0, %v6806
    %v6812 = vmul.f32 %v6811, %v6810
    %v6813 = vmul.f32 %v6806, %v6484
    %v6814 = vadd.f32 %v6812, %v6813
    %v6815 = vadd.f32 %v6510, %v6721
    %v6816 = vsub.f32 0.0, %v6815
    %v6817 = vmul.f32 %v6816, 1.442695
    %v6818 = vpow.pop %v6817
    %v6819 = vadd.f32 %v6818, 1.0
    %v6820 = vrcp.pop %v6819
    %v6821 = vadd.f32 %v6511, %v6723
    %v6822 = vsub.f32 0.0, %v6821
    %v6823 = vmul.f32 %v6822, 1.442695
    %v6824 = vpow.pop %v6823
    %v6825 = vadd.f32 %v6824, 1.0
    %v6826 = vrcp.pop %v6825
    %v6827 = vadd.f32 %v6792, %v4525
    %v6828 = vmul.f32 %v6820, %v6827
    %v6829 = vadd.f32 %v6512, %v6828
    %v6830 = vtanh.pop %v6829
    %v6831 = vsub.f32 1.0, %v6826
    %v6832 = vmul.f32 %v6831, %v6830
    %v6833 = vmul.f32 %v6826, %v6504
    %v6834 = vadd.f32 %v6832, %v6833
    %6835 = vst [vmem:[#allocation5 + $0x30] sm:$0xff] %v6814
    %6836 = vst [vmem:[#allocation6 + $0x8] sm:$0xff] %v6834
    %v6837 = vld [vmem:[#allocation2 + $0x150] sm:$0xff]
    %v6838 = vld [vmem:[#allocation2 + $0x158] sm:$0xff]
    %v6839 = vld [vmem:[#allocation2 + $0x160] sm:$0xff]
    %v6840 = vld [vmem:[#allocation2 + $0x18] sm:$0xff]
    %v6841 = vld [vmem:[#allocation2 + $0x20] sm:$0xff]
    %v6842 = vld [vmem:[#allocation2 + $0x28] sm:$0xff]
    %6843 = vmatprep.subr.mxu0 %v4416
    %6844 = vmatpush1.msra.mxu0 %v4415
    %6845 = vmatprep.subr.mxu0 %v4419
    %6846 = vmatpush1.msra.mxu0 %v4418
    %6847 = vmatprep.subr.mxu0 %v4422
    %6848 = vmatpush1.msra.mxu0 %v4421
    %6849 = vmatprep.subr.mxu0 %v4425
    %6850 = vmatpush1.msra.mxu0 %v4424
    %6851 = vmatprep.subr.mxu0 %v4428
    %6852 = vmatpush1.msra.mxu0 %v4427
    %6853 = vmatprep.subr.mxu0 %v4431
    %6854 = vmatpush1.msra.mxu0 %v4430
    %6855 = vmatprep.subr.mxu0 %v4434
    %6856 = vmatpush1.msra.mxu0 %v4433
    %6857 = vmatprep.subr.mxu0 %v4437
    %6858 = vmatpush1.msra.mxu0 %v4436
    %6859 = vmatprep.subr.mxu0 %v4440
    %6860 = vmatpush1.msra.mxu0 %v4439
    %6861 = vmatprep.subr.mxu0 %v4443
    %6862 = vmatpush1.msra.mxu0 %v4442
    %6863 = vmatprep.subr.mxu0 %v4446
    %6864 = vmatpush1.msra.mxu0 %v4445
    %6865 = vmatprep.subr.mxu0 %v4449
    %6866 = vmatpush1.msra.mxu0 %v4448
    %6867 = vmatprep.subr.mxu0 %v4452
    %6868 = vmatpush1.msra.mxu0 %v4451
    %6869 = vmatprep.subr.mxu0 %v4455
    %6870 = vmatpush1.msra.mxu0 %v4454
    %6871 = vmatprep.subr.mxu0 %v4458
    %6872 = vmatpush1.msra.mxu0 %v4457
    %6873 = vmatprep.subr.mxu0 %v4461
    %6874 = vmatpush1.msra.mxu0 %v4460
    %6875 = vmatprep.subr.mxu0 0.0
    %6876 = vmatpush1.msra.mxu0 0.0
    %6877 = vmatprep.subr.mxu0 0.0
    %6878 = vmatpush1.msra.mxu0 0.0
    %6879 = vmatprep.subr.mxu0 0.0
    %6880 = vmatpush1.msra.mxu0 0.0
    %6881 = vmatprep.subr.mxu0 0.0
    %6882 = vmatpush1.msra.mxu0 0.0
    %6883 = vmatprep.subr.mxu0 0.0
    %6884 = vmatpush1.msra.mxu0 0.0
    %6885 = vmatprep.subr.mxu0 0.0
    %6886 = vmatpush1.msra.mxu0 0.0
    %6887 = vmatprep.subr.mxu0 0.0
    %6888 = vmatpush1.msra.mxu0 0.0
    %6889 = vmatprep.subr.mxu0 0.0
    %6890 = vmatpush1.msra.mxu0 0.0
    %6891 = vmatprep.subr.mxu0 0.0
    %6892 = vmatpush1.msra.mxu0 0.0
    %6893 = vmatprep.subr.mxu0 0.0
    %6894 = vmatpush1.msra.mxu0 0.0
    %6895 = vmatprep.subr.mxu0 0.0
    %6896 = vmatpush1.msra.mxu0 0.0
    %6897 = vmatprep.subr.mxu0 0.0
    %6898 = vmatpush1.msra.mxu0 0.0
    %6899 = vmatprep.subr.mxu0 0.0
    %6900 = vmatpush1.msra.mxu0 0.0
    %6901 = vmatprep.subr.mxu0 0.0
    %6902 = vmatpush1.msra.mxu0 0.0
    %6903 = vmatprep.subr.mxu0 0.0
    %6904 = vmatpush1.msra.mxu0 0.0
    %6905 = vmatprep.subr.mxu0 0.0
    %6906 = vmatpush1.msra.mxu0 0.0
    %6907 = vmatprep.mubr.f32.mxu0 0.0
    %6908 = vmatmul.mubr.f32.gmra.mrb[0].mxu0 %v6814
    %v6909 = vpop.f32.mrb[0].mxu0
    %v6910 = vadd.f32 0.0, %v6909
    %v6911 = vpop.f32.mrb[0].mxu0
    %v6912 = vadd.f32 0.0, %v6911
    %6913 = vdwg.mxu0
    %6914 = vmatprep.subr.mxu0 0.0
    %6915 = vmatpush1.msra.mxu0 %v4417
    %6916 = vmatprep.subr.mxu0 0.0
    %6917 = vmatpush1.msra.mxu0 %v4420
    %6918 = vmatprep.subr.mxu0 0.0
    %6919 = vmatpush1.msra.mxu0 %v4423
    %6920 = vmatprep.subr.mxu0 0.0
    %6921 = vmatpush1.msra.mxu0 %v4426
    %6922 = vmatprep.subr.mxu0 0.0
    %6923 = vmatpush1.msra.mxu0 %v4429
    %6924 = vmatprep.subr.mxu0 0.0
    %6925 = vmatpush1.msra.mxu0 %v4432
    %6926 = vmatprep.subr.mxu0 0.0
    %6927 = vmatpush1.msra.mxu0 %v4435
    %6928 = vmatprep.subr.mxu0 0.0
    %6929 = vmatpush1.msra.mxu0 %v4438
    %6930 = vmatprep.subr.mxu0 0.0
    %6931 = vmatpush1.msra.mxu0 %v4441
    %6932 = vmatprep.subr.mxu0 0.0
    %6933 = vmatpush1.msra.mxu0 %v4444
    %6934 = vmatprep.subr.mxu0 0.0
    %6935 = vmatpush1.msra.mxu0 %v4447
    %6936 = vmatprep.subr.mxu0 0.0
    %6937 = vmatpush1.msra.mxu0 %v4450
    %6938 = vmatprep.subr.mxu0 0.0
    %6939 = vmatpush1.msra.mxu0 %v4453
    %6940 = vmatprep.subr.mxu0 0.0
    %6941 = vmatpush1.msra.mxu0 %v4456
    %6942 = vmatprep.subr.mxu0 0.0
    %6943 = vmatpush1.msra.mxu0 %v4459
    %6944 = vmatprep.subr.mxu0 0.0
    %6945 = vmatpush1.msra.mxu0 %v4462
    %6946 = vmatprep.subr.mxu0 0.0
    %6947 = vmatpush1.msra.mxu0 0.0
    %6948 = vmatprep.subr.mxu0 0.0
    %6949 = vmatpush1.msra.mxu0 0.0
    %6950 = vmatprep.subr.mxu0 0.0
    %6951 = vmatpush1.msra.mxu0 0.0
    %6952 = vmatprep.subr.mxu0 0.0
    %6953 = vmatpush1.msra.mxu0 0.0
    %6954 = vmatprep.subr.mxu0 0.0
    %6955 = vmatpush1.msra.mxu0 0.0
    %6956 = vmatprep.subr.mxu0 0.0
    %6957 = vmatpush1.msra.mxu0 0.0
    %6958 = vmatprep.subr.mxu0 0.0
    %6959 = vmatpush1.msra.mxu0 0.0
    %6960 = vmatprep.subr.mxu0 0.0
    %6961 = vmatpush1.msra.mxu0 0.0
    %6962 = vmatprep.subr.mxu0 0.0
    %6963 = vmatpush1.msra.mxu0 0.0
    %6964 = vmatprep.subr.mxu0 0.0
    %6965 = vmatpush1.msra.mxu0 0.0
    %6966 = vmatprep.subr.mxu0 0.0
    %6967 = vmatpush1.msra.mxu0 0.0
    %6968 = vmatprep.subr.mxu0 0.0
    %6969 = vmatpush1.msra.mxu0 0.0
    %6970 = vmatprep.subr.mxu0 0.0
    %6971 = vmatpush1.msra.mxu0 0.0
    %6972 = vmatprep.subr.mxu0 0.0
    %6973 = vmatpush1.msra.mxu0 0.0
    %6974 = vmatprep.subr.mxu0 0.0
    %6975 = vmatpush1.msra.mxu0 0.0
    %6976 = vmatprep.subr.mxu0 0.0
    %6977 = vmatpush1.msra.mxu0 0.0
    %6978 = vmatprep.mubr.f32.mxu0 0.0
    %6979 = vmatmul.mubr.f32.gmra.mrb[0].mxu0 %v6814
    %v6980 = vpop.f32.mrb[0].mxu0
    %v6981 = vadd.f32 0.0, %v6980
    %v6982 = vpop.f32.mrb[0].mxu0
    %6983 = vdwg.mxu0
    %6984 = vmatprep.subr.mxu0 %v4465
    %6985 = vmatpush1.msra.mxu0 %v4464
    %6986 = vmatprep.subr.mxu0 %v4468
    %6987 = vmatpush1.msra.mxu0 %v4467
    %6988 = vmatprep.subr.mxu0 %v4471
    %6989 = vmatpush1.msra.mxu0 %v4470
    %6990 = vmatprep.subr.mxu0 %v4474
    %6991 = vmatpush1.msra.mxu0 %v4473
    %6992 = vmatprep.subr.mxu0 %v4477
    %6993 = vmatpush1.msra.mxu0 %v4476
    %6994 = vmatprep.subr.mxu0 %v4480
    %6995 = vmatpush1.msra.mxu0 %v4479
    %6996 = vmatprep.subr.mxu0 %v4483
    %6997 = vmatpush1.msra.mxu0 %v4482
    %6998 = vmatprep.subr.mxu0 %v4486
    %6999 = vmatpush1.msra.mxu0 %v4485
    %7000 = vmatprep.subr.mxu0 %v4489
    %7001 = vmatpush1.msra.mxu0 %v4488
    %7002 = vmatprep.subr.mxu0 %v4492
    %7003 = vmatpush1.msra.mxu0 %v4491
    %7004 = vmatprep.subr.mxu0 %v4495
    %7005 = vmatpush1.msra.mxu0 %v4494
    %7006 = vmatprep.subr.mxu0 %v4498
    %7007 = vmatpush1.msra.mxu0 %v4497
    %7008 = vmatprep.subr.mxu0 %v4501
    %7009 = vmatpush1.msra.mxu0 %v4500
    %7010 = vmatprep.subr.mxu0 %v4504
    %7011 = vmatpush1.msra.mxu0 %v4503
    %7012 = vmatprep.subr.mxu0 %v4507
    %7013 = vmatpush1.msra.mxu0 %v4506
    %7014 = vmatprep.subr.mxu0 %v4510
    %7015 = vmatpush1.msra.mxu0 %v4509
    %7016 = vmatprep.subr.mxu0 0.0
    %7017 = vmatpush1.msra.mxu0 0.0
    %7018 = vmatprep.subr.mxu0 0.0
    %7019 = vmatpush1.msra.mxu0 0.0
    %7020 = vmatprep.subr.mxu0 0.0
    %7021 = vmatpush1.msra.mxu0 0.0
    %7022 = vmatprep.subr.mxu0 0.0
    %7023 = vmatpush1.msra.mxu0 0.0
    %7024 = vmatprep.subr.mxu0 0.0
    %7025 = vmatpush1.msra.mxu0 0.0
    %7026 = vmatprep.subr.mxu0 0.0
    %7027 = vmatpush1.msra.mxu0 0.0
    %7028 = vmatprep.subr.mxu0 0.0
    %7029 = vmatpush1.msra.mxu0 0.0
    %7030 = vmatprep.subr.mxu0 0.0
    %7031 = vmatpush1.msra.mxu0 0.0
    %7032 = vmatprep.subr.mxu0 0.0
    %7033 = vmatpush1.msra.mxu0 0.0
    %7034 = vmatprep.subr.mxu0 0.0
    %7035 = vmatpush1.msra.mxu0 0.0
    %7036 = vmatprep.subr.mxu0 0.0
    %7037 = vmatpush1.msra.mxu0 0.0
    %7038 = vmatprep.subr.mxu0 0.0
    %7039 = vmatpush1.msra.mxu0 0.0
    %7040 = vmatprep.subr.mxu0 0.0
    %7041 = vmatpush1.msra.mxu0 0.0
    %7042 = vmatprep.subr.mxu0 0.0
    %7043 = vmatpush1.msra.mxu0 0.0
    %7044 = vmatprep.subr.mxu0 0.0
    %7045 = vmatpush1.msra.mxu0 0.0
    %7046 = vmatprep.subr.mxu0 0.0
    %7047 = vmatpush1.msra.mxu0 0.0
    %7048 = vmatprep.mubr.f32.mxu0 0.0
    %7049 = vmatmul.mubr.f32.gmra.mrb[0].mxu0 %v6834
    %v7050 = vpop.f32.mrb[0].mxu0
    %v7051 = vadd.f32 0.0, %v7050
    %v7052 = vpop.f32.mrb[0].mxu0
    %v7053 = vadd.f32 0.0, %v7052
    %7054 = vdwg.mxu0
    %7055 = vmatprep.subr.mxu0 0.0
    %7056 = vmatpush1.msra.mxu0 %v4466
    %7057 = vmatprep.subr.mxu0 0.0
    %7058 = vmatpush1.msra.mxu0 %v4469
    %7059 = vmatprep.subr.mxu0 0.0
    %7060 = vmatpush1.msra.mxu0 %v4472
    %7061 = vmatprep.subr.mxu0 0.0
    %7062 = vmatpush1.msra.mxu0 %v4475
    %7063 = vmatprep.subr.mxu0 0.0
    %7064 = vmatpush1.msra.mxu0 %v4478
    %7065 = vmatprep.subr.mxu0 0.0
    %7066 = vmatpush1.msra.mxu0 %v4481
    %7067 = vmatprep.subr.mxu0 0.0
    %7068 = vmatpush1.msra.mxu0 %v4484
    %7069 = vmatprep.subr.mxu0 0.0
    %7070 = vmatpush1.msra.mxu0 %v4487
    %7071 = vmatprep.subr.mxu0 0.0
    %7072 = vmatpush1.msra.mxu0 %v4490
    %7073 = vmatprep.subr.mxu0 0.0
    %7074 = vmatpush1.msra.mxu0 %v4493
    %7075 = vmatprep.subr.mxu0 0.0
    %7076 = vmatpush1.msra.mxu0 %v4496
    %7077 = vmatprep.subr.mxu0 0.0
    %7078 = vmatpush1.msra.mxu0 %v4499
    %7079 = vmatprep.subr.mxu0 0.0
    %7080 = vmatpush1.msra.mxu0 %v4502
    %7081 = vmatprep.subr.mxu0 0.0
    %7082 = vmatpush1.msra.mxu0 %v4505
    %7083 = vmatprep.subr.mxu0 0.0
    %7084 = vmatpush1.msra.mxu0 %v4508
    %7085 = vmatprep.subr.mxu0 0.0
    %7086 = vmatpush1.msra.mxu0 %v4511
    %7087 = vmatprep.subr.mxu0 0.0
    %7088 = vmatpush1.msra.mxu0 0.0
    %7089 = vmatprep.subr.mxu0 0.0
    %7090 = vmatpush1.msra.mxu0 0.0
    %7091 = vmatprep.subr.mxu0 0.0
    %7092 = vmatpush1.msra.mxu0 0.0
    %7093 = vmatprep.subr.mxu0 0.0
    %7094 = vmatpush1.msra.mxu0 0.0
    %7095 = vmatprep.subr.mxu0 0.0
    %7096 = vmatpush1.msra.mxu0 0.0
    %7097 = vmatprep.subr.mxu0 0.0
    %7098 = vmatpush1.msra.mxu0 0.0
    %7099 = vmatprep.subr.mxu0 0.0
    %7100 = vmatpush1.msra.mxu0 0.0
    %7101 = vmatprep.subr.mxu0 0.0
    %7102 = vmatpush1.msra.mxu0 0.0
    %7103 = vmatprep.subr.mxu0 0.0
    %7104 = vmatpush1.msra.mxu0 0.0
    %7105 = vmatprep.subr.mxu0 0.0
    %7106 = vmatpush1.msra.mxu0 0.0
    %7107 = vmatprep.subr.mxu0 0.0
    %7108 = vmatpush1.msra.mxu0 0.0
    %7109 = vmatprep.subr.mxu0 0.0
    %7110 = vmatpush1.msra.mxu0 0.0
    %7111 = vmatprep.subr.mxu0 0.0
    %7112 = vmatpush1.msra.mxu0 0.0
    %7113 = vmatprep.subr.mxu0 0.0
    %7114 = vmatpush1.msra.mxu0 0.0
    %7115 = vmatprep.subr.mxu0 0.0
    %7116 = vmatpush1.msra.mxu0 0.0
    %7117 = vmatprep.subr.mxu0 0.0
    %7118 = vmatpush1.msra.mxu0 0.0
    %7119 = vmatprep.mubr.f32.mxu0 0.0
    %7120 = vmatmul.mubr.f32.gmra.mrb[0].mxu0 %v6834
    %v7121 = vpop.f32.mrb[0].mxu0
    %v7122 = vadd.f32 0.0, %v7121
    %v7123 = vpop.f32.mrb[0].mxu0
    %7124 = vdwg.mxu0
    %v7125 = vadd.f32 %v6837, %v6910
    %v7126 = vsub.f32 0.0, %v7125
    %v7127 = vmul.f32 %v7126, 1.442695
    %v7128 = vpow.pop %v7127
    %v7129 = vadd.f32 %v7128, 1.0
    %v7130 = vrcp.pop %v7129
    %v7131 = vadd.f32 %v6838, %v6912
    %v7132 = vsub.f32 0.0, %v7131
    %v7133 = vmul.f32 %v7132, 1.442695
    %v7134 = vpow.pop %v7133
    %v7135 = vadd.f32 %v7134, 1.0
    %v7136 = vrcp.pop %v7135
    %v7137 = vadd.f32 %v6981, %v4517
    %v7138 = vmul.f32 %v7130, %v7137
    %v7139 = vadd.f32 %v6839, %v7138
    %v7140 = vtanh.pop %v7139
    %v7141 = vsub.f32 1.0, %v7136
    %v7142 = vmul.f32 %v7141, %v7140
    %v7143 = vmul.f32 %v7136, %v6814
    %v7144 = vadd.f32 %v7142, %v7143
    %v7145 = vadd.f32 %v6840, %v7051
    %v7146 = vsub.f32 0.0, %v7145
    %v7147 = vmul.f32 %v7146, 1.442695
    %v7148 = vpow.pop %v7147
    %v7149 = vadd.f32 %v7148, 1.0
    %v7150 = vrcp.pop %v7149
    %v7151 = vadd.f32 %v6841, %v7053
    %v7152 = vsub.f32 0.0, %v7151
    %v7153 = vmul.f32 %v7152, 1.442695
    %v7154 = vpow.pop %v7153
    %v7155 = vadd.f32 %v7154, 1.0
    %v7156 = vrcp.pop %v7155
    %v7157 = vadd.f32 %v7122, %v4525
    %v7158 = vmul.f32 %v7150, %v7157
    %v7159 = vadd.f32 %v6842, %v7158
    %v7160 = vtanh.pop %v7159
    %v7161 = vsub.f32 1.0, %v7156
    %v7162 = vmul.f32 %v7161, %v7160
    %v7163 = vmul.f32 %v7156, %v6834
    %v7164 = vadd.f32 %v7162, %v7163
    %7165 = vst [vmem:[#allocation5 + $0x38] sm:$0xff] %v7144
    %7166 = vst [vmem:[#allocation6] sm:$0xff] %v7164
    %v7167 = vld [vmem:[#allocation5] sm:$0xff]
    %v7168 = vld [vmem:[#allocation5 + $0x8] sm:$0xff]
    %v7169 = vld [vmem:[#allocation5 + $0x10] sm:$0xff]
    %v7170 = vld [vmem:[#allocation5 + $0x18] sm:$0xff]
    %v7171 = vld [vmem:[#allocation5 + $0x20] sm:$0xff]
    %v7172 = vld [vmem:[#allocation5 + $0x28] sm:$0xff]
    %v7173 = vld [vmem:[#allocation5 + $0x30] sm:$0xff]
    %v7174 = vld [vmem:[#allocation5 + $0x38] sm:$0xff]
    %v7175 = vpack.c.bf16 %v7168, %v7167
    %v7176 = vpack.c.bf16 %v7170, %v7169
    %v7177 = vpack.c.bf16 %v7172, %v7171
    %v7178 = vpack.c.bf16 %v7174, %v7173
    %v7179 = vld [vmem:[%s10] sm:$0xf]
    %v7180 = vld [vmem:[%s10 + $0x4] sm:$0xf]
    %v7181 = vld [vmem:[%s10 + $0x8] sm:$0xf]
    %v7182 = vld [vmem:[%s10 + $0xc] sm:$0xf]
    %v7183 = vld [vmem:[%s10 + $0x10] sm:$0xf]
    %v7184 = vld [vmem:[%s10 + $0x14] sm:$0xf]
    %v7185 = vld [vmem:[%s10 + $0x18] sm:$0xf]
    %v7186 = vld [vmem:[%s10 + $0x1c] sm:$0xf]
    %v7187 = vld [vmem:[%s10 + $0x20] sm:$0xf]
    %v7188 = vld [vmem:[%s10 + $0x24] sm:$0xf]
    %v7189 = vld [vmem:[%s10 + $0x28] sm:$0xf]
    %v7190 = vld [vmem:[%s10 + $0x2c] sm:$0xf]
    %v7191 = vld [vmem:[%s10 + $0x30] sm:$0xf]
    %v7192 = vld [vmem:[%s10 + $0x34] sm:$0xf]
    %v7193 = vld [vmem:[%s10 + $0x38] sm:$0xf]
    %v7194 = vld [vmem:[%s10 + $0x3c] sm:$0xf]
    %v7195 = vld [vmem:[#allocation6] sm:$0xff]
    %v7196 = vld [vmem:[#allocation6 + $0x8] sm:$0xff]
    %v7197 = vld [vmem:[#allocation6 + $0x10] sm:$0xff]
    %v7198 = vld [vmem:[#allocation6 + $0x18] sm:$0xff]
    %v7199 = vld [vmem:[#allocation6 + $0x20] sm:$0xff]
    %v7200 = vld [vmem:[#allocation6 + $0x28] sm:$0xff]
    %v7201 = vld [vmem:[#allocation6 + $0x30] sm:$0xff]
    %v7202 = vld [vmem:[#allocation6 + $0x38] sm:$0xff]
    %v7203 = vpack.c.bf16 %v7196, %v7195
    %v7204 = vpack.c.bf16 %v7198, %v7197
    %v7205 = vpack.c.bf16 %v7200, %v7199
    %v7206 = vpack.c.bf16 %v7202, %v7201
    %s7207 = scalar_lea.vmem %s10, 64
    %v7208 = vld [vmem:[%s7207] sm:$0xf]
    %v7209 = vld [vmem:[%s7207 + $0x4] sm:$0xf]
    %v7210 = vld [vmem:[%s7207 + $0x8] sm:$0xf]
    %v7211 = vld [vmem:[%s7207 + $0xc] sm:$0xf]
    %v7212 = vld [vmem:[%s7207 + $0x10] sm:$0xf]
    %v7213 = vld [vmem:[%s7207 + $0x14] sm:$0xf]
    %v7214 = vld [vmem:[%s7207 + $0x18] sm:$0xf]
    %v7215 = vld [vmem:[%s7207 + $0x1c] sm:$0xf]
    %v7216 = vld [vmem:[%s7207 + $0x20] sm:$0xf]
    %v7217 = vld [vmem:[%s7207 + $0x24] sm:$0xf]
    %v7218 = vld [vmem:[%s7207 + $0x28] sm:$0xf]
    %v7219 = vld [vmem:[%s7207 + $0x2c] sm:$0xf]
    %v7220 = vld [vmem:[%s7207 + $0x30] sm:$0xf]
    %v7221 = vld [vmem:[%s7207 + $0x34] sm:$0xf]
    %v7222 = vld [vmem:[%s7207 + $0x38] sm:$0xf]
    %v7223 = vld [vmem:[%s7207 + $0x3c] sm:$0xf]
    %v7240 = vunpack.c.l.b16 %v7208
    %v7241 = vunpack.c.l.b16 %v7209
    %v7242 = vunpack.c.l.b16 %v7210
    %v7243 = vunpack.c.l.b16 %v7211
    %v7244 = vunpack.c.l.b16 %v7212
    %v7245 = vunpack.c.l.b16 %v7213
    %v7246 = vunpack.c.l.b16 %v7214
    %v7247 = vunpack.c.l.b16 %v7215
    %v7248 = vunpack.c.l.b16 %v7216
    %v7249 = vunpack.c.l.b16 %v7217
    %v7250 = vunpack.c.l.b16 %v7218
    %v7251 = vunpack.c.l.b16 %v7219
    %v7252 = vunpack.c.l.b16 %v7220
    %v7253 = vunpack.c.l.b16 %v7221
    %v7254 = vunpack.c.l.b16 %v7222
    %v7255 = vunpack.c.l.b16 %v7223
    %v7256 = vpack.c.b16 %v7241, %v7240
    %v7257 = vpack.c.b16 %v7243, %v7242
    %v7258 = vpack.c.b16 %v7245, %v7244
    %v7259 = vpack.c.b16 %v7247, %v7246
    %v7260 = vpack.c.b16 %v7249, %v7248
    %v7261 = vpack.c.b16 %v7251, %v7250
    %v7262 = vpack.c.b16 %v7253, %v7252
    %v7263 = vpack.c.b16 %v7255, %v7254
    %7272 = vmatprep.subr.bf16.mxu0 0
    %7273 = vmatpush1.bf16.msra.mxu0 %v7256
    %7274 = vmatprep.subr.bf16.mxu0 0
    %7275 = vmatpush1.bf16.msra.mxu0 %v7257
    %7276 = vmatprep.subr.bf16.mxu0 0
    %7277 = vmatpush1.bf16.msra.mxu0 %v7258
    %7278 = vmatprep.subr.bf16.mxu0 0
    %7279 = vmatpush1.bf16.msra.mxu0 %v7259
    %7280 = vmatprep.subr.bf16.mxu0 0
    %7281 = vmatpush1.bf16.msra.mxu0 %v7260
    %7282 = vmatprep.subr.bf16.mxu0 0
    %7283 = vmatpush1.bf16.msra.mxu0 %v7261
    %7284 = vmatprep.subr.bf16.mxu0 0
    %7285 = vmatpush1.bf16.msra.mxu0 %v7262
    %7286 = vmatprep.subr.bf16.mxu0 0
    %7287 = vmatpush1.bf16.msra.mxu0 %v7263
    %7288 = vmatprep.subr.bf16.mxu0 0
    %7289 = vmatpush1.bf16.msra.mxu0 0
    %7290 = vmatprep.subr.bf16.mxu0 0
    %7291 = vmatpush1.bf16.msra.mxu0 0
    %7292 = vmatprep.subr.bf16.mxu0 0
    %7293 = vmatpush1.bf16.msra.mxu0 0
    %7294 = vmatprep.subr.bf16.mxu0 0
    %7295 = vmatpush1.bf16.msra.mxu0 0
    %7296 = vmatprep.subr.bf16.mxu0 0
    %7297 = vmatpush1.bf16.msra.mxu0 0
    %7298 = vmatprep.subr.bf16.mxu0 0
    %7299 = vmatpush1.bf16.msra.mxu0 0
    %7300 = vmatprep.subr.bf16.mxu0 0
    %7301 = vmatpush1.bf16.msra.mxu0 0
    %7302 = vmatprep.subr.bf16.mxu0 0
    %7303 = vmatpush1.bf16.msra.mxu0 0
    %7304 = vmatprep.mubr.bf16.mxu0 0
    %7305 = vmatmul.mubr.bf16.gmra.mrb[0].mxu0 %v7203
    %v7306 = vpop.f32.mrb[0].mxu0
    %v7307 = vadd.f32 0.0, %v7306
    %v7308 = vpop.f32.mrb[0].mxu0
    %v7309 = vpop.f32.mrb[0].mxu0
    %v7310 = vadd.f32 0.0, %v7309
    %v7311 = vpop.f32.mrb[0].mxu0
    %7312 = vmatprep.mubr.bf16.mxu0 0
    %7313 = vmatmul.mubr.bf16.gmra.mrb[0].mxu0 %v7204
    %v7314 = vpop.f32.mrb[0].mxu0
    %v7315 = vadd.f32 0.0, %v7314
    %v7316 = vpop.f32.mrb[0].mxu0
    %v7317 = vpop.f32.mrb[0].mxu0
    %v7318 = vadd.f32 0.0, %v7317
    %v7319 = vpop.f32.mrb[0].mxu0
    %7320 = vmatprep.mubr.bf16.mxu0 0
    %7321 = vmatmul.mubr.bf16.gmra.mrb[0].mxu0 %v7205
    %v7322 = vpop.f32.mrb[0].mxu0
    %v7323 = vadd.f32 0.0, %v7322
    %v7324 = vpop.f32.mrb[0].mxu0
    %v7325 = vpop.f32.mrb[0].mxu0
    %v7326 = vadd.f32 0.0, %v7325
    %v7327 = vpop.f32.mrb[0].mxu0
    %7328 = vmatprep.mubr.bf16.mxu0 0
    %7329 = vmatmul.mubr.bf16.gmra.mrb[0].mxu0 %v7206
    %v7330 = vpop.f32.mrb[0].mxu0
    %v7331 = vadd.f32 0.0, %v7330
    %v7332 = vpop.f32.mrb[0].mxu0
    %v7333 = vpop.f32.mrb[0].mxu0
    %v7334 = vadd.f32 0.0, %v7333
    %v7335 = vpop.f32.mrb[0].mxu0
    %7336 = vdwg.mxu0
    %v7353 = vunpack.c.l.b16 %v7179
    %v7354 = vunpack.c.l.b16 %v7180
    %v7355 = vunpack.c.l.b16 %v7181
    %v7356 = vunpack.c.l.b16 %v7182
    %v7357 = vunpack.c.l.b16 %v7183
    %v7358 = vunpack.c.l.b16 %v7184
    %v7359 = vunpack.c.l.b16 %v7185
    %v7360 = vunpack.c.l.b16 %v7186
    %v7361 = vunpack.c.l.b16 %v7187
    %v7362 = vunpack.c.l.b16 %v7188
    %v7363 = vunpack.c.l.b16 %v7189
    %v7364 = vunpack.c.l.b16 %v7190
    %v7365 = vunpack.c.l.b16 %v7191
    %v7366 = vunpack.c.l.b16 %v7192
    %v7367 = vunpack.c.l.b16 %v7193
    %v7368 = vunpack.c.l.b16 %v7194
    %v7369 = vpack.c.b16 %v7354, %v7353
    %v7370 = vpack.c.b16 %v7356, %v7355
    %v7371 = vpack.c.b16 %v7358, %v7357
    %v7372 = vpack.c.b16 %v7360, %v7359
    %v7373 = vpack.c.b16 %v7362, %v7361
    %v7374 = vpack.c.b16 %v7364, %v7363
    %v7375 = vpack.c.b16 %v7366, %v7365
    %v7376 = vpack.c.b16 %v7368, %v7367
    %7385 = vmatprep.subr.bf16.mxu0 0
    %7386 = vmatpush1.bf16.msra.mxu0 %v7369
    %7387 = vmatprep.subr.bf16.mxu0 0
    %7388 = vmatpush1.bf16.msra.mxu0 %v7370
    %7389 = vmatprep.subr.bf16.mxu0 0
    %7390 = vmatpush1.bf16.msra.mxu0 %v7371
    %7391 = vmatprep.subr.bf16.mxu0 0
    %7392 = vmatpush1.bf16.msra.mxu0 %v7372
    %7393 = vmatprep.subr.bf16.mxu0 0
    %7394 = vmatpush1.bf16.msra.mxu0 %v7373
    %7395 = vmatprep.subr.bf16.mxu0 0
    %7396 = vmatpush1.bf16.msra.mxu0 %v7374
    %7397 = vmatprep.subr.bf16.mxu0 0
    %7398 = vmatpush1.bf16.msra.mxu0 %v7375
    %7399 = vmatprep.subr.bf16.mxu0 0
    %7400 = vmatpush1.bf16.msra.mxu0 %v7376
    %7401 = vmatprep.subr.bf16.mxu0 0
    %7402 = vmatpush1.bf16.msra.mxu0 0
    %7403 = vmatprep.subr.bf16.mxu0 0
    %7404 = vmatpush1.bf16.msra.mxu0 0
    %7405 = vmatprep.subr.bf16.mxu0 0
    %7406 = vmatpush1.bf16.msra.mxu0 0
    %7407 = vmatprep.subr.bf16.mxu0 0
    %7408 = vmatpush1.bf16.msra.mxu0 0
    %7409 = vmatprep.subr.bf16.mxu0 0
    %7410 = vmatpush1.bf16.msra.mxu0 0
    %7411 = vmatprep.subr.bf16.mxu0 0
    %7412 = vmatpush1.bf16.msra.mxu0 0
    %7413 = vmatprep.subr.bf16.mxu0 0
    %7414 = vmatpush1.bf16.msra.mxu0 0
    %7415 = vmatprep.subr.bf16.mxu0 0
    %7416 = vmatpush1.bf16.msra.mxu0 0
    %7417 = vmatprep.mubr.bf16.mxu0 0
    %7418 = vmatmul.mubr.bf16.gmra.mrb[0].mxu0 %v7175
    %v7419 = vpop.f32.mrb[0].mxu0
    %v7420 = vadd.f32 %v7307, %v7419
    %v7421 = vpop.f32.mrb[0].mxu0
    %v7422 = vpop.f32.mrb[0].mxu0
    %v7423 = vadd.f32 %v7310, %v7422
    %v7424 = vpop.f32.mrb[0].mxu0
    %7425 = vmatprep.mubr.bf16.mxu0 0
    %7426 = vmatmul.mubr.bf16.gmra.mrb[0].mxu0 %v7176
    %v7427 = vpop.f32.mrb[0].mxu0
    %v7428 = vadd.f32 %v7315, %v7427
    %v7429 = vpop.f32.mrb[0].mxu0
    %v7430 = vpop.f32.mrb[0].mxu0
    %v7431 = vadd.f32 %v7318, %v7430
    %v7432 = vpop.f32.mrb[0].mxu0
    %7433 = vmatprep.mubr.bf16.mxu0 0
    %7434 = vmatmul.mubr.bf16.gmra.mrb[0].mxu0 %v7177
    %v7435 = vpop.f32.mrb[0].mxu0
    %v7436 = vadd.f32 %v7323, %v7435
    %v7437 = vpop.f32.mrb[0].mxu0
    %v7438 = vpop.f32.mrb[0].mxu0
    %v7439 = vadd.f32 %v7326, %v7438
    %v7440 = vpop.f32.mrb[0].mxu0
    %7441 = vmatprep.mubr.bf16.mxu0 0
    %7442 = vmatmul.mubr.bf16.gmra.mrb[0].mxu0 %v7178
    %v7443 = vpop.f32.mrb[0].mxu0
    %v7444 = vadd.f32 %v7331, %v7443
    %v7445 = vpop.f32.mrb[0].mxu0
    %v7446 = vpop.f32.mrb[0].mxu0
    %v7447 = vadd.f32 %v7334, %v7446
    %v7448 = vpop.f32.mrb[0].mxu0
    %7449 = vdwg.mxu0
    %v7450 = vld [vmem:[#allocation7] sm:$0x1]
    %v7452 = vlaneseq
    %v7453 = vshrl.u32 %v7452, 7
    %v7454 = vsub.s32 0, %v7453
    %v7455 = vrot.slane %v7450, %v7454
    %v7457 = vadd.f32 %v7420, %v7455
    %v7458 = vadd.f32 %v7423, %v7455
    %v7459 = vadd.f32 %v7428, %v7455
    %v7460 = vadd.f32 %v7431, %v7455
    %v7461 = vadd.f32 %v7436, %v7455
    %v7462 = vadd.f32 %v7439, %v7455
    %v7463 = vadd.f32 %v7444, %v7455
    %v7464 = vadd.f32 %v7447, %v7455
    %vm7465 = vcmask 7168
    %7466 = vst.msk [vmem:[%s12] sm:$0xff] %vm7465, %v7457
    %7467 = vst.msk [vmem:[%s12 + $0x8] sm:$0xff] %vm7465, %v7458
    %7468 = vst.msk [vmem:[%s12 + $0x10] sm:$0xff] %vm7465, %v7459
    %7469 = vst.msk [vmem:[%s12 + $0x18] sm:$0xff] %vm7465, %v7460
    %7470 = vst.msk [vmem:[%s12 + $0x20] sm:$0xff] %vm7465, %v7461
    %7471 = vst.msk [vmem:[%s12 + $0x28] sm:$0xff] %vm7465, %v7462
    %7472 = vst.msk [vmem:[%s12 + $0x30] sm:$0xff] %vm7465, %v7463
    %7473 = vst.msk [vmem:[%s12 + $0x38] sm:$0xff] %vm7465, %v7464
    // Predicated region
    $region62: #{sentiment_bigru_forward.1} parent=1 // pred_check
      _
    $region63: #{sentiment_bigru_forward.1} parent=1 // pred_check_branch
      %7475 = sbr.rel (0) target = $region65
    $region64: #{sentiment_bigru_forward.1} parent=1 // pred_region
      _
    $region65: #{sentiment_bigru_forward.1} parent=1 // pred_fallthru
      _
    // Predicated region
    $region66: #{sentiment_bigru_forward.1} parent=1 // pred_check
      _
    $region67: #{sentiment_bigru_forward.1} parent=1 // pred_check_branch
      %7477 = sbr.rel (0) target = $region69
    $region68: #{sentiment_bigru_forward.1} parent=1 // pred_region
      _
    $region69: #{sentiment_bigru_forward.1} parent=1 // pred_fallthru
      _
    %7478 = vsyncpa [#allocation9], 1
    %7479 = vsyncpa [#allocation11], 1

</llo_original>
